<compile_context>
chip_gen: v7x
topology: tpu7x:2x2x1
jax: 0.10.0
libtpu: 0.0.40
codegen_flags: <defaults>
</compile_context>

<pallas_src>
import jax
import jax.numpy as jnp
from jax.experimental import pallas as pl
from jax.experimental.pallas import tpu as pltpu

# ---- ModelArgs(d_model=32, n_layer=1, vocab_size=...) derived sizes ----
D_MODEL = 32
EXPAND = 2
D_INNER = EXPAND * D_MODEL          # 64
D_STATE = 16                        # n
D_CONV = 4
DT_RANK = (D_MODEL + 15) // 16      # ceil(d_model / 16) = 2
EPS = 1e-5


def _softplus(x):
    # matches F.softplus (beta=1, threshold=20)
    return jnp.where(x > 20.0, x, jnp.log1p(jnp.exp(jnp.minimum(x, 20.0))))


def _silu(x):
    return x * jax.nn.sigmoid(x)


def residual_block_kernel(
    x_ref,       # (1, L, T*D_MODEL)              folded input block (T batch elems)
    mavg_ref,    # (T*D_MODEL, T*D_MODEL)         block-diag averaging matrix (RMS mean)
    nw_ref,      # (1, T*D_MODEL)                 RMSNorm weight (lane-tiled)
    win_ref,     # (T*D_MODEL, 2*T*D_INNER)       in_proj, cols = [x block | res block]
    cw_ref,      # (D_CONV, T*D_INNER)            depthwise conv taps (lane-tiled)
    cb_ref,      # (1, T*D_INNER)                 conv bias
    wbc_ref,     # (T*D_INNER, 2*T*D_STATE)       x_proj B|C columns (block-diag)
    wdelta_ref,  # (T*D_INNER, T*D_INNER)         fused x_proj_dt @ dt_proj (block-diag)
    bdt_ref,     # (1, T*D_INNER)                 dt_proj bias
    at_ref,      # (D_STATE, T*D_INNER)           A^T (A = -exp(A_log)), lane-tiled
    dp_ref,      # (1, T*D_INNER)                 D parameter
    wout_ref,    # (T*D_INNER, T*D_MODEL)         out_proj (block-diag)
    exp_ref,     # (D_STATE, 2*T*D_STATE, 2*T*D_INNER)  0/1 lane-expansion matrices
    o_ref,       # (1, L, T*D_MODEL)              output block
    da_scr,      # (L, D_STATE, T*D_INNER)        exp(delta*A)
    dbu_scr,     # (L, D_STATE, T*D_INNER)        delta*B*u, lane-expanded
    c_scr,       # (L, D_STATE, T*D_INNER)        C, lane-expanded
    y_scr,       # (L, T*D_INNER)                 scan outputs
):
    f32 = jnp.float32
    L = x_ref.shape[1]
    BD = da_scr.shape[2]            # T * D_INNER (lane-dense, 256 for T=4)

    x = x_ref[0]                                                   # (L, T*D_MODEL)

    # ---- RMSNorm (per-batch mean over its own D_MODEL lane block, via MXU) ----
    ms = jnp.dot(x * x, mavg_ref[...], preferred_element_type=f32)
    xn = x * jax.lax.rsqrt(ms + EPS) * nw_ref[...]

    # ---- in_proj -> split into x / res (256-lane aligned column groups) ----
    xr = jnp.dot(xn, win_ref[...], preferred_element_type=f32)     # (L, 2*BD)
    xz = xr[:, :BD]
    res = xr[:, BD:]

    # ---- depthwise causal conv1d: sublane rolls + masks (no shift matrices) ----
    # (correct for L multiple of 8; re-check roll/mask padding for odd L)
    t_idx = jax.lax.broadcasted_iota(jnp.int32, (L, BD), 0)
    conv = xz * cw_ref[pl.ds(D_CONV - 1, 1), :]                    # s = 0 tap
    for s in range(1, D_CONV):
        shifted = pltpu.roll(xz, shift=s, axis=0)                  # shifted[t] = xz[t-s]
        shifted = jnp.where(t_idx >= s, shifted, 0.0)              # causal zero-fill
        conv = conv + shifted * cw_ref[pl.ds(D_CONV - 1 - s, 1), :]
    conv = conv + cb_ref[...]
    xs = _silu(conv)                                               # (L, BD)

    # ---- delta: single lane-dense dot (x_proj dt-columns fused with dt_proj) ----
    delta = _softplus(
        jnp.dot(xs, wdelta_ref[...], preferred_element_type=f32) + bdt_ref[...]
    )                                                              # (L, BD)

    # ---- compact B|C projection: one 128-wide lane-aligned dot ----
    bc = jnp.dot(xs, wbc_ref[...], preferred_element_type=f32)     # (L, 2*T*N)

    du = delta * xs                                                # (L, BD)

    # ---- discretized A for every timestep (vectorized, lane-dense) ----
    da_scr[...] = jnp.exp(delta[:, None, :] * at_ref[...][None, :, :])   # (L, N, BD)

    # ---- lane-dense expansion of B / C across each batch's D_INNER lanes:
    #      one small 0/1 MXU matmul per state index, full BD-wide elementwise products
    #      (replaces per-batch 16->64 lane broadcasts + strided partial stores) ----
    for n in range(D_STATE):
        slab = jnp.dot(bc, exp_ref[n], preferred_element_type=f32)  # (L, 2*BD)
        dbu_scr[:, n:n + 1, :] = (slab[:, :BD] * du)[:, None, :]
        c_scr[:, n:n + 1, :] = slab[:, BD:][:, None, :]

    # ---- selective scan: state carried in registers, C contraction fused per step,
    #      no per-step state writeback, bounded unroll ----
    def body(i, h):
        h = da_scr[i] * h + dbu_scr[i]                             # (N, BD)
        y_scr[pl.ds(i, 1), :] = jnp.sum(c_scr[i] * h, axis=0, keepdims=True)
        return h

    jax.lax.fori_loop(0, L, body, jnp.zeros((D_STATE, BD), f32),
                      unroll=min(8, L))

    # ---- skip term, gating, out_proj, residual (all lane-dense) ----
    y = y_scr[...] + xs * dp_ref[...]
    y = y * _silu(res)
    out = jnp.dot(y, wout_ref[...], preferred_element_type=f32)    # (L, T*D_MODEL)
    o_ref[0] = out + x


def make_expand_const(T):
    """(N, 2*T*N, 2*T*D_INNER) 0/1 expander.

    For state n:  (bc @ E[n])[:, :BD]  = B[l, batch(c)*N + n]   replicated over lanes,
                  (bc @ E[n])[:, BD:]  = C[l, batch(c)*N + n]   replicated over lanes.
    """
    f32 = jnp.float32
    N, Di = D_STATE, D_INNER
    G, BD = T * N, T * Di
    lane_b = jnp.arange(BD) // Di                                   # batch of each lane
    rows = lane_b[None, :] * N + jnp.arange(N)[:, None]             # (N, BD)
    E = (rows[:, None, :] == jnp.arange(G)[None, :, None]).astype(f32)   # (N, G, BD)
    Z = jnp.zeros_like(E)
    top = jnp.concatenate([E, Z], axis=2)                           # B rows -> B lanes
    bot = jnp.concatenate([Z, E], axis=2)                           # C rows -> C lanes
    return jnp.concatenate([top, bot], axis=1)                      # (N, 2G, 2BD)


def fold_params(p, T):
    """Build lane-folded / block-diagonal parameters for a batch tile of size T."""
    f32 = jnp.float32
    eye = jnp.eye(T, dtype=f32)

    def bdiag(w):
        return jnp.kron(eye, w)                                     # block-diag replicate

    Di, R, N = D_INNER, DT_RANK, D_STATE
    w_in = p["w_in"]
    w_in_f = jnp.concatenate([bdiag(w_in[:, :Di]), bdiag(w_in[:, Di:])], axis=1)
    w_x = p["w_x"]
    w_bc_f = jnp.concatenate([bdiag(w_x[:, R:R + N]), bdiag(w_x[:, R + N:])], axis=1)
    # fuse the low-rank dt path: xs @ (w_x_dt @ w_dt)  ==  (xs @ w_x_dt) @ w_dt
    w_delta_f = bdiag(w_x[:, :R] @ p["w_dt"])

    return dict(
        mavg=bdiag(jnp.full((D_MODEL, D_MODEL), 1.0 / D_MODEL, f32)),
        nw=jnp.tile(p["nw"], (1, T)),
        w_in=w_in_f,
        cw=jnp.tile(p["cw"], (1, T)),
        cb=jnp.tile(p["cb"], (1, T)),
        w_bc=w_bc_f,
        w_delta=w_delta_f,
        b_dt=jnp.tile(p["b_dt"], (1, T)),
        a_t=jnp.tile(p["a_t"], (1, T)),
        Dp=jnp.tile(p["Dp"], (1, T)),
        w_out=bdiag(p["w_out"]),
        expand=make_expand_const(T),
    )


def residual_block(x, params, block_batch=4):
    b, L, d = x.shape
    assert d == D_MODEL
    T = block_batch
    # pad batch to a multiple of T so the lane-dense (T*d = 128-wide) fast path is kept
    pad = (-b) % T
    x_p = jnp.concatenate([x, jnp.zeros((pad, L, d), x.dtype)], axis=0) if pad else x
    bp = b + pad
    nt = bp // T

    fp = fold_params(params, T)
    # fold batch into the lane dimension: (bp, L, d) -> (nt, L, T*d)
    xf = x_p.reshape(nt, T, L, d).transpose(0, 2, 1, 3).reshape(nt, L, T * d)

    plist = [fp["mavg"], fp["nw"], fp["w_in"], fp["cw"], fp["cb"], fp["w_bc"],
             fp["w_delta"], fp["b_dt"], fp["a_t"], fp["Dp"], fp["w_out"], fp["expand"]]

    def _full_spec(p):
        nd = p.ndim
        return pl.BlockSpec(p.shape, lambda i, nd=nd: (0,) * nd)

    in_specs = [pl.BlockSpec((1, L, T * d), lambda i: (i, 0, 0))] + [
        _full_spec(p) for p in plist
    ]
    out_specs = pl.BlockSpec((1, L, T * d), lambda i: (i, 0, 0))

    scratch_shapes = [
        pltpu.VMEM((L, D_STATE, T * D_INNER), jnp.float32),   # exp(delta*A)
        pltpu.VMEM((L, D_STATE, T * D_INNER), jnp.float32),   # delta*B*u (expanded)
        pltpu.VMEM((L, D_STATE, T * D_INNER), jnp.float32),   # C (expanded)
        pltpu.VMEM((L, T * D_INNER), jnp.float32),            # scan outputs
    ]

    outf = pl.pallas_call(
        residual_block_kernel,
        out_shape=jax.ShapeDtypeStruct((nt, L, T * d), jnp.float32),
        grid_spec=pltpu.PrefetchScalarGridSpec(
            num_scalar_prefetch=0,
            grid=(nt,),
            in_specs=in_specs,
            out_specs=out_specs,
            scratch_shapes=scratch_shapes,
        ),
        compiler_params=pltpu.CompilerParams(
            dimension_semantics=("parallel",),        # batch tiles are independent
            vmem_limit_bytes=32 * 1024 * 1024,
        ),
    )(xf, *plist)

    # unfold lanes back to (b, L, d); drop batch padding
    out = outf.reshape(nt, L, T, d).transpose(0, 2, 1, 3).reshape(bp, L, d)
    return out[:b]


def make_params(key):
    ks = jax.random.split(key, 8)
    f32 = jnp.float32

    nw = (1.0 + 0.1 * jax.random.normal(ks[0], (1, D_MODEL))).astype(f32)
    w_in = (jax.random.normal(ks[1], (D_MODEL, 2 * D_INNER)) / jnp.sqrt(D_MODEL)).astype(f32)
    cw = (0.5 * jax.random.normal(ks[2], (D_CONV, D_INNER)) / jnp.sqrt(D_CONV)).astype(f32)
    cb = (0.1 * jax.random.normal(ks[3], (1, D_INNER))).astype(f32)
    w_x = (jax.random.normal(ks[4], (D_INNER, DT_RANK + 2 * D_STATE)) / jnp.sqrt(D_INNER)).astype(f32)
    w_dt = (jax.random.normal(ks[5], (DT_RANK, D_INNER)) / jnp.sqrt(DT_RANK)).astype(f32)
    b_dt = (0.1 * jax.random.normal(ks[6], (1, D_INNER))).astype(f32)
    w_out = (jax.random.normal(ks[7], (D_INNER, D_MODEL)) / jnp.sqrt(D_INNER)).astype(f32)

    # A_log = log(repeat(arange(1, n+1), 'n -> d n'));  A = -exp(A_log)
    A = -jnp.broadcast_to(jnp.arange(1, D_STATE + 1, dtype=f32), (D_INNER, D_STATE))
    a_t = A.T                                              # (N, D_INNER)
    Dp = jnp.ones((1, D_INNER), f32)

    return dict(nw=nw, w_in=w_in, cw=cw, cb=cb, w_x=w_x, w_dt=w_dt,
                b_dt=b_dt, a_t=a_t, Dp=Dp, w_out=w_out)


def ref_forward(x, p):
    """Plain-JAX reference mirroring the PyTorch ResidualBlock forward."""
    hi = jax.lax.Precision.HIGHEST
    b, L, d = x.shape
    xn = x * jax.lax.rsqrt(jnp.mean(x * x, -1, keepdims=True) + EPS) * p["nw"][0]
    xr = jnp.einsum("bld,de->ble", xn, p["w_in"], precision=hi)
    xz, res = xr[..., :D_INNER], xr[..., D_INNER:]
    pad = jnp.pad(xz, ((0, 0), (D_CONV - 1, 0), (0, 0)))
    conv = sum(p["cw"][k][None, None, :] * pad[:, k:k + L, :] for k in range(D_CONV))
    conv = conv + p["cb"][0]
    xs = conv * (1.0 / (1.0 + jnp.exp(-conv)))
    x_dbl = jnp.einsum("bld,de->ble", xs, p["w_x"], precision=hi)
    dr = x_dbl[..., :DT_RANK]
    Bm = x_dbl[..., DT_RANK:DT_RANK + D_STATE]
    Cm = x_dbl[..., DT_RANK + D_STATE:]
    delta = _softplus(jnp.einsum("blr,re->ble", dr, p["w_dt"], precision=hi) + p["b_dt"][0])
    A = p["a_t"].T                                          # (D_INNER, N), negative
    dA = jnp.exp(jnp.einsum("bld,dn->bldn", delta, A, precision=hi))
    dBu = jnp.einsum("bld,bln,bld->bldn", delta, Bm, xs, precision=hi)
    st = jnp.zeros((b, D_INNER, D_STATE), jnp.float32)
    ys = []
    for i in range(L):
        st = dA[:, i] * st + dBu[:, i]
        ys.append(jnp.einsum("bdn,bn->bd", st, Cm[:, i], precision=hi))
    y = jnp.stack(ys, axis=1)
    y = y + xs * p["Dp"][0]
    y = y * (res * (1.0 / (1.0 + jnp.exp(-res))))
    return jnp.einsum("bld,de->ble", y, p["w_out"], precision=hi) + x


if __name__ == "__main__":
    B, L = 2, 8
    key = jax.random.PRNGKey(0)
    kx, kp = jax.random.split(key)
    x = jax.random.normal(kx, (B, L, D_MODEL), dtype=jnp.float32)
    params = make_params(kp)

    out = residual_block(x, params)
    out = jax.block_until_ready(out)

    ref = ref_forward(x, params)
    assert out.shape == (B, L, D_MODEL)
    assert jnp.allclose(out, ref, atol=1e-3, rtol=1e-3), (
        f"max abs diff = {float(jnp.max(jnp.abs(out - ref)))}"
    )
    print("KERNEL_OK")
</pallas_src>

<mosaic_0001>
module attributes {stable_mosaic.version = 11 : i64} {
  func.func @residual_block_kernel(%arg0: i32, %arg1: memref<1x8x128xf32, #tpu.memory_space<vmem>>, %arg2: memref<128x128xf32, #tpu.memory_space<vmem>>, %arg3: memref<1x128xf32, #tpu.memory_space<vmem>>, %arg4: memref<128x512xf32, #tpu.memory_space<vmem>>, %arg5: memref<4x256xf32, #tpu.memory_space<vmem>>, %arg6: memref<1x256xf32, #tpu.memory_space<vmem>>, %arg7: memref<256x128xf32, #tpu.memory_space<vmem>>, %arg8: memref<256x256xf32, #tpu.memory_space<vmem>>, %arg9: memref<1x256xf32, #tpu.memory_space<vmem>>, %arg10: memref<16x256xf32, #tpu.memory_space<vmem>>, %arg11: memref<1x256xf32, #tpu.memory_space<vmem>>, %arg12: memref<256x128xf32, #tpu.memory_space<vmem>>, %arg13: memref<16x128x512xf32, #tpu.memory_space<vmem>>, %arg14: memref<1x8x128xf32, #tpu.memory_space<vmem>>, %arg15: memref<8x16x256xf32, #tpu.memory_space<vmem>>, %arg16: memref<8x16x256xf32, #tpu.memory_space<vmem>>, %arg17: memref<8x16x256xf32, #tpu.memory_space<vmem>>, %arg18: memref<8x256xf32, #tpu.memory_space<vmem>>) attributes {dimension_semantics = [#tpu.dimension_semantics<parallel>], iteration_bounds = array<i64: 1>, scalar_prefetch = 0 : i64, scratch_operands = 4 : i64, tpu.core_type = #tpu.core_type<tc>, window_params = [{transform_indices = @transform_0, window_bounds = array<i64: 1, 8, 128>}, {pipeline_mode = #tpu.pipeline_mode<synchronous>, transform_indices = @transform_1, window_bounds = array<i64: 128, 128>}, {pipeline_mode = #tpu.pipeline_mode<synchronous>, transform_indices = @transform_2, window_bounds = array<i64: 1, 128>}, {pipeline_mode = #tpu.pipeline_mode<synchronous>, transform_indices = @transform_3, window_bounds = array<i64: 128, 512>}, {pipeline_mode = #tpu.pipeline_mode<synchronous>, transform_indices = @transform_4, window_bounds = array<i64: 4, 256>}, {pipeline_mode = #tpu.pipeline_mode<synchronous>, transform_indices = @transform_5, window_bounds = array<i64: 1, 256>}, {pipeline_mode = #tpu.pipeline_mode<synchronous>, transform_indices = @transform_6, window_bounds = array<i64: 256, 128>}, {pipeline_mode = #tpu.pipeline_mode<synchronous>, transform_indices = @transform_7, window_bounds = array<i64: 256, 256>}, {pipeline_mode = #tpu.pipeline_mode<synchronous>, transform_indices = @transform_8, window_bounds = array<i64: 1, 256>}, {pipeline_mode = #tpu.pipeline_mode<synchronous>, transform_indices = @transform_9, window_bounds = array<i64: 16, 256>}, {pipeline_mode = #tpu.pipeline_mode<synchronous>, transform_indices = @transform_10, window_bounds = array<i64: 1, 256>}, {pipeline_mode = #tpu.pipeline_mode<synchronous>, transform_indices = @transform_11, window_bounds = array<i64: 256, 128>}, {pipeline_mode = #tpu.pipeline_mode<synchronous>, transform_indices = @transform_12, window_bounds = array<i64: 16, 128, 512>}, {transform_indices = @transform_13, window_bounds = array<i64: 1, 8, 128>}]} {
    %c0 = arith.constant 0 : index
    %c0_0 = arith.constant 0 : index
    %c0_1 = arith.constant 0 : index
    %0 = vector.load %arg1[%c0, %c0_0, %c0_1] : memref<1x8x128xf32, #tpu.memory_space<vmem>>, vector<1x8x128xf32>
    %1 = vector.shape_cast %0 : vector<1x8x128xf32> to vector<8x128xf32>
    %2 = arith.mulf %1, %1 : vector<8x128xf32>
    %c0_2 = arith.constant 0 : index
    %c0_3 = arith.constant 0 : index
    %3 = vector.load %arg2[%c0_2, %c0_3] : memref<128x128xf32, #tpu.memory_space<vmem>>, vector<128x128xf32>
    %cst = arith.constant dense<0.000000e+00> : vector<8x128xf32>
    %4 = tpu.matmul %2, %3, %cst {dimension_numbers = #tpu.dot_dimension_numbers<[1], [0], [0], [1], [0, 0, 1, 1], [], []>} : vector<8x128xf32>, vector<128x128xf32>, vector<8x128xf32> -> vector<8x128xf32>
    %cst_4 = arith.constant 9.99999974E-6 : f32
    %5 = vector.broadcast %cst_4 : f32 to vector<8x128xf32>
    %6 = arith.addf %4, %5 : vector<8x128xf32>
    %7 = math.rsqrt %6 : vector<8x128xf32>
    %8 = arith.mulf %1, %7 : vector<8x128xf32>
    %c0_5 = arith.constant 0 : index
    %c0_6 = arith.constant 0 : index
    %9 = vector.load %arg3[%c0_5, %c0_6] : memref<1x128xf32, #tpu.memory_space<vmem>>, vector<1x128xf32>
    %10 = vector.broadcast %9 : vector<1x128xf32> to vector<8x128xf32>
    %11 = arith.mulf %8, %10 : vector<8x128xf32>
    %c0_7 = arith.constant 0 : index
    %c0_8 = arith.constant 0 : index
    %12 = vector.load %arg4[%c0_7, %c0_8] : memref<128x512xf32, #tpu.memory_space<vmem>>, vector<128x512xf32>
    %cst_9 = arith.constant dense<0.000000e+00> : vector<8x512xf32>
    %13 = tpu.matmul %11, %12, %cst_9 {dimension_numbers = #tpu.dot_dimension_numbers<[1], [0], [0], [1], [0, 0, 1, 1], [], []>} : vector<8x128xf32>, vector<128x512xf32>, vector<8x512xf32> -> vector<8x512xf32>
    %14 = vector.extract_strided_slice %13 {offsets = [0, 0], sizes = [8, 256], strides = [1, 1]} : vector<8x512xf32> to vector<8x256xf32>
    %15 = vector.extract_strided_slice %13 {offsets = [0, 256], sizes = [8, 256], strides = [1, 1]} : vector<8x512xf32> to vector<8x256xf32>
    %16 = tpu.iota {dimensions = array<i32: 0>} : vector<8x256xi32>
    %c3 = arith.constant 3 : index
    %c0_10 = arith.constant 0 : index
    %17 = vector.load %arg5[%c3, %c0_10] : memref<4x256xf32, #tpu.memory_space<vmem>>, vector<1x256xf32>
    %18 = vector.broadcast %17 : vector<1x256xf32> to vector<8x256xf32>
    %19 = arith.mulf %14, %18 : vector<8x256xf32>
    %c1_i32 = arith.constant 1 : i32
    %20 = tpu.dynamic_rotate %14 by %c1_i32 dim 0 : vector<8x256xf32>, i32 -> vector<8x256xf32>
    %c1_i32_11 = arith.constant 1 : i32
    %21 = vector.broadcast %c1_i32_11 : i32 to vector<8x256xi32>
    %22 = arith.cmpi sge, %16, %21 : vector<8x256xi32>
    %cst_12 = arith.constant 0.000000e+00 : f32
    %23 = vector.broadcast %cst_12 : f32 to vector<8x256xf32>
    %24 = arith.select %22, %20, %23 : vector<8x256xi1>, vector<8x256xf32>
    %c2 = arith.constant 2 : index
    %c0_13 = arith.constant 0 : index
    %25 = vector.load %arg5[%c2, %c0_13] : memref<4x256xf32, #tpu.memory_space<vmem>>, vector<1x256xf32>
    %26 = vector.broadcast %25 : vector<1x256xf32> to vector<8x256xf32>
    %27 = arith.mulf %24, %26 : vector<8x256xf32>
    %28 = arith.addf %19, %27 : vector<8x256xf32>
    %c2_i32 = arith.constant 2 : i32
    %29 = tpu.dynamic_rotate %14 by %c2_i32 dim 0 : vector<8x256xf32>, i32 -> vector<8x256xf32>
    %c2_i32_14 = arith.constant 2 : i32
    %30 = vector.broadcast %c2_i32_14 : i32 to vector<8x256xi32>
    %31 = arith.cmpi sge, %16, %30 : vector<8x256xi32>
    %cst_15 = arith.constant 0.000000e+00 : f32
    %32 = vector.broadcast %cst_15 : f32 to vector<8x256xf32>
    %33 = arith.select %31, %29, %32 : vector<8x256xi1>, vector<8x256xf32>
    %c1 = arith.constant 1 : index
    %c0_16 = arith.constant 0 : index
    %34 = vector.load %arg5[%c1, %c0_16] : memref<4x256xf32, #tpu.memory_space<vmem>>, vector<1x256xf32>
    %35 = vector.broadcast %34 : vector<1x256xf32> to vector<8x256xf32>
    %36 = arith.mulf %33, %35 : vector<8x256xf32>
    %37 = arith.addf %28, %36 : vector<8x256xf32>
    %c3_i32 = arith.constant 3 : i32
    %38 = tpu.dynamic_rotate %14 by %c3_i32 dim 0 : vector<8x256xf32>, i32 -> vector<8x256xf32>
    %c3_i32_17 = arith.constant 3 : i32
    %39 = vector.broadcast %c3_i32_17 : i32 to vector<8x256xi32>
    %40 = arith.cmpi sge, %16, %39 : vector<8x256xi32>
    %cst_18 = arith.constant 0.000000e+00 : f32
    %41 = vector.broadcast %cst_18 : f32 to vector<8x256xf32>
    %42 = arith.select %40, %38, %41 : vector<8x256xi1>, vector<8x256xf32>
    %c0_19 = arith.constant 0 : index
    %c0_20 = arith.constant 0 : index
    %43 = vector.load %arg5[%c0_19, %c0_20] : memref<4x256xf32, #tpu.memory_space<vmem>>, vector<1x256xf32>
    %44 = vector.broadcast %43 : vector<1x256xf32> to vector<8x256xf32>
    %45 = arith.mulf %42, %44 : vector<8x256xf32>
    %46 = arith.addf %37, %45 : vector<8x256xf32>
    %c0_21 = arith.constant 0 : index
    %c0_22 = arith.constant 0 : index
    %47 = vector.load %arg6[%c0_21, %c0_22] : memref<1x256xf32, #tpu.memory_space<vmem>>, vector<1x256xf32>
    %48 = vector.broadcast %47 : vector<1x256xf32> to vector<8x256xf32>
    %49 = arith.addf %46, %48 : vector<8x256xf32>
    %50 = arith.negf %49 : vector<8x256xf32>
    %51 = math.exp %50 : vector<8x256xf32>
    %cst_23 = arith.constant 1.000000e+00 : f32
    %52 = vector.broadcast %cst_23 : f32 to vector<8x256xf32>
    %53 = arith.addf %52, %51 : vector<8x256xf32>
    %54 = arith.divf %52, %53 : vector<8x256xf32>
    %55 = arith.mulf %49, %54 : vector<8x256xf32>
    %c0_24 = arith.constant 0 : index
    %c0_25 = arith.constant 0 : index
    %56 = vector.load %arg8[%c0_24, %c0_25] : memref<256x256xf32, #tpu.memory_space<vmem>>, vector<256x256xf32>
    %cst_26 = arith.constant dense<0.000000e+00> : vector<8x256xf32>
    %57 = tpu.matmul %55, %56, %cst_26 {dimension_numbers = #tpu.dot_dimension_numbers<[1], [0], [0], [1], [0, 0, 1, 1], [], []>} : vector<8x256xf32>, vector<256x256xf32>, vector<8x256xf32> -> vector<8x256xf32>
    %c0_27 = arith.constant 0 : index
    %c0_28 = arith.constant 0 : index
    %58 = vector.load %arg9[%c0_27, %c0_28] : memref<1x256xf32, #tpu.memory_space<vmem>>, vector<1x256xf32>
    %59 = vector.broadcast %58 : vector<1x256xf32> to vector<8x256xf32>
    %60 = arith.addf %57, %59 : vector<8x256xf32>
    %cst_29 = arith.constant 2.000000e+01 : f32
    %61 = vector.broadcast %cst_29 : f32 to vector<8x256xf32>
    %62 = arith.cmpf ogt, %60, %61 : vector<8x256xf32>
    %cst_30 = arith.constant 2.000000e+01 : f32
    %63 = vector.broadcast %cst_30 : f32 to vector<8x256xf32>
    %64 = arith.minimumf %60, %63 : vector<8x256xf32>
    %65 = math.exp %64 : vector<8x256xf32>
    %66 = math.log1p %65 : vector<8x256xf32>
    %67 = arith.select %62, %60, %66 : vector<8x256xi1>, vector<8x256xf32>
    %c0_31 = arith.constant 0 : index
    %c0_32 = arith.constant 0 : index
    %68 = vector.load %arg7[%c0_31, %c0_32] : memref<256x128xf32, #tpu.memory_space<vmem>>, vector<256x128xf32>
    %cst_33 = arith.constant dense<0.000000e+00> : vector<8x128xf32>
    %69 = tpu.matmul %55, %68, %cst_33 {dimension_numbers = #tpu.dot_dimension_numbers<[1], [0], [0], [1], [0, 0, 1, 1], [], []>} : vector<8x256xf32>, vector<256x128xf32>, vector<8x128xf32> -> vector<8x128xf32>
    %70 = arith.mulf %67, %55 : vector<8x256xf32>
    %71 = vector.shape_cast %67 : vector<8x256xf32> to vector<8x1x256xf32>
    %c0_34 = arith.constant 0 : index
    %c0_35 = arith.constant 0 : index
    %72 = vector.load %arg10[%c0_34, %c0_35] : memref<16x256xf32, #tpu.memory_space<vmem>>, vector<16x256xf32>
    %73 = vector.shape_cast %72 : vector<16x256xf32> to vector<1x16x256xf32>
    %74 = vector.broadcast %71 : vector<8x1x256xf32> to vector<8x16x256xf32>
    %75 = vector.broadcast %73 : vector<1x16x256xf32> to vector<8x16x256xf32>
    %76 = arith.mulf %74, %75 : vector<8x16x256xf32>
    %77 = math.exp %76 : vector<8x16x256xf32>
    %c0_36 = arith.constant 0 : index
    %c0_37 = arith.constant 0 : index
    %c0_38 = arith.constant 0 : index
    %78 = vector.load %arg15[%c0_36, %c0_37, %c0_38] : memref<8x16x256xf32, #tpu.memory_space<vmem>>, vector<8x16x256xf32>
    tpu.vector_store %arg15[%c0_36, %c0_37, %c0_38], %77 {strides = array<i32>} : memref<8x16x256xf32, #tpu.memory_space<vmem>>, vector<8x16x256xf32>,
    %c0_39 = arith.constant 0 : index
    %c0_40 = arith.constant 0 : index
    %c0_41 = arith.constant 0 : index
    %79 = vector.load %arg13[%c0_39, %c0_40, %c0_41] : memref<16x128x512xf32, #tpu.memory_space<vmem>>, vector<1x128x512xf32>
    %80 = vector.shape_cast %79 : vector<1x128x512xf32> to vector<128x512xf32>
    %cst_42 = arith.constant dense<0.000000e+00> : vector<8x512xf32>
    %81 = tpu.matmul %69, %80, %cst_42 {dimension_numbers = #tpu.dot_dimension_numbers<[1], [0], [0], [1], [0, 0, 1, 1], [], []>} : vector<8x128xf32>, vector<128x512xf32>, vector<8x512xf32> -> vector<8x512xf32>
    %82 = vector.extract_strided_slice %81 {offsets = [0, 0], sizes = [8, 256], strides = [1, 1]} : vector<8x512xf32> to vector<8x256xf32>
    %83 = arith.mulf %82, %70 : vector<8x256xf32>
    %84 = vector.shape_cast %83 : vector<8x256xf32> to vector<8x1x256xf32>
    %c0_43 = arith.constant 0 : index
    %c0_44 = arith.constant 0 : index
    %c0_45 = arith.constant 0 : index
    %85 = vector.load %arg16[%c0_43, %c0_44, %c0_45] : memref<8x16x256xf32, #tpu.memory_space<vmem>>, vector<8x1x256xf32>
    tpu.vector_store %arg16[%c0_43, %c0_44, %c0_45], %84 {strides = array<i32>} : memref<8x16x256xf32, #tpu.memory_space<vmem>>, vector<8x1x256xf32>,
    %86 = vector.extract_strided_slice %81 {offsets = [0, 256], sizes = [8, 256], strides = [1, 1]} : vector<8x512xf32> to vector<8x256xf32>
    %87 = vector.shape_cast %86 : vector<8x256xf32> to vector<8x1x256xf32>
    %c0_46 = arith.constant 0 : index
    %c0_47 = arith.constant 0 : index
    %c0_48 = arith.constant 0 : index
    %88 = vector.load %arg17[%c0_46, %c0_47, %c0_48] : memref<8x16x256xf32, #tpu.memory_space<vmem>>, vector<8x1x256xf32>
    tpu.vector_store %arg17[%c0_46, %c0_47, %c0_48], %87 {strides = array<i32>} : memref<8x16x256xf32, #tpu.memory_space<vmem>>, vector<8x1x256xf32>,
    %c1_49 = arith.constant 1 : index
    %c0_50 = arith.constant 0 : index
    %c0_51 = arith.constant 0 : index
    %89 = vector.load %arg13[%c1_49, %c0_50, %c0_51] : memref<16x128x512xf32, #tpu.memory_space<vmem>>, vector<1x128x512xf32>
    %90 = vector.shape_cast %89 : vector<1x128x512xf32> to vector<128x512xf32>
    %cst_52 = arith.constant dense<0.000000e+00> : vector<8x512xf32>
    %91 = tpu.matmul %69, %90, %cst_52 {dimension_numbers = #tpu.dot_dimension_numbers<[1], [0], [0], [1], [0, 0, 1, 1], [], []>} : vector<8x128xf32>, vector<128x512xf32>, vector<8x512xf32> -> vector<8x512xf32>
    %92 = vector.extract_strided_slice %91 {offsets = [0, 0], sizes = [8, 256], strides = [1, 1]} : vector<8x512xf32> to vector<8x256xf32>
    %93 = arith.mulf %92, %70 : vector<8x256xf32>
    %94 = vector.shape_cast %93 : vector<8x256xf32> to vector<8x1x256xf32>
    %c0_53 = arith.constant 0 : index
    %c1_54 = arith.constant 1 : index
    %c0_55 = arith.constant 0 : index
    %95 = vector.load %arg16[%c0_53, %c1_54, %c0_55] : memref<8x16x256xf32, #tpu.memory_space<vmem>>, vector<8x1x256xf32>
    tpu.vector_store %arg16[%c0_53, %c1_54, %c0_55], %94 {strides = array<i32>} : memref<8x16x256xf32, #tpu.memory_space<vmem>>, vector<8x1x256xf32>,
    %96 = vector.extract_strided_slice %91 {offsets = [0, 256], sizes = [8, 256], strides = [1, 1]} : vector<8x512xf32> to vector<8x256xf32>
    %97 = vector.shape_cast %96 : vector<8x256xf32> to vector<8x1x256xf32>
    %c0_56 = arith.constant 0 : index
    %c1_57 = arith.constant 1 : index
    %c0_58 = arith.constant 0 : index
    %98 = vector.load %arg17[%c0_56, %c1_57, %c0_58] : memref<8x16x256xf32, #tpu.memory_space<vmem>>, vector<8x1x256xf32>
    tpu.vector_store %arg17[%c0_56, %c1_57, %c0_58], %97 {strides = array<i32>} : memref<8x16x256xf32, #tpu.memory_space<vmem>>, vector<8x1x256xf32>,
    %c2_59 = arith.constant 2 : index
    %c0_60 = arith.constant 0 : index
    %c0_61 = arith.constant 0 : index
    %99 = vector.load %arg13[%c2_59, %c0_60, %c0_61] : memref<16x128x512xf32, #tpu.memory_space<vmem>>, vector<1x128x512xf32>
    %100 = vector.shape_cast %99 : vector<1x128x512xf32> to vector<128x512xf32>
    %cst_62 = arith.constant dense<0.000000e+00> : vector<8x512xf32>
    %101 = tpu.matmul %69, %100, %cst_62 {dimension_numbers = #tpu.dot_dimension_numbers<[1], [0], [0], [1], [0, 0, 1, 1], [], []>} : vector<8x128xf32>, vector<128x512xf32>, vector<8x512xf32> -> vector<8x512xf32>
    %102 = vector.extract_strided_slice %101 {offsets = [0, 0], sizes = [8, 256], strides = [1, 1]} : vector<8x512xf32> to vector<8x256xf32>
    %103 = arith.mulf %102, %70 : vector<8x256xf32>
    %104 = vector.shape_cast %103 : vector<8x256xf32> to vector<8x1x256xf32>
    %c0_63 = arith.constant 0 : index
    %c2_64 = arith.constant 2 : index
    %c0_65 = arith.constant 0 : index
    %105 = vector.load %arg16[%c0_63, %c2_64, %c0_65] : memref<8x16x256xf32, #tpu.memory_space<vmem>>, vector<8x1x256xf32>
    tpu.vector_store %arg16[%c0_63, %c2_64, %c0_65], %104 {strides = array<i32>} : memref<8x16x256xf32, #tpu.memory_space<vmem>>, vector<8x1x256xf32>,
    %106 = vector.extract_strided_slice %101 {offsets = [0, 256], sizes = [8, 256], strides = [1, 1]} : vector<8x512xf32> to vector<8x256xf32>
    %107 = vector.shape_cast %106 : vector<8x256xf32> to vector<8x1x256xf32>
    %c0_66 = arith.constant 0 : index
    %c2_67 = arith.constant 2 : index
    %c0_68 = arith.constant 0 : index
    %108 = vector.load %arg17[%c0_66, %c2_67, %c0_68] : memref<8x16x256xf32, #tpu.memory_space<vmem>>, vector<8x1x256xf32>
    tpu.vector_store %arg17[%c0_66, %c2_67, %c0_68], %107 {strides = array<i32>} : memref<8x16x256xf32, #tpu.memory_space<vmem>>, vector<8x1x256xf32>,
    %c3_69 = arith.constant 3 : index
    %c0_70 = arith.constant 0 : index
    %c0_71 = arith.constant 0 : index
    %109 = vector.load %arg13[%c3_69, %c0_70, %c0_71] : memref<16x128x512xf32, #tpu.memory_space<vmem>>, vector<1x128x512xf32>
    %110 = vector.shape_cast %109 : vector<1x128x512xf32> to vector<128x512xf32>
    %cst_72 = arith.constant dense<0.000000e+00> : vector<8x512xf32>
    %111 = tpu.matmul %69, %110, %cst_72 {dimension_numbers = #tpu.dot_dimension_numbers<[1], [0], [0], [1], [0, 0, 1, 1], [], []>} : vector<8x128xf32>, vector<128x512xf32>, vector<8x512xf32> -> vector<8x512xf32>
    %112 = vector.extract_strided_slice %111 {offsets = [0, 0], sizes = [8, 256], strides = [1, 1]} : vector<8x512xf32> to vector<8x256xf32>
    %113 = arith.mulf %112, %70 : vector<8x256xf32>
    %114 = vector.shape_cast %113 : vector<8x256xf32> to vector<8x1x256xf32>
    %c0_73 = arith.constant 0 : index
    %c3_74 = arith.constant 3 : index
    %c0_75 = arith.constant 0 : index
    %115 = vector.load %arg16[%c0_73, %c3_74, %c0_75] : memref<8x16x256xf32, #tpu.memory_space<vmem>>, vector<8x1x256xf32>
    tpu.vector_store %arg16[%c0_73, %c3_74, %c0_75], %114 {strides = array<i32>} : memref<8x16x256xf32, #tpu.memory_space<vmem>>, vector<8x1x256xf32>,
    %116 = vector.extract_strided_slice %111 {offsets = [0, 256], sizes = [8, 256], strides = [1, 1]} : vector<8x512xf32> to vector<8x256xf32>
    %117 = vector.shape_cast %116 : vector<8x256xf32> to vector<8x1x256xf32>
    %c0_76 = arith.constant 0 : index
    %c3_77 = arith.constant 3 : index
    %c0_78 = arith.constant 0 : index
    %118 = vector.load %arg17[%c0_76, %c3_77, %c0_78] : memref<8x16x256xf32, #tpu.memory_space<vmem>>, vector<8x1x256xf32>
    tpu.vector_store %arg17[%c0_76, %c3_77, %c0_78], %117 {strides = array<i32>} : memref<8x16x256xf32, #tpu.memory_space<vmem>>, vector<8x1x256xf32>,
    %c4 = arith.constant 4 : index
    %c0_79 = arith.constant 0 : index
    %c0_80 = arith.constant 0 : index
    %119 = vector.load %arg13[%c4, %c0_79, %c0_80] : memref<16x128x512xf32, #tpu.memory_space<vmem>>, vector<1x128x512xf32>
    %120 = vector.shape_cast %119 : vector<1x128x512xf32> to vector<128x512xf32>
    %cst_81 = arith.constant dense<0.000000e+00> : vector<8x512xf32>
    %121 = tpu.matmul %69, %120, %cst_81 {dimension_numbers = #tpu.dot_dimension_numbers<[1], [0], [0], [1], [0, 0, 1, 1], [], []>} : vector<8x128xf32>, vector<128x512xf32>, vector<8x512xf32> -> vector<8x512xf32>
    %122 = vector.extract_strided_slice %121 {offsets = [0, 0], sizes = [8, 256], strides = [1, 1]} : vector<8x512xf32> to vector<8x256xf32>
    %123 = arith.mulf %122, %70 : vector<8x256xf32>
    %124 = vector.shape_cast %123 : vector<8x256xf32> to vector<8x1x256xf32>
    %c0_82 = arith.constant 0 : index
    %c4_83 = arith.constant 4 : index
    %c0_84 = arith.constant 0 : index
    %125 = vector.load %arg16[%c0_82, %c4_83, %c0_84] : memref<8x16x256xf32, #tpu.memory_space<vmem>>, vector<8x1x256xf32>
    tpu.vector_store %arg16[%c0_82, %c4_83, %c0_84], %124 {strides = array<i32>} : memref<8x16x256xf32, #tpu.memory_space<vmem>>, vector<8x1x256xf32>,
    %126 = vector.extract_strided_slice %121 {offsets = [0, 256], sizes = [8, 256], strides = [1, 1]} : vector<8x512xf32> to vector<8x256xf32>
    %127 = vector.shape_cast %126 : vector<8x256xf32> to vector<8x1x256xf32>
    %c0_85 = arith.constant 0 : index
    %c4_86 = arith.constant 4 : index
    %c0_87 = arith.constant 0 : index
    %128 = vector.load %arg17[%c0_85, %c4_86, %c0_87] : memref<8x16x256xf32, #tpu.memory_space<vmem>>, vector<8x1x256xf32>
    tpu.vector_store %arg17[%c0_85, %c4_86, %c0_87], %127 {strides = array<i32>} : memref<8x16x256xf32, #tpu.memory_space<vmem>>, vector<8x1x256xf32>,
    %c5 = arith.constant 5 : index
    %c0_88 = arith.constant 0 : index
    %c0_89 = arith.constant 0 : index
    %129 = vector.load %arg13[%c5, %c0_88, %c0_89] : memref<16x128x512xf32, #tpu.memory_space<vmem>>, vector<1x128x512xf32>
    %130 = vector.shape_cast %129 : vector<1x128x512xf32> to vector<128x512xf32>
    %cst_90 = arith.constant dense<0.000000e+00> : vector<8x512xf32>
    %131 = tpu.matmul %69, %130, %cst_90 {dimension_numbers = #tpu.dot_dimension_numbers<[1], [0], [0], [1], [0, 0, 1, 1], [], []>} : vector<8x128xf32>, vector<128x512xf32>, vector<8x512xf32> -> vector<8x512xf32>
    %132 = vector.extract_strided_slice %131 {offsets = [0, 0], sizes = [8, 256], strides = [1, 1]} : vector<8x512xf32> to vector<8x256xf32>
    %133 = arith.mulf %132, %70 : vector<8x256xf32>
    %134 = vector.shape_cast %133 : vector<8x256xf32> to vector<8x1x256xf32>
    %c0_91 = arith.constant 0 : index
    %c5_92 = arith.constant 5 : index
    %c0_93 = arith.constant 0 : index
    %135 = vector.load %arg16[%c0_91, %c5_92, %c0_93] : memref<8x16x256xf32, #tpu.memory_space<vmem>>, vector<8x1x256xf32>
    tpu.vector_store %arg16[%c0_91, %c5_92, %c0_93], %134 {strides = array<i32>} : memref<8x16x256xf32, #tpu.memory_space<vmem>>, vector<8x1x256xf32>,
    %136 = vector.extract_strided_slice %131 {offsets = [0, 256], sizes = [8, 256], strides = [1, 1]} : vector<8x512xf32> to vector<8x256xf32>
    %137 = vector.shape_cast %136 : vector<8x256xf32> to vector<8x1x256xf32>
    %c0_94 = arith.constant 0 : index
    %c5_95 = arith.constant 5 : index
    %c0_96 = arith.constant 0 : index
    %138 = vector.load %arg17[%c0_94, %c5_95, %c0_96] : memref<8x16x256xf32, #tpu.memory_space<vmem>>, vector<8x1x256xf32>
    tpu.vector_store %arg17[%c0_94, %c5_95, %c0_96], %137 {strides = array<i32>} : memref<8x16x256xf32, #tpu.memory_space<vmem>>, vector<8x1x256xf32>,
    %c6 = arith.constant 6 : index
    %c0_97 = arith.constant 0 : index
    %c0_98 = arith.constant 0 : index
    %139 = vector.load %arg13[%c6, %c0_97, %c0_98] : memref<16x128x512xf32, #tpu.memory_space<vmem>>, vector<1x128x512xf32>
    %140 = vector.shape_cast %139 : vector<1x128x512xf32> to vector<128x512xf32>
    %cst_99 = arith.constant dense<0.000000e+00> : vector<8x512xf32>
    %141 = tpu.matmul %69, %140, %cst_99 {dimension_numbers = #tpu.dot_dimension_numbers<[1], [0], [0], [1], [0, 0, 1, 1], [], []>} : vector<8x128xf32>, vector<128x512xf32>, vector<8x512xf32> -> vector<8x512xf32>
    %142 = vector.extract_strided_slice %141 {offsets = [0, 0], sizes = [8, 256], strides = [1, 1]} : vector<8x512xf32> to vector<8x256xf32>
    %143 = arith.mulf %142, %70 : vector<8x256xf32>
    %144 = vector.shape_cast %143 : vector<8x256xf32> to vector<8x1x256xf32>
    %c0_100 = arith.constant 0 : index
    %c6_101 = arith.constant 6 : index
    %c0_102 = arith.constant 0 : index
    %145 = vector.load %arg16[%c0_100, %c6_101, %c0_102] : memref<8x16x256xf32, #tpu.memory_space<vmem>>, vector<8x1x256xf32>
    tpu.vector_store %arg16[%c0_100, %c6_101, %c0_102], %144 {strides = array<i32>} : memref<8x16x256xf32, #tpu.memory_space<vmem>>, vector<8x1x256xf32>,
    %146 = vector.extract_strided_slice %141 {offsets = [0, 256], sizes = [8, 256], strides = [1, 1]} : vector<8x512xf32> to vector<8x256xf32>
    %147 = vector.shape_cast %146 : vector<8x256xf32> to vector<8x1x256xf32>
    %c0_103 = arith.constant 0 : index
    %c6_104 = arith.constant 6 : index
    %c0_105 = arith.constant 0 : index
    %148 = vector.load %arg17[%c0_103, %c6_104, %c0_105] : memref<8x16x256xf32, #tpu.memory_space<vmem>>, vector<8x1x256xf32>
    tpu.vector_store %arg17[%c0_103, %c6_104, %c0_105], %147 {strides = array<i32>} : memref<8x16x256xf32, #tpu.memory_space<vmem>>, vector<8x1x256xf32>,
    %c7 = arith.constant 7 : index
    %c0_106 = arith.constant 0 : index
    %c0_107 = arith.constant 0 : index
    %149 = vector.load %arg13[%c7, %c0_106, %c0_107] : memref<16x128x512xf32, #tpu.memory_space<vmem>>, vector<1x128x512xf32>
    %150 = vector.shape_cast %149 : vector<1x128x512xf32> to vector<128x512xf32>
    %cst_108 = arith.constant dense<0.000000e+00> : vector<8x512xf32>
    %151 = tpu.matmul %69, %150, %cst_108 {dimension_numbers = #tpu.dot_dimension_numbers<[1], [0], [0], [1], [0, 0, 1, 1], [], []>} : vector<8x128xf32>, vector<128x512xf32>, vector<8x512xf32> -> vector<8x512xf32>
    %152 = vector.extract_strided_slice %151 {offsets = [0, 0], sizes = [8, 256], strides = [1, 1]} : vector<8x512xf32> to vector<8x256xf32>
    %153 = arith.mulf %152, %70 : vector<8x256xf32>
    %154 = vector.shape_cast %153 : vector<8x256xf32> to vector<8x1x256xf32>
    %c0_109 = arith.constant 0 : index
    %c7_110 = arith.constant 7 : index
    %c0_111 = arith.constant 0 : index
    %155 = vector.load %arg16[%c0_109, %c7_110, %c0_111] : memref<8x16x256xf32, #tpu.memory_space<vmem>>, vector<8x1x256xf32>
    tpu.vector_store %arg16[%c0_109, %c7_110, %c0_111], %154 {strides = array<i32>} : memref<8x16x256xf32, #tpu.memory_space<vmem>>, vector<8x1x256xf32>,
    %156 = vector.extract_strided_slice %151 {offsets = [0, 256], sizes = [8, 256], strides = [1, 1]} : vector<8x512xf32> to vector<8x256xf32>
    %157 = vector.shape_cast %156 : vector<8x256xf32> to vector<8x1x256xf32>
    %c0_112 = arith.constant 0 : index
    %c7_113 = arith.constant 7 : index
    %c0_114 = arith.constant 0 : index
    %158 = vector.load %arg17[%c0_112, %c7_113, %c0_114] : memref<8x16x256xf32, #tpu.memory_space<vmem>>, vector<8x1x256xf32>
    tpu.vector_store %arg17[%c0_112, %c7_113, %c0_114], %157 {strides = array<i32>} : memref<8x16x256xf32, #tpu.memory_space<vmem>>, vector<8x1x256xf32>,
    %c8 = arith.constant 8 : index
    %c0_115 = arith.constant 0 : index
    %c0_116 = arith.constant 0 : index
    %159 = vector.load %arg13[%c8, %c0_115, %c0_116] : memref<16x128x512xf32, #tpu.memory_space<vmem>>, vector<1x128x512xf32>
    %160 = vector.shape_cast %159 : vector<1x128x512xf32> to vector<128x512xf32>
    %cst_117 = arith.constant dense<0.000000e+00> : vector<8x512xf32>
    %161 = tpu.matmul %69, %160, %cst_117 {dimension_numbers = #tpu.dot_dimension_numbers<[1], [0], [0], [1], [0, 0, 1, 1], [], []>} : vector<8x128xf32>, vector<128x512xf32>, vector<8x512xf32> -> vector<8x512xf32>
    %162 = vector.extract_strided_slice %161 {offsets = [0, 0], sizes = [8, 256], strides = [1, 1]} : vector<8x512xf32> to vector<8x256xf32>
    %163 = arith.mulf %162, %70 : vector<8x256xf32>
    %164 = vector.shape_cast %163 : vector<8x256xf32> to vector<8x1x256xf32>
    %c0_118 = arith.constant 0 : index
    %c8_119 = arith.constant 8 : index
    %c0_120 = arith.constant 0 : index
    %165 = vector.load %arg16[%c0_118, %c8_119, %c0_120] : memref<8x16x256xf32, #tpu.memory_space<vmem>>, vector<8x1x256xf32>
    tpu.vector_store %arg16[%c0_118, %c8_119, %c0_120], %164 {strides = array<i32>} : memref<8x16x256xf32, #tpu.memory_space<vmem>>, vector<8x1x256xf32>,
    %166 = vector.extract_strided_slice %161 {offsets = [0, 256], sizes = [8, 256], strides = [1, 1]} : vector<8x512xf32> to vector<8x256xf32>
    %167 = vector.shape_cast %166 : vector<8x256xf32> to vector<8x1x256xf32>
    %c0_121 = arith.constant 0 : index
    %c8_122 = arith.constant 8 : index
    %c0_123 = arith.constant 0 : index
    %168 = vector.load %arg17[%c0_121, %c8_122, %c0_123] : memref<8x16x256xf32, #tpu.memory_space<vmem>>, vector<8x1x256xf32>
    tpu.vector_store %arg17[%c0_121, %c8_122, %c0_123], %167 {strides = array<i32>} : memref<8x16x256xf32, #tpu.memory_space<vmem>>, vector<8x1x256xf32>,
    %c9 = arith.constant 9 : index
    %c0_124 = arith.constant 0 : index
    %c0_125 = arith.constant 0 : index
    %169 = vector.load %arg13[%c9, %c0_124, %c0_125] : memref<16x128x512xf32, #tpu.memory_space<vmem>>, vector<1x128x512xf32>
    %170 = vector.shape_cast %169 : vector<1x128x512xf32> to vector<128x512xf32>
    %cst_126 = arith.constant dense<0.000000e+00> : vector<8x512xf32>
    %171 = tpu.matmul %69, %170, %cst_126 {dimension_numbers = #tpu.dot_dimension_numbers<[1], [0], [0], [1], [0, 0, 1, 1], [], []>} : vector<8x128xf32>, vector<128x512xf32>, vector<8x512xf32> -> vector<8x512xf32>
    %172 = vector.extract_strided_slice %171 {offsets = [0, 0], sizes = [8, 256], strides = [1, 1]} : vector<8x512xf32> to vector<8x256xf32>
    %173 = arith.mulf %172, %70 : vector<8x256xf32>
    %174 = vector.shape_cast %173 : vector<8x256xf32> to vector<8x1x256xf32>
    %c0_127 = arith.constant 0 : index
    %c9_128 = arith.constant 9 : index
    %c0_129 = arith.constant 0 : index
    %175 = vector.load %arg16[%c0_127, %c9_128, %c0_129] : memref<8x16x256xf32, #tpu.memory_space<vmem>>, vector<8x1x256xf32>
    tpu.vector_store %arg16[%c0_127, %c9_128, %c0_129], %174 {strides = array<i32>} : memref<8x16x256xf32, #tpu.memory_space<vmem>>, vector<8x1x256xf32>,
    %176 = vector.extract_strided_slice %171 {offsets = [0, 256], sizes = [8, 256], strides = [1, 1]} : vector<8x512xf32> to vector<8x256xf32>
    %177 = vector.shape_cast %176 : vector<8x256xf32> to vector<8x1x256xf32>
    %c0_130 = arith.constant 0 : index
    %c9_131 = arith.constant 9 : index
    %c0_132 = arith.constant 0 : index
    %178 = vector.load %arg17[%c0_130, %c9_131, %c0_132] : memref<8x16x256xf32, #tpu.memory_space<vmem>>, vector<8x1x256xf32>
    tpu.vector_store %arg17[%c0_130, %c9_131, %c0_132], %177 {strides = array<i32>} : memref<8x16x256xf32, #tpu.memory_space<vmem>>, vector<8x1x256xf32>,
    %c10 = arith.constant 10 : index
    %c0_133 = arith.constant 0 : index
    %c0_134 = arith.constant 0 : index
    %179 = vector.load %arg13[%c10, %c0_133, %c0_134] : memref<16x128x512xf32, #tpu.memory_space<vmem>>, vector<1x128x512xf32>
    %180 = vector.shape_cast %179 : vector<1x128x512xf32> to vector<128x512xf32>
    %cst_135 = arith.constant dense<0.000000e+00> : vector<8x512xf32>
    %181 = tpu.matmul %69, %180, %cst_135 {dimension_numbers = #tpu.dot_dimension_numbers<[1], [0], [0], [1], [0, 0, 1, 1], [], []>} : vector<8x128xf32>, vector<128x512xf32>, vector<8x512xf32> -> vector<8x512xf32>
    %182 = vector.extract_strided_slice %181 {offsets = [0, 0], sizes = [8, 256], strides = [1, 1]} : vector<8x512xf32> to vector<8x256xf32>
    %183 = arith.mulf %182, %70 : vector<8x256xf32>
    %184 = vector.shape_cast %183 : vector<8x256xf32> to vector<8x1x256xf32>
    %c0_136 = arith.constant 0 : index
    %c10_137 = arith.constant 10 : index
    %c0_138 = arith.constant 0 : index
    %185 = vector.load %arg16[%c0_136, %c10_137, %c0_138] : memref<8x16x256xf32, #tpu.memory_space<vmem>>, vector<8x1x256xf32>
    tpu.vector_store %arg16[%c0_136, %c10_137, %c0_138], %184 {strides = array<i32>} : memref<8x16x256xf32, #tpu.memory_space<vmem>>, vector<8x1x256xf32>,
    %186 = vector.extract_strided_slice %181 {offsets = [0, 256], sizes = [8, 256], strides = [1, 1]} : vector<8x512xf32> to vector<8x256xf32>
    %187 = vector.shape_cast %186 : vector<8x256xf32> to vector<8x1x256xf32>
    %c0_139 = arith.constant 0 : index
    %c10_140 = arith.constant 10 : index
    %c0_141 = arith.constant 0 : index
    %188 = vector.load %arg17[%c0_139, %c10_140, %c0_141] : memref<8x16x256xf32, #tpu.memory_space<vmem>>, vector<8x1x256xf32>
    tpu.vector_store %arg17[%c0_139, %c10_140, %c0_141], %187 {strides = array<i32>} : memref<8x16x256xf32, #tpu.memory_space<vmem>>, vector<8x1x256xf32>,
    %c11 = arith.constant 11 : index
    %c0_142 = arith.constant 0 : index
    %c0_143 = arith.constant 0 : index
    %189 = vector.load %arg13[%c11, %c0_142, %c0_143] : memref<16x128x512xf32, #tpu.memory_space<vmem>>, vector<1x128x512xf32>
    %190 = vector.shape_cast %189 : vector<1x128x512xf32> to vector<128x512xf32>
    %cst_144 = arith.constant dense<0.000000e+00> : vector<8x512xf32>
    %191 = tpu.matmul %69, %190, %cst_144 {dimension_numbers = #tpu.dot_dimension_numbers<[1], [0], [0], [1], [0, 0, 1, 1], [], []>} : vector<8x128xf32>, vector<128x512xf32>, vector<8x512xf32> -> vector<8x512xf32>
    %192 = vector.extract_strided_slice %191 {offsets = [0, 0], sizes = [8, 256], strides = [1, 1]} : vector<8x512xf32> to vector<8x256xf32>
    %193 = arith.mulf %192, %70 : vector<8x256xf32>
    %194 = vector.shape_cast %193 : vector<8x256xf32> to vector<8x1x256xf32>
    %c0_145 = arith.constant 0 : index
    %c11_146 = arith.constant 11 : index
    %c0_147 = arith.constant 0 : index
    %195 = vector.load %arg16[%c0_145, %c11_146, %c0_147] : memref<8x16x256xf32, #tpu.memory_space<vmem>>, vector<8x1x256xf32>
    tpu.vector_store %arg16[%c0_145, %c11_146, %c0_147], %194 {strides = array<i32>} : memref<8x16x256xf32, #tpu.memory_space<vmem>>, vector<8x1x256xf32>,
    %196 = vector.extract_strided_slice %191 {offsets = [0, 256], sizes = [8, 256], strides = [1, 1]} : vector<8x512xf32> to vector<8x256xf32>
    %197 = vector.shape_cast %196 : vector<8x256xf32> to vector<8x1x256xf32>
    %c0_148 = arith.constant 0 : index
    %c11_149 = arith.constant 11 : index
    %c0_150 = arith.constant 0 : index
    %198 = vector.load %arg17[%c0_148, %c11_149, %c0_150] : memref<8x16x256xf32, #tpu.memory_space<vmem>>, vector<8x1x256xf32>
    tpu.vector_store %arg17[%c0_148, %c11_149, %c0_150], %197 {strides = array<i32>} : memref<8x16x256xf32, #tpu.memory_space<vmem>>, vector<8x1x256xf32>,
    %c12 = arith.constant 12 : index
    %c0_151 = arith.constant 0 : index
    %c0_152 = arith.constant 0 : index
    %199 = vector.load %arg13[%c12, %c0_151, %c0_152] : memref<16x128x512xf32, #tpu.memory_space<vmem>>, vector<1x128x512xf32>
    %200 = vector.shape_cast %199 : vector<1x128x512xf32> to vector<128x512xf32>
    %cst_153 = arith.constant dense<0.000000e+00> : vector<8x512xf32>
    %201 = tpu.matmul %69, %200, %cst_153 {dimension_numbers = #tpu.dot_dimension_numbers<[1], [0], [0], [1], [0, 0, 1, 1], [], []>} : vector<8x128xf32>, vector<128x512xf32>, vector<8x512xf32> -> vector<8x512xf32>
    %202 = vector.extract_strided_slice %201 {offsets = [0, 0], sizes = [8, 256], strides = [1, 1]} : vector<8x512xf32> to vector<8x256xf32>
    %203 = arith.mulf %202, %70 : vector<8x256xf32>
    %204 = vector.shape_cast %203 : vector<8x256xf32> to vector<8x1x256xf32>
    %c0_154 = arith.constant 0 : index
    %c12_155 = arith.constant 12 : index
    %c0_156 = arith.constant 0 : index
    %205 = vector.load %arg16[%c0_154, %c12_155, %c0_156] : memref<8x16x256xf32, #tpu.memory_space<vmem>>, vector<8x1x256xf32>
    tpu.vector_store %arg16[%c0_154, %c12_155, %c0_156], %204 {strides = array<i32>} : memref<8x16x256xf32, #tpu.memory_space<vmem>>, vector<8x1x256xf32>,
    %206 = vector.extract_strided_slice %201 {offsets = [0, 256], sizes = [8, 256], strides = [1, 1]} : vector<8x512xf32> to vector<8x256xf32>
    %207 = vector.shape_cast %206 : vector<8x256xf32> to vector<8x1x256xf32>
    %c0_157 = arith.constant 0 : index
    %c12_158 = arith.constant 12 : index
    %c0_159 = arith.constant 0 : index
    %208 = vector.load %arg17[%c0_157, %c12_158, %c0_159] : memref<8x16x256xf32, #tpu.memory_space<vmem>>, vector<8x1x256xf32>
    tpu.vector_store %arg17[%c0_157, %c12_158, %c0_159], %207 {strides = array<i32>} : memref<8x16x256xf32, #tpu.memory_space<vmem>>, vector<8x1x256xf32>,
    %c13 = arith.constant 13 : index
    %c0_160 = arith.constant 0 : index
    %c0_161 = arith.constant 0 : index
    %209 = vector.load %arg13[%c13, %c0_160, %c0_161] : memref<16x128x512xf32, #tpu.memory_space<vmem>>, vector<1x128x512xf32>
    %210 = vector.shape_cast %209 : vector<1x128x512xf32> to vector<128x512xf32>
    %cst_162 = arith.constant dense<0.000000e+00> : vector<8x512xf32>
    %211 = tpu.matmul %69, %210, %cst_162 {dimension_numbers = #tpu.dot_dimension_numbers<[1], [0], [0], [1], [0, 0, 1, 1], [], []>} : vector<8x128xf32>, vector<128x512xf32>, vector<8x512xf32> -> vector<8x512xf32>
    %212 = vector.extract_strided_slice %211 {offsets = [0, 0], sizes = [8, 256], strides = [1, 1]} : vector<8x512xf32> to vector<8x256xf32>
    %213 = arith.mulf %212, %70 : vector<8x256xf32>
    %214 = vector.shape_cast %213 : vector<8x256xf32> to vector<8x1x256xf32>
    %c0_163 = arith.constant 0 : index
    %c13_164 = arith.constant 13 : index
    %c0_165 = arith.constant 0 : index
    %215 = vector.load %arg16[%c0_163, %c13_164, %c0_165] : memref<8x16x256xf32, #tpu.memory_space<vmem>>, vector<8x1x256xf32>
    tpu.vector_store %arg16[%c0_163, %c13_164, %c0_165], %214 {strides = array<i32>} : memref<8x16x256xf32, #tpu.memory_space<vmem>>, vector<8x1x256xf32>,
    %216 = vector.extract_strided_slice %211 {offsets = [0, 256], sizes = [8, 256], strides = [1, 1]} : vector<8x512xf32> to vector<8x256xf32>
    %217 = vector.shape_cast %216 : vector<8x256xf32> to vector<8x1x256xf32>
    %c0_166 = arith.constant 0 : index
    %c13_167 = arith.constant 13 : index
    %c0_168 = arith.constant 0 : index
    %218 = vector.load %arg17[%c0_166, %c13_167, %c0_168] : memref<8x16x256xf32, #tpu.memory_space<vmem>>, vector<8x1x256xf32>
    tpu.vector_store %arg17[%c0_166, %c13_167, %c0_168], %217 {strides = array<i32>} : memref<8x16x256xf32, #tpu.memory_space<vmem>>, vector<8x1x256xf32>,
    %c14 = arith.constant 14 : index
    %c0_169 = arith.constant 0 : index
    %c0_170 = arith.constant 0 : index
    %219 = vector.load %arg13[%c14, %c0_169, %c0_170] : memref<16x128x512xf32, #tpu.memory_space<vmem>>, vector<1x128x512xf32>
    %220 = vector.shape_cast %219 : vector<1x128x512xf32> to vector<128x512xf32>
    %cst_171 = arith.constant dense<0.000000e+00> : vector<8x512xf32>
    %221 = tpu.matmul %69, %220, %cst_171 {dimension_numbers = #tpu.dot_dimension_numbers<[1], [0], [0], [1], [0, 0, 1, 1], [], []>} : vector<8x128xf32>, vector<128x512xf32>, vector<8x512xf32> -> vector<8x512xf32>
    %222 = vector.extract_strided_slice %221 {offsets = [0, 0], sizes = [8, 256], strides = [1, 1]} : vector<8x512xf32> to vector<8x256xf32>
    %223 = arith.mulf %222, %70 : vector<8x256xf32>
    %224 = vector.shape_cast %223 : vector<8x256xf32> to vector<8x1x256xf32>
    %c0_172 = arith.constant 0 : index
    %c14_173 = arith.constant 14 : index
    %c0_174 = arith.constant 0 : index
    %225 = vector.load %arg16[%c0_172, %c14_173, %c0_174] : memref<8x16x256xf32, #tpu.memory_space<vmem>>, vector<8x1x256xf32>
    tpu.vector_store %arg16[%c0_172, %c14_173, %c0_174], %224 {strides = array<i32>} : memref<8x16x256xf32, #tpu.memory_space<vmem>>, vector<8x1x256xf32>,
    %226 = vector.extract_strided_slice %221 {offsets = [0, 256], sizes = [8, 256], strides = [1, 1]} : vector<8x512xf32> to vector<8x256xf32>
    %227 = vector.shape_cast %226 : vector<8x256xf32> to vector<8x1x256xf32>
    %c0_175 = arith.constant 0 : index
    %c14_176 = arith.constant 14 : index
    %c0_177 = arith.constant 0 : index
    %228 = vector.load %arg17[%c0_175, %c14_176, %c0_177] : memref<8x16x256xf32, #tpu.memory_space<vmem>>, vector<8x1x256xf32>
    tpu.vector_store %arg17[%c0_175, %c14_176, %c0_177], %227 {strides = array<i32>} : memref<8x16x256xf32, #tpu.memory_space<vmem>>, vector<8x1x256xf32>,
    %c15 = arith.constant 15 : index
    %c0_178 = arith.constant 0 : index
    %c0_179 = arith.constant 0 : index
    %229 = vector.load %arg13[%c15, %c0_178, %c0_179] : memref<16x128x512xf32, #tpu.memory_space<vmem>>, vector<1x128x512xf32>
    %230 = vector.shape_cast %229 : vector<1x128x512xf32> to vector<128x512xf32>
    %cst_180 = arith.constant dense<0.000000e+00> : vector<8x512xf32>
    %231 = tpu.matmul %69, %230, %cst_180 {dimension_numbers = #tpu.dot_dimension_numbers<[1], [0], [0], [1], [0, 0, 1, 1], [], []>} : vector<8x128xf32>, vector<128x512xf32>, vector<8x512xf32> -> vector<8x512xf32>
    %232 = vector.extract_strided_slice %231 {offsets = [0, 0], sizes = [8, 256], strides = [1, 1]} : vector<8x512xf32> to vector<8x256xf32>
    %233 = arith.mulf %232, %70 : vector<8x256xf32>
    %234 = vector.shape_cast %233 : vector<8x256xf32> to vector<8x1x256xf32>
    %c0_181 = arith.constant 0 : index
    %c15_182 = arith.constant 15 : index
    %c0_183 = arith.constant 0 : index
    %235 = vector.load %arg16[%c0_181, %c15_182, %c0_183] : memref<8x16x256xf32, #tpu.memory_space<vmem>>, vector<8x1x256xf32>
    tpu.vector_store %arg16[%c0_181, %c15_182, %c0_183], %234 {strides = array<i32>} : memref<8x16x256xf32, #tpu.memory_space<vmem>>, vector<8x1x256xf32>,
    %236 = vector.extract_strided_slice %231 {offsets = [0, 256], sizes = [8, 256], strides = [1, 1]} : vector<8x512xf32> to vector<8x256xf32>
    %237 = vector.shape_cast %236 : vector<8x256xf32> to vector<8x1x256xf32>
    %c0_184 = arith.constant 0 : index
    %c15_185 = arith.constant 15 : index
    %c0_186 = arith.constant 0 : index
    %238 = vector.load %arg17[%c0_184, %c15_185, %c0_186] : memref<8x16x256xf32, #tpu.memory_space<vmem>>, vector<8x1x256xf32>
    tpu.vector_store %arg17[%c0_184, %c15_185, %c0_186], %237 {strides = array<i32>} : memref<8x16x256xf32, #tpu.memory_space<vmem>>, vector<8x1x256xf32>,
    %cst_187 = arith.constant 0.000000e+00 : f32
    %239 = vector.broadcast %cst_187 : f32 to vector<16x256xf32>
    %c0_i32 = arith.constant 0 : i32
    %240 = arith.index_cast %c0_i32 : i32 to index
    %c0_188 = arith.constant 0 : index
    %c0_189 = arith.constant 0 : index
    %241 = vector.load %arg15[%240, %c0_188, %c0_189] : memref<8x16x256xf32, #tpu.memory_space<vmem>>, vector<1x16x256xf32>
    %242 = vector.shape_cast %241 : vector<1x16x256xf32> to vector<16x256xf32>
    %243 = arith.mulf %242, %239 : vector<16x256xf32>
    %244 = arith.index_cast %c0_i32 : i32 to index
    %c0_190 = arith.constant 0 : index
    %c0_191 = arith.constant 0 : index
    %245 = vector.load %arg16[%244, %c0_190, %c0_191] : memref<8x16x256xf32, #tpu.memory_space<vmem>>, vector<1x16x256xf32>
    %246 = vector.shape_cast %245 : vector<1x16x256xf32> to vector<16x256xf32>
    %247 = arith.addf %243, %246 : vector<16x256xf32>
    %248 = arith.index_cast %c0_i32 : i32 to index
    %c0_192 = arith.constant 0 : index
    %c0_193 = arith.constant 0 : index
    %249 = vector.load %arg17[%248, %c0_192, %c0_193] : memref<8x16x256xf32, #tpu.memory_space<vmem>>, vector<1x16x256xf32>
    %250 = vector.shape_cast %249 : vector<1x16x256xf32> to vector<16x256xf32>
    %251 = arith.mulf %250, %247 : vector<16x256xf32>
    %cst_194 = arith.constant dense<0.000000e+00> : vector<256xf32>
    %252 = vector.multi_reduction <add>, %251, %cst_194 [0] : vector<16x256xf32> to vector<256xf32>
    %253 = vector.shape_cast %252 : vector<256xf32> to vector<1x256xf32>
    %254 = arith.index_cast %c0_i32 : i32 to index
    %c0_195 = arith.constant 0 : index
    %255 = vector.load %arg18[%254, %c0_195] : memref<8x256xf32, #tpu.memory_space<vmem>>, vector<1x256xf32>
    tpu.vector_store %arg18[%254, %c0_195], %253 {strides = array<i32>} : memref<8x256xf32, #tpu.memory_space<vmem>>, vector<1x256xf32>,
    %c1_i32_196 = arith.constant 1 : i32
    %256 = arith.index_cast %c1_i32_196 : i32 to index
    %c0_197 = arith.constant 0 : index
    %c0_198 = arith.constant 0 : index
    %257 = vector.load %arg15[%256, %c0_197, %c0_198] : memref<8x16x256xf32, #tpu.memory_space<vmem>>, vector<1x16x256xf32>
    %258 = vector.shape_cast %257 : vector<1x16x256xf32> to vector<16x256xf32>
    %259 = arith.mulf %258, %247 : vector<16x256xf32>
    %260 = arith.index_cast %c1_i32_196 : i32 to index
    %c0_199 = arith.constant 0 : index
    %c0_200 = arith.constant 0 : index
    %261 = vector.load %arg16[%260, %c0_199, %c0_200] : memref<8x16x256xf32, #tpu.memory_space<vmem>>, vector<1x16x256xf32>
    %262 = vector.shape_cast %261 : vector<1x16x256xf32> to vector<16x256xf32>
    %263 = arith.addf %259, %262 : vector<16x256xf32>
    %264 = arith.index_cast %c1_i32_196 : i32 to index
    %c0_201 = arith.constant 0 : index
    %c0_202 = arith.constant 0 : index
    %265 = vector.load %arg17[%264, %c0_201, %c0_202] : memref<8x16x256xf32, #tpu.memory_space<vmem>>, vector<1x16x256xf32>
    %266 = vector.shape_cast %265 : vector<1x16x256xf32> to vector<16x256xf32>
    %267 = arith.mulf %266, %263 : vector<16x256xf32>
    %cst_203 = arith.constant dense<0.000000e+00> : vector<256xf32>
    %268 = vector.multi_reduction <add>, %267, %cst_203 [0] : vector<16x256xf32> to vector<256xf32>
    %269 = vector.shape_cast %268 : vector<256xf32> to vector<1x256xf32>
    %270 = arith.index_cast %c1_i32_196 : i32 to index
    %c0_204 = arith.constant 0 : index
    %271 = vector.load %arg18[%270, %c0_204] : memref<8x256xf32, #tpu.memory_space<vmem>>, vector<1x256xf32>
    tpu.vector_store %arg18[%270, %c0_204], %269 {strides = array<i32>} : memref<8x256xf32, #tpu.memory_space<vmem>>, vector<1x256xf32>,
    %c2_i32_205 = arith.constant 2 : i32
    %272 = arith.index_cast %c2_i32_205 : i32 to index
    %c0_206 = arith.constant 0 : index
    %c0_207 = arith.constant 0 : index
    %273 = vector.load %arg15[%272, %c0_206, %c0_207] : memref<8x16x256xf32, #tpu.memory_space<vmem>>, vector<1x16x256xf32>
    %274 = vector.shape_cast %273 : vector<1x16x256xf32> to vector<16x256xf32>
    %275 = arith.mulf %274, %263 : vector<16x256xf32>
    %276 = arith.index_cast %c2_i32_205 : i32 to index
    %c0_208 = arith.constant 0 : index
    %c0_209 = arith.constant 0 : index
    %277 = vector.load %arg16[%276, %c0_208, %c0_209] : memref<8x16x256xf32, #tpu.memory_space<vmem>>, vector<1x16x256xf32>
    %278 = vector.shape_cast %277 : vector<1x16x256xf32> to vector<16x256xf32>
    %279 = arith.addf %275, %278 : vector<16x256xf32>
    %280 = arith.index_cast %c2_i32_205 : i32 to index
    %c0_210 = arith.constant 0 : index
    %c0_211 = arith.constant 0 : index
    %281 = vector.load %arg17[%280, %c0_210, %c0_211] : memref<8x16x256xf32, #tpu.memory_space<vmem>>, vector<1x16x256xf32>
    %282 = vector.shape_cast %281 : vector<1x16x256xf32> to vector<16x256xf32>
    %283 = arith.mulf %282, %279 : vector<16x256xf32>
    %cst_212 = arith.constant dense<0.000000e+00> : vector<256xf32>
    %284 = vector.multi_reduction <add>, %283, %cst_212 [0] : vector<16x256xf32> to vector<256xf32>
    %285 = vector.shape_cast %284 : vector<256xf32> to vector<1x256xf32>
    %286 = arith.index_cast %c2_i32_205 : i32 to index
    %c0_213 = arith.constant 0 : index
    %287 = vector.load %arg18[%286, %c0_213] : memref<8x256xf32, #tpu.memory_space<vmem>>, vector<1x256xf32>
    tpu.vector_store %arg18[%286, %c0_213], %285 {strides = array<i32>} : memref<8x256xf32, #tpu.memory_space<vmem>>, vector<1x256xf32>,
    %c3_i32_214 = arith.constant 3 : i32
    %288 = arith.index_cast %c3_i32_214 : i32 to index
    %c0_215 = arith.constant 0 : index
    %c0_216 = arith.constant 0 : index
    %289 = vector.load %arg15[%288, %c0_215, %c0_216] : memref<8x16x256xf32, #tpu.memory_space<vmem>>, vector<1x16x256xf32>
    %290 = vector.shape_cast %289 : vector<1x16x256xf32> to vector<16x256xf32>
    %291 = arith.mulf %290, %279 : vector<16x256xf32>
    %292 = arith.index_cast %c3_i32_214 : i32 to index
    %c0_217 = arith.constant 0 : index
    %c0_218 = arith.constant 0 : index
    %293 = vector.load %arg16[%292, %c0_217, %c0_218] : memref<8x16x256xf32, #tpu.memory_space<vmem>>, vector<1x16x256xf32>
    %294 = vector.shape_cast %293 : vector<1x16x256xf32> to vector<16x256xf32>
    %295 = arith.addf %291, %294 : vector<16x256xf32>
    %296 = arith.index_cast %c3_i32_214 : i32 to index
    %c0_219 = arith.constant 0 : index
    %c0_220 = arith.constant 0 : index
    %297 = vector.load %arg17[%296, %c0_219, %c0_220] : memref<8x16x256xf32, #tpu.memory_space<vmem>>, vector<1x16x256xf32>
    %298 = vector.shape_cast %297 : vector<1x16x256xf32> to vector<16x256xf32>
    %299 = arith.mulf %298, %295 : vector<16x256xf32>
    %cst_221 = arith.constant dense<0.000000e+00> : vector<256xf32>
    %300 = vector.multi_reduction <add>, %299, %cst_221 [0] : vector<16x256xf32> to vector<256xf32>
    %301 = vector.shape_cast %300 : vector<256xf32> to vector<1x256xf32>
    %302 = arith.index_cast %c3_i32_214 : i32 to index
    %c0_222 = arith.constant 0 : index
    %303 = vector.load %arg18[%302, %c0_222] : memref<8x256xf32, #tpu.memory_space<vmem>>, vector<1x256xf32>
    tpu.vector_store %arg18[%302, %c0_222], %301 {strides = array<i32>} : memref<8x256xf32, #tpu.memory_space<vmem>>, vector<1x256xf32>,
    %c4_i32 = arith.constant 4 : i32
    %304 = arith.index_cast %c4_i32 : i32 to index
    %c0_223 = arith.constant 0 : index
    %c0_224 = arith.constant 0 : index
    %305 = vector.load %arg15[%304, %c0_223, %c0_224] : memref<8x16x256xf32, #tpu.memory_space<vmem>>, vector<1x16x256xf32>
    %306 = vector.shape_cast %305 : vector<1x16x256xf32> to vector<16x256xf32>
    %307 = arith.mulf %306, %295 : vector<16x256xf32>
    %308 = arith.index_cast %c4_i32 : i32 to index
    %c0_225 = arith.constant 0 : index
    %c0_226 = arith.constant 0 : index
    %309 = vector.load %arg16[%308, %c0_225, %c0_226] : memref<8x16x256xf32, #tpu.memory_space<vmem>>, vector<1x16x256xf32>
    %310 = vector.shape_cast %309 : vector<1x16x256xf32> to vector<16x256xf32>
    %311 = arith.addf %307, %310 : vector<16x256xf32>
    %312 = arith.index_cast %c4_i32 : i32 to index
    %c0_227 = arith.constant 0 : index
    %c0_228 = arith.constant 0 : index
    %313 = vector.load %arg17[%312, %c0_227, %c0_228] : memref<8x16x256xf32, #tpu.memory_space<vmem>>, vector<1x16x256xf32>
    %314 = vector.shape_cast %313 : vector<1x16x256xf32> to vector<16x256xf32>
    %315 = arith.mulf %314, %311 : vector<16x256xf32>
    %cst_229 = arith.constant dense<0.000000e+00> : vector<256xf32>
    %316 = vector.multi_reduction <add>, %315, %cst_229 [0] : vector<16x256xf32> to vector<256xf32>
    %317 = vector.shape_cast %316 : vector<256xf32> to vector<1x256xf32>
    %318 = arith.index_cast %c4_i32 : i32 to index
    %c0_230 = arith.constant 0 : index
    %319 = vector.load %arg18[%318, %c0_230] : memref<8x256xf32, #tpu.memory_space<vmem>>, vector<1x256xf32>
    tpu.vector_store %arg18[%318, %c0_230], %317 {strides = array<i32>} : memref<8x256xf32, #tpu.memory_space<vmem>>, vector<1x256xf32>,
    %c5_i32 = arith.constant 5 : i32
    %320 = arith.index_cast %c5_i32 : i32 to index
    %c0_231 = arith.constant 0 : index
    %c0_232 = arith.constant 0 : index
    %321 = vector.load %arg15[%320, %c0_231, %c0_232] : memref<8x16x256xf32, #tpu.memory_space<vmem>>, vector<1x16x256xf32>
    %322 = vector.shape_cast %321 : vector<1x16x256xf32> to vector<16x256xf32>
    %323 = arith.mulf %322, %311 : vector<16x256xf32>
    %324 = arith.index_cast %c5_i32 : i32 to index
    %c0_233 = arith.constant 0 : index
    %c0_234 = arith.constant 0 : index
    %325 = vector.load %arg16[%324, %c0_233, %c0_234] : memref<8x16x256xf32, #tpu.memory_space<vmem>>, vector<1x16x256xf32>
    %326 = vector.shape_cast %325 : vector<1x16x256xf32> to vector<16x256xf32>
    %327 = arith.addf %323, %326 : vector<16x256xf32>
    %328 = arith.index_cast %c5_i32 : i32 to index
    %c0_235 = arith.constant 0 : index
    %c0_236 = arith.constant 0 : index
    %329 = vector.load %arg17[%328, %c0_235, %c0_236] : memref<8x16x256xf32, #tpu.memory_space<vmem>>, vector<1x16x256xf32>
    %330 = vector.shape_cast %329 : vector<1x16x256xf32> to vector<16x256xf32>
    %331 = arith.mulf %330, %327 : vector<16x256xf32>
    %cst_237 = arith.constant dense<0.000000e+00> : vector<256xf32>
    %332 = vector.multi_reduction <add>, %331, %cst_237 [0] : vector<16x256xf32> to vector<256xf32>
    %333 = vector.shape_cast %332 : vector<256xf32> to vector<1x256xf32>
    %334 = arith.index_cast %c5_i32 : i32 to index
    %c0_238 = arith.constant 0 : index
    %335 = vector.load %arg18[%334, %c0_238] : memref<8x256xf32, #tpu.memory_space<vmem>>, vector<1x256xf32>
    tpu.vector_store %arg18[%334, %c0_238], %333 {strides = array<i32>} : memref<8x256xf32, #tpu.memory_space<vmem>>, vector<1x256xf32>,
    %c6_i32 = arith.constant 6 : i32
    %336 = arith.index_cast %c6_i32 : i32 to index
    %c0_239 = arith.constant 0 : index
    %c0_240 = arith.constant 0 : index
    %337 = vector.load %arg15[%336, %c0_239, %c0_240] : memref<8x16x256xf32, #tpu.memory_space<vmem>>, vector<1x16x256xf32>
    %338 = vector.shape_cast %337 : vector<1x16x256xf32> to vector<16x256xf32>
    %339 = arith.mulf %338, %327 : vector<16x256xf32>
    %340 = arith.index_cast %c6_i32 : i32 to index
    %c0_241 = arith.constant 0 : index
    %c0_242 = arith.constant 0 : index
    %341 = vector.load %arg16[%340, %c0_241, %c0_242] : memref<8x16x256xf32, #tpu.memory_space<vmem>>, vector<1x16x256xf32>
    %342 = vector.shape_cast %341 : vector<1x16x256xf32> to vector<16x256xf32>
    %343 = arith.addf %339, %342 : vector<16x256xf32>
    %344 = arith.index_cast %c6_i32 : i32 to index
    %c0_243 = arith.constant 0 : index
    %c0_244 = arith.constant 0 : index
    %345 = vector.load %arg17[%344, %c0_243, %c0_244] : memref<8x16x256xf32, #tpu.memory_space<vmem>>, vector<1x16x256xf32>
    %346 = vector.shape_cast %345 : vector<1x16x256xf32> to vector<16x256xf32>
    %347 = arith.mulf %346, %343 : vector<16x256xf32>
    %cst_245 = arith.constant dense<0.000000e+00> : vector<256xf32>
    %348 = vector.multi_reduction <add>, %347, %cst_245 [0] : vector<16x256xf32> to vector<256xf32>
    %349 = vector.shape_cast %348 : vector<256xf32> to vector<1x256xf32>
    %350 = arith.index_cast %c6_i32 : i32 to index
    %c0_246 = arith.constant 0 : index
    %351 = vector.load %arg18[%350, %c0_246] : memref<8x256xf32, #tpu.memory_space<vmem>>, vector<1x256xf32>
    tpu.vector_store %arg18[%350, %c0_246], %349 {strides = array<i32>} : memref<8x256xf32, #tpu.memory_space<vmem>>, vector<1x256xf32>,
    %c7_i32 = arith.constant 7 : i32
    %352 = arith.index_cast %c7_i32 : i32 to index
    %c0_247 = arith.constant 0 : index
    %c0_248 = arith.constant 0 : index
    %353 = vector.load %arg15[%352, %c0_247, %c0_248] : memref<8x16x256xf32, #tpu.memory_space<vmem>>, vector<1x16x256xf32>
    %354 = vector.shape_cast %353 : vector<1x16x256xf32> to vector<16x256xf32>
    %355 = arith.mulf %354, %343 : vector<16x256xf32>
    %356 = arith.index_cast %c7_i32 : i32 to index
    %c0_249 = arith.constant 0 : index
    %c0_250 = arith.constant 0 : index
    %357 = vector.load %arg16[%356, %c0_249, %c0_250] : memref<8x16x256xf32, #tpu.memory_space<vmem>>, vector<1x16x256xf32>
    %358 = vector.shape_cast %357 : vector<1x16x256xf32> to vector<16x256xf32>
    %359 = arith.addf %355, %358 : vector<16x256xf32>
    %360 = arith.index_cast %c7_i32 : i32 to index
    %c0_251 = arith.constant 0 : index
    %c0_252 = arith.constant 0 : index
    %361 = vector.load %arg17[%360, %c0_251, %c0_252] : memref<8x16x256xf32, #tpu.memory_space<vmem>>, vector<1x16x256xf32>
    %362 = vector.shape_cast %361 : vector<1x16x256xf32> to vector<16x256xf32>
    %363 = arith.mulf %362, %359 : vector<16x256xf32>
    %cst_253 = arith.constant dense<0.000000e+00> : vector<256xf32>
    %364 = vector.multi_reduction <add>, %363, %cst_253 [0] : vector<16x256xf32> to vector<256xf32>
    %365 = vector.shape_cast %364 : vector<256xf32> to vector<1x256xf32>
    %366 = arith.index_cast %c7_i32 : i32 to index
    %c0_254 = arith.constant 0 : index
    %367 = vector.load %arg18[%366, %c0_254] : memref<8x256xf32, #tpu.memory_space<vmem>>, vector<1x256xf32>
    tpu.vector_store %arg18[%366, %c0_254], %365 {strides = array<i32>} : memref<8x256xf32, #tpu.memory_space<vmem>>, vector<1x256xf32>,
    %c8_i32 = arith.constant 8 : i32
    %c0_255 = arith.constant 0 : index
    %c0_256 = arith.constant 0 : index
    %368 = vector.load %arg18[%c0_255, %c0_256] : memref<8x256xf32, #tpu.memory_space<vmem>>, vector<8x256xf32>
    %c0_257 = arith.constant 0 : index
    %c0_258 = arith.constant 0 : index
    %369 = vector.load %arg11[%c0_257, %c0_258] : memref<1x256xf32, #tpu.memory_space<vmem>>, vector<1x256xf32>
    %370 = vector.broadcast %369 : vector<1x256xf32> to vector<8x256xf32>
    %371 = arith.mulf %55, %370 : vector<8x256xf32>
    %372 = arith.addf %368, %371 : vector<8x256xf32>
    %373 = arith.negf %15 : vector<8x256xf32>
    %374 = math.exp %373 : vector<8x256xf32>
    %cst_259 = arith.constant 1.000000e+00 : f32
    %375 = vector.broadcast %cst_259 : f32 to vector<8x256xf32>
    %376 = arith.addf %375, %374 : vector<8x256xf32>
    %377 = arith.divf %375, %376 : vector<8x256xf32>
    %378 = arith.mulf %15, %377 : vector<8x256xf32>
    %379 = arith.mulf %372, %378 : vector<8x256xf32>
    %c0_260 = arith.constant 0 : index
    %c0_261 = arith.constant 0 : index
    %380 = vector.load %arg12[%c0_260, %c0_261] : memref<256x128xf32, #tpu.memory_space<vmem>>, vector<256x128xf32>
    %cst_262 = arith.constant dense<0.000000e+00> : vector<8x128xf32>
    %381 = tpu.matmul %379, %380, %cst_262 {dimension_numbers = #tpu.dot_dimension_numbers<[1], [0], [0], [1], [0, 0, 1, 1], [], []>} : vector<8x256xf32>, vector<256x128xf32>, vector<8x128xf32> -> vector<8x128xf32>
    %382 = arith.addf %381, %1 : vector<8x128xf32>
    %c0_263 = arith.constant 0 : index
    %c0_264 = arith.constant 0 : index
    %c0_265 = arith.constant 0 : index
    %383 = vector.load %arg14[%c0_263, %c0_264, %c0_265] : memref<1x8x128xf32, #tpu.memory_space<vmem>>, vector<1x8x128xf32>
    %384 = vector.shape_cast %383 : vector<1x8x128xf32> to vector<8x128xf32>
    %385 = vector.shape_cast %382 : vector<8x128xf32> to vector<1x8x128xf32>
    tpu.vector_store %arg14[%c0_263, %c0_264, %c0_265], %385 {strides = array<i32>} : memref<1x8x128xf32, #tpu.memory_space<vmem>>, vector<1x8x128xf32>,
    return
  }
  func.func @transform_0(%arg0: i32) -> (i32, i32, i32) {
    %c0_i32 = arith.constant 0 : i32
    %c0_i32_0 = arith.constant 0 : i32
    %c0_i32_1 = arith.constant 0 : i32
    return %arg0, %c0_i32, %c0_i32_0 : i32, i32, i32
  }
  func.func @transform_1(%arg0: i32) -> (i32, i32) {
    %c0_i32 = arith.constant 0 : i32
    %c0_i32_0 = arith.constant 0 : i32
    %c0_i32_1 = arith.constant 0 : i32
    return %c0_i32, %c0_i32_0 : i32, i32
  }
  func.func @transform_2(%arg0: i32) -> (i32, i32) {
    %c0_i32 = arith.constant 0 : i32
    %c0_i32_0 = arith.constant 0 : i32
    %c0_i32_1 = arith.constant 0 : i32
    return %c0_i32, %c0_i32_0 : i32, i32
  }
  func.func @transform_3(%arg0: i32) -> (i32, i32) {
    %c0_i32 = arith.constant 0 : i32
    %c0_i32_0 = arith.constant 0 : i32
    %c0_i32_1 = arith.constant 0 : i32
    return %c0_i32, %c0_i32_0 : i32, i32
  }
  func.func @transform_4(%arg0: i32) -> (i32, i32) {
    %c0_i32 = arith.constant 0 : i32
    %c0_i32_0 = arith.constant 0 : i32
    %c0_i32_1 = arith.constant 0 : i32
    return %c0_i32, %c0_i32_0 : i32, i32
  }
  func.func @transform_5(%arg0: i32) -> (i32, i32) {
    %c0_i32 = arith.constant 0 : i32
    %c0_i32_0 = arith.constant 0 : i32
    %c0_i32_1 = arith.constant 0 : i32
    return %c0_i32, %c0_i32_0 : i32, i32
  }
  func.func @transform_6(%arg0: i32) -> (i32, i32) {
    %c0_i32 = arith.constant 0 : i32
    %c0_i32_0 = arith.constant 0 : i32
    %c0_i32_1 = arith.constant 0 : i32
    return %c0_i32, %c0_i32_0 : i32, i32
  }
  func.func @transform_7(%arg0: i32) -> (i32, i32) {
    %c0_i32 = arith.constant 0 : i32
    %c0_i32_0 = arith.constant 0 : i32
    %c0_i32_1 = arith.constant 0 : i32
    return %c0_i32, %c0_i32_0 : i32, i32
  }
  func.func @transform_8(%arg0: i32) -> (i32, i32) {
    %c0_i32 = arith.constant 0 : i32
    %c0_i32_0 = arith.constant 0 : i32
    %c0_i32_1 = arith.constant 0 : i32
    return %c0_i32, %c0_i32_0 : i32, i32
  }
  func.func @transform_9(%arg0: i32) -> (i32, i32) {
    %c0_i32 = arith.constant 0 : i32
    %c0_i32_0 = arith.constant 0 : i32
    %c0_i32_1 = arith.constant 0 : i32
    return %c0_i32, %c0_i32_0 : i32, i32
  }
  func.func @transform_10(%arg0: i32) -> (i32, i32) {
    %c0_i32 = arith.constant 0 : i32
    %c0_i32_0 = arith.constant 0 : i32
    %c0_i32_1 = arith.constant 0 : i32
    return %c0_i32, %c0_i32_0 : i32, i32
  }
  func.func @transform_11(%arg0: i32) -> (i32, i32) {
    %c0_i32 = arith.constant 0 : i32
    %c0_i32_0 = arith.constant 0 : i32
    %c0_i32_1 = arith.constant 0 : i32
    return %c0_i32, %c0_i32_0 : i32, i32
  }
  func.func @transform_12(%arg0: i32) -> (i32, i32, i32) {
    %c0_i32 = arith.constant 0 : i32
    %c0_i32_0 = arith.constant 0 : i32
    %c0_i32_1 = arith.constant 0 : i32
    %c0_i32_2 = arith.constant 0 : i32
    return %c0_i32, %c0_i32_0, %c0_i32_1 : i32, i32, i32
  }
  func.func @transform_13(%arg0: i32) -> (i32, i32, i32) {
    %c0_i32 = arith.constant 0 : i32
    %c0_i32_0 = arith.constant 0 : i32
    %c0_i32_1 = arith.constant 0 : i32
    return %arg0, %c0_i32, %c0_i32_0 : i32, i32, i32
  }
}

</mosaic_0001>

<llo_original>
// kernel: tpu_custom_call.1
$region0: #{tpu_custom_call.1}
  #allocation0 [shape = 'u32[]', space=smem, size = 0x4, offset = 0x4, fixed_abs, tag = 'smem constant byte address 0x4 - core index']
  #allocation1 [shape = 'u32[144,128]{1,0:T(1,128)}', space=vmem, size = 0x12000, scoped, tag = 'internal scratch']
  #allocation2 [shape = 'f32[8,16,256]{2,1,0:T(8,128)}', space=vmem, size = 0x20000, scoped, tag = 'scratch operand']
  #allocation3 [shape = 'f32[8,16,256]{2,1,0:T(8,128)}', space=vmem, size = 0x20000, scoped, tag = 'scratch operand']
  #allocation4 [shape = 'f32[8,16,256]{2,1,0:T(8,128)}', space=vmem, size = 0x20000, scoped, tag = 'scratch operand']
  #allocation5 [shape = 'f32[8,256]{1,0:T(8,128)}', space=vmem, size = 0x2000, scoped, tag = 'scratch operand']
  %s0 = inlined_call_operand.hbm [shape: f32[1,8,128], index: 0, kind: input, shape index: {}]
  %s1 = inlined_call_operand.hbm [shape: f32[128,128], index: 1, kind: input, shape index: {}]
  %s2 = inlined_call_operand.hbm [shape: f32[1,128], index: 2, kind: input, shape index: {}]
  %s3 = inlined_call_operand.hbm [shape: f32[128,512], index: 3, kind: input, shape index: {}]
  %s4 = inlined_call_operand.hbm [shape: f32[4,256], index: 4, kind: input, shape index: {}]
  %s5 = inlined_call_operand.hbm [shape: f32[1,256], index: 5, kind: input, shape index: {}]
  %s6 = inlined_call_operand.hbm [shape: f32[256,128], index: 6, kind: input, shape index: {}]
  %s7 = inlined_call_operand.hbm [shape: f32[256,256], index: 7, kind: input, shape index: {}]
  %s8 = inlined_call_operand.hbm [shape: f32[1,256], index: 8, kind: input, shape index: {}]
  %s9 = inlined_call_operand.hbm [shape: f32[16,256], index: 9, kind: input, shape index: {}]
  %s10 = inlined_call_operand.hbm [shape: f32[1,256], index: 10, kind: input, shape index: {}]
  %s11 = inlined_call_operand.hbm [shape: f32[256,128], index: 11, kind: input, shape index: {}]
  %s12 = inlined_call_operand.hbm [shape: f32[16,128,512], index: 12, kind: input, shape index: {}]
  %s13 = inlined_call_operand.hbm [shape: f32[1,8,128], index: 13, kind: output, shape index: {}]
  %s14 = sld [smem:[#allocation0]]
  $region114: #{tpu_custom_call.1} parent=0
    _
  %s16 = ssub.s32 1, %s14
  %s17 = scalar_select 0, %s16, %s14
  $region1: #{tpu_custom_call.1} parent=0
    #allocation6 [shape = 'u8[4096]{0}', space=vmem, size = 0x1000, scoped, tag = 'input window, operand 0, single buffered']
    #allocation7 [shape = 's32[1]{0}', space=sflag, size = 0x4, scoped, tag = 'scoped memory for tpu_custom_call.1']
    #allocation8 [shape = 's32[1]{0}', space=sflag, size = 0x4, scoped, tag = 'scoped memory for tpu_custom_call.1']
    #allocation9 [shape = 'u8[65536]{0}', space=vmem, size = 0x10000, scoped, tag = 'input window, operand 1, single buffered']
    #allocation10 [shape = 's32[1]{0}', space=sflag, size = 0x4, scoped, tag = 'scoped memory for tpu_custom_call.1']
    #allocation11 [shape = 'u8[512]{0}', space=vmem, size = 0x400, scoped, tag = 'input window, operand 2, single buffered']
    #allocation12 [shape = 'u8[262144]{0}', space=vmem, size = 0x40000, scoped, tag = 'input window, operand 3, single buffered']
    #allocation13 [shape = 's32[1]{0}', space=sflag, size = 0x4, scoped, tag = 'scoped memory for tpu_custom_call.1']
    #allocation14 [shape = 'u8[4096]{0}', space=vmem, size = 0x1000, scoped, tag = 'input window, operand 4, single buffered']
    #allocation15 [shape = 'u8[1024]{0}', space=vmem, size = 0x400, scoped, tag = 'input window, operand 5, single buffered']
    #allocation16 [shape = 's32[1]{0}', space=sflag, size = 0x4, scoped, tag = 'scoped memory for tpu_custom_call.1']
    #allocation17 [shape = 'u8[131072]{0}', space=vmem, size = 0x20000, scoped, tag = 'input window, operand 6, single buffered']
    #allocation18 [shape = 'u8[262144]{0}', space=vmem, size = 0x40000, scoped, tag = 'input window, operand 7, single buffered']
    #allocation19 [shape = 's32[1]{0}', space=sflag, size = 0x4, scoped, tag = 'scoped memory for tpu_custom_call.1']
    #allocation20 [shape = 'u8[1024]{0}', space=vmem, size = 0x400, scoped, tag = 'input window, operand 8, single buffered']
    #allocation21 [shape = 'u8[16384]{0}', space=vmem, size = 0x4000, scoped, tag = 'input window, operand 9, single buffered']
    #allocation22 [shape = 's32[1]{0}', space=sflag, size = 0x4, scoped, tag = 'scoped memory for tpu_custom_call.1']
    #allocation23 [shape = 'u8[1024]{0}', space=vmem, size = 0x400, scoped, tag = 'input window, operand 10, single buffered']
    #allocation24 [shape = 'u8[131072]{0}', space=vmem, size = 0x20000, scoped, tag = 'input window, operand 11, single buffered']
    #allocation25 [shape = 's32[1]{0}', space=sflag, size = 0x4, scoped, tag = 'scoped memory for tpu_custom_call.1']
    #allocation26 [shape = 'u8[4194304]{0}', space=vmem, size = 0x400000, scoped, tag = 'input window, operand 12, single buffered']
    #allocation27 [shape = 'u8[4096]{0}', space=vmem, size = 0x1000, scoped, tag = 'output window, operand 0, single buffered']
    %18 = vsyncpa [#allocation7], 0
    %19 = vsyncpa [#allocation10], 0
    %20 = vsyncpa [#allocation13], 0
    %21 = vsyncpa [#allocation16], 0
    %22 = vsyncpa [#allocation19], 0
    %23 = vsyncpa [#allocation22], 0
    %24 = vsyncpa [#allocation25], 0
    %25 = vsyncpa [#allocation8], 0
    // Predicated region
    $region2: #{tpu_custom_call.1} parent=1 // pred_check
      _
    $region3: #{tpu_custom_call.1} parent=1 // pred_check_branch
      %27 = sbr.rel (0) target = $region5
    $region4: #{tpu_custom_call.1} parent=1 // pred_region
      %s29 = ssub.s32 128, 128
      %30 = vsyncadd [#allocation7], %s29
      %s32 = sshll.u32 [#allocation6], 4
      %s33 = int_to_ptr.vmem [resolvable:$true] %s32
      %35 = dma.hbm_to_vmem [thread:$0]  %s0, 128, %s33, [#allocation7]
    $region5: #{tpu_custom_call.1} parent=1 // pred_fallthru
      _
    // Predicated region
    $region6: #{tpu_custom_call.1} parent=1 // pred_check
      _
    $region7: #{tpu_custom_call.1} parent=1 // pred_check_branch
      %37 = sbr.rel (0) target = $region9
    $region8: #{tpu_custom_call.1} parent=1 // pred_region
      %s39 = ssub.s32 2048, 2048
      %40 = vsyncadd [#allocation10], %s39
      %s41 = sshll.u32 [#allocation9], 4
      %s42 = int_to_ptr.vmem [resolvable:$true] %s41
      %47 = dma.hbm_to_vmem [thread:$0]  %s1, 2048, %s42, [#allocation10], 128, 128, 8
    $region9: #{tpu_custom_call.1} parent=1 // pred_fallthru
      _
    // Predicated region
    $region10: #{tpu_custom_call.1} parent=1 // pred_check
      _
    $region11: #{tpu_custom_call.1} parent=1 // pred_check_branch
      %49 = sbr.rel (0) target = $region13
    $region12: #{tpu_custom_call.1} parent=1 // pred_region
      %s51 = ssub.s32 16, 16
      %52 = vsyncadd [#allocation10], %s51
      %s54 = sshll.u32 [#allocation11], 4
      %s55 = int_to_ptr.vmem [resolvable:$true] %s54
      %57 = dma.hbm_to_vmem [thread:$0]  %s2, 16, %s55, [#allocation10]
    $region13: #{tpu_custom_call.1} parent=1 // pred_fallthru
      _
    // Predicated region
    $region14: #{tpu_custom_call.1} parent=1 // pred_check
      _
    $region15: #{tpu_custom_call.1} parent=1 // pred_check_branch
      %59 = sbr.rel (0) target = $region17
    $region16: #{tpu_custom_call.1} parent=1 // pred_region
      %s61 = ssub.s32 8192, 8192
      %62 = vsyncadd [#allocation13], %s61
      %s63 = sshll.u32 [#allocation12], 4
      %s64 = int_to_ptr.vmem [resolvable:$true] %s63
      %69 = dma.hbm_to_vmem [thread:$0]  %s3, 8192, %s64, [#allocation13], 512, 512, 32
    $region17: #{tpu_custom_call.1} parent=1 // pred_fallthru
      _
    // Predicated region
    $region18: #{tpu_custom_call.1} parent=1 // pred_check
      _
    $region19: #{tpu_custom_call.1} parent=1 // pred_check_branch
      %71 = sbr.rel (0) target = $region21
    $region20: #{tpu_custom_call.1} parent=1 // pred_region
      %s73 = ssub.s32 128, 128
      %74 = vsyncadd [#allocation13], %s73
      %s76 = sshll.u32 [#allocation14], 4
      %s77 = int_to_ptr.vmem [resolvable:$true] %s76
      %79 = dma.hbm_to_vmem [thread:$0]  %s4, 128, %s77, [#allocation13]
    $region21: #{tpu_custom_call.1} parent=1 // pred_fallthru
      _
    // Predicated region
    $region22: #{tpu_custom_call.1} parent=1 // pred_check
      _
    $region23: #{tpu_custom_call.1} parent=1 // pred_check_branch
      %81 = sbr.rel (0) target = $region25
    $region24: #{tpu_custom_call.1} parent=1 // pred_region
      %s83 = ssub.s32 32, 32
      %84 = vsyncadd [#allocation16], %s83
      %s86 = sshll.u32 [#allocation15], 4
      %s87 = int_to_ptr.vmem [resolvable:$true] %s86
      %89 = dma.hbm_to_vmem [thread:$0]  %s5, 32, %s87, [#allocation16]
    $region25: #{tpu_custom_call.1} parent=1 // pred_fallthru
      _
    // Predicated region
    $region26: #{tpu_custom_call.1} parent=1 // pred_check
      _
    $region27: #{tpu_custom_call.1} parent=1 // pred_check_branch
      %91 = sbr.rel (0) target = $region29
    $region28: #{tpu_custom_call.1} parent=1 // pred_region
      %s93 = ssub.s32 4096, 4096
      %94 = vsyncadd [#allocation16], %s93
      %s95 = sshll.u32 [#allocation17], 4
      %s96 = int_to_ptr.vmem [resolvable:$true] %s95
      %101 = dma.hbm_to_vmem [thread:$0]  %s6, 4096, %s96, [#allocation16], 128, 128, 8
    $region29: #{tpu_custom_call.1} parent=1 // pred_fallthru
      _
    // Predicated region
    $region30: #{tpu_custom_call.1} parent=1 // pred_check
      _
    $region31: #{tpu_custom_call.1} parent=1 // pred_check_branch
      %103 = sbr.rel (0) target = $region33
    $region32: #{tpu_custom_call.1} parent=1 // pred_region
      %s105 = ssub.s32 8192, 8192
      %106 = vsyncadd [#allocation19], %s105
      %s107 = sshll.u32 [#allocation18], 4
      %s108 = int_to_ptr.vmem [resolvable:$true] %s107
      %113 = dma.hbm_to_vmem [thread:$0]  %s7, 8192, %s108, [#allocation19], 256, 256, 16
    $region33: #{tpu_custom_call.1} parent=1 // pred_fallthru
      _
    // Predicated region
    $region34: #{tpu_custom_call.1} parent=1 // pred_check
      _
    $region35: #{tpu_custom_call.1} parent=1 // pred_check_branch
      %115 = sbr.rel (0) target = $region37
    $region36: #{tpu_custom_call.1} parent=1 // pred_region
      %s117 = ssub.s32 32, 32
      %118 = vsyncadd [#allocation19], %s117
      %s120 = sshll.u32 [#allocation20], 4
      %s121 = int_to_ptr.vmem [resolvable:$true] %s120
      %123 = dma.hbm_to_vmem [thread:$0]  %s8, 32, %s121, [#allocation19]
    $region37: #{tpu_custom_call.1} parent=1 // pred_fallthru
      _
    // Predicated region
    $region38: #{tpu_custom_call.1} parent=1 // pred_check
      _
    $region39: #{tpu_custom_call.1} parent=1 // pred_check_branch
      %125 = sbr.rel (0) target = $region41
    $region40: #{tpu_custom_call.1} parent=1 // pred_region
      %s127 = ssub.s32 512, 512
      %128 = vsyncadd [#allocation22], %s127
      %s129 = sshll.u32 [#allocation21], 4
      %s130 = int_to_ptr.vmem [resolvable:$true] %s129
      %135 = dma.hbm_to_vmem [thread:$0]  %s9, 512, %s130, [#allocation22], 256, 256, 16
    $region41: #{tpu_custom_call.1} parent=1 // pred_fallthru
      _
    // Predicated region
    $region42: #{tpu_custom_call.1} parent=1 // pred_check
      _
    $region43: #{tpu_custom_call.1} parent=1 // pred_check_branch
      %137 = sbr.rel (0) target = $region45
    $region44: #{tpu_custom_call.1} parent=1 // pred_region
      %s139 = ssub.s32 32, 32
      %140 = vsyncadd [#allocation22], %s139
      %s142 = sshll.u32 [#allocation23], 4
      %s143 = int_to_ptr.vmem [resolvable:$true] %s142
      %145 = dma.hbm_to_vmem [thread:$0]  %s10, 32, %s143, [#allocation22]
    $region45: #{tpu_custom_call.1} parent=1 // pred_fallthru
      _
    // Predicated region
    $region46: #{tpu_custom_call.1} parent=1 // pred_check
      _
    $region47: #{tpu_custom_call.1} parent=1 // pred_check_branch
      %147 = sbr.rel (0) target = $region49
    $region48: #{tpu_custom_call.1} parent=1 // pred_region
      %s149 = ssub.s32 4096, 4096
      %150 = vsyncadd [#allocation25], %s149
      %s151 = sshll.u32 [#allocation24], 4
      %s152 = int_to_ptr.vmem [resolvable:$true] %s151
      %157 = dma.hbm_to_vmem [thread:$0]  %s11, 4096, %s152, [#allocation25], 128, 128, 8
    $region49: #{tpu_custom_call.1} parent=1 // pred_fallthru
      _
    // Predicated region
    $region50: #{tpu_custom_call.1} parent=1 // pred_check
      _
    $region51: #{tpu_custom_call.1} parent=1 // pred_check_branch
      %159 = sbr.rel (0) target = $region53
    $region52: #{tpu_custom_call.1} parent=1 // pred_region
      %s161 = ssub.s32 131072, 131072
      %162 = vsyncadd [#allocation25], %s161
      %s163 = sshll.u32 [#allocation26], 4
      %s164 = int_to_ptr.vmem [resolvable:$true] %s163
      %169 = dma.hbm_to_vmem [thread:$0]  %s12, 131072, %s164, [#allocation25], 512, 512, 32
    $region53: #{tpu_custom_call.1} parent=1 // pred_fallthru
      _
    // Predicated region
    $region54: #{tpu_custom_call.1} parent=1 // pred_check
      _
    $region55: #{tpu_custom_call.1} parent=1 // pred_check_branch
      %171 = sbr.rel (0) target = $region57
    $region56: #{tpu_custom_call.1} parent=1 // pred_region
      %172 = dma.done [#allocation7], 128
    $region57: #{tpu_custom_call.1} parent=1 // pred_fallthru
      _
    // Predicated region
    $region58: #{tpu_custom_call.1} parent=1 // pred_check
      _
    $region59: #{tpu_custom_call.1} parent=1 // pred_check_branch
      %174 = sbr.rel (0) target = $region61
    $region60: #{tpu_custom_call.1} parent=1 // pred_region
      %175 = dma.done [#allocation10], 2048
    $region61: #{tpu_custom_call.1} parent=1 // pred_fallthru
      _
    // Predicated region
    $region62: #{tpu_custom_call.1} parent=1 // pred_check
      _
    $region63: #{tpu_custom_call.1} parent=1 // pred_check_branch
      %177 = sbr.rel (0) target = $region65
    $region64: #{tpu_custom_call.1} parent=1 // pred_region
      %178 = dma.done [#allocation10], 16
    $region65: #{tpu_custom_call.1} parent=1 // pred_fallthru
      _
    // Predicated region
    $region66: #{tpu_custom_call.1} parent=1 // pred_check
      _
    $region67: #{tpu_custom_call.1} parent=1 // pred_check_branch
      %180 = sbr.rel (0) target = $region69
    $region68: #{tpu_custom_call.1} parent=1 // pred_region
      %181 = dma.done [#allocation13], 8192
    $region69: #{tpu_custom_call.1} parent=1 // pred_fallthru
      _
    // Predicated region
    $region70: #{tpu_custom_call.1} parent=1 // pred_check
      _
    $region71: #{tpu_custom_call.1} parent=1 // pred_check_branch
      %183 = sbr.rel (0) target = $region73
    $region72: #{tpu_custom_call.1} parent=1 // pred_region
      %184 = dma.done [#allocation13], 128
    $region73: #{tpu_custom_call.1} parent=1 // pred_fallthru
      _
    // Predicated region
    $region74: #{tpu_custom_call.1} parent=1 // pred_check
      _
    $region75: #{tpu_custom_call.1} parent=1 // pred_check_branch
      %186 = sbr.rel (0) target = $region77
    $region76: #{tpu_custom_call.1} parent=1 // pred_region
      %187 = dma.done [#allocation16], 32
    $region77: #{tpu_custom_call.1} parent=1 // pred_fallthru
      _
    // Predicated region
    $region78: #{tpu_custom_call.1} parent=1 // pred_check
      _
    $region79: #{tpu_custom_call.1} parent=1 // pred_check_branch
      %189 = sbr.rel (0) target = $region81
    $region80: #{tpu_custom_call.1} parent=1 // pred_region
      %190 = dma.done [#allocation16], 4096
    $region81: #{tpu_custom_call.1} parent=1 // pred_fallthru
      _
    // Predicated region
    $region82: #{tpu_custom_call.1} parent=1 // pred_check
      _
    $region83: #{tpu_custom_call.1} parent=1 // pred_check_branch
      %192 = sbr.rel (0) target = $region85
    $region84: #{tpu_custom_call.1} parent=1 // pred_region
      %193 = dma.done [#allocation19], 8192
    $region85: #{tpu_custom_call.1} parent=1 // pred_fallthru
      _
    // Predicated region
    $region86: #{tpu_custom_call.1} parent=1 // pred_check
      _
    $region87: #{tpu_custom_call.1} parent=1 // pred_check_branch
      %195 = sbr.rel (0) target = $region89
    $region88: #{tpu_custom_call.1} parent=1 // pred_region
      %196 = dma.done [#allocation19], 32
    $region89: #{tpu_custom_call.1} parent=1 // pred_fallthru
      _
    // Predicated region
    $region90: #{tpu_custom_call.1} parent=1 // pred_check
      _
    $region91: #{tpu_custom_call.1} parent=1 // pred_check_branch
      %198 = sbr.rel (0) target = $region93
    $region92: #{tpu_custom_call.1} parent=1 // pred_region
      %199 = dma.done [#allocation22], 512
    $region93: #{tpu_custom_call.1} parent=1 // pred_fallthru
      _
    // Predicated region
    $region94: #{tpu_custom_call.1} parent=1 // pred_check
      _
    $region95: #{tpu_custom_call.1} parent=1 // pred_check_branch
      %201 = sbr.rel (0) target = $region97
    $region96: #{tpu_custom_call.1} parent=1 // pred_region
      %202 = dma.done [#allocation22], 32
    $region97: #{tpu_custom_call.1} parent=1 // pred_fallthru
      _
    // Predicated region
    $region98: #{tpu_custom_call.1} parent=1 // pred_check
      _
    $region99: #{tpu_custom_call.1} parent=1 // pred_check_branch
      %204 = sbr.rel (0) target = $region101
    $region100: #{tpu_custom_call.1} parent=1 // pred_region
      %205 = dma.done [#allocation25], 4096
    $region101: #{tpu_custom_call.1} parent=1 // pred_fallthru
      _
    // Predicated region
    $region102: #{tpu_custom_call.1} parent=1 // pred_check
      _
    $region103: #{tpu_custom_call.1} parent=1 // pred_check_branch
      %207 = sbr.rel (0) target = $region105
    $region104: #{tpu_custom_call.1} parent=1 // pred_region
      %208 = dma.done [#allocation25], 131072
    $region105: #{tpu_custom_call.1} parent=1 // pred_fallthru
      _
    %v209 = vld [vmem:[#allocation6] sm:$0xff]
    %v210 = vmul.f32 %v209, %v209
    %v211 = vld [vmem:[#allocation9] sm:$0xff]
    %v212 = vld [vmem:[#allocation9 + $0x8] sm:$0xff]
    %v213 = vld [vmem:[#allocation9 + $0x10] sm:$0xff]
    %v214 = vld [vmem:[#allocation9 + $0x18] sm:$0xff]
    %v215 = vld [vmem:[#allocation9 + $0x20] sm:$0xff]
    %v216 = vld [vmem:[#allocation9 + $0x28] sm:$0xff]
    %v217 = vld [vmem:[#allocation9 + $0x30] sm:$0xff]
    %v218 = vld [vmem:[#allocation9 + $0x38] sm:$0xff]
    %v219 = vld [vmem:[#allocation9 + $0x40] sm:$0xff]
    %v220 = vld [vmem:[#allocation9 + $0x48] sm:$0xff]
    %v221 = vld [vmem:[#allocation9 + $0x50] sm:$0xff]
    %v222 = vld [vmem:[#allocation9 + $0x58] sm:$0xff]
    %v223 = vld [vmem:[#allocation9 + $0x60] sm:$0xff]
    %v224 = vld [vmem:[#allocation9 + $0x68] sm:$0xff]
    %v225 = vld [vmem:[#allocation9 + $0x70] sm:$0xff]
    %v226 = vld [vmem:[#allocation9 + $0x78] sm:$0xff]
    %227 = vmatprep.subr.mxu0 0.0
    %228 = vmatpush1.msra.mxu0 %v211
    %229 = vmatprep.subr.mxu0 0.0
    %230 = vmatpush1.msra.mxu0 %v212
    %231 = vmatprep.subr.mxu0 0.0
    %232 = vmatpush1.msra.mxu0 %v213
    %233 = vmatprep.subr.mxu0 0.0
    %234 = vmatpush1.msra.mxu0 %v214
    %235 = vmatprep.subr.mxu0 0.0
    %236 = vmatpush1.msra.mxu0 %v215
    %237 = vmatprep.subr.mxu0 0.0
    %238 = vmatpush1.msra.mxu0 %v216
    %239 = vmatprep.subr.mxu0 0.0
    %240 = vmatpush1.msra.mxu0 %v217
    %241 = vmatprep.subr.mxu0 0.0
    %242 = vmatpush1.msra.mxu0 %v218
    %243 = vmatprep.subr.mxu0 0.0
    %244 = vmatpush1.msra.mxu0 %v219
    %245 = vmatprep.subr.mxu0 0.0
    %246 = vmatpush1.msra.mxu0 %v220
    %247 = vmatprep.subr.mxu0 0.0
    %248 = vmatpush1.msra.mxu0 %v221
    %249 = vmatprep.subr.mxu0 0.0
    %250 = vmatpush1.msra.mxu0 %v222
    %251 = vmatprep.subr.mxu0 0.0
    %252 = vmatpush1.msra.mxu0 %v223
    %253 = vmatprep.subr.mxu0 0.0
    %254 = vmatpush1.msra.mxu0 %v224
    %255 = vmatprep.subr.mxu0 0.0
    %256 = vmatpush1.msra.mxu0 %v225
    %257 = vmatprep.subr.mxu0 0.0
    %258 = vmatpush1.msra.mxu0 %v226
    %259 = vmatprep.subr.mxu0 0.0
    %260 = vmatpush1.msra.mxu0 0.0
    %261 = vmatprep.subr.mxu0 0.0
    %262 = vmatpush1.msra.mxu0 0.0
    %263 = vmatprep.subr.mxu0 0.0
    %264 = vmatpush1.msra.mxu0 0.0
    %265 = vmatprep.subr.mxu0 0.0
    %266 = vmatpush1.msra.mxu0 0.0
    %267 = vmatprep.subr.mxu0 0.0
    %268 = vmatpush1.msra.mxu0 0.0
    %269 = vmatprep.subr.mxu0 0.0
    %270 = vmatpush1.msra.mxu0 0.0
    %271 = vmatprep.subr.mxu0 0.0
    %272 = vmatpush1.msra.mxu0 0.0
    %273 = vmatprep.subr.mxu0 0.0
    %274 = vmatpush1.msra.mxu0 0.0
    %275 = vmatprep.subr.mxu0 0.0
    %276 = vmatpush1.msra.mxu0 0.0
    %277 = vmatprep.subr.mxu0 0.0
    %278 = vmatpush1.msra.mxu0 0.0
    %279 = vmatprep.subr.mxu0 0.0
    %280 = vmatpush1.msra.mxu0 0.0
    %281 = vmatprep.subr.mxu0 0.0
    %282 = vmatpush1.msra.mxu0 0.0
    %283 = vmatprep.subr.mxu0 0.0
    %284 = vmatpush1.msra.mxu0 0.0
    %285 = vmatprep.subr.mxu0 0.0
    %286 = vmatpush1.msra.mxu0 0.0
    %287 = vmatprep.subr.mxu0 0.0
    %288 = vmatpush1.msra.mxu0 0.0
    %289 = vmatprep.subr.mxu0 0.0
    %290 = vmatpush1.msra.mxu0 0.0
    %291 = vmatprep.mubr.f32.mxu0 0.0
    %292 = vmatmul.mubr.f32.gmra.mrb[0].mxu0 %v210
    %v293 = vpop.f32.mrb[0].mxu0
    %v294 = vadd.f32 1e-05, %v293
    %v295 = vpop.f32.mrb[0].mxu0
    %296 = vdwg.mxu0
    %v297 = vrsqrt.pop %v294
    %v298 = vmul.f32 %v209, %v297
    %v299 = vld [vmem:[#allocation11] sm:$0x1]
    %v301 = vlaneseq
    %v302 = vshrl.u32 %v301, 7
    %v303 = vsub.s32 0, %v302
    %v304 = vrot.slane %v299, %v303
    %v306 = vmul.f32 %v298, %v304
    %v307 = vld [vmem:[#allocation12] sm:$0xff]
    %v308 = vld [vmem:[#allocation12 + $0x8] sm:$0xff]
    %v309 = vld [vmem:[#allocation12 + $0x10] sm:$0xff]
    %v310 = vld [vmem:[#allocation12 + $0x18] sm:$0xff]
    %v311 = vld [vmem:[#allocation12 + $0x20] sm:$0xff]
    %v312 = vld [vmem:[#allocation12 + $0x28] sm:$0xff]
    %v313 = vld [vmem:[#allocation12 + $0x30] sm:$0xff]
    %v314 = vld [vmem:[#allocation12 + $0x38] sm:$0xff]
    %v315 = vld [vmem:[#allocation12 + $0x40] sm:$0xff]
    %v316 = vld [vmem:[#allocation12 + $0x48] sm:$0xff]
    %v317 = vld [vmem:[#allocation12 + $0x50] sm:$0xff]
    %v318 = vld [vmem:[#allocation12 + $0x58] sm:$0xff]
    %v319 = vld [vmem:[#allocation12 + $0x60] sm:$0xff]
    %v320 = vld [vmem:[#allocation12 + $0x68] sm:$0xff]
    %v321 = vld [vmem:[#allocation12 + $0x70] sm:$0xff]
    %v322 = vld [vmem:[#allocation12 + $0x78] sm:$0xff]
    %v323 = vld [vmem:[#allocation12 + $0x80] sm:$0xff]
    %v324 = vld [vmem:[#allocation12 + $0x88] sm:$0xff]
    %v325 = vld [vmem:[#allocation12 + $0x90] sm:$0xff]
    %v326 = vld [vmem:[#allocation12 + $0x98] sm:$0xff]
    %v327 = vld [vmem:[#allocation12 + $0xa0] sm:$0xff]
    %v328 = vld [vmem:[#allocation12 + $0xa8] sm:$0xff]
    %v329 = vld [vmem:[#allocation12 + $0xb0] sm:$0xff]
    %v330 = vld [vmem:[#allocation12 + $0xb8] sm:$0xff]
    %v331 = vld [vmem:[#allocation12 + $0xc0] sm:$0xff]
    %v332 = vld [vmem:[#allocation12 + $0xc8] sm:$0xff]
    %v333 = vld [vmem:[#allocation12 + $0xd0] sm:$0xff]
    %v334 = vld [vmem:[#allocation12 + $0xd8] sm:$0xff]
    %v335 = vld [vmem:[#allocation12 + $0xe0] sm:$0xff]
    %v336 = vld [vmem:[#allocation12 + $0xe8] sm:$0xff]
    %v337 = vld [vmem:[#allocation12 + $0xf0] sm:$0xff]
    %v338 = vld [vmem:[#allocation12 + $0xf8] sm:$0xff]
    %v339 = vld [vmem:[#allocation12 + $0x100] sm:$0xff]
    %v340 = vld [vmem:[#allocation12 + $0x108] sm:$0xff]
    %v341 = vld [vmem:[#allocation12 + $0x110] sm:$0xff]
    %v342 = vld [vmem:[#allocation12 + $0x118] sm:$0xff]
    %v343 = vld [vmem:[#allocation12 + $0x120] sm:$0xff]
    %v344 = vld [vmem:[#allocation12 + $0x128] sm:$0xff]
    %v345 = vld [vmem:[#allocation12 + $0x130] sm:$0xff]
    %v346 = vld [vmem:[#allocation12 + $0x138] sm:$0xff]
    %v347 = vld [vmem:[#allocation12 + $0x140] sm:$0xff]
    %v348 = vld [vmem:[#allocation12 + $0x148] sm:$0xff]
    %v349 = vld [vmem:[#allocation12 + $0x150] sm:$0xff]
    %v350 = vld [vmem:[#allocation12 + $0x158] sm:$0xff]
    %v351 = vld [vmem:[#allocation12 + $0x160] sm:$0xff]
    %v352 = vld [vmem:[#allocation12 + $0x168] sm:$0xff]
    %v353 = vld [vmem:[#allocation12 + $0x170] sm:$0xff]
    %v354 = vld [vmem:[#allocation12 + $0x178] sm:$0xff]
    %v355 = vld [vmem:[#allocation12 + $0x180] sm:$0xff]
    %v356 = vld [vmem:[#allocation12 + $0x188] sm:$0xff]
    %v357 = vld [vmem:[#allocation12 + $0x190] sm:$0xff]
    %v358 = vld [vmem:[#allocation12 + $0x198] sm:$0xff]
    %v359 = vld [vmem:[#allocation12 + $0x1a0] sm:$0xff]
    %v360 = vld [vmem:[#allocation12 + $0x1a8] sm:$0xff]
    %v361 = vld [vmem:[#allocation12 + $0x1b0] sm:$0xff]
    %v362 = vld [vmem:[#allocation12 + $0x1b8] sm:$0xff]
    %v363 = vld [vmem:[#allocation12 + $0x1c0] sm:$0xff]
    %v364 = vld [vmem:[#allocation12 + $0x1c8] sm:$0xff]
    %v365 = vld [vmem:[#allocation12 + $0x1d0] sm:$0xff]
    %v366 = vld [vmem:[#allocation12 + $0x1d8] sm:$0xff]
    %v367 = vld [vmem:[#allocation12 + $0x1e0] sm:$0xff]
    %v368 = vld [vmem:[#allocation12 + $0x1e8] sm:$0xff]
    %v369 = vld [vmem:[#allocation12 + $0x1f0] sm:$0xff]
    %v370 = vld [vmem:[#allocation12 + $0x1f8] sm:$0xff]
    %371 = vmatprep.subr.mxu0 %v308
    %372 = vmatpush1.msra.mxu0 %v307
    %373 = vmatprep.subr.mxu0 %v312
    %374 = vmatpush1.msra.mxu0 %v311
    %375 = vmatprep.subr.mxu0 %v316
    %376 = vmatpush1.msra.mxu0 %v315
    %377 = vmatprep.subr.mxu0 %v320
    %378 = vmatpush1.msra.mxu0 %v319
    %379 = vmatprep.subr.mxu0 %v324
    %380 = vmatpush1.msra.mxu0 %v323
    %381 = vmatprep.subr.mxu0 %v328
    %382 = vmatpush1.msra.mxu0 %v327
    %383 = vmatprep.subr.mxu0 %v332
    %384 = vmatpush1.msra.mxu0 %v331
    %385 = vmatprep.subr.mxu0 %v336
    %386 = vmatpush1.msra.mxu0 %v335
    %387 = vmatprep.subr.mxu0 %v340
    %388 = vmatpush1.msra.mxu0 %v339
    %389 = vmatprep.subr.mxu0 %v344
    %390 = vmatpush1.msra.mxu0 %v343
    %391 = vmatprep.subr.mxu0 %v348
    %392 = vmatpush1.msra.mxu0 %v347
    %393 = vmatprep.subr.mxu0 %v352
    %394 = vmatpush1.msra.mxu0 %v351
    %395 = vmatprep.subr.mxu0 %v356
    %396 = vmatpush1.msra.mxu0 %v355
    %397 = vmatprep.subr.mxu0 %v360
    %398 = vmatpush1.msra.mxu0 %v359
    %399 = vmatprep.subr.mxu0 %v364
    %400 = vmatpush1.msra.mxu0 %v363
    %401 = vmatprep.subr.mxu0 %v368
    %402 = vmatpush1.msra.mxu0 %v367
    %403 = vmatprep.subr.mxu0 0.0
    %404 = vmatpush1.msra.mxu0 0.0
    %405 = vmatprep.subr.mxu0 0.0
    %406 = vmatpush1.msra.mxu0 0.0
    %407 = vmatprep.subr.mxu0 0.0
    %408 = vmatpush1.msra.mxu0 0.0
    %409 = vmatprep.subr.mxu0 0.0
    %410 = vmatpush1.msra.mxu0 0.0
    %411 = vmatprep.subr.mxu0 0.0
    %412 = vmatpush1.msra.mxu0 0.0
    %413 = vmatprep.subr.mxu0 0.0
    %414 = vmatpush1.msra.mxu0 0.0
    %415 = vmatprep.subr.mxu0 0.0
    %416 = vmatpush1.msra.mxu0 0.0
    %417 = vmatprep.subr.mxu0 0.0
    %418 = vmatpush1.msra.mxu0 0.0
    %419 = vmatprep.subr.mxu0 0.0
    %420 = vmatpush1.msra.mxu0 0.0
    %421 = vmatprep.subr.mxu0 0.0
    %422 = vmatpush1.msra.mxu0 0.0
    %423 = vmatprep.subr.mxu0 0.0
    %424 = vmatpush1.msra.mxu0 0.0
    %425 = vmatprep.subr.mxu0 0.0
    %426 = vmatpush1.msra.mxu0 0.0
    %427 = vmatprep.subr.mxu0 0.0
    %428 = vmatpush1.msra.mxu0 0.0
    %429 = vmatprep.subr.mxu0 0.0
    %430 = vmatpush1.msra.mxu0 0.0
    %431 = vmatprep.subr.mxu0 0.0
    %432 = vmatpush1.msra.mxu0 0.0
    %433 = vmatprep.subr.mxu0 0.0
    %434 = vmatpush1.msra.mxu0 0.0
    %435 = vmatprep.mubr.f32.mxu0 0.0
    %436 = vmatmul.mubr.f32.gmra.mrb[0].mxu0 %v306
    %v437 = vpop.f32.mrb[0].mxu0
    %v438 = vadd.f32 0.0, %v437
    %v439 = vpop.f32.mrb[0].mxu0
    %v440 = vadd.f32 0.0, %v439
    %441 = vdwg.mxu0
    %442 = vmatprep.subr.mxu0 %v310
    %443 = vmatpush1.msra.mxu0 %v309
    %444 = vmatprep.subr.mxu0 %v314
    %445 = vmatpush1.msra.mxu0 %v313
    %446 = vmatprep.subr.mxu0 %v318
    %447 = vmatpush1.msra.mxu0 %v317
    %448 = vmatprep.subr.mxu0 %v322
    %449 = vmatpush1.msra.mxu0 %v321
    %450 = vmatprep.subr.mxu0 %v326
    %451 = vmatpush1.msra.mxu0 %v325
    %452 = vmatprep.subr.mxu0 %v330
    %453 = vmatpush1.msra.mxu0 %v329
    %454 = vmatprep.subr.mxu0 %v334
    %455 = vmatpush1.msra.mxu0 %v333
    %456 = vmatprep.subr.mxu0 %v338
    %457 = vmatpush1.msra.mxu0 %v337
    %458 = vmatprep.subr.mxu0 %v342
    %459 = vmatpush1.msra.mxu0 %v341
    %460 = vmatprep.subr.mxu0 %v346
    %461 = vmatpush1.msra.mxu0 %v345
    %462 = vmatprep.subr.mxu0 %v350
    %463 = vmatpush1.msra.mxu0 %v349
    %464 = vmatprep.subr.mxu0 %v354
    %465 = vmatpush1.msra.mxu0 %v353
    %466 = vmatprep.subr.mxu0 %v358
    %467 = vmatpush1.msra.mxu0 %v357
    %468 = vmatprep.subr.mxu0 %v362
    %469 = vmatpush1.msra.mxu0 %v361
    %470 = vmatprep.subr.mxu0 %v366
    %471 = vmatpush1.msra.mxu0 %v365
    %472 = vmatprep.subr.mxu0 %v370
    %473 = vmatpush1.msra.mxu0 %v369
    %474 = vmatprep.subr.mxu0 0.0
    %475 = vmatpush1.msra.mxu0 0.0
    %476 = vmatprep.subr.mxu0 0.0
    %477 = vmatpush1.msra.mxu0 0.0
    %478 = vmatprep.subr.mxu0 0.0
    %479 = vmatpush1.msra.mxu0 0.0
    %480 = vmatprep.subr.mxu0 0.0
    %481 = vmatpush1.msra.mxu0 0.0
    %482 = vmatprep.subr.mxu0 0.0
    %483 = vmatpush1.msra.mxu0 0.0
    %484 = vmatprep.subr.mxu0 0.0
    %485 = vmatpush1.msra.mxu0 0.0
    %486 = vmatprep.subr.mxu0 0.0
    %487 = vmatpush1.msra.mxu0 0.0
    %488 = vmatprep.subr.mxu0 0.0
    %489 = vmatpush1.msra.mxu0 0.0
    %490 = vmatprep.subr.mxu0 0.0
    %491 = vmatpush1.msra.mxu0 0.0
    %492 = vmatprep.subr.mxu0 0.0
    %493 = vmatpush1.msra.mxu0 0.0
    %494 = vmatprep.subr.mxu0 0.0
    %495 = vmatpush1.msra.mxu0 0.0
    %496 = vmatprep.subr.mxu0 0.0
    %497 = vmatpush1.msra.mxu0 0.0
    %498 = vmatprep.subr.mxu0 0.0
    %499 = vmatpush1.msra.mxu0 0.0
    %500 = vmatprep.subr.mxu0 0.0
    %501 = vmatpush1.msra.mxu0 0.0
    %502 = vmatprep.subr.mxu0 0.0
    %503 = vmatpush1.msra.mxu0 0.0
    %504 = vmatprep.subr.mxu0 0.0
    %505 = vmatpush1.msra.mxu0 0.0
    %506 = vmatprep.mubr.f32.mxu0 0.0
    %507 = vmatmul.mubr.f32.gmra.mrb[0].mxu0 %v306
    %v508 = vpop.f32.mrb[0].mxu0
    %v509 = vadd.f32 0.0, %v508
    %v510 = vpop.f32.mrb[0].mxu0
    %v511 = vadd.f32 0.0, %v510
    %512 = vdwg.mxu0
    %v513 = vlaneseq
    %v514 = vshrl.u32 %v513, 7
    %s515 = scalar_lea.vmem [#allocation14], 3
    %v516 = vld [vmem:[%s515] ss:$4 sm:$0x3]
    %v518 = vlaneseq
    %v519 = vshrl.u32 %v518, 7
    %v520 = vsub.s32 0, %v519
    %v521 = vrot.slane %v516, %v520
    %v522 = vlaneseq
    %v523 = vshrl.u32 %v522, 7
    %v524 = vsub.s32 1, %v523
    %v525 = vrot.slane %v516, %v524
    %v528 = vmul.f32 %v438, %v521
    %v529 = vmul.f32 %v440, %v525
    %v530 = vrot.slane %v438, 7
    %v531 = vrot.slane %v440, 7
    %vm532 = vcmp.ge.s32.totalorder %v514, 1
    %v533 = vsel %vm532, %v530, 0.0
    %v534 = vsel %vm532, %v531, 0.0
    %s535 = scalar_lea.vmem [#allocation14], 2
    %v536 = vld [vmem:[%s535] ss:$4 sm:$0x3]
    %v538 = vlaneseq
    %v539 = vshrl.u32 %v538, 7
    %v540 = vsub.s32 0, %v539
    %v541 = vrot.slane %v536, %v540
    %v542 = vlaneseq
    %v543 = vshrl.u32 %v542, 7
    %v544 = vsub.s32 1, %v543
    %v545 = vrot.slane %v536, %v544
    %v548 = vmul.f32 %v533, %v541
    %v549 = vmul.f32 %v534, %v545
    %v550 = vadd.f32 %v528, %v548
    %v551 = vadd.f32 %v529, %v549
    %v552 = vrot.slane %v438, 6
    %v553 = vrot.slane %v440, 6
    %vm554 = vcmp.ge.s32.totalorder %v514, 2
    %v555 = vsel %vm554, %v552, 0.0
    %v556 = vsel %vm554, %v553, 0.0
    %s557 = scalar_lea.vmem [#allocation14], 1
    %v558 = vld [vmem:[%s557] ss:$4 sm:$0x3]
    %v560 = vlaneseq
    %v561 = vshrl.u32 %v560, 7
    %v562 = vsub.s32 0, %v561
    %v563 = vrot.slane %v558, %v562
    %v564 = vlaneseq
    %v565 = vshrl.u32 %v564, 7
    %v566 = vsub.s32 1, %v565
    %v567 = vrot.slane %v558, %v566
    %v570 = vmul.f32 %v555, %v563
    %v571 = vmul.f32 %v556, %v567
    %v572 = vadd.f32 %v550, %v570
    %v573 = vadd.f32 %v551, %v571
    %v574 = vrot.slane %v438, 5
    %v575 = vrot.slane %v440, 5
    %vm576 = vcmp.ge.s32.totalorder %v514, 3
    %v577 = vsel %vm576, %v574, 0.0
    %v578 = vsel %vm576, %v575, 0.0
    %v579 = vld [vmem:[#allocation14] ss:$4 sm:$0x3]
    %v581 = vlaneseq
    %v582 = vshrl.u32 %v581, 7
    %v583 = vsub.s32 0, %v582
    %v584 = vrot.slane %v579, %v583
    %v585 = vlaneseq
    %v586 = vshrl.u32 %v585, 7
    %v587 = vsub.s32 1, %v586
    %v588 = vrot.slane %v579, %v587
    %v591 = vmul.f32 %v577, %v584
    %v592 = vmul.f32 %v578, %v588
    %v593 = vadd.f32 %v572, %v591
    %v594 = vadd.f32 %v573, %v592
    %v595 = vld [vmem:[#allocation15] sm:$0x3]
    %v597 = vlaneseq
    %v598 = vshrl.u32 %v597, 7
    %v599 = vsub.s32 0, %v598
    %v600 = vrot.slane %v595, %v599
    %v601 = vlaneseq
    %v602 = vshrl.u32 %v601, 7
    %v603 = vsub.s32 1, %v602
    %v604 = vrot.slane %v595, %v603
    %v607 = vadd.f32 %v593, %v600
    %v608 = vadd.f32 %v594, %v604
    %v609 = vxor.u32 %v607, 2147483648
    %v610 = vxor.u32 %v608, 2147483648
    %v611 = vmul.f32 %v609, 1.442695
    %v612 = vpow.pop %v611
    %v613 = vmul.f32 %v610, 1.442695
    %v614 = vpow.pop %v613
    %v615 = vadd.f32 %v612, 1.0
    %v616 = vadd.f32 %v614, 1.0
    %v617 = vrcp.pop %v615
    %v618 = vmul.f32 1.0, %v617
    %v619 = vrcp.pop %v616
    %v620 = vmul.f32 1.0, %v619
    %v621 = vmul.f32 %v607, %v618
    %v622 = vmul.f32 %v608, %v620
    %v623 = vld [vmem:[#allocation18] sm:$0xff]
    %v624 = vld [vmem:[#allocation18 + $0x8] sm:$0xff]
    %v625 = vld [vmem:[#allocation18 + $0x10] sm:$0xff]
    %v626 = vld [vmem:[#allocation18 + $0x18] sm:$0xff]
    %v627 = vld [vmem:[#allocation18 + $0x20] sm:$0xff]
    %v628 = vld [vmem:[#allocation18 + $0x28] sm:$0xff]
    %v629 = vld [vmem:[#allocation18 + $0x30] sm:$0xff]
    %v630 = vld [vmem:[#allocation18 + $0x38] sm:$0xff]
    %v631 = vld [vmem:[#allocation18 + $0x40] sm:$0xff]
    %v632 = vld [vmem:[#allocation18 + $0x48] sm:$0xff]
    %v633 = vld [vmem:[#allocation18 + $0x50] sm:$0xff]
    %v634 = vld [vmem:[#allocation18 + $0x58] sm:$0xff]
    %v635 = vld [vmem:[#allocation18 + $0x60] sm:$0xff]
    %v636 = vld [vmem:[#allocation18 + $0x68] sm:$0xff]
    %v637 = vld [vmem:[#allocation18 + $0x70] sm:$0xff]
    %v638 = vld [vmem:[#allocation18 + $0x78] sm:$0xff]
    %v639 = vld [vmem:[#allocation18 + $0x80] sm:$0xff]
    %v640 = vld [vmem:[#allocation18 + $0x88] sm:$0xff]
    %v641 = vld [vmem:[#allocation18 + $0x90] sm:$0xff]
    %v642 = vld [vmem:[#allocation18 + $0x98] sm:$0xff]
    %v643 = vld [vmem:[#allocation18 + $0xa0] sm:$0xff]
    %v644 = vld [vmem:[#allocation18 + $0xa8] sm:$0xff]
    %v645 = vld [vmem:[#allocation18 + $0xb0] sm:$0xff]
    %v646 = vld [vmem:[#allocation18 + $0xb8] sm:$0xff]
    %v647 = vld [vmem:[#allocation18 + $0xc0] sm:$0xff]
    %v648 = vld [vmem:[#allocation18 + $0xc8] sm:$0xff]
    %v649 = vld [vmem:[#allocation18 + $0xd0] sm:$0xff]
    %v650 = vld [vmem:[#allocation18 + $0xd8] sm:$0xff]
    %v651 = vld [vmem:[#allocation18 + $0xe0] sm:$0xff]
    %v652 = vld [vmem:[#allocation18 + $0xe8] sm:$0xff]
    %v653 = vld [vmem:[#allocation18 + $0xf0] sm:$0xff]
    %v654 = vld [vmem:[#allocation18 + $0xf8] sm:$0xff]
    %v655 = vld [vmem:[#allocation18 + $0x100] sm:$0xff]
    %v656 = vld [vmem:[#allocation18 + $0x108] sm:$0xff]
    %v657 = vld [vmem:[#allocation18 + $0x110] sm:$0xff]
    %v658 = vld [vmem:[#allocation18 + $0x118] sm:$0xff]
    %v659 = vld [vmem:[#allocation18 + $0x120] sm:$0xff]
    %v660 = vld [vmem:[#allocation18 + $0x128] sm:$0xff]
    %v661 = vld [vmem:[#allocation18 + $0x130] sm:$0xff]
    %v662 = vld [vmem:[#allocation18 + $0x138] sm:$0xff]
    %v663 = vld [vmem:[#allocation18 + $0x140] sm:$0xff]
    %v664 = vld [vmem:[#allocation18 + $0x148] sm:$0xff]
    %v665 = vld [vmem:[#allocation18 + $0x150] sm:$0xff]
    %v666 = vld [vmem:[#allocation18 + $0x158] sm:$0xff]
    %v667 = vld [vmem:[#allocation18 + $0x160] sm:$0xff]
    %v668 = vld [vmem:[#allocation18 + $0x168] sm:$0xff]
    %v669 = vld [vmem:[#allocation18 + $0x170] sm:$0xff]
    %v670 = vld [vmem:[#allocation18 + $0x178] sm:$0xff]
    %v671 = vld [vmem:[#allocation18 + $0x180] sm:$0xff]
    %v672 = vld [vmem:[#allocation18 + $0x188] sm:$0xff]
    %v673 = vld [vmem:[#allocation18 + $0x190] sm:$0xff]
    %v674 = vld [vmem:[#allocation18 + $0x198] sm:$0xff]
    %v675 = vld [vmem:[#allocation18 + $0x1a0] sm:$0xff]
    %v676 = vld [vmem:[#allocation18 + $0x1a8] sm:$0xff]
    %v677 = vld [vmem:[#allocation18 + $0x1b0] sm:$0xff]
    %v678 = vld [vmem:[#allocation18 + $0x1b8] sm:$0xff]
    %v679 = vld [vmem:[#allocation18 + $0x1c0] sm:$0xff]
    %v680 = vld [vmem:[#allocation18 + $0x1c8] sm:$0xff]
    %v681 = vld [vmem:[#allocation18 + $0x1d0] sm:$0xff]
    %v682 = vld [vmem:[#allocation18 + $0x1d8] sm:$0xff]
    %v683 = vld [vmem:[#allocation18 + $0x1e0] sm:$0xff]
    %v684 = vld [vmem:[#allocation18 + $0x1e8] sm:$0xff]
    %v685 = vld [vmem:[#allocation18 + $0x1f0] sm:$0xff]
    %v686 = vld [vmem:[#allocation18 + $0x1f8] sm:$0xff]
    %v687 = vld [vmem:[#allocation20] sm:$0x3]
    %v689 = vlaneseq
    %v690 = vshrl.u32 %v689, 7
    %v691 = vsub.s32 0, %v690
    %v692 = vrot.slane %v687, %v691
    %v693 = vlaneseq
    %v694 = vshrl.u32 %v693, 7
    %v695 = vsub.s32 1, %v694
    %v696 = vrot.slane %v687, %v695
    %699 = vmatprep.subr.mxu0 %v624
    %700 = vmatpush1.msra.mxu0 %v623
    %701 = vmatprep.subr.mxu0 %v626
    %702 = vmatpush1.msra.mxu0 %v625
    %703 = vmatprep.subr.mxu0 %v628
    %704 = vmatpush1.msra.mxu0 %v627
    %705 = vmatprep.subr.mxu0 %v630
    %706 = vmatpush1.msra.mxu0 %v629
    %707 = vmatprep.subr.mxu0 %v632
    %708 = vmatpush1.msra.mxu0 %v631
    %709 = vmatprep.subr.mxu0 %v634
    %710 = vmatpush1.msra.mxu0 %v633
    %711 = vmatprep.subr.mxu0 %v636
    %712 = vmatpush1.msra.mxu0 %v635
    %713 = vmatprep.subr.mxu0 %v638
    %714 = vmatpush1.msra.mxu0 %v637
    %715 = vmatprep.subr.mxu0 %v640
    %716 = vmatpush1.msra.mxu0 %v639
    %717 = vmatprep.subr.mxu0 %v642
    %718 = vmatpush1.msra.mxu0 %v641
    %719 = vmatprep.subr.mxu0 %v644
    %720 = vmatpush1.msra.mxu0 %v643
    %721 = vmatprep.subr.mxu0 %v646
    %722 = vmatpush1.msra.mxu0 %v645
    %723 = vmatprep.subr.mxu0 %v648
    %724 = vmatpush1.msra.mxu0 %v647
    %725 = vmatprep.subr.mxu0 %v650
    %726 = vmatpush1.msra.mxu0 %v649
    %727 = vmatprep.subr.mxu0 %v652
    %728 = vmatpush1.msra.mxu0 %v651
    %729 = vmatprep.subr.mxu0 %v654
    %730 = vmatpush1.msra.mxu0 %v653
    %731 = vmatprep.subr.mxu0 %v656
    %732 = vmatpush1.msra.mxu0 %v655
    %733 = vmatprep.subr.mxu0 %v658
    %734 = vmatpush1.msra.mxu0 %v657
    %735 = vmatprep.subr.mxu0 %v660
    %736 = vmatpush1.msra.mxu0 %v659
    %737 = vmatprep.subr.mxu0 %v662
    %738 = vmatpush1.msra.mxu0 %v661
    %739 = vmatprep.subr.mxu0 %v664
    %740 = vmatpush1.msra.mxu0 %v663
    %741 = vmatprep.subr.mxu0 %v666
    %742 = vmatpush1.msra.mxu0 %v665
    %743 = vmatprep.subr.mxu0 %v668
    %744 = vmatpush1.msra.mxu0 %v667
    %745 = vmatprep.subr.mxu0 %v670
    %746 = vmatpush1.msra.mxu0 %v669
    %747 = vmatprep.subr.mxu0 %v672
    %748 = vmatpush1.msra.mxu0 %v671
    %749 = vmatprep.subr.mxu0 %v674
    %750 = vmatpush1.msra.mxu0 %v673
    %751 = vmatprep.subr.mxu0 %v676
    %752 = vmatpush1.msra.mxu0 %v675
    %753 = vmatprep.subr.mxu0 %v678
    %754 = vmatpush1.msra.mxu0 %v677
    %755 = vmatprep.subr.mxu0 %v680
    %756 = vmatpush1.msra.mxu0 %v679
    %757 = vmatprep.subr.mxu0 %v682
    %758 = vmatpush1.msra.mxu0 %v681
    %759 = vmatprep.subr.mxu0 %v684
    %760 = vmatpush1.msra.mxu0 %v683
    %761 = vmatprep.subr.mxu0 %v686
    %762 = vmatpush1.msra.mxu0 %v685
    %763 = vmatprep.mubr.f32.mxu0 %v622
    %764 = vmatmul.mubr.f32.gmra.mrb[0].mxu0 %v621
    %v765 = vpop.f32.mrb[0].mxu0
    %v766 = vadd.f32 %v692, %v765
    %v767 = vpop.f32.mrb[0].mxu0
    %v768 = vadd.f32 %v696, %v767
    %769 = vdwg.mxu0
    %vm770 = vcmp.gt.f32.partialorder %v766, 20.0
    %vm771 = vcmp.gt.f32.partialorder %v768, 20.0
    %v772 = vmin.f32 %v766, 20.0
    %v773 = vmin.f32 %v768, 20.0
    %v774 = vmul.f32 %v772, 1.442695
    %v775 = vpow.pop %v774
    %v776 = vmul.f32 %v773, 1.442695
    %v777 = vpow.pop %v776
    %v778 = vadd.f32 %v775, 1.0
    %v779 = vlog2.pop %v778
    %v780 = vmul.f32 %v779, 0.6931472
    %v781 = vmul.f32 -0.5, %v775
    %v782 = vadd.f32 %v781, 1.0
    %v783 = vmul.f32 %v782, %v775
    %v784 = vand.u32 2147483647, %v775
    %vm785 = vcmp.lt.f32.partialorder %v784, 0.0004427343
    %v786 = vsel %vm785, %v783, %v780
    %v787 = vadd.f32 %v777, 1.0
    %v788 = vlog2.pop %v787
    %v789 = vmul.f32 %v788, 0.6931472
    %v790 = vmul.f32 -0.5, %v777
    %v791 = vadd.f32 %v790, 1.0
    %v792 = vmul.f32 %v791, %v777
    %v793 = vand.u32 2147483647, %v777
    %vm794 = vcmp.lt.f32.partialorder %v793, 0.0004427343
    %v795 = vsel %vm794, %v792, %v789
    %v796 = vsel %vm770, %v766, %v786
    %v797 = vsel %vm771, %v768, %v795
    %v798 = vld [vmem:[#allocation17] sm:$0xff]
    %v799 = vld [vmem:[#allocation17 + $0x8] sm:$0xff]
    %v800 = vld [vmem:[#allocation17 + $0x10] sm:$0xff]
    %v801 = vld [vmem:[#allocation17 + $0x18] sm:$0xff]
    %v802 = vld [vmem:[#allocation17 + $0x20] sm:$0xff]
    %v803 = vld [vmem:[#allocation17 + $0x28] sm:$0xff]
    %v804 = vld [vmem:[#allocation17 + $0x30] sm:$0xff]
    %v805 = vld [vmem:[#allocation17 + $0x38] sm:$0xff]
    %v806 = vld [vmem:[#allocation17 + $0x40] sm:$0xff]
    %v807 = vld [vmem:[#allocation17 + $0x48] sm:$0xff]
    %v808 = vld [vmem:[#allocation17 + $0x50] sm:$0xff]
    %v809 = vld [vmem:[#allocation17 + $0x58] sm:$0xff]
    %v810 = vld [vmem:[#allocation17 + $0x60] sm:$0xff]
    %v811 = vld [vmem:[#allocation17 + $0x68] sm:$0xff]
    %v812 = vld [vmem:[#allocation17 + $0x70] sm:$0xff]
    %v813 = vld [vmem:[#allocation17 + $0x78] sm:$0xff]
    %v814 = vld [vmem:[#allocation17 + $0x80] sm:$0xff]
    %v815 = vld [vmem:[#allocation17 + $0x88] sm:$0xff]
    %v816 = vld [vmem:[#allocation17 + $0x90] sm:$0xff]
    %v817 = vld [vmem:[#allocation17 + $0x98] sm:$0xff]
    %v818 = vld [vmem:[#allocation17 + $0xa0] sm:$0xff]
    %v819 = vld [vmem:[#allocation17 + $0xa8] sm:$0xff]
    %v820 = vld [vmem:[#allocation17 + $0xb0] sm:$0xff]
    %v821 = vld [vmem:[#allocation17 + $0xb8] sm:$0xff]
    %v822 = vld [vmem:[#allocation17 + $0xc0] sm:$0xff]
    %v823 = vld [vmem:[#allocation17 + $0xc8] sm:$0xff]
    %v824 = vld [vmem:[#allocation17 + $0xd0] sm:$0xff]
    %v825 = vld [vmem:[#allocation17 + $0xd8] sm:$0xff]
    %v826 = vld [vmem:[#allocation17 + $0xe0] sm:$0xff]
    %v827 = vld [vmem:[#allocation17 + $0xe8] sm:$0xff]
    %v828 = vld [vmem:[#allocation17 + $0xf0] sm:$0xff]
    %v829 = vld [vmem:[#allocation17 + $0xf8] sm:$0xff]
    %830 = vmatprep.subr.mxu0 0.0
    %831 = vmatpush1.msra.mxu0 %v798
    %832 = vmatprep.subr.mxu0 0.0
    %833 = vmatpush1.msra.mxu0 %v799
    %834 = vmatprep.subr.mxu0 0.0
    %835 = vmatpush1.msra.mxu0 %v800
    %836 = vmatprep.subr.mxu0 0.0
    %837 = vmatpush1.msra.mxu0 %v801
    %838 = vmatprep.subr.mxu0 0.0
    %839 = vmatpush1.msra.mxu0 %v802
    %840 = vmatprep.subr.mxu0 0.0
    %841 = vmatpush1.msra.mxu0 %v803
    %842 = vmatprep.subr.mxu0 0.0
    %843 = vmatpush1.msra.mxu0 %v804
    %844 = vmatprep.subr.mxu0 0.0
    %845 = vmatpush1.msra.mxu0 %v805
    %846 = vmatprep.subr.mxu0 0.0
    %847 = vmatpush1.msra.mxu0 %v806
    %848 = vmatprep.subr.mxu0 0.0
    %849 = vmatpush1.msra.mxu0 %v807
    %850 = vmatprep.subr.mxu0 0.0
    %851 = vmatpush1.msra.mxu0 %v808
    %852 = vmatprep.subr.mxu0 0.0
    %853 = vmatpush1.msra.mxu0 %v809
    %854 = vmatprep.subr.mxu0 0.0
    %855 = vmatpush1.msra.mxu0 %v810
    %856 = vmatprep.subr.mxu0 0.0
    %857 = vmatpush1.msra.mxu0 %v811
    %858 = vmatprep.subr.mxu0 0.0
    %859 = vmatpush1.msra.mxu0 %v812
    %860 = vmatprep.subr.mxu0 0.0
    %861 = vmatpush1.msra.mxu0 %v813
    %862 = vmatprep.subr.mxu0 0.0
    %863 = vmatpush1.msra.mxu0 %v814
    %864 = vmatprep.subr.mxu0 0.0
    %865 = vmatpush1.msra.mxu0 %v815
    %866 = vmatprep.subr.mxu0 0.0
    %867 = vmatpush1.msra.mxu0 %v816
    %868 = vmatprep.subr.mxu0 0.0
    %869 = vmatpush1.msra.mxu0 %v817
    %870 = vmatprep.subr.mxu0 0.0
    %871 = vmatpush1.msra.mxu0 %v818
    %872 = vmatprep.subr.mxu0 0.0
    %873 = vmatpush1.msra.mxu0 %v819
    %874 = vmatprep.subr.mxu0 0.0
    %875 = vmatpush1.msra.mxu0 %v820
    %876 = vmatprep.subr.mxu0 0.0
    %877 = vmatpush1.msra.mxu0 %v821
    %878 = vmatprep.subr.mxu0 0.0
    %879 = vmatpush1.msra.mxu0 %v822
    %880 = vmatprep.subr.mxu0 0.0
    %881 = vmatpush1.msra.mxu0 %v823
    %882 = vmatprep.subr.mxu0 0.0
    %883 = vmatpush1.msra.mxu0 %v824
    %884 = vmatprep.subr.mxu0 0.0
    %885 = vmatpush1.msra.mxu0 %v825
    %886 = vmatprep.subr.mxu0 0.0
    %887 = vmatpush1.msra.mxu0 %v826
    %888 = vmatprep.subr.mxu0 0.0
    %889 = vmatpush1.msra.mxu0 %v827
    %890 = vmatprep.subr.mxu0 0.0
    %891 = vmatpush1.msra.mxu0 %v828
    %892 = vmatprep.subr.mxu0 0.0
    %893 = vmatpush1.msra.mxu0 %v829
    %894 = vmatprep.mubr.f32.mxu0 %v622
    %895 = vmatmul.mubr.f32.gmra.mrb[0].mxu0 %v621
    %v896 = vpop.f32.mrb[0].mxu0
    %v897 = vadd.f32 0.0, %v896
    %v898 = vpop.f32.mrb[0].mxu0
    %899 = vdwg.mxu0
    %v900 = vmul.f32 %v796, %v621
    %v901 = vmul.f32 %v797, %v622
    %v904 = vcombine.low %v796, %v797
    %v905 = vcombine.high %v796, %v797
    %v907 = vunpack.c.l.s4 1966171168
    %v908 = vunpack.c.0.s8 %v907
    %v909 = vlaneseq
    %v910 = vshrl.u32 %v909, 7
    %v911 = vsub.s32 %v908, %v910
    %v912 = vrot.slane %v904, %v911
    %v914 = vunpack.c.l.s4 1966171168
    %v915 = vunpack.c.0.s8 %v914
    %v916 = vlaneseq
    %v917 = vshrl.u32 %v916, 7
    %v918 = vsub.s32 %v915, %v917
    %v919 = vrot.slane %v905, %v918
    %v920 = vcombine.high %v912, %v912
    %v921 = vcombine.high %v919, %v919
    %v923 = vunpack.c.l.s4 1966171168
    %v924 = vunpack.c.0.s8 %v923
    %v925 = vlaneseq
    %v926 = vshrl.u32 %v925, 7
    %v927 = vsub.s32 %v924, %v926
    %v928 = vrot.slane %v912, %v927
    %v930 = vunpack.c.l.s4 1966171168
    %v931 = vunpack.c.0.s8 %v930
    %v932 = vlaneseq
    %v933 = vshrl.u32 %v932, 7
    %v934 = vsub.s32 %v931, %v933
    %v935 = vrot.slane %v919, %v934
    %v937 = vunpack.c.l.s4 1966171168
    %v938 = vunpack.c.0.s8 %v937
    %v939 = vlaneseq
    %v940 = vshrl.u32 %v939, 7
    %v941 = vsub.s32 %v938, %v940
    %v942 = vrot.slane %v920, %v941
    %v944 = vunpack.c.l.s4 1966171168
    %v945 = vunpack.c.0.s8 %v944
    %v946 = vlaneseq
    %v947 = vshrl.u32 %v946, 7
    %v948 = vsub.s32 %v945, %v947
    %v949 = vrot.slane %v921, %v948
    %v950 = vcombine.high %v928, %v928
    %v951 = vcombine.high %v935, %v935
    %v952 = vcombine.high %v942, %v942
    %v953 = vcombine.high %v949, %v949
    %v954 = vld [vmem:[#allocation21] sm:$0xff]
    %v955 = vld [vmem:[#allocation21 + $0x8] sm:$0xff]
    %v956 = vld [vmem:[#allocation21 + $0x10] sm:$0xff]
    %v957 = vld [vmem:[#allocation21 + $0x18] sm:$0xff]
    %v958 = vlaneseq
    %v959 = vshrl.u32 %v958, 7
    %v960 = vsub.s32 0, %v959
    %v961 = vrot.slane %v928, %v960
    %v962 = vlaneseq
    %v963 = vshrl.u32 %v962, 7
    %v964 = vsub.s32 1, %v963
    %v965 = vrot.slane %v928, %v964
    %v966 = vlaneseq
    %v967 = vshrl.u32 %v966, 7
    %v968 = vsub.s32 0, %v967
    %v969 = vrot.slane %v942, %v968
    %v970 = vlaneseq
    %v971 = vshrl.u32 %v970, 7
    %v972 = vsub.s32 1, %v971
    %v973 = vrot.slane %v942, %v972
    %v974 = vlaneseq
    %v975 = vshrl.u32 %v974, 7
    %v976 = vsub.s32 0, %v975
    %v977 = vrot.slane %v950, %v976
    %v978 = vlaneseq
    %v979 = vshrl.u32 %v978, 7
    %v980 = vsub.s32 1, %v979
    %v981 = vrot.slane %v950, %v980
    %v982 = vlaneseq
    %v983 = vshrl.u32 %v982, 7
    %v984 = vsub.s32 0, %v983
    %v985 = vrot.slane %v952, %v984
    %v986 = vlaneseq
    %v987 = vshrl.u32 %v986, 7
    %v988 = vsub.s32 1, %v987
    %v989 = vrot.slane %v952, %v988
    %v990 = vlaneseq
    %v991 = vshrl.u32 %v990, 7
    %v992 = vsub.s32 0, %v991
    %v993 = vrot.slane %v935, %v992
    %v994 = vlaneseq
    %v995 = vshrl.u32 %v994, 7
    %v996 = vsub.s32 1, %v995
    %v997 = vrot.slane %v935, %v996
    %v998 = vlaneseq
    %v999 = vshrl.u32 %v998, 7
    %v1000 = vsub.s32 0, %v999
    %v1001 = vrot.slane %v949, %v1000
    %v1002 = vlaneseq
    %v1003 = vshrl.u32 %v1002, 7
    %v1004 = vsub.s32 1, %v1003
    %v1005 = vrot.slane %v949, %v1004
    %v1006 = vlaneseq
    %v1007 = vshrl.u32 %v1006, 7
    %v1008 = vsub.s32 0, %v1007
    %v1009 = vrot.slane %v951, %v1008
    %v1010 = vlaneseq
    %v1011 = vshrl.u32 %v1010, 7
    %v1012 = vsub.s32 1, %v1011
    %v1013 = vrot.slane %v951, %v1012
    %v1014 = vlaneseq
    %v1015 = vshrl.u32 %v1014, 7
    %v1016 = vsub.s32 0, %v1015
    %v1017 = vrot.slane %v953, %v1016
    %v1018 = vlaneseq
    %v1019 = vshrl.u32 %v1018, 7
    %v1020 = vsub.s32 1, %v1019
    %v1021 = vrot.slane %v953, %v1020
    %v1038 = vmul.f32 %v961, %v954
    %v1039 = vmul.f32 %v965, %v955
    %v1040 = vmul.f32 %v961, %v956
    %v1041 = vmul.f32 %v965, %v957
    %v1042 = vmul.f32 %v969, %v954
    %v1043 = vmul.f32 %v973, %v955
    %v1044 = vmul.f32 %v969, %v956
    %v1045 = vmul.f32 %v973, %v957
    %v1046 = vmul.f32 %v977, %v954
    %v1047 = vmul.f32 %v981, %v955
    %v1048 = vmul.f32 %v977, %v956
    %v1049 = vmul.f32 %v981, %v957
    %v1050 = vmul.f32 %v985, %v954
    %v1051 = vmul.f32 %v989, %v955
    %v1052 = vmul.f32 %v985, %v956
    %v1053 = vmul.f32 %v989, %v957
    %v1054 = vmul.f32 %v993, %v954
    %v1055 = vmul.f32 %v997, %v955
    %v1056 = vmul.f32 %v993, %v956
    %v1057 = vmul.f32 %v997, %v957
    %v1058 = vmul.f32 %v1001, %v954
    %v1059 = vmul.f32 %v1005, %v955
    %v1060 = vmul.f32 %v1001, %v956
    %v1061 = vmul.f32 %v1005, %v957
    %v1062 = vmul.f32 %v1009, %v954
    %v1063 = vmul.f32 %v1013, %v955
    %v1064 = vmul.f32 %v1009, %v956
    %v1065 = vmul.f32 %v1013, %v957
    %v1066 = vmul.f32 %v1017, %v954
    %v1067 = vmul.f32 %v1021, %v955
    %v1068 = vmul.f32 %v1017, %v956
    %v1069 = vmul.f32 %v1021, %v957
    %v1070 = vmul.f32 %v1038, 1.442695
    %v1071 = vpow.pop %v1070
    %v1072 = vmul.f32 %v1039, 1.442695
    %v1073 = vpow.pop %v1072
    %v1074 = vmul.f32 %v1040, 1.442695
    %v1075 = vpow.pop %v1074
    %v1076 = vmul.f32 %v1041, 1.442695
    %v1077 = vpow.pop %v1076
    %v1078 = vmul.f32 %v1042, 1.442695
    %v1079 = vpow.pop %v1078
    %v1080 = vmul.f32 %v1043, 1.442695
    %v1081 = vpow.pop %v1080
    %v1082 = vmul.f32 %v1044, 1.442695
    %v1083 = vpow.pop %v1082
    %v1084 = vmul.f32 %v1045, 1.442695
    %v1085 = vpow.pop %v1084
    %v1086 = vmul.f32 %v1046, 1.442695
    %v1087 = vpow.pop %v1086
    %v1088 = vmul.f32 %v1047, 1.442695
    %v1089 = vpow.pop %v1088
    %v1090 = vmul.f32 %v1048, 1.442695
    %v1091 = vpow.pop %v1090
    %v1092 = vmul.f32 %v1049, 1.442695
    %v1093 = vpow.pop %v1092
    %v1094 = vmul.f32 %v1050, 1.442695
    %v1095 = vpow.pop %v1094
    %v1096 = vmul.f32 %v1051, 1.442695
    %v1097 = vpow.pop %v1096
    %v1098 = vmul.f32 %v1052, 1.442695
    %v1099 = vpow.pop %v1098
    %v1100 = vmul.f32 %v1053, 1.442695
    %v1101 = vpow.pop %v1100
    %v1102 = vmul.f32 %v1054, 1.442695
    %v1103 = vpow.pop %v1102
    %v1104 = vmul.f32 %v1055, 1.442695
    %v1105 = vpow.pop %v1104
    %v1106 = vmul.f32 %v1056, 1.442695
    %v1107 = vpow.pop %v1106
    %v1108 = vmul.f32 %v1057, 1.442695
    %v1109 = vpow.pop %v1108
    %v1110 = vmul.f32 %v1058, 1.442695
    %v1111 = vpow.pop %v1110
    %v1112 = vmul.f32 %v1059, 1.442695
    %v1113 = vpow.pop %v1112
    %v1114 = vmul.f32 %v1060, 1.442695
    %v1115 = vpow.pop %v1114
    %v1116 = vmul.f32 %v1061, 1.442695
    %v1117 = vpow.pop %v1116
    %v1118 = vmul.f32 %v1062, 1.442695
    %v1119 = vpow.pop %v1118
    %v1120 = vmul.f32 %v1063, 1.442695
    %v1121 = vpow.pop %v1120
    %v1122 = vmul.f32 %v1064, 1.442695
    %v1123 = vpow.pop %v1122
    %v1124 = vmul.f32 %v1065, 1.442695
    %v1125 = vpow.pop %v1124
    %v1126 = vmul.f32 %v1066, 1.442695
    %v1127 = vpow.pop %v1126
    %v1128 = vmul.f32 %v1067, 1.442695
    %v1129 = vpow.pop %v1128
    %v1130 = vmul.f32 %v1068, 1.442695
    %v1131 = vpow.pop %v1130
    %v1132 = vmul.f32 %v1069, 1.442695
    %v1133 = vpow.pop %v1132
    %1134 = vst [vmem:[#allocation2] sm:$0xff] %v1071
    %1135 = vst [vmem:[#allocation2 + $0x8] sm:$0xff] %v1073
    %1136 = vst [vmem:[#allocation2 + $0x10] sm:$0xff] %v1075
    %1137 = vst [vmem:[#allocation2 + $0x18] sm:$0xff] %v1077
    %1138 = vst [vmem:[#allocation2 + $0x20] sm:$0xff] %v1079
    %1139 = vst [vmem:[#allocation2 + $0x28] sm:$0xff] %v1081
    %1140 = vst [vmem:[#allocation2 + $0x30] sm:$0xff] %v1083
    %1141 = vst [vmem:[#allocation2 + $0x38] sm:$0xff] %v1085
    %1142 = vst [vmem:[#allocation2 + $0x40] sm:$0xff] %v1087
    %1143 = vst [vmem:[#allocation2 + $0x48] sm:$0xff] %v1089
    %1144 = vst [vmem:[#allocation2 + $0x50] sm:$0xff] %v1091
    %1145 = vst [vmem:[#allocation2 + $0x58] sm:$0xff] %v1093
    %1146 = vst [vmem:[#allocation2 + $0x60] sm:$0xff] %v1095
    %1147 = vst [vmem:[#allocation2 + $0x68] sm:$0xff] %v1097
    %1148 = vst [vmem:[#allocation2 + $0x70] sm:$0xff] %v1099
    %1149 = vst [vmem:[#allocation2 + $0x78] sm:$0xff] %v1101
    %1150 = vst [vmem:[#allocation2 + $0x80] sm:$0xff] %v1103
    %1151 = vst [vmem:[#allocation2 + $0x88] sm:$0xff] %v1105
    %1152 = vst [vmem:[#allocation2 + $0x90] sm:$0xff] %v1107
    %1153 = vst [vmem:[#allocation2 + $0x98] sm:$0xff] %v1109
    %1154 = vst [vmem:[#allocation2 + $0xa0] sm:$0xff] %v1111
    %1155 = vst [vmem:[#allocation2 + $0xa8] sm:$0xff] %v1113
    %1156 = vst [vmem:[#allocation2 + $0xb0] sm:$0xff] %v1115
    %1157 = vst [vmem:[#allocation2 + $0xb8] sm:$0xff] %v1117
    %1158 = vst [vmem:[#allocation2 + $0xc0] sm:$0xff] %v1119
    %1159 = vst [vmem:[#allocation2 + $0xc8] sm:$0xff] %v1121
    %1160 = vst [vmem:[#allocation2 + $0xd0] sm:$0xff] %v1123
    %1161 = vst [vmem:[#allocation2 + $0xd8] sm:$0xff] %v1125
    %1162 = vst [vmem:[#allocation2 + $0xe0] sm:$0xff] %v1127
    %1163 = vst [vmem:[#allocation2 + $0xe8] sm:$0xff] %v1129
    %1164 = vst [vmem:[#allocation2 + $0xf0] sm:$0xff] %v1131
    %1165 = vst [vmem:[#allocation2 + $0xf8] sm:$0xff] %v1133
    %v1166 = vld [vmem:[#allocation26] sm:$0xff]
    %v1167 = vld [vmem:[#allocation26 + $0x8] sm:$0xff]
    %v1168 = vld [vmem:[#allocation26 + $0x10] sm:$0xff]
    %v1169 = vld [vmem:[#allocation26 + $0x18] sm:$0xff]
    %v1170 = vld [vmem:[#allocation26 + $0x20] sm:$0xff]
    %v1171 = vld [vmem:[#allocation26 + $0x28] sm:$0xff]
    %v1172 = vld [vmem:[#allocation26 + $0x30] sm:$0xff]
    %v1173 = vld [vmem:[#allocation26 + $0x38] sm:$0xff]
    %v1174 = vld [vmem:[#allocation26 + $0x40] sm:$0xff]
    %v1175 = vld [vmem:[#allocation26 + $0x48] sm:$0xff]
    %v1176 = vld [vmem:[#allocation26 + $0x50] sm:$0xff]
    %v1177 = vld [vmem:[#allocation26 + $0x58] sm:$0xff]
    %v1178 = vld [vmem:[#allocation26 + $0x60] sm:$0xff]
    %v1179 = vld [vmem:[#allocation26 + $0x68] sm:$0xff]
    %v1180 = vld [vmem:[#allocation26 + $0x70] sm:$0xff]
    %v1181 = vld [vmem:[#allocation26 + $0x78] sm:$0xff]
    %v1182 = vld [vmem:[#allocation26 + $0x80] sm:$0xff]
    %v1183 = vld [vmem:[#allocation26 + $0x88] sm:$0xff]
    %v1184 = vld [vmem:[#allocation26 + $0x90] sm:$0xff]
    %v1185 = vld [vmem:[#allocation26 + $0x98] sm:$0xff]
    %v1186 = vld [vmem:[#allocation26 + $0xa0] sm:$0xff]
    %v1187 = vld [vmem:[#allocation26 + $0xa8] sm:$0xff]
    %v1188 = vld [vmem:[#allocation26 + $0xb0] sm:$0xff]
    %v1189 = vld [vmem:[#allocation26 + $0xb8] sm:$0xff]
    %v1190 = vld [vmem:[#allocation26 + $0xc0] sm:$0xff]
    %v1191 = vld [vmem:[#allocation26 + $0xc8] sm:$0xff]
    %v1192 = vld [vmem:[#allocation26 + $0xd0] sm:$0xff]
    %v1193 = vld [vmem:[#allocation26 + $0xd8] sm:$0xff]
    %v1194 = vld [vmem:[#allocation26 + $0xe0] sm:$0xff]
    %v1195 = vld [vmem:[#allocation26 + $0xe8] sm:$0xff]
    %v1196 = vld [vmem:[#allocation26 + $0xf0] sm:$0xff]
    %v1197 = vld [vmem:[#allocation26 + $0xf8] sm:$0xff]
    %v1198 = vld [vmem:[#allocation26 + $0x100] sm:$0xff]
    %v1199 = vld [vmem:[#allocation26 + $0x108] sm:$0xff]
    %v1200 = vld [vmem:[#allocation26 + $0x110] sm:$0xff]
    %v1201 = vld [vmem:[#allocation26 + $0x118] sm:$0xff]
    %v1202 = vld [vmem:[#allocation26 + $0x120] sm:$0xff]
    %v1203 = vld [vmem:[#allocation26 + $0x128] sm:$0xff]
    %v1204 = vld [vmem:[#allocation26 + $0x130] sm:$0xff]
    %v1205 = vld [vmem:[#allocation26 + $0x138] sm:$0xff]
    %v1206 = vld [vmem:[#allocation26 + $0x140] sm:$0xff]
    %v1207 = vld [vmem:[#allocation26 + $0x148] sm:$0xff]
    %v1208 = vld [vmem:[#allocation26 + $0x150] sm:$0xff]
    %v1209 = vld [vmem:[#allocation26 + $0x158] sm:$0xff]
    %v1210 = vld [vmem:[#allocation26 + $0x160] sm:$0xff]
    %v1211 = vld [vmem:[#allocation26 + $0x168] sm:$0xff]
    %v1212 = vld [vmem:[#allocation26 + $0x170] sm:$0xff]
    %v1213 = vld [vmem:[#allocation26 + $0x178] sm:$0xff]
    %v1214 = vld [vmem:[#allocation26 + $0x180] sm:$0xff]
    %v1215 = vld [vmem:[#allocation26 + $0x188] sm:$0xff]
    %v1216 = vld [vmem:[#allocation26 + $0x190] sm:$0xff]
    %v1217 = vld [vmem:[#allocation26 + $0x198] sm:$0xff]
    %v1218 = vld [vmem:[#allocation26 + $0x1a0] sm:$0xff]
    %v1219 = vld [vmem:[#allocation26 + $0x1a8] sm:$0xff]
    %v1220 = vld [vmem:[#allocation26 + $0x1b0] sm:$0xff]
    %v1221 = vld [vmem:[#allocation26 + $0x1b8] sm:$0xff]
    %v1222 = vld [vmem:[#allocation26 + $0x1c0] sm:$0xff]
    %v1223 = vld [vmem:[#allocation26 + $0x1c8] sm:$0xff]
    %v1224 = vld [vmem:[#allocation26 + $0x1d0] sm:$0xff]
    %v1225 = vld [vmem:[#allocation26 + $0x1d8] sm:$0xff]
    %v1226 = vld [vmem:[#allocation26 + $0x1e0] sm:$0xff]
    %v1227 = vld [vmem:[#allocation26 + $0x1e8] sm:$0xff]
    %v1228 = vld [vmem:[#allocation26 + $0x1f0] sm:$0xff]
    %v1229 = vld [vmem:[#allocation26 + $0x1f8] sm:$0xff]
    %1230 = vmatprep.subr.mxu0 %v1167
    %1231 = vmatpush1.msra.mxu0 %v1166
    %1232 = vmatprep.subr.mxu0 %v1171
    %1233 = vmatpush1.msra.mxu0 %v1170
    %1234 = vmatprep.subr.mxu0 %v1175
    %1235 = vmatpush1.msra.mxu0 %v1174
    %1236 = vmatprep.subr.mxu0 %v1179
    %1237 = vmatpush1.msra.mxu0 %v1178
    %1238 = vmatprep.subr.mxu0 %v1183
    %1239 = vmatpush1.msra.mxu0 %v1182
    %1240 = vmatprep.subr.mxu0 %v1187
    %1241 = vmatpush1.msra.mxu0 %v1186
    %1242 = vmatprep.subr.mxu0 %v1191
    %1243 = vmatpush1.msra.mxu0 %v1190
    %1244 = vmatprep.subr.mxu0 %v1195
    %1245 = vmatpush1.msra.mxu0 %v1194
    %1246 = vmatprep.subr.mxu0 %v1199
    %1247 = vmatpush1.msra.mxu0 %v1198
    %1248 = vmatprep.subr.mxu0 %v1203
    %1249 = vmatpush1.msra.mxu0 %v1202
    %1250 = vmatprep.subr.mxu0 %v1207
    %1251 = vmatpush1.msra.mxu0 %v1206
    %1252 = vmatprep.subr.mxu0 %v1211
    %1253 = vmatpush1.msra.mxu0 %v1210
    %1254 = vmatprep.subr.mxu0 %v1215
    %1255 = vmatpush1.msra.mxu0 %v1214
    %1256 = vmatprep.subr.mxu0 %v1219
    %1257 = vmatpush1.msra.mxu0 %v1218
    %1258 = vmatprep.subr.mxu0 %v1223
    %1259 = vmatpush1.msra.mxu0 %v1222
    %1260 = vmatprep.subr.mxu0 %v1227
    %1261 = vmatpush1.msra.mxu0 %v1226
    %1262 = vmatprep.subr.mxu0 0.0
    %1263 = vmatpush1.msra.mxu0 0.0
    %1264 = vmatprep.subr.mxu0 0.0
    %1265 = vmatpush1.msra.mxu0 0.0
    %1266 = vmatprep.subr.mxu0 0.0
    %1267 = vmatpush1.msra.mxu0 0.0
    %1268 = vmatprep.subr.mxu0 0.0
    %1269 = vmatpush1.msra.mxu0 0.0
    %1270 = vmatprep.subr.mxu0 0.0
    %1271 = vmatpush1.msra.mxu0 0.0
    %1272 = vmatprep.subr.mxu0 0.0
    %1273 = vmatpush1.msra.mxu0 0.0
    %1274 = vmatprep.subr.mxu0 0.0
    %1275 = vmatpush1.msra.mxu0 0.0
    %1276 = vmatprep.subr.mxu0 0.0
    %1277 = vmatpush1.msra.mxu0 0.0
    %1278 = vmatprep.subr.mxu0 0.0
    %1279 = vmatpush1.msra.mxu0 0.0
    %1280 = vmatprep.subr.mxu0 0.0
    %1281 = vmatpush1.msra.mxu0 0.0
    %1282 = vmatprep.subr.mxu0 0.0
    %1283 = vmatpush1.msra.mxu0 0.0
    %1284 = vmatprep.subr.mxu0 0.0
    %1285 = vmatpush1.msra.mxu0 0.0
    %1286 = vmatprep.subr.mxu0 0.0
    %1287 = vmatpush1.msra.mxu0 0.0
    %1288 = vmatprep.subr.mxu0 0.0
    %1289 = vmatpush1.msra.mxu0 0.0
    %1290 = vmatprep.subr.mxu0 0.0
    %1291 = vmatpush1.msra.mxu0 0.0
    %1292 = vmatprep.subr.mxu0 0.0
    %1293 = vmatpush1.msra.mxu0 0.0
    %1294 = vmatprep.mubr.f32.mxu0 0.0
    %1295 = vmatmul.mubr.f32.gmra.mrb[0].mxu0 %v897
    %v1296 = vpop.f32.mrb[0].mxu0
    %v1297 = vadd.f32 0.0, %v1296
    %v1298 = vpop.f32.mrb[0].mxu0
    %v1299 = vadd.f32 0.0, %v1298
    %1300 = vdwg.mxu0
    %1301 = vmatprep.subr.mxu0 %v1169
    %1302 = vmatpush1.msra.mxu0 %v1168
    %1303 = vmatprep.subr.mxu0 %v1173
    %1304 = vmatpush1.msra.mxu0 %v1172
    %1305 = vmatprep.subr.mxu0 %v1177
    %1306 = vmatpush1.msra.mxu0 %v1176
    %1307 = vmatprep.subr.mxu0 %v1181
    %1308 = vmatpush1.msra.mxu0 %v1180
    %1309 = vmatprep.subr.mxu0 %v1185
    %1310 = vmatpush1.msra.mxu0 %v1184
    %1311 = vmatprep.subr.mxu0 %v1189
    %1312 = vmatpush1.msra.mxu0 %v1188
    %1313 = vmatprep.subr.mxu0 %v1193
    %1314 = vmatpush1.msra.mxu0 %v1192
    %1315 = vmatprep.subr.mxu0 %v1197
    %1316 = vmatpush1.msra.mxu0 %v1196
    %1317 = vmatprep.subr.mxu0 %v1201
    %1318 = vmatpush1.msra.mxu0 %v1200
    %1319 = vmatprep.subr.mxu0 %v1205
    %1320 = vmatpush1.msra.mxu0 %v1204
    %1321 = vmatprep.subr.mxu0 %v1209
    %1322 = vmatpush1.msra.mxu0 %v1208
    %1323 = vmatprep.subr.mxu0 %v1213
    %1324 = vmatpush1.msra.mxu0 %v1212
    %1325 = vmatprep.subr.mxu0 %v1217
    %1326 = vmatpush1.msra.mxu0 %v1216
    %1327 = vmatprep.subr.mxu0 %v1221
    %1328 = vmatpush1.msra.mxu0 %v1220
    %1329 = vmatprep.subr.mxu0 %v1225
    %1330 = vmatpush1.msra.mxu0 %v1224
    %1331 = vmatprep.subr.mxu0 %v1229
    %1332 = vmatpush1.msra.mxu0 %v1228
    %1333 = vmatprep.subr.mxu0 0.0
    %1334 = vmatpush1.msra.mxu0 0.0
    %1335 = vmatprep.subr.mxu0 0.0
    %1336 = vmatpush1.msra.mxu0 0.0
    %1337 = vmatprep.subr.mxu0 0.0
    %1338 = vmatpush1.msra.mxu0 0.0
    %1339 = vmatprep.subr.mxu0 0.0
    %1340 = vmatpush1.msra.mxu0 0.0
    %1341 = vmatprep.subr.mxu0 0.0
    %1342 = vmatpush1.msra.mxu0 0.0
    %1343 = vmatprep.subr.mxu0 0.0
    %1344 = vmatpush1.msra.mxu0 0.0
    %1345 = vmatprep.subr.mxu0 0.0
    %1346 = vmatpush1.msra.mxu0 0.0
    %1347 = vmatprep.subr.mxu0 0.0
    %1348 = vmatpush1.msra.mxu0 0.0
    %1349 = vmatprep.subr.mxu0 0.0
    %1350 = vmatpush1.msra.mxu0 0.0
    %1351 = vmatprep.subr.mxu0 0.0
    %1352 = vmatpush1.msra.mxu0 0.0
    %1353 = vmatprep.subr.mxu0 0.0
    %1354 = vmatpush1.msra.mxu0 0.0
    %1355 = vmatprep.subr.mxu0 0.0
    %1356 = vmatpush1.msra.mxu0 0.0
    %1357 = vmatprep.subr.mxu0 0.0
    %1358 = vmatpush1.msra.mxu0 0.0
    %1359 = vmatprep.subr.mxu0 0.0
    %1360 = vmatpush1.msra.mxu0 0.0
    %1361 = vmatprep.subr.mxu0 0.0
    %1362 = vmatpush1.msra.mxu0 0.0
    %1363 = vmatprep.subr.mxu0 0.0
    %1364 = vmatpush1.msra.mxu0 0.0
    %1365 = vmatprep.mubr.f32.mxu0 0.0
    %1366 = vmatmul.mubr.f32.gmra.mrb[0].mxu0 %v897
    %v1367 = vpop.f32.mrb[0].mxu0
    %v1368 = vadd.f32 0.0, %v1367
    %v1369 = vpop.f32.mrb[0].mxu0
    %v1370 = vadd.f32 0.0, %v1369
    %1371 = vdwg.mxu0
    %v1372 = vmul.f32 %v1297, %v900
    %v1373 = vmul.f32 %v1299, %v901
    %v1376 = vcombine.low %v1372, %v1373
    %v1377 = vcombine.high %v1372, %v1373
    %v1379 = vunpack.c.l.s4 1966171168
    %v1380 = vunpack.c.0.s8 %v1379
    %v1381 = vlaneseq
    %v1382 = vshrl.u32 %v1381, 7
    %v1383 = vsub.s32 %v1380, %v1382
    %v1384 = vrot.slane %v1376, %v1383
    %v1386 = vunpack.c.l.s4 1966171168
    %v1387 = vunpack.c.0.s8 %v1386
    %v1388 = vlaneseq
    %v1389 = vshrl.u32 %v1388, 7
    %v1390 = vsub.s32 %v1387, %v1389
    %v1391 = vrot.slane %v1377, %v1390
    %v1392 = vcombine.high %v1384, %v1384
    %v1393 = vcombine.high %v1391, %v1391
    %v1395 = vunpack.c.l.s4 1966171168
    %v1396 = vunpack.c.0.s8 %v1395
    %v1397 = vlaneseq
    %v1398 = vshrl.u32 %v1397, 7
    %v1399 = vsub.s32 %v1396, %v1398
    %v1400 = vrot.slane %v1384, %v1399
    %v1402 = vunpack.c.l.s4 1966171168
    %v1403 = vunpack.c.0.s8 %v1402
    %v1404 = vlaneseq
    %v1405 = vshrl.u32 %v1404, 7
    %v1406 = vsub.s32 %v1403, %v1405
    %v1407 = vrot.slane %v1391, %v1406
    %v1409 = vunpack.c.l.s4 1966171168
    %v1410 = vunpack.c.0.s8 %v1409
    %v1411 = vlaneseq
    %v1412 = vshrl.u32 %v1411, 7
    %v1413 = vsub.s32 %v1410, %v1412
    %v1414 = vrot.slane %v1392, %v1413
    %v1416 = vunpack.c.l.s4 1966171168
    %v1417 = vunpack.c.0.s8 %v1416
    %v1418 = vlaneseq
    %v1419 = vshrl.u32 %v1418, 7
    %v1420 = vsub.s32 %v1417, %v1419
    %v1421 = vrot.slane %v1393, %v1420
    %v1422 = vcombine.high %v1400, %v1400
    %v1423 = vcombine.high %v1407, %v1407
    %v1424 = vcombine.high %v1414, %v1414
    %v1425 = vcombine.high %v1421, %v1421
    %v1434 = vlaneseq
    %vm1435 = vcmp.ge.s32.totalorder %v1434, 0
    %vm1436 = vcmp.lt.s32.totalorder %v1434, 256
    %vm1437 = vmand %vm1435, %vm1436
    %1438 = vst.msk [vmem:[#allocation3] ss:$8 sm:$0x3] %vm1437, %v1400
    %1439 = vst.msk [vmem:[#allocation3] ss:$8 sm:$0x0] %vm1437, %v1400
    %s1440 = scalar_lea.vmem [#allocation3], 32
    %1441 = vst.msk [vmem:[%s1440] ss:$8 sm:$0x3] %vm1437, %v1414
    %1442 = vst.msk [vmem:[%s1440] ss:$8 sm:$0x0] %vm1437, %v1414
    %s1443 = scalar_lea.vmem [#allocation3], 64
    %1444 = vst.msk [vmem:[%s1443] ss:$8 sm:$0x3] %vm1437, %v1422
    %1445 = vst.msk [vmem:[%s1443] ss:$8 sm:$0x0] %vm1437, %v1422
    %s1446 = scalar_lea.vmem [#allocation3], 96
    %1447 = vst.msk [vmem:[%s1446] ss:$8 sm:$0x3] %vm1437, %v1424
    %1448 = vst.msk [vmem:[%s1446] ss:$8 sm:$0x0] %vm1437, %v1424
    %s1449 = scalar_lea.vmem [#allocation3], 128
    %1450 = vst.msk [vmem:[%s1449] ss:$8 sm:$0x3] %vm1437, %v1407
    %1451 = vst.msk [vmem:[%s1449] ss:$8 sm:$0x0] %vm1437, %v1407
    %s1452 = scalar_lea.vmem [#allocation3], 160
    %1453 = vst.msk [vmem:[%s1452] ss:$8 sm:$0x3] %vm1437, %v1421
    %1454 = vst.msk [vmem:[%s1452] ss:$8 sm:$0x0] %vm1437, %v1421
    %s1455 = scalar_lea.vmem [#allocation3], 192
    %1456 = vst.msk [vmem:[%s1455] ss:$8 sm:$0x3] %vm1437, %v1423
    %1457 = vst.msk [vmem:[%s1455] ss:$8 sm:$0x0] %vm1437, %v1423
    %s1458 = scalar_lea.vmem [#allocation3], 224
    %1459 = vst.msk [vmem:[%s1458] ss:$8 sm:$0x3] %vm1437, %v1425
    %1460 = vst.msk [vmem:[%s1458] ss:$8 sm:$0x0] %vm1437, %v1425
    %v1463 = vcombine.low %v1368, %v1370
    %v1464 = vcombine.high %v1368, %v1370
    %v1466 = vunpack.c.l.s4 1966171168
    %v1467 = vunpack.c.0.s8 %v1466
    %v1468 = vlaneseq
    %v1469 = vshrl.u32 %v1468, 7
    %v1470 = vsub.s32 %v1467, %v1469
    %v1471 = vrot.slane %v1463, %v1470
    %v1473 = vunpack.c.l.s4 1966171168
    %v1474 = vunpack.c.0.s8 %v1473
    %v1475 = vlaneseq
    %v1476 = vshrl.u32 %v1475, 7
    %v1477 = vsub.s32 %v1474, %v1476
    %v1478 = vrot.slane %v1464, %v1477
    %v1479 = vcombine.high %v1471, %v1471
    %v1480 = vcombine.high %v1478, %v1478
    %v1482 = vunpack.c.l.s4 1966171168
    %v1483 = vunpack.c.0.s8 %v1482
    %v1484 = vlaneseq
    %v1485 = vshrl.u32 %v1484, 7
    %v1486 = vsub.s32 %v1483, %v1485
    %v1487 = vrot.slane %v1471, %v1486
    %v1489 = vunpack.c.l.s4 1966171168
    %v1490 = vunpack.c.0.s8 %v1489
    %v1491 = vlaneseq
    %v1492 = vshrl.u32 %v1491, 7
    %v1493 = vsub.s32 %v1490, %v1492
    %v1494 = vrot.slane %v1478, %v1493
    %v1496 = vunpack.c.l.s4 1966171168
    %v1497 = vunpack.c.0.s8 %v1496
    %v1498 = vlaneseq
    %v1499 = vshrl.u32 %v1498, 7
    %v1500 = vsub.s32 %v1497, %v1499
    %v1501 = vrot.slane %v1479, %v1500
    %v1503 = vunpack.c.l.s4 1966171168
    %v1504 = vunpack.c.0.s8 %v1503
    %v1505 = vlaneseq
    %v1506 = vshrl.u32 %v1505, 7
    %v1507 = vsub.s32 %v1504, %v1506
    %v1508 = vrot.slane %v1480, %v1507
    %v1509 = vcombine.high %v1487, %v1487
    %v1510 = vcombine.high %v1494, %v1494
    %v1511 = vcombine.high %v1501, %v1501
    %v1512 = vcombine.high %v1508, %v1508
    %1521 = vst.msk [vmem:[#allocation4] ss:$8 sm:$0x3] %vm1437, %v1487
    %1522 = vst.msk [vmem:[#allocation4] ss:$8 sm:$0x0] %vm1437, %v1487
    %s1523 = scalar_lea.vmem [#allocation4], 32
    %1524 = vst.msk [vmem:[%s1523] ss:$8 sm:$0x3] %vm1437, %v1501
    %1525 = vst.msk [vmem:[%s1523] ss:$8 sm:$0x0] %vm1437, %v1501
    %s1526 = scalar_lea.vmem [#allocation4], 64
    %1527 = vst.msk [vmem:[%s1526] ss:$8 sm:$0x3] %vm1437, %v1509
    %1528 = vst.msk [vmem:[%s1526] ss:$8 sm:$0x0] %vm1437, %v1509
    %s1529 = scalar_lea.vmem [#allocation4], 96
    %1530 = vst.msk [vmem:[%s1529] ss:$8 sm:$0x3] %vm1437, %v1511
    %1531 = vst.msk [vmem:[%s1529] ss:$8 sm:$0x0] %vm1437, %v1511
    %s1532 = scalar_lea.vmem [#allocation4], 128
    %1533 = vst.msk [vmem:[%s1532] ss:$8 sm:$0x3] %vm1437, %v1494
    %1534 = vst.msk [vmem:[%s1532] ss:$8 sm:$0x0] %vm1437, %v1494
    %s1535 = scalar_lea.vmem [#allocation4], 160
    %1536 = vst.msk [vmem:[%s1535] ss:$8 sm:$0x3] %vm1437, %v1508
    %1537 = vst.msk [vmem:[%s1535] ss:$8 sm:$0x0] %vm1437, %v1508
    %s1538 = scalar_lea.vmem [#allocation4], 192
    %1539 = vst.msk [vmem:[%s1538] ss:$8 sm:$0x3] %vm1437, %v1510
    %1540 = vst.msk [vmem:[%s1538] ss:$8 sm:$0x0] %vm1437, %v1510
    %s1541 = scalar_lea.vmem [#allocation4], 224
    %1542 = vst.msk [vmem:[%s1541] ss:$8 sm:$0x3] %vm1437, %v1512
    %1543 = vst.msk [vmem:[%s1541] ss:$8 sm:$0x0] %vm1437, %v1512
    %s1544 = scalar_lea.vmem [#allocation26], 512
    %v1545 = vld [vmem:[%s1544] sm:$0xff]
    %v1546 = vld [vmem:[%s1544 + $0x8] sm:$0xff]
    %v1547 = vld [vmem:[%s1544 + $0x10] sm:$0xff]
    %v1548 = vld [vmem:[%s1544 + $0x18] sm:$0xff]
    %v1549 = vld [vmem:[%s1544 + $0x20] sm:$0xff]
    %v1550 = vld [vmem:[%s1544 + $0x28] sm:$0xff]
    %v1551 = vld [vmem:[%s1544 + $0x30] sm:$0xff]
    %v1552 = vld [vmem:[%s1544 + $0x38] sm:$0xff]
    %v1553 = vld [vmem:[%s1544 + $0x40] sm:$0xff]
    %v1554 = vld [vmem:[%s1544 + $0x48] sm:$0xff]
    %v1555 = vld [vmem:[%s1544 + $0x50] sm:$0xff]
    %v1556 = vld [vmem:[%s1544 + $0x58] sm:$0xff]
    %v1557 = vld [vmem:[%s1544 + $0x60] sm:$0xff]
    %v1558 = vld [vmem:[%s1544 + $0x68] sm:$0xff]
    %v1559 = vld [vmem:[%s1544 + $0x70] sm:$0xff]
    %v1560 = vld [vmem:[%s1544 + $0x78] sm:$0xff]
    %v1561 = vld [vmem:[%s1544 + $0x80] sm:$0xff]
    %v1562 = vld [vmem:[%s1544 + $0x88] sm:$0xff]
    %v1563 = vld [vmem:[%s1544 + $0x90] sm:$0xff]
    %v1564 = vld [vmem:[%s1544 + $0x98] sm:$0xff]
    %v1565 = vld [vmem:[%s1544 + $0xa0] sm:$0xff]
    %v1566 = vld [vmem:[%s1544 + $0xa8] sm:$0xff]
    %v1567 = vld [vmem:[%s1544 + $0xb0] sm:$0xff]
    %v1568 = vld [vmem:[%s1544 + $0xb8] sm:$0xff]
    %v1569 = vld [vmem:[%s1544 + $0xc0] sm:$0xff]
    %v1570 = vld [vmem:[%s1544 + $0xc8] sm:$0xff]
    %v1571 = vld [vmem:[%s1544 + $0xd0] sm:$0xff]
    %v1572 = vld [vmem:[%s1544 + $0xd8] sm:$0xff]
    %v1573 = vld [vmem:[%s1544 + $0xe0] sm:$0xff]
    %v1574 = vld [vmem:[%s1544 + $0xe8] sm:$0xff]
    %v1575 = vld [vmem:[%s1544 + $0xf0] sm:$0xff]
    %v1576 = vld [vmem:[%s1544 + $0xf8] sm:$0xff]
    %v1577 = vld [vmem:[%s1544 + $0x100] sm:$0xff]
    %v1578 = vld [vmem:[%s1544 + $0x108] sm:$0xff]
    %v1579 = vld [vmem:[%s1544 + $0x110] sm:$0xff]
    %v1580 = vld [vmem:[%s1544 + $0x118] sm:$0xff]
    %v1581 = vld [vmem:[%s1544 + $0x120] sm:$0xff]
    %v1582 = vld [vmem:[%s1544 + $0x128] sm:$0xff]
    %v1583 = vld [vmem:[%s1544 + $0x130] sm:$0xff]
    %v1584 = vld [vmem:[%s1544 + $0x138] sm:$0xff]
    %v1585 = vld [vmem:[%s1544 + $0x140] sm:$0xff]
    %v1586 = vld [vmem:[%s1544 + $0x148] sm:$0xff]
    %v1587 = vld [vmem:[%s1544 + $0x150] sm:$0xff]
    %v1588 = vld [vmem:[%s1544 + $0x158] sm:$0xff]
    %v1589 = vld [vmem:[%s1544 + $0x160] sm:$0xff]
    %v1590 = vld [vmem:[%s1544 + $0x168] sm:$0xff]
    %v1591 = vld [vmem:[%s1544 + $0x170] sm:$0xff]
    %v1592 = vld [vmem:[%s1544 + $0x178] sm:$0xff]
    %v1593 = vld [vmem:[%s1544 + $0x180] sm:$0xff]
    %v1594 = vld [vmem:[%s1544 + $0x188] sm:$0xff]
    %v1595 = vld [vmem:[%s1544 + $0x190] sm:$0xff]
    %v1596 = vld [vmem:[%s1544 + $0x198] sm:$0xff]
    %v1597 = vld [vmem:[%s1544 + $0x1a0] sm:$0xff]
    %v1598 = vld [vmem:[%s1544 + $0x1a8] sm:$0xff]
    %v1599 = vld [vmem:[%s1544 + $0x1b0] sm:$0xff]
    %v1600 = vld [vmem:[%s1544 + $0x1b8] sm:$0xff]
    %v1601 = vld [vmem:[%s1544 + $0x1c0] sm:$0xff]
    %v1602 = vld [vmem:[%s1544 + $0x1c8] sm:$0xff]
    %v1603 = vld [vmem:[%s1544 + $0x1d0] sm:$0xff]
    %v1604 = vld [vmem:[%s1544 + $0x1d8] sm:$0xff]
    %v1605 = vld [vmem:[%s1544 + $0x1e0] sm:$0xff]
    %v1606 = vld [vmem:[%s1544 + $0x1e8] sm:$0xff]
    %v1607 = vld [vmem:[%s1544 + $0x1f0] sm:$0xff]
    %v1608 = vld [vmem:[%s1544 + $0x1f8] sm:$0xff]
    %1609 = vmatprep.subr.mxu0 %v1546
    %1610 = vmatpush1.msra.mxu0 %v1545
    %1611 = vmatprep.subr.mxu0 %v1550
    %1612 = vmatpush1.msra.mxu0 %v1549
    %1613 = vmatprep.subr.mxu0 %v1554
    %1614 = vmatpush1.msra.mxu0 %v1553
    %1615 = vmatprep.subr.mxu0 %v1558
    %1616 = vmatpush1.msra.mxu0 %v1557
    %1617 = vmatprep.subr.mxu0 %v1562
    %1618 = vmatpush1.msra.mxu0 %v1561
    %1619 = vmatprep.subr.mxu0 %v1566
    %1620 = vmatpush1.msra.mxu0 %v1565
    %1621 = vmatprep.subr.mxu0 %v1570
    %1622 = vmatpush1.msra.mxu0 %v1569
    %1623 = vmatprep.subr.mxu0 %v1574
    %1624 = vmatpush1.msra.mxu0 %v1573
    %1625 = vmatprep.subr.mxu0 %v1578
    %1626 = vmatpush1.msra.mxu0 %v1577
    %1627 = vmatprep.subr.mxu0 %v1582
    %1628 = vmatpush1.msra.mxu0 %v1581
    %1629 = vmatprep.subr.mxu0 %v1586
    %1630 = vmatpush1.msra.mxu0 %v1585
    %1631 = vmatprep.subr.mxu0 %v1590
    %1632 = vmatpush1.msra.mxu0 %v1589
    %1633 = vmatprep.subr.mxu0 %v1594
    %1634 = vmatpush1.msra.mxu0 %v1593
    %1635 = vmatprep.subr.mxu0 %v1598
    %1636 = vmatpush1.msra.mxu0 %v1597
    %1637 = vmatprep.subr.mxu0 %v1602
    %1638 = vmatpush1.msra.mxu0 %v1601
    %1639 = vmatprep.subr.mxu0 %v1606
    %1640 = vmatpush1.msra.mxu0 %v1605
    %1641 = vmatprep.subr.mxu0 0.0
    %1642 = vmatpush1.msra.mxu0 0.0
    %1643 = vmatprep.subr.mxu0 0.0
    %1644 = vmatpush1.msra.mxu0 0.0
    %1645 = vmatprep.subr.mxu0 0.0
    %1646 = vmatpush1.msra.mxu0 0.0
    %1647 = vmatprep.subr.mxu0 0.0
    %1648 = vmatpush1.msra.mxu0 0.0
    %1649 = vmatprep.subr.mxu0 0.0
    %1650 = vmatpush1.msra.mxu0 0.0
    %1651 = vmatprep.subr.mxu0 0.0
    %1652 = vmatpush1.msra.mxu0 0.0
    %1653 = vmatprep.subr.mxu0 0.0
    %1654 = vmatpush1.msra.mxu0 0.0
    %1655 = vmatprep.subr.mxu0 0.0
    %1656 = vmatpush1.msra.mxu0 0.0
    %1657 = vmatprep.subr.mxu0 0.0
    %1658 = vmatpush1.msra.mxu0 0.0
    %1659 = vmatprep.subr.mxu0 0.0
    %1660 = vmatpush1.msra.mxu0 0.0
    %1661 = vmatprep.subr.mxu0 0.0
    %1662 = vmatpush1.msra.mxu0 0.0
    %1663 = vmatprep.subr.mxu0 0.0
    %1664 = vmatpush1.msra.mxu0 0.0
    %1665 = vmatprep.subr.mxu0 0.0
    %1666 = vmatpush1.msra.mxu0 0.0
    %1667 = vmatprep.subr.mxu0 0.0
    %1668 = vmatpush1.msra.mxu0 0.0
    %1669 = vmatprep.subr.mxu0 0.0
    %1670 = vmatpush1.msra.mxu0 0.0
    %1671 = vmatprep.subr.mxu0 0.0
    %1672 = vmatpush1.msra.mxu0 0.0
    %1673 = vmatprep.mubr.f32.mxu0 0.0
    %1674 = vmatmul.mubr.f32.gmra.mrb[0].mxu0 %v897
    %v1675 = vpop.f32.mrb[0].mxu0
    %v1676 = vadd.f32 0.0, %v1675
    %v1677 = vpop.f32.mrb[0].mxu0
    %v1678 = vadd.f32 0.0, %v1677
    %1679 = vdwg.mxu0
    %1680 = vmatprep.subr.mxu0 %v1548
    %1681 = vmatpush1.msra.mxu0 %v1547
    %1682 = vmatprep.subr.mxu0 %v1552
    %1683 = vmatpush1.msra.mxu0 %v1551
    %1684 = vmatprep.subr.mxu0 %v1556
    %1685 = vmatpush1.msra.mxu0 %v1555
    %1686 = vmatprep.subr.mxu0 %v1560
    %1687 = vmatpush1.msra.mxu0 %v1559
    %1688 = vmatprep.subr.mxu0 %v1564
    %1689 = vmatpush1.msra.mxu0 %v1563
    %1690 = vmatprep.subr.mxu0 %v1568
    %1691 = vmatpush1.msra.mxu0 %v1567
    %1692 = vmatprep.subr.mxu0 %v1572
    %1693 = vmatpush1.msra.mxu0 %v1571
    %1694 = vmatprep.subr.mxu0 %v1576
    %1695 = vmatpush1.msra.mxu0 %v1575
    %1696 = vmatprep.subr.mxu0 %v1580
    %1697 = vmatpush1.msra.mxu0 %v1579
    %1698 = vmatprep.subr.mxu0 %v1584
    %1699 = vmatpush1.msra.mxu0 %v1583
    %1700 = vmatprep.subr.mxu0 %v1588
    %1701 = vmatpush1.msra.mxu0 %v1587
    %1702 = vmatprep.subr.mxu0 %v1592
    %1703 = vmatpush1.msra.mxu0 %v1591
    %1704 = vmatprep.subr.mxu0 %v1596
    %1705 = vmatpush1.msra.mxu0 %v1595
    %1706 = vmatprep.subr.mxu0 %v1600
    %1707 = vmatpush1.msra.mxu0 %v1599
    %1708 = vmatprep.subr.mxu0 %v1604
    %1709 = vmatpush1.msra.mxu0 %v1603
    %1710 = vmatprep.subr.mxu0 %v1608
    %1711 = vmatpush1.msra.mxu0 %v1607
    %1712 = vmatprep.subr.mxu0 0.0
    %1713 = vmatpush1.msra.mxu0 0.0
    %1714 = vmatprep.subr.mxu0 0.0
    %1715 = vmatpush1.msra.mxu0 0.0
    %1716 = vmatprep.subr.mxu0 0.0
    %1717 = vmatpush1.msra.mxu0 0.0
    %1718 = vmatprep.subr.mxu0 0.0
    %1719 = vmatpush1.msra.mxu0 0.0
    %1720 = vmatprep.subr.mxu0 0.0
    %1721 = vmatpush1.msra.mxu0 0.0
    %1722 = vmatprep.subr.mxu0 0.0
    %1723 = vmatpush1.msra.mxu0 0.0
    %1724 = vmatprep.subr.mxu0 0.0
    %1725 = vmatpush1.msra.mxu0 0.0
    %1726 = vmatprep.subr.mxu0 0.0
    %1727 = vmatpush1.msra.mxu0 0.0
    %1728 = vmatprep.subr.mxu0 0.0
    %1729 = vmatpush1.msra.mxu0 0.0
    %1730 = vmatprep.subr.mxu0 0.0
    %1731 = vmatpush1.msra.mxu0 0.0
    %1732 = vmatprep.subr.mxu0 0.0
    %1733 = vmatpush1.msra.mxu0 0.0
    %1734 = vmatprep.subr.mxu0 0.0
    %1735 = vmatpush1.msra.mxu0 0.0
    %1736 = vmatprep.subr.mxu0 0.0
    %1737 = vmatpush1.msra.mxu0 0.0
    %1738 = vmatprep.subr.mxu0 0.0
    %1739 = vmatpush1.msra.mxu0 0.0
    %1740 = vmatprep.subr.mxu0 0.0
    %1741 = vmatpush1.msra.mxu0 0.0
    %1742 = vmatprep.subr.mxu0 0.0
    %1743 = vmatpush1.msra.mxu0 0.0
    %1744 = vmatprep.mubr.f32.mxu0 0.0
    %1745 = vmatmul.mubr.f32.gmra.mrb[0].mxu0 %v897
    %v1746 = vpop.f32.mrb[0].mxu0
    %v1747 = vadd.f32 0.0, %v1746
    %v1748 = vpop.f32.mrb[0].mxu0
    %v1749 = vadd.f32 0.0, %v1748
    %1750 = vdwg.mxu0
    %v1751 = vmul.f32 %v1676, %v900
    %v1752 = vmul.f32 %v1678, %v901
    %v1755 = vcombine.low %v1751, %v1752
    %v1756 = vcombine.high %v1751, %v1752
    %v1758 = vunpack.c.l.s4 1966171168
    %v1759 = vunpack.c.0.s8 %v1758
    %v1760 = vlaneseq
    %v1761 = vshrl.u32 %v1760, 7
    %v1762 = vsub.s32 %v1759, %v1761
    %v1763 = vrot.slane %v1755, %v1762
    %v1765 = vunpack.c.l.s4 1966171168
    %v1766 = vunpack.c.0.s8 %v1765
    %v1767 = vlaneseq
    %v1768 = vshrl.u32 %v1767, 7
    %v1769 = vsub.s32 %v1766, %v1768
    %v1770 = vrot.slane %v1756, %v1769
    %v1771 = vcombine.high %v1763, %v1763
    %v1772 = vcombine.high %v1770, %v1770
    %v1774 = vunpack.c.l.s4 1966171168
    %v1775 = vunpack.c.0.s8 %v1774
    %v1776 = vlaneseq
    %v1777 = vshrl.u32 %v1776, 7
    %v1778 = vsub.s32 %v1775, %v1777
    %v1779 = vrot.slane %v1763, %v1778
    %v1781 = vunpack.c.l.s4 1966171168
    %v1782 = vunpack.c.0.s8 %v1781
    %v1783 = vlaneseq
    %v1784 = vshrl.u32 %v1783, 7
    %v1785 = vsub.s32 %v1782, %v1784
    %v1786 = vrot.slane %v1770, %v1785
    %v1788 = vunpack.c.l.s4 1966171168
    %v1789 = vunpack.c.0.s8 %v1788
    %v1790 = vlaneseq
    %v1791 = vshrl.u32 %v1790, 7
    %v1792 = vsub.s32 %v1789, %v1791
    %v1793 = vrot.slane %v1771, %v1792
    %v1795 = vunpack.c.l.s4 1966171168
    %v1796 = vunpack.c.0.s8 %v1795
    %v1797 = vlaneseq
    %v1798 = vshrl.u32 %v1797, 7
    %v1799 = vsub.s32 %v1796, %v1798
    %v1800 = vrot.slane %v1772, %v1799
    %v1801 = vcombine.high %v1779, %v1779
    %v1802 = vcombine.high %v1786, %v1786
    %v1803 = vcombine.high %v1793, %v1793
    %v1804 = vcombine.high %v1800, %v1800
    %s1813 = scalar_lea.vmem [#allocation3], 1
    %1814 = vst.msk [vmem:[%s1813] ss:$8 sm:$0x3] %vm1437, %v1779
    %1815 = vst.msk [vmem:[%s1813] ss:$8 sm:$0x0] %vm1437, %v1779
    %s1816 = scalar_lea.vmem [#allocation3], 33
    %1817 = vst.msk [vmem:[%s1816] ss:$8 sm:$0x3] %vm1437, %v1793
    %1818 = vst.msk [vmem:[%s1816] ss:$8 sm:$0x0] %vm1437, %v1793
    %s1819 = scalar_lea.vmem [#allocation3], 65
    %1820 = vst.msk [vmem:[%s1819] ss:$8 sm:$0x3] %vm1437, %v1801
    %1821 = vst.msk [vmem:[%s1819] ss:$8 sm:$0x0] %vm1437, %v1801
    %s1822 = scalar_lea.vmem [#allocation3], 97
    %1823 = vst.msk [vmem:[%s1822] ss:$8 sm:$0x3] %vm1437, %v1803
    %1824 = vst.msk [vmem:[%s1822] ss:$8 sm:$0x0] %vm1437, %v1803
    %s1825 = scalar_lea.vmem [#allocation3], 129
    %1826 = vst.msk [vmem:[%s1825] ss:$8 sm:$0x3] %vm1437, %v1786
    %1827 = vst.msk [vmem:[%s1825] ss:$8 sm:$0x0] %vm1437, %v1786
    %s1828 = scalar_lea.vmem [#allocation3], 161
    %1829 = vst.msk [vmem:[%s1828] ss:$8 sm:$0x3] %vm1437, %v1800
    %1830 = vst.msk [vmem:[%s1828] ss:$8 sm:$0x0] %vm1437, %v1800
    %s1831 = scalar_lea.vmem [#allocation3], 193
    %1832 = vst.msk [vmem:[%s1831] ss:$8 sm:$0x3] %vm1437, %v1802
    %1833 = vst.msk [vmem:[%s1831] ss:$8 sm:$0x0] %vm1437, %v1802
    %s1834 = scalar_lea.vmem [#allocation3], 225
    %1835 = vst.msk [vmem:[%s1834] ss:$8 sm:$0x3] %vm1437, %v1804
    %1836 = vst.msk [vmem:[%s1834] ss:$8 sm:$0x0] %vm1437, %v1804
    %v1839 = vcombine.low %v1747, %v1749
    %v1840 = vcombine.high %v1747, %v1749
    %v1842 = vunpack.c.l.s4 1966171168
    %v1843 = vunpack.c.0.s8 %v1842
    %v1844 = vlaneseq
    %v1845 = vshrl.u32 %v1844, 7
    %v1846 = vsub.s32 %v1843, %v1845
    %v1847 = vrot.slane %v1839, %v1846
    %v1849 = vunpack.c.l.s4 1966171168
    %v1850 = vunpack.c.0.s8 %v1849
    %v1851 = vlaneseq
    %v1852 = vshrl.u32 %v1851, 7
    %v1853 = vsub.s32 %v1850, %v1852
    %v1854 = vrot.slane %v1840, %v1853
    %v1855 = vcombine.high %v1847, %v1847
    %v1856 = vcombine.high %v1854, %v1854
    %v1858 = vunpack.c.l.s4 1966171168
    %v1859 = vunpack.c.0.s8 %v1858
    %v1860 = vlaneseq
    %v1861 = vshrl.u32 %v1860, 7
    %v1862 = vsub.s32 %v1859, %v1861
    %v1863 = vrot.slane %v1847, %v1862
    %v1865 = vunpack.c.l.s4 1966171168
    %v1866 = vunpack.c.0.s8 %v1865
    %v1867 = vlaneseq
    %v1868 = vshrl.u32 %v1867, 7
    %v1869 = vsub.s32 %v1866, %v1868
    %v1870 = vrot.slane %v1854, %v1869
    %v1872 = vunpack.c.l.s4 1966171168
    %v1873 = vunpack.c.0.s8 %v1872
    %v1874 = vlaneseq
    %v1875 = vshrl.u32 %v1874, 7
    %v1876 = vsub.s32 %v1873, %v1875
    %v1877 = vrot.slane %v1855, %v1876
    %v1879 = vunpack.c.l.s4 1966171168
    %v1880 = vunpack.c.0.s8 %v1879
    %v1881 = vlaneseq
    %v1882 = vshrl.u32 %v1881, 7
    %v1883 = vsub.s32 %v1880, %v1882
    %v1884 = vrot.slane %v1856, %v1883
    %v1885 = vcombine.high %v1863, %v1863
    %v1886 = vcombine.high %v1870, %v1870
    %v1887 = vcombine.high %v1877, %v1877
    %v1888 = vcombine.high %v1884, %v1884
    %s1897 = scalar_lea.vmem [#allocation4], 1
    %1898 = vst.msk [vmem:[%s1897] ss:$8 sm:$0x3] %vm1437, %v1863
    %1899 = vst.msk [vmem:[%s1897] ss:$8 sm:$0x0] %vm1437, %v1863
    %s1900 = scalar_lea.vmem [#allocation4], 33
    %1901 = vst.msk [vmem:[%s1900] ss:$8 sm:$0x3] %vm1437, %v1877
    %1902 = vst.msk [vmem:[%s1900] ss:$8 sm:$0x0] %vm1437, %v1877
    %s1903 = scalar_lea.vmem [#allocation4], 65
    %1904 = vst.msk [vmem:[%s1903] ss:$8 sm:$0x3] %vm1437, %v1885
    %1905 = vst.msk [vmem:[%s1903] ss:$8 sm:$0x0] %vm1437, %v1885
    %s1906 = scalar_lea.vmem [#allocation4], 97
    %1907 = vst.msk [vmem:[%s1906] ss:$8 sm:$0x3] %vm1437, %v1887
    %1908 = vst.msk [vmem:[%s1906] ss:$8 sm:$0x0] %vm1437, %v1887
    %s1909 = scalar_lea.vmem [#allocation4], 129
    %1910 = vst.msk [vmem:[%s1909] ss:$8 sm:$0x3] %vm1437, %v1870
    %1911 = vst.msk [vmem:[%s1909] ss:$8 sm:$0x0] %vm1437, %v1870
    %s1912 = scalar_lea.vmem [#allocation4], 161
    %1913 = vst.msk [vmem:[%s1912] ss:$8 sm:$0x3] %vm1437, %v1884
    %1914 = vst.msk [vmem:[%s1912] ss:$8 sm:$0x0] %vm1437, %v1884
    %s1915 = scalar_lea.vmem [#allocation4], 193
    %1916 = vst.msk [vmem:[%s1915] ss:$8 sm:$0x3] %vm1437, %v1886
    %1917 = vst.msk [vmem:[%s1915] ss:$8 sm:$0x0] %vm1437, %v1886
    %s1918 = scalar_lea.vmem [#allocation4], 225
    %1919 = vst.msk [vmem:[%s1918] ss:$8 sm:$0x3] %vm1437, %v1888
    %1920 = vst.msk [vmem:[%s1918] ss:$8 sm:$0x0] %vm1437, %v1888
    %s1921 = scalar_lea.vmem [#allocation26], 1024
    %v1922 = vld [vmem:[%s1921] sm:$0xff]
    %v1923 = vld [vmem:[%s1921 + $0x8] sm:$0xff]
    %v1924 = vld [vmem:[%s1921 + $0x10] sm:$0xff]
    %v1925 = vld [vmem:[%s1921 + $0x18] sm:$0xff]
    %v1926 = vld [vmem:[%s1921 + $0x20] sm:$0xff]
    %v1927 = vld [vmem:[%s1921 + $0x28] sm:$0xff]
    %v1928 = vld [vmem:[%s1921 + $0x30] sm:$0xff]
    %v1929 = vld [vmem:[%s1921 + $0x38] sm:$0xff]
    %v1930 = vld [vmem:[%s1921 + $0x40] sm:$0xff]
    %v1931 = vld [vmem:[%s1921 + $0x48] sm:$0xff]
    %v1932 = vld [vmem:[%s1921 + $0x50] sm:$0xff]
    %v1933 = vld [vmem:[%s1921 + $0x58] sm:$0xff]
    %v1934 = vld [vmem:[%s1921 + $0x60] sm:$0xff]
    %v1935 = vld [vmem:[%s1921 + $0x68] sm:$0xff]
    %v1936 = vld [vmem:[%s1921 + $0x70] sm:$0xff]
    %v1937 = vld [vmem:[%s1921 + $0x78] sm:$0xff]
    %v1938 = vld [vmem:[%s1921 + $0x80] sm:$0xff]
    %v1939 = vld [vmem:[%s1921 + $0x88] sm:$0xff]
    %v1940 = vld [vmem:[%s1921 + $0x90] sm:$0xff]
    %v1941 = vld [vmem:[%s1921 + $0x98] sm:$0xff]
    %v1942 = vld [vmem:[%s1921 + $0xa0] sm:$0xff]
    %v1943 = vld [vmem:[%s1921 + $0xa8] sm:$0xff]
    %v1944 = vld [vmem:[%s1921 + $0xb0] sm:$0xff]
    %v1945 = vld [vmem:[%s1921 + $0xb8] sm:$0xff]
    %v1946 = vld [vmem:[%s1921 + $0xc0] sm:$0xff]
    %v1947 = vld [vmem:[%s1921 + $0xc8] sm:$0xff]
    %v1948 = vld [vmem:[%s1921 + $0xd0] sm:$0xff]
    %v1949 = vld [vmem:[%s1921 + $0xd8] sm:$0xff]
    %v1950 = vld [vmem:[%s1921 + $0xe0] sm:$0xff]
    %v1951 = vld [vmem:[%s1921 + $0xe8] sm:$0xff]
    %v1952 = vld [vmem:[%s1921 + $0xf0] sm:$0xff]
    %v1953 = vld [vmem:[%s1921 + $0xf8] sm:$0xff]
    %v1954 = vld [vmem:[%s1921 + $0x100] sm:$0xff]
    %v1955 = vld [vmem:[%s1921 + $0x108] sm:$0xff]
    %v1956 = vld [vmem:[%s1921 + $0x110] sm:$0xff]
    %v1957 = vld [vmem:[%s1921 + $0x118] sm:$0xff]
    %v1958 = vld [vmem:[%s1921 + $0x120] sm:$0xff]
    %v1959 = vld [vmem:[%s1921 + $0x128] sm:$0xff]
    %v1960 = vld [vmem:[%s1921 + $0x130] sm:$0xff]
    %v1961 = vld [vmem:[%s1921 + $0x138] sm:$0xff]
    %v1962 = vld [vmem:[%s1921 + $0x140] sm:$0xff]
    %v1963 = vld [vmem:[%s1921 + $0x148] sm:$0xff]
    %v1964 = vld [vmem:[%s1921 + $0x150] sm:$0xff]
    %v1965 = vld [vmem:[%s1921 + $0x158] sm:$0xff]
    %v1966 = vld [vmem:[%s1921 + $0x160] sm:$0xff]
    %v1967 = vld [vmem:[%s1921 + $0x168] sm:$0xff]
    %v1968 = vld [vmem:[%s1921 + $0x170] sm:$0xff]
    %v1969 = vld [vmem:[%s1921 + $0x178] sm:$0xff]
    %v1970 = vld [vmem:[%s1921 + $0x180] sm:$0xff]
    %v1971 = vld [vmem:[%s1921 + $0x188] sm:$0xff]
    %v1972 = vld [vmem:[%s1921 + $0x190] sm:$0xff]
    %v1973 = vld [vmem:[%s1921 + $0x198] sm:$0xff]
    %v1974 = vld [vmem:[%s1921 + $0x1a0] sm:$0xff]
    %v1975 = vld [vmem:[%s1921 + $0x1a8] sm:$0xff]
    %v1976 = vld [vmem:[%s1921 + $0x1b0] sm:$0xff]
    %v1977 = vld [vmem:[%s1921 + $0x1b8] sm:$0xff]
    %v1978 = vld [vmem:[%s1921 + $0x1c0] sm:$0xff]
    %v1979 = vld [vmem:[%s1921 + $0x1c8] sm:$0xff]
    %v1980 = vld [vmem:[%s1921 + $0x1d0] sm:$0xff]
    %v1981 = vld [vmem:[%s1921 + $0x1d8] sm:$0xff]
    %v1982 = vld [vmem:[%s1921 + $0x1e0] sm:$0xff]
    %v1983 = vld [vmem:[%s1921 + $0x1e8] sm:$0xff]
    %v1984 = vld [vmem:[%s1921 + $0x1f0] sm:$0xff]
    %v1985 = vld [vmem:[%s1921 + $0x1f8] sm:$0xff]
    %1986 = vmatprep.subr.mxu0 %v1923
    %1987 = vmatpush1.msra.mxu0 %v1922
    %1988 = vmatprep.subr.mxu0 %v1927
    %1989 = vmatpush1.msra.mxu0 %v1926
    %1990 = vmatprep.subr.mxu0 %v1931
    %1991 = vmatpush1.msra.mxu0 %v1930
    %1992 = vmatprep.subr.mxu0 %v1935
    %1993 = vmatpush1.msra.mxu0 %v1934
    %1994 = vmatprep.subr.mxu0 %v1939
    %1995 = vmatpush1.msra.mxu0 %v1938
    %1996 = vmatprep.subr.mxu0 %v1943
    %1997 = vmatpush1.msra.mxu0 %v1942
    %1998 = vmatprep.subr.mxu0 %v1947
    %1999 = vmatpush1.msra.mxu0 %v1946
    %2000 = vmatprep.subr.mxu0 %v1951
    %2001 = vmatpush1.msra.mxu0 %v1950
    %2002 = vmatprep.subr.mxu0 %v1955
    %2003 = vmatpush1.msra.mxu0 %v1954
    %2004 = vmatprep.subr.mxu0 %v1959
    %2005 = vmatpush1.msra.mxu0 %v1958
    %2006 = vmatprep.subr.mxu0 %v1963
    %2007 = vmatpush1.msra.mxu0 %v1962
    %2008 = vmatprep.subr.mxu0 %v1967
    %2009 = vmatpush1.msra.mxu0 %v1966
    %2010 = vmatprep.subr.mxu0 %v1971
    %2011 = vmatpush1.msra.mxu0 %v1970
    %2012 = vmatprep.subr.mxu0 %v1975
    %2013 = vmatpush1.msra.mxu0 %v1974
    %2014 = vmatprep.subr.mxu0 %v1979
    %2015 = vmatpush1.msra.mxu0 %v1978
    %2016 = vmatprep.subr.mxu0 %v1983
    %2017 = vmatpush1.msra.mxu0 %v1982
    %2018 = vmatprep.subr.mxu0 0.0
    %2019 = vmatpush1.msra.mxu0 0.0
    %2020 = vmatprep.subr.mxu0 0.0
    %2021 = vmatpush1.msra.mxu0 0.0
    %2022 = vmatprep.subr.mxu0 0.0
    %2023 = vmatpush1.msra.mxu0 0.0
    %2024 = vmatprep.subr.mxu0 0.0
    %2025 = vmatpush1.msra.mxu0 0.0
    %2026 = vmatprep.subr.mxu0 0.0
    %2027 = vmatpush1.msra.mxu0 0.0
    %2028 = vmatprep.subr.mxu0 0.0
    %2029 = vmatpush1.msra.mxu0 0.0
    %2030 = vmatprep.subr.mxu0 0.0
    %2031 = vmatpush1.msra.mxu0 0.0
    %2032 = vmatprep.subr.mxu0 0.0
    %2033 = vmatpush1.msra.mxu0 0.0
    %2034 = vmatprep.subr.mxu0 0.0
    %2035 = vmatpush1.msra.mxu0 0.0
    %2036 = vmatprep.subr.mxu0 0.0
    %2037 = vmatpush1.msra.mxu0 0.0
    %2038 = vmatprep.subr.mxu0 0.0
    %2039 = vmatpush1.msra.mxu0 0.0
    %2040 = vmatprep.subr.mxu0 0.0
    %2041 = vmatpush1.msra.mxu0 0.0
    %2042 = vmatprep.subr.mxu0 0.0
    %2043 = vmatpush1.msra.mxu0 0.0
    %2044 = vmatprep.subr.mxu0 0.0
    %2045 = vmatpush1.msra.mxu0 0.0
    %2046 = vmatprep.subr.mxu0 0.0
    %2047 = vmatpush1.msra.mxu0 0.0
    %2048 = vmatprep.subr.mxu0 0.0
    %2049 = vmatpush1.msra.mxu0 0.0
    %2050 = vmatprep.mubr.f32.mxu0 0.0
    %2051 = vmatmul.mubr.f32.gmra.mrb[0].mxu0 %v897
    %v2052 = vpop.f32.mrb[0].mxu0
    %v2053 = vadd.f32 0.0, %v2052
    %v2054 = vpop.f32.mrb[0].mxu0
    %v2055 = vadd.f32 0.0, %v2054
    %2056 = vdwg.mxu0
    %2057 = vmatprep.subr.mxu0 %v1925
    %2058 = vmatpush1.msra.mxu0 %v1924
    %2059 = vmatprep.subr.mxu0 %v1929
    %2060 = vmatpush1.msra.mxu0 %v1928
    %2061 = vmatprep.subr.mxu0 %v1933
    %2062 = vmatpush1.msra.mxu0 %v1932
    %2063 = vmatprep.subr.mxu0 %v1937
    %2064 = vmatpush1.msra.mxu0 %v1936
    %2065 = vmatprep.subr.mxu0 %v1941
    %2066 = vmatpush1.msra.mxu0 %v1940
    %2067 = vmatprep.subr.mxu0 %v1945
    %2068 = vmatpush1.msra.mxu0 %v1944
    %2069 = vmatprep.subr.mxu0 %v1949
    %2070 = vmatpush1.msra.mxu0 %v1948
    %2071 = vmatprep.subr.mxu0 %v1953
    %2072 = vmatpush1.msra.mxu0 %v1952
    %2073 = vmatprep.subr.mxu0 %v1957
    %2074 = vmatpush1.msra.mxu0 %v1956
    %2075 = vmatprep.subr.mxu0 %v1961
    %2076 = vmatpush1.msra.mxu0 %v1960
    %2077 = vmatprep.subr.mxu0 %v1965
    %2078 = vmatpush1.msra.mxu0 %v1964
    %2079 = vmatprep.subr.mxu0 %v1969
    %2080 = vmatpush1.msra.mxu0 %v1968
    %2081 = vmatprep.subr.mxu0 %v1973
    %2082 = vmatpush1.msra.mxu0 %v1972
    %2083 = vmatprep.subr.mxu0 %v1977
    %2084 = vmatpush1.msra.mxu0 %v1976
    %2085 = vmatprep.subr.mxu0 %v1981
    %2086 = vmatpush1.msra.mxu0 %v1980
    %2087 = vmatprep.subr.mxu0 %v1985
    %2088 = vmatpush1.msra.mxu0 %v1984
    %2089 = vmatprep.subr.mxu0 0.0
    %2090 = vmatpush1.msra.mxu0 0.0
    %2091 = vmatprep.subr.mxu0 0.0
    %2092 = vmatpush1.msra.mxu0 0.0
    %2093 = vmatprep.subr.mxu0 0.0
    %2094 = vmatpush1.msra.mxu0 0.0
    %2095 = vmatprep.subr.mxu0 0.0
    %2096 = vmatpush1.msra.mxu0 0.0
    %2097 = vmatprep.subr.mxu0 0.0
    %2098 = vmatpush1.msra.mxu0 0.0
    %2099 = vmatprep.subr.mxu0 0.0
    %2100 = vmatpush1.msra.mxu0 0.0
    %2101 = vmatprep.subr.mxu0 0.0
    %2102 = vmatpush1.msra.mxu0 0.0
    %2103 = vmatprep.subr.mxu0 0.0
    %2104 = vmatpush1.msra.mxu0 0.0
    %2105 = vmatprep.subr.mxu0 0.0
    %2106 = vmatpush1.msra.mxu0 0.0
    %2107 = vmatprep.subr.mxu0 0.0
    %2108 = vmatpush1.msra.mxu0 0.0
    %2109 = vmatprep.subr.mxu0 0.0
    %2110 = vmatpush1.msra.mxu0 0.0
    %2111 = vmatprep.subr.mxu0 0.0
    %2112 = vmatpush1.msra.mxu0 0.0
    %2113 = vmatprep.subr.mxu0 0.0
    %2114 = vmatpush1.msra.mxu0 0.0
    %2115 = vmatprep.subr.mxu0 0.0
    %2116 = vmatpush1.msra.mxu0 0.0
    %2117 = vmatprep.subr.mxu0 0.0
    %2118 = vmatpush1.msra.mxu0 0.0
    %2119 = vmatprep.subr.mxu0 0.0
    %2120 = vmatpush1.msra.mxu0 0.0
    %2121 = vmatprep.mubr.f32.mxu0 0.0
    %2122 = vmatmul.mubr.f32.gmra.mrb[0].mxu0 %v897
    %v2123 = vpop.f32.mrb[0].mxu0
    %v2124 = vadd.f32 0.0, %v2123
    %v2125 = vpop.f32.mrb[0].mxu0
    %v2126 = vadd.f32 0.0, %v2125
    %2127 = vdwg.mxu0
    %v2128 = vmul.f32 %v2053, %v900
    %v2129 = vmul.f32 %v2055, %v901
    %v2132 = vcombine.low %v2128, %v2129
    %v2133 = vcombine.high %v2128, %v2129
    %v2135 = vunpack.c.l.s4 1966171168
    %v2136 = vunpack.c.0.s8 %v2135
    %v2137 = vlaneseq
    %v2138 = vshrl.u32 %v2137, 7
    %v2139 = vsub.s32 %v2136, %v2138
    %v2140 = vrot.slane %v2132, %v2139
    %v2142 = vunpack.c.l.s4 1966171168
    %v2143 = vunpack.c.0.s8 %v2142
    %v2144 = vlaneseq
    %v2145 = vshrl.u32 %v2144, 7
    %v2146 = vsub.s32 %v2143, %v2145
    %v2147 = vrot.slane %v2133, %v2146
    %v2148 = vcombine.high %v2140, %v2140
    %v2149 = vcombine.high %v2147, %v2147
    %v2151 = vunpack.c.l.s4 1966171168
    %v2152 = vunpack.c.0.s8 %v2151
    %v2153 = vlaneseq
    %v2154 = vshrl.u32 %v2153, 7
    %v2155 = vsub.s32 %v2152, %v2154
    %v2156 = vrot.slane %v2140, %v2155
    %v2158 = vunpack.c.l.s4 1966171168
    %v2159 = vunpack.c.0.s8 %v2158
    %v2160 = vlaneseq
    %v2161 = vshrl.u32 %v2160, 7
    %v2162 = vsub.s32 %v2159, %v2161
    %v2163 = vrot.slane %v2147, %v2162
    %v2165 = vunpack.c.l.s4 1966171168
    %v2166 = vunpack.c.0.s8 %v2165
    %v2167 = vlaneseq
    %v2168 = vshrl.u32 %v2167, 7
    %v2169 = vsub.s32 %v2166, %v2168
    %v2170 = vrot.slane %v2148, %v2169
    %v2172 = vunpack.c.l.s4 1966171168
    %v2173 = vunpack.c.0.s8 %v2172
    %v2174 = vlaneseq
    %v2175 = vshrl.u32 %v2174, 7
    %v2176 = vsub.s32 %v2173, %v2175
    %v2177 = vrot.slane %v2149, %v2176
    %v2178 = vcombine.high %v2156, %v2156
    %v2179 = vcombine.high %v2163, %v2163
    %v2180 = vcombine.high %v2170, %v2170
    %v2181 = vcombine.high %v2177, %v2177
    %s2190 = scalar_lea.vmem [#allocation3], 2
    %2191 = vst.msk [vmem:[%s2190] ss:$8 sm:$0x3] %vm1437, %v2156
    %2192 = vst.msk [vmem:[%s2190] ss:$8 sm:$0x0] %vm1437, %v2156
    %s2193 = scalar_lea.vmem [#allocation3], 34
    %2194 = vst.msk [vmem:[%s2193] ss:$8 sm:$0x3] %vm1437, %v2170
    %2195 = vst.msk [vmem:[%s2193] ss:$8 sm:$0x0] %vm1437, %v2170
    %s2196 = scalar_lea.vmem [#allocation3], 66
    %2197 = vst.msk [vmem:[%s2196] ss:$8 sm:$0x3] %vm1437, %v2178
    %2198 = vst.msk [vmem:[%s2196] ss:$8 sm:$0x0] %vm1437, %v2178
    %s2199 = scalar_lea.vmem [#allocation3], 98
    %2200 = vst.msk [vmem:[%s2199] ss:$8 sm:$0x3] %vm1437, %v2180
    %2201 = vst.msk [vmem:[%s2199] ss:$8 sm:$0x0] %vm1437, %v2180
    %s2202 = scalar_lea.vmem [#allocation3], 130
    %2203 = vst.msk [vmem:[%s2202] ss:$8 sm:$0x3] %vm1437, %v2163
    %2204 = vst.msk [vmem:[%s2202] ss:$8 sm:$0x0] %vm1437, %v2163
    %s2205 = scalar_lea.vmem [#allocation3], 162
    %2206 = vst.msk [vmem:[%s2205] ss:$8 sm:$0x3] %vm1437, %v2177
    %2207 = vst.msk [vmem:[%s2205] ss:$8 sm:$0x0] %vm1437, %v2177
    %s2208 = scalar_lea.vmem [#allocation3], 194
    %2209 = vst.msk [vmem:[%s2208] ss:$8 sm:$0x3] %vm1437, %v2179
    %2210 = vst.msk [vmem:[%s2208] ss:$8 sm:$0x0] %vm1437, %v2179
    %s2211 = scalar_lea.vmem [#allocation3], 226
    %2212 = vst.msk [vmem:[%s2211] ss:$8 sm:$0x3] %vm1437, %v2181
    %2213 = vst.msk [vmem:[%s2211] ss:$8 sm:$0x0] %vm1437, %v2181
    %v2216 = vcombine.low %v2124, %v2126
    %v2217 = vcombine.high %v2124, %v2126
    %v2219 = vunpack.c.l.s4 1966171168
    %v2220 = vunpack.c.0.s8 %v2219
    %v2221 = vlaneseq
    %v2222 = vshrl.u32 %v2221, 7
    %v2223 = vsub.s32 %v2220, %v2222
    %v2224 = vrot.slane %v2216, %v2223
    %v2226 = vunpack.c.l.s4 1966171168
    %v2227 = vunpack.c.0.s8 %v2226
    %v2228 = vlaneseq
    %v2229 = vshrl.u32 %v2228, 7
    %v2230 = vsub.s32 %v2227, %v2229
    %v2231 = vrot.slane %v2217, %v2230
    %v2232 = vcombine.high %v2224, %v2224
    %v2233 = vcombine.high %v2231, %v2231
    %v2235 = vunpack.c.l.s4 1966171168
    %v2236 = vunpack.c.0.s8 %v2235
    %v2237 = vlaneseq
    %v2238 = vshrl.u32 %v2237, 7
    %v2239 = vsub.s32 %v2236, %v2238
    %v2240 = vrot.slane %v2224, %v2239
    %v2242 = vunpack.c.l.s4 1966171168
    %v2243 = vunpack.c.0.s8 %v2242
    %v2244 = vlaneseq
    %v2245 = vshrl.u32 %v2244, 7
    %v2246 = vsub.s32 %v2243, %v2245
    %v2247 = vrot.slane %v2231, %v2246
    %v2249 = vunpack.c.l.s4 1966171168
    %v2250 = vunpack.c.0.s8 %v2249
    %v2251 = vlaneseq
    %v2252 = vshrl.u32 %v2251, 7
    %v2253 = vsub.s32 %v2250, %v2252
    %v2254 = vrot.slane %v2232, %v2253
    %v2256 = vunpack.c.l.s4 1966171168
    %v2257 = vunpack.c.0.s8 %v2256
    %v2258 = vlaneseq
    %v2259 = vshrl.u32 %v2258, 7
    %v2260 = vsub.s32 %v2257, %v2259
    %v2261 = vrot.slane %v2233, %v2260
    %v2262 = vcombine.high %v2240, %v2240
    %v2263 = vcombine.high %v2247, %v2247
    %v2264 = vcombine.high %v2254, %v2254
    %v2265 = vcombine.high %v2261, %v2261
    %s2274 = scalar_lea.vmem [#allocation4], 2
    %2275 = vst.msk [vmem:[%s2274] ss:$8 sm:$0x3] %vm1437, %v2240
    %2276 = vst.msk [vmem:[%s2274] ss:$8 sm:$0x0] %vm1437, %v2240
    %s2277 = scalar_lea.vmem [#allocation4], 34
    %2278 = vst.msk [vmem:[%s2277] ss:$8 sm:$0x3] %vm1437, %v2254
    %2279 = vst.msk [vmem:[%s2277] ss:$8 sm:$0x0] %vm1437, %v2254
    %s2280 = scalar_lea.vmem [#allocation4], 66
    %2281 = vst.msk [vmem:[%s2280] ss:$8 sm:$0x3] %vm1437, %v2262
    %2282 = vst.msk [vmem:[%s2280] ss:$8 sm:$0x0] %vm1437, %v2262
    %s2283 = scalar_lea.vmem [#allocation4], 98
    %2284 = vst.msk [vmem:[%s2283] ss:$8 sm:$0x3] %vm1437, %v2264
    %2285 = vst.msk [vmem:[%s2283] ss:$8 sm:$0x0] %vm1437, %v2264
    %s2286 = scalar_lea.vmem [#allocation4], 130
    %2287 = vst.msk [vmem:[%s2286] ss:$8 sm:$0x3] %vm1437, %v2247
    %2288 = vst.msk [vmem:[%s2286] ss:$8 sm:$0x0] %vm1437, %v2247
    %s2289 = scalar_lea.vmem [#allocation4], 162
    %2290 = vst.msk [vmem:[%s2289] ss:$8 sm:$0x3] %vm1437, %v2261
    %2291 = vst.msk [vmem:[%s2289] ss:$8 sm:$0x0] %vm1437, %v2261
    %s2292 = scalar_lea.vmem [#allocation4], 194
    %2293 = vst.msk [vmem:[%s2292] ss:$8 sm:$0x3] %vm1437, %v2263
    %2294 = vst.msk [vmem:[%s2292] ss:$8 sm:$0x0] %vm1437, %v2263
    %s2295 = scalar_lea.vmem [#allocation4], 226
    %2296 = vst.msk [vmem:[%s2295] ss:$8 sm:$0x3] %vm1437, %v2265
    %2297 = vst.msk [vmem:[%s2295] ss:$8 sm:$0x0] %vm1437, %v2265
    %s2298 = scalar_lea.vmem [#allocation26], 1536
    %v2299 = vld [vmem:[%s2298] sm:$0xff]
    %v2300 = vld [vmem:[%s2298 + $0x8] sm:$0xff]
    %v2301 = vld [vmem:[%s2298 + $0x10] sm:$0xff]
    %v2302 = vld [vmem:[%s2298 + $0x18] sm:$0xff]
    %v2303 = vld [vmem:[%s2298 + $0x20] sm:$0xff]
    %v2304 = vld [vmem:[%s2298 + $0x28] sm:$0xff]
    %v2305 = vld [vmem:[%s2298 + $0x30] sm:$0xff]
    %v2306 = vld [vmem:[%s2298 + $0x38] sm:$0xff]
    %v2307 = vld [vmem:[%s2298 + $0x40] sm:$0xff]
    %v2308 = vld [vmem:[%s2298 + $0x48] sm:$0xff]
    %v2309 = vld [vmem:[%s2298 + $0x50] sm:$0xff]
    %v2310 = vld [vmem:[%s2298 + $0x58] sm:$0xff]
    %v2311 = vld [vmem:[%s2298 + $0x60] sm:$0xff]
    %v2312 = vld [vmem:[%s2298 + $0x68] sm:$0xff]
    %v2313 = vld [vmem:[%s2298 + $0x70] sm:$0xff]
    %v2314 = vld [vmem:[%s2298 + $0x78] sm:$0xff]
    %v2315 = vld [vmem:[%s2298 + $0x80] sm:$0xff]
    %v2316 = vld [vmem:[%s2298 + $0x88] sm:$0xff]
    %v2317 = vld [vmem:[%s2298 + $0x90] sm:$0xff]
    %v2318 = vld [vmem:[%s2298 + $0x98] sm:$0xff]
    %v2319 = vld [vmem:[%s2298 + $0xa0] sm:$0xff]
    %v2320 = vld [vmem:[%s2298 + $0xa8] sm:$0xff]
    %v2321 = vld [vmem:[%s2298 + $0xb0] sm:$0xff]
    %v2322 = vld [vmem:[%s2298 + $0xb8] sm:$0xff]
    %v2323 = vld [vmem:[%s2298 + $0xc0] sm:$0xff]
    %v2324 = vld [vmem:[%s2298 + $0xc8] sm:$0xff]
    %v2325 = vld [vmem:[%s2298 + $0xd0] sm:$0xff]
    %v2326 = vld [vmem:[%s2298 + $0xd8] sm:$0xff]
    %v2327 = vld [vmem:[%s2298 + $0xe0] sm:$0xff]
    %v2328 = vld [vmem:[%s2298 + $0xe8] sm:$0xff]
    %v2329 = vld [vmem:[%s2298 + $0xf0] sm:$0xff]
    %v2330 = vld [vmem:[%s2298 + $0xf8] sm:$0xff]
    %v2331 = vld [vmem:[%s2298 + $0x100] sm:$0xff]
    %v2332 = vld [vmem:[%s2298 + $0x108] sm:$0xff]
    %v2333 = vld [vmem:[%s2298 + $0x110] sm:$0xff]
    %v2334 = vld [vmem:[%s2298 + $0x118] sm:$0xff]
    %v2335 = vld [vmem:[%s2298 + $0x120] sm:$0xff]
    %v2336 = vld [vmem:[%s2298 + $0x128] sm:$0xff]
    %v2337 = vld [vmem:[%s2298 + $0x130] sm:$0xff]
    %v2338 = vld [vmem:[%s2298 + $0x138] sm:$0xff]
    %v2339 = vld [vmem:[%s2298 + $0x140] sm:$0xff]
    %v2340 = vld [vmem:[%s2298 + $0x148] sm:$0xff]
    %v2341 = vld [vmem:[%s2298 + $0x150] sm:$0xff]
    %v2342 = vld [vmem:[%s2298 + $0x158] sm:$0xff]
    %v2343 = vld [vmem:[%s2298 + $0x160] sm:$0xff]
    %v2344 = vld [vmem:[%s2298 + $0x168] sm:$0xff]
    %v2345 = vld [vmem:[%s2298 + $0x170] sm:$0xff]
    %v2346 = vld [vmem:[%s2298 + $0x178] sm:$0xff]
    %v2347 = vld [vmem:[%s2298 + $0x180] sm:$0xff]
    %v2348 = vld [vmem:[%s2298 + $0x188] sm:$0xff]
    %v2349 = vld [vmem:[%s2298 + $0x190] sm:$0xff]
    %v2350 = vld [vmem:[%s2298 + $0x198] sm:$0xff]
    %v2351 = vld [vmem:[%s2298 + $0x1a0] sm:$0xff]
    %v2352 = vld [vmem:[%s2298 + $0x1a8] sm:$0xff]
    %v2353 = vld [vmem:[%s2298 + $0x1b0] sm:$0xff]
    %v2354 = vld [vmem:[%s2298 + $0x1b8] sm:$0xff]
    %v2355 = vld [vmem:[%s2298 + $0x1c0] sm:$0xff]
    %v2356 = vld [vmem:[%s2298 + $0x1c8] sm:$0xff]
    %v2357 = vld [vmem:[%s2298 + $0x1d0] sm:$0xff]
    %v2358 = vld [vmem:[%s2298 + $0x1d8] sm:$0xff]
    %v2359 = vld [vmem:[%s2298 + $0x1e0] sm:$0xff]
    %v2360 = vld [vmem:[%s2298 + $0x1e8] sm:$0xff]
    %v2361 = vld [vmem:[%s2298 + $0x1f0] sm:$0xff]
    %v2362 = vld [vmem:[%s2298 + $0x1f8] sm:$0xff]
    %2363 = vmatprep.subr.mxu0 %v2300
    %2364 = vmatpush1.msra.mxu0 %v2299
    %2365 = vmatprep.subr.mxu0 %v2304
    %2366 = vmatpush1.msra.mxu0 %v2303
    %2367 = vmatprep.subr.mxu0 %v2308
    %2368 = vmatpush1.msra.mxu0 %v2307
    %2369 = vmatprep.subr.mxu0 %v2312
    %2370 = vmatpush1.msra.mxu0 %v2311
    %2371 = vmatprep.subr.mxu0 %v2316
    %2372 = vmatpush1.msra.mxu0 %v2315
    %2373 = vmatprep.subr.mxu0 %v2320
    %2374 = vmatpush1.msra.mxu0 %v2319
    %2375 = vmatprep.subr.mxu0 %v2324
    %2376 = vmatpush1.msra.mxu0 %v2323
    %2377 = vmatprep.subr.mxu0 %v2328
    %2378 = vmatpush1.msra.mxu0 %v2327
    %2379 = vmatprep.subr.mxu0 %v2332
    %2380 = vmatpush1.msra.mxu0 %v2331
    %2381 = vmatprep.subr.mxu0 %v2336
    %2382 = vmatpush1.msra.mxu0 %v2335
    %2383 = vmatprep.subr.mxu0 %v2340
    %2384 = vmatpush1.msra.mxu0 %v2339
    %2385 = vmatprep.subr.mxu0 %v2344
    %2386 = vmatpush1.msra.mxu0 %v2343
    %2387 = vmatprep.subr.mxu0 %v2348
    %2388 = vmatpush1.msra.mxu0 %v2347
    %2389 = vmatprep.subr.mxu0 %v2352
    %2390 = vmatpush1.msra.mxu0 %v2351
    %2391 = vmatprep.subr.mxu0 %v2356
    %2392 = vmatpush1.msra.mxu0 %v2355
    %2393 = vmatprep.subr.mxu0 %v2360
    %2394 = vmatpush1.msra.mxu0 %v2359
    %2395 = vmatprep.subr.mxu0 0.0
    %2396 = vmatpush1.msra.mxu0 0.0
    %2397 = vmatprep.subr.mxu0 0.0
    %2398 = vmatpush1.msra.mxu0 0.0
    %2399 = vmatprep.subr.mxu0 0.0
    %2400 = vmatpush1.msra.mxu0 0.0
    %2401 = vmatprep.subr.mxu0 0.0
    %2402 = vmatpush1.msra.mxu0 0.0
    %2403 = vmatprep.subr.mxu0 0.0
    %2404 = vmatpush1.msra.mxu0 0.0
    %2405 = vmatprep.subr.mxu0 0.0
    %2406 = vmatpush1.msra.mxu0 0.0
    %2407 = vmatprep.subr.mxu0 0.0
    %2408 = vmatpush1.msra.mxu0 0.0
    %2409 = vmatprep.subr.mxu0 0.0
    %2410 = vmatpush1.msra.mxu0 0.0
    %2411 = vmatprep.subr.mxu0 0.0
    %2412 = vmatpush1.msra.mxu0 0.0
    %2413 = vmatprep.subr.mxu0 0.0
    %2414 = vmatpush1.msra.mxu0 0.0
    %2415 = vmatprep.subr.mxu0 0.0
    %2416 = vmatpush1.msra.mxu0 0.0
    %2417 = vmatprep.subr.mxu0 0.0
    %2418 = vmatpush1.msra.mxu0 0.0
    %2419 = vmatprep.subr.mxu0 0.0
    %2420 = vmatpush1.msra.mxu0 0.0
    %2421 = vmatprep.subr.mxu0 0.0
    %2422 = vmatpush1.msra.mxu0 0.0
    %2423 = vmatprep.subr.mxu0 0.0
    %2424 = vmatpush1.msra.mxu0 0.0
    %2425 = vmatprep.subr.mxu0 0.0
    %2426 = vmatpush1.msra.mxu0 0.0
    %2427 = vmatprep.mubr.f32.mxu0 0.0
    %2428 = vmatmul.mubr.f32.gmra.mrb[0].mxu0 %v897
    %v2429 = vpop.f32.mrb[0].mxu0
    %v2430 = vadd.f32 0.0, %v2429
    %v2431 = vpop.f32.mrb[0].mxu0
    %v2432 = vadd.f32 0.0, %v2431
    %2433 = vdwg.mxu0
    %2434 = vmatprep.subr.mxu0 %v2302
    %2435 = vmatpush1.msra.mxu0 %v2301
    %2436 = vmatprep.subr.mxu0 %v2306
    %2437 = vmatpush1.msra.mxu0 %v2305
    %2438 = vmatprep.subr.mxu0 %v2310
    %2439 = vmatpush1.msra.mxu0 %v2309
    %2440 = vmatprep.subr.mxu0 %v2314
    %2441 = vmatpush1.msra.mxu0 %v2313
    %2442 = vmatprep.subr.mxu0 %v2318
    %2443 = vmatpush1.msra.mxu0 %v2317
    %2444 = vmatprep.subr.mxu0 %v2322
    %2445 = vmatpush1.msra.mxu0 %v2321
    %2446 = vmatprep.subr.mxu0 %v2326
    %2447 = vmatpush1.msra.mxu0 %v2325
    %2448 = vmatprep.subr.mxu0 %v2330
    %2449 = vmatpush1.msra.mxu0 %v2329
    %2450 = vmatprep.subr.mxu0 %v2334
    %2451 = vmatpush1.msra.mxu0 %v2333
    %2452 = vmatprep.subr.mxu0 %v2338
    %2453 = vmatpush1.msra.mxu0 %v2337
    %2454 = vmatprep.subr.mxu0 %v2342
    %2455 = vmatpush1.msra.mxu0 %v2341
    %2456 = vmatprep.subr.mxu0 %v2346
    %2457 = vmatpush1.msra.mxu0 %v2345
    %2458 = vmatprep.subr.mxu0 %v2350
    %2459 = vmatpush1.msra.mxu0 %v2349
    %2460 = vmatprep.subr.mxu0 %v2354
    %2461 = vmatpush1.msra.mxu0 %v2353
    %2462 = vmatprep.subr.mxu0 %v2358
    %2463 = vmatpush1.msra.mxu0 %v2357
    %2464 = vmatprep.subr.mxu0 %v2362
    %2465 = vmatpush1.msra.mxu0 %v2361
    %2466 = vmatprep.subr.mxu0 0.0
    %2467 = vmatpush1.msra.mxu0 0.0
    %2468 = vmatprep.subr.mxu0 0.0
    %2469 = vmatpush1.msra.mxu0 0.0
    %2470 = vmatprep.subr.mxu0 0.0
    %2471 = vmatpush1.msra.mxu0 0.0
    %2472 = vmatprep.subr.mxu0 0.0
    %2473 = vmatpush1.msra.mxu0 0.0
    %2474 = vmatprep.subr.mxu0 0.0
    %2475 = vmatpush1.msra.mxu0 0.0
    %2476 = vmatprep.subr.mxu0 0.0
    %2477 = vmatpush1.msra.mxu0 0.0
    %2478 = vmatprep.subr.mxu0 0.0
    %2479 = vmatpush1.msra.mxu0 0.0
    %2480 = vmatprep.subr.mxu0 0.0
    %2481 = vmatpush1.msra.mxu0 0.0
    %2482 = vmatprep.subr.mxu0 0.0
    %2483 = vmatpush1.msra.mxu0 0.0
    %2484 = vmatprep.subr.mxu0 0.0
    %2485 = vmatpush1.msra.mxu0 0.0
    %2486 = vmatprep.subr.mxu0 0.0
    %2487 = vmatpush1.msra.mxu0 0.0
    %2488 = vmatprep.subr.mxu0 0.0
    %2489 = vmatpush1.msra.mxu0 0.0
    %2490 = vmatprep.subr.mxu0 0.0
    %2491 = vmatpush1.msra.mxu0 0.0
    %2492 = vmatprep.subr.mxu0 0.0
    %2493 = vmatpush1.msra.mxu0 0.0
    %2494 = vmatprep.subr.mxu0 0.0
    %2495 = vmatpush1.msra.mxu0 0.0
    %2496 = vmatprep.subr.mxu0 0.0
    %2497 = vmatpush1.msra.mxu0 0.0
    %2498 = vmatprep.mubr.f32.mxu0 0.0
    %2499 = vmatmul.mubr.f32.gmra.mrb[0].mxu0 %v897
    %v2500 = vpop.f32.mrb[0].mxu0
    %v2501 = vadd.f32 0.0, %v2500
    %v2502 = vpop.f32.mrb[0].mxu0
    %v2503 = vadd.f32 0.0, %v2502
    %2504 = vdwg.mxu0
    %v2505 = vmul.f32 %v2430, %v900
    %v2506 = vmul.f32 %v2432, %v901
    %v2509 = vcombine.low %v2505, %v2506
    %v2510 = vcombine.high %v2505, %v2506
    %v2512 = vunpack.c.l.s4 1966171168
    %v2513 = vunpack.c.0.s8 %v2512
    %v2514 = vlaneseq
    %v2515 = vshrl.u32 %v2514, 7
    %v2516 = vsub.s32 %v2513, %v2515
    %v2517 = vrot.slane %v2509, %v2516
    %v2519 = vunpack.c.l.s4 1966171168
    %v2520 = vunpack.c.0.s8 %v2519
    %v2521 = vlaneseq
    %v2522 = vshrl.u32 %v2521, 7
    %v2523 = vsub.s32 %v2520, %v2522
    %v2524 = vrot.slane %v2510, %v2523
    %v2525 = vcombine.high %v2517, %v2517
    %v2526 = vcombine.high %v2524, %v2524
    %v2528 = vunpack.c.l.s4 1966171168
    %v2529 = vunpack.c.0.s8 %v2528
    %v2530 = vlaneseq
    %v2531 = vshrl.u32 %v2530, 7
    %v2532 = vsub.s32 %v2529, %v2531
    %v2533 = vrot.slane %v2517, %v2532
    %v2535 = vunpack.c.l.s4 1966171168
    %v2536 = vunpack.c.0.s8 %v2535
    %v2537 = vlaneseq
    %v2538 = vshrl.u32 %v2537, 7
    %v2539 = vsub.s32 %v2536, %v2538
    %v2540 = vrot.slane %v2524, %v2539
    %v2542 = vunpack.c.l.s4 1966171168
    %v2543 = vunpack.c.0.s8 %v2542
    %v2544 = vlaneseq
    %v2545 = vshrl.u32 %v2544, 7
    %v2546 = vsub.s32 %v2543, %v2545
    %v2547 = vrot.slane %v2525, %v2546
    %v2549 = vunpack.c.l.s4 1966171168
    %v2550 = vunpack.c.0.s8 %v2549
    %v2551 = vlaneseq
    %v2552 = vshrl.u32 %v2551, 7
    %v2553 = vsub.s32 %v2550, %v2552
    %v2554 = vrot.slane %v2526, %v2553
    %v2555 = vcombine.high %v2533, %v2533
    %v2556 = vcombine.high %v2540, %v2540
    %v2557 = vcombine.high %v2547, %v2547
    %v2558 = vcombine.high %v2554, %v2554
    %s2567 = scalar_lea.vmem [#allocation3], 3
    %2568 = vst.msk [vmem:[%s2567] ss:$8 sm:$0x3] %vm1437, %v2533
    %2569 = vst.msk [vmem:[%s2567] ss:$8 sm:$0x0] %vm1437, %v2533
    %s2570 = scalar_lea.vmem [#allocation3], 35
    %2571 = vst.msk [vmem:[%s2570] ss:$8 sm:$0x3] %vm1437, %v2547
    %2572 = vst.msk [vmem:[%s2570] ss:$8 sm:$0x0] %vm1437, %v2547
    %s2573 = scalar_lea.vmem [#allocation3], 67
    %2574 = vst.msk [vmem:[%s2573] ss:$8 sm:$0x3] %vm1437, %v2555
    %2575 = vst.msk [vmem:[%s2573] ss:$8 sm:$0x0] %vm1437, %v2555
    %s2576 = scalar_lea.vmem [#allocation3], 99
    %2577 = vst.msk [vmem:[%s2576] ss:$8 sm:$0x3] %vm1437, %v2557
    %2578 = vst.msk [vmem:[%s2576] ss:$8 sm:$0x0] %vm1437, %v2557
    %s2579 = scalar_lea.vmem [#allocation3], 131
    %2580 = vst.msk [vmem:[%s2579] ss:$8 sm:$0x3] %vm1437, %v2540
    %2581 = vst.msk [vmem:[%s2579] ss:$8 sm:$0x0] %vm1437, %v2540
    %s2582 = scalar_lea.vmem [#allocation3], 163
    %2583 = vst.msk [vmem:[%s2582] ss:$8 sm:$0x3] %vm1437, %v2554
    %2584 = vst.msk [vmem:[%s2582] ss:$8 sm:$0x0] %vm1437, %v2554
    %s2585 = scalar_lea.vmem [#allocation3], 195
    %2586 = vst.msk [vmem:[%s2585] ss:$8 sm:$0x3] %vm1437, %v2556
    %2587 = vst.msk [vmem:[%s2585] ss:$8 sm:$0x0] %vm1437, %v2556
    %s2588 = scalar_lea.vmem [#allocation3], 227
    %2589 = vst.msk [vmem:[%s2588] ss:$8 sm:$0x3] %vm1437, %v2558
    %2590 = vst.msk [vmem:[%s2588] ss:$8 sm:$0x0] %vm1437, %v2558
    %v2593 = vcombine.low %v2501, %v2503
    %v2594 = vcombine.high %v2501, %v2503
    %v2596 = vunpack.c.l.s4 1966171168
    %v2597 = vunpack.c.0.s8 %v2596
    %v2598 = vlaneseq
    %v2599 = vshrl.u32 %v2598, 7
    %v2600 = vsub.s32 %v2597, %v2599
    %v2601 = vrot.slane %v2593, %v2600
    %v2603 = vunpack.c.l.s4 1966171168
    %v2604 = vunpack.c.0.s8 %v2603
    %v2605 = vlaneseq
    %v2606 = vshrl.u32 %v2605, 7
    %v2607 = vsub.s32 %v2604, %v2606
    %v2608 = vrot.slane %v2594, %v2607
    %v2609 = vcombine.high %v2601, %v2601
    %v2610 = vcombine.high %v2608, %v2608
    %v2612 = vunpack.c.l.s4 1966171168
    %v2613 = vunpack.c.0.s8 %v2612
    %v2614 = vlaneseq
    %v2615 = vshrl.u32 %v2614, 7
    %v2616 = vsub.s32 %v2613, %v2615
    %v2617 = vrot.slane %v2601, %v2616
    %v2619 = vunpack.c.l.s4 1966171168
    %v2620 = vunpack.c.0.s8 %v2619
    %v2621 = vlaneseq
    %v2622 = vshrl.u32 %v2621, 7
    %v2623 = vsub.s32 %v2620, %v2622
    %v2624 = vrot.slane %v2608, %v2623
    %v2626 = vunpack.c.l.s4 1966171168
    %v2627 = vunpack.c.0.s8 %v2626
    %v2628 = vlaneseq
    %v2629 = vshrl.u32 %v2628, 7
    %v2630 = vsub.s32 %v2627, %v2629
    %v2631 = vrot.slane %v2609, %v2630
    %v2633 = vunpack.c.l.s4 1966171168
    %v2634 = vunpack.c.0.s8 %v2633
    %v2635 = vlaneseq
    %v2636 = vshrl.u32 %v2635, 7
    %v2637 = vsub.s32 %v2634, %v2636
    %v2638 = vrot.slane %v2610, %v2637
    %v2639 = vcombine.high %v2617, %v2617
    %v2640 = vcombine.high %v2624, %v2624
    %v2641 = vcombine.high %v2631, %v2631
    %v2642 = vcombine.high %v2638, %v2638
    %s2651 = scalar_lea.vmem [#allocation4], 3
    %2652 = vst.msk [vmem:[%s2651] ss:$8 sm:$0x3] %vm1437, %v2617
    %2653 = vst.msk [vmem:[%s2651] ss:$8 sm:$0x0] %vm1437, %v2617
    %s2654 = scalar_lea.vmem [#allocation4], 35
    %2655 = vst.msk [vmem:[%s2654] ss:$8 sm:$0x3] %vm1437, %v2631
    %2656 = vst.msk [vmem:[%s2654] ss:$8 sm:$0x0] %vm1437, %v2631
    %s2657 = scalar_lea.vmem [#allocation4], 67
    %2658 = vst.msk [vmem:[%s2657] ss:$8 sm:$0x3] %vm1437, %v2639
    %2659 = vst.msk [vmem:[%s2657] ss:$8 sm:$0x0] %vm1437, %v2639
    %s2660 = scalar_lea.vmem [#allocation4], 99
    %2661 = vst.msk [vmem:[%s2660] ss:$8 sm:$0x3] %vm1437, %v2641
    %2662 = vst.msk [vmem:[%s2660] ss:$8 sm:$0x0] %vm1437, %v2641
    %s2663 = scalar_lea.vmem [#allocation4], 131
    %2664 = vst.msk [vmem:[%s2663] ss:$8 sm:$0x3] %vm1437, %v2624
    %2665 = vst.msk [vmem:[%s2663] ss:$8 sm:$0x0] %vm1437, %v2624
    %s2666 = scalar_lea.vmem [#allocation4], 163
    %2667 = vst.msk [vmem:[%s2666] ss:$8 sm:$0x3] %vm1437, %v2638
    %2668 = vst.msk [vmem:[%s2666] ss:$8 sm:$0x0] %vm1437, %v2638
    %s2669 = scalar_lea.vmem [#allocation4], 195
    %2670 = vst.msk [vmem:[%s2669] ss:$8 sm:$0x3] %vm1437, %v2640
    %2671 = vst.msk [vmem:[%s2669] ss:$8 sm:$0x0] %vm1437, %v2640
    %s2672 = scalar_lea.vmem [#allocation4], 227
    %2673 = vst.msk [vmem:[%s2672] ss:$8 sm:$0x3] %vm1437, %v2642
    %2674 = vst.msk [vmem:[%s2672] ss:$8 sm:$0x0] %vm1437, %v2642
    %s2675 = scalar_lea.vmem [#allocation26], 2048
    %v2676 = vld [vmem:[%s2675] sm:$0xff]
    %v2677 = vld [vmem:[%s2675 + $0x8] sm:$0xff]
    %v2678 = vld [vmem:[%s2675 + $0x10] sm:$0xff]
    %v2679 = vld [vmem:[%s2675 + $0x18] sm:$0xff]
    %v2680 = vld [vmem:[%s2675 + $0x20] sm:$0xff]
    %v2681 = vld [vmem:[%s2675 + $0x28] sm:$0xff]
    %v2682 = vld [vmem:[%s2675 + $0x30] sm:$0xff]
    %v2683 = vld [vmem:[%s2675 + $0x38] sm:$0xff]
    %v2684 = vld [vmem:[%s2675 + $0x40] sm:$0xff]
    %v2685 = vld [vmem:[%s2675 + $0x48] sm:$0xff]
    %v2686 = vld [vmem:[%s2675 + $0x50] sm:$0xff]
    %v2687 = vld [vmem:[%s2675 + $0x58] sm:$0xff]
    %v2688 = vld [vmem:[%s2675 + $0x60] sm:$0xff]
    %v2689 = vld [vmem:[%s2675 + $0x68] sm:$0xff]
    %v2690 = vld [vmem:[%s2675 + $0x70] sm:$0xff]
    %v2691 = vld [vmem:[%s2675 + $0x78] sm:$0xff]
    %v2692 = vld [vmem:[%s2675 + $0x80] sm:$0xff]
    %v2693 = vld [vmem:[%s2675 + $0x88] sm:$0xff]
    %v2694 = vld [vmem:[%s2675 + $0x90] sm:$0xff]
    %v2695 = vld [vmem:[%s2675 + $0x98] sm:$0xff]
    %v2696 = vld [vmem:[%s2675 + $0xa0] sm:$0xff]
    %v2697 = vld [vmem:[%s2675 + $0xa8] sm:$0xff]
    %v2698 = vld [vmem:[%s2675 + $0xb0] sm:$0xff]
    %v2699 = vld [vmem:[%s2675 + $0xb8] sm:$0xff]
    %v2700 = vld [vmem:[%s2675 + $0xc0] sm:$0xff]
    %v2701 = vld [vmem:[%s2675 + $0xc8] sm:$0xff]
    %v2702 = vld [vmem:[%s2675 + $0xd0] sm:$0xff]
    %v2703 = vld [vmem:[%s2675 + $0xd8] sm:$0xff]
    %v2704 = vld [vmem:[%s2675 + $0xe0] sm:$0xff]
    %v2705 = vld [vmem:[%s2675 + $0xe8] sm:$0xff]
    %v2706 = vld [vmem:[%s2675 + $0xf0] sm:$0xff]
    %v2707 = vld [vmem:[%s2675 + $0xf8] sm:$0xff]
    %v2708 = vld [vmem:[%s2675 + $0x100] sm:$0xff]
    %v2709 = vld [vmem:[%s2675 + $0x108] sm:$0xff]
    %v2710 = vld [vmem:[%s2675 + $0x110] sm:$0xff]
    %v2711 = vld [vmem:[%s2675 + $0x118] sm:$0xff]
    %v2712 = vld [vmem:[%s2675 + $0x120] sm:$0xff]
    %v2713 = vld [vmem:[%s2675 + $0x128] sm:$0xff]
    %v2714 = vld [vmem:[%s2675 + $0x130] sm:$0xff]
    %v2715 = vld [vmem:[%s2675 + $0x138] sm:$0xff]
    %v2716 = vld [vmem:[%s2675 + $0x140] sm:$0xff]
    %v2717 = vld [vmem:[%s2675 + $0x148] sm:$0xff]
    %v2718 = vld [vmem:[%s2675 + $0x150] sm:$0xff]
    %v2719 = vld [vmem:[%s2675 + $0x158] sm:$0xff]
    %v2720 = vld [vmem:[%s2675 + $0x160] sm:$0xff]
    %v2721 = vld [vmem:[%s2675 + $0x168] sm:$0xff]
    %v2722 = vld [vmem:[%s2675 + $0x170] sm:$0xff]
    %v2723 = vld [vmem:[%s2675 + $0x178] sm:$0xff]
    %v2724 = vld [vmem:[%s2675 + $0x180] sm:$0xff]
    %v2725 = vld [vmem:[%s2675 + $0x188] sm:$0xff]
    %v2726 = vld [vmem:[%s2675 + $0x190] sm:$0xff]
    %v2727 = vld [vmem:[%s2675 + $0x198] sm:$0xff]
    %v2728 = vld [vmem:[%s2675 + $0x1a0] sm:$0xff]
    %v2729 = vld [vmem:[%s2675 + $0x1a8] sm:$0xff]
    %v2730 = vld [vmem:[%s2675 + $0x1b0] sm:$0xff]
    %v2731 = vld [vmem:[%s2675 + $0x1b8] sm:$0xff]
    %v2732 = vld [vmem:[%s2675 + $0x1c0] sm:$0xff]
    %v2733 = vld [vmem:[%s2675 + $0x1c8] sm:$0xff]
    %v2734 = vld [vmem:[%s2675 + $0x1d0] sm:$0xff]
    %v2735 = vld [vmem:[%s2675 + $0x1d8] sm:$0xff]
    %v2736 = vld [vmem:[%s2675 + $0x1e0] sm:$0xff]
    %v2737 = vld [vmem:[%s2675 + $0x1e8] sm:$0xff]
    %v2738 = vld [vmem:[%s2675 + $0x1f0] sm:$0xff]
    %v2739 = vld [vmem:[%s2675 + $0x1f8] sm:$0xff]
    %2740 = vmatprep.subr.mxu0 %v2677
    %2741 = vmatpush1.msra.mxu0 %v2676
    %2742 = vmatprep.subr.mxu0 %v2681
    %2743 = vmatpush1.msra.mxu0 %v2680
    %2744 = vmatprep.subr.mxu0 %v2685
    %2745 = vmatpush1.msra.mxu0 %v2684
    %2746 = vmatprep.subr.mxu0 %v2689
    %2747 = vmatpush1.msra.mxu0 %v2688
    %2748 = vmatprep.subr.mxu0 %v2693
    %2749 = vmatpush1.msra.mxu0 %v2692
    %2750 = vmatprep.subr.mxu0 %v2697
    %2751 = vmatpush1.msra.mxu0 %v2696
    %2752 = vmatprep.subr.mxu0 %v2701
    %2753 = vmatpush1.msra.mxu0 %v2700
    %2754 = vmatprep.subr.mxu0 %v2705
    %2755 = vmatpush1.msra.mxu0 %v2704
    %2756 = vmatprep.subr.mxu0 %v2709
    %2757 = vmatpush1.msra.mxu0 %v2708
    %2758 = vmatprep.subr.mxu0 %v2713
    %2759 = vmatpush1.msra.mxu0 %v2712
    %2760 = vmatprep.subr.mxu0 %v2717
    %2761 = vmatpush1.msra.mxu0 %v2716
    %2762 = vmatprep.subr.mxu0 %v2721
    %2763 = vmatpush1.msra.mxu0 %v2720
    %2764 = vmatprep.subr.mxu0 %v2725
    %2765 = vmatpush1.msra.mxu0 %v2724
    %2766 = vmatprep.subr.mxu0 %v2729
    %2767 = vmatpush1.msra.mxu0 %v2728
    %2768 = vmatprep.subr.mxu0 %v2733
    %2769 = vmatpush1.msra.mxu0 %v2732
    %2770 = vmatprep.subr.mxu0 %v2737
    %2771 = vmatpush1.msra.mxu0 %v2736
    %2772 = vmatprep.subr.mxu0 0.0
    %2773 = vmatpush1.msra.mxu0 0.0
    %2774 = vmatprep.subr.mxu0 0.0
    %2775 = vmatpush1.msra.mxu0 0.0
    %2776 = vmatprep.subr.mxu0 0.0
    %2777 = vmatpush1.msra.mxu0 0.0
    %2778 = vmatprep.subr.mxu0 0.0
    %2779 = vmatpush1.msra.mxu0 0.0
    %2780 = vmatprep.subr.mxu0 0.0
    %2781 = vmatpush1.msra.mxu0 0.0
    %2782 = vmatprep.subr.mxu0 0.0
    %2783 = vmatpush1.msra.mxu0 0.0
    %2784 = vmatprep.subr.mxu0 0.0
    %2785 = vmatpush1.msra.mxu0 0.0
    %2786 = vmatprep.subr.mxu0 0.0
    %2787 = vmatpush1.msra.mxu0 0.0
    %2788 = vmatprep.subr.mxu0 0.0
    %2789 = vmatpush1.msra.mxu0 0.0
    %2790 = vmatprep.subr.mxu0 0.0
    %2791 = vmatpush1.msra.mxu0 0.0
    %2792 = vmatprep.subr.mxu0 0.0
    %2793 = vmatpush1.msra.mxu0 0.0
    %2794 = vmatprep.subr.mxu0 0.0
    %2795 = vmatpush1.msra.mxu0 0.0
    %2796 = vmatprep.subr.mxu0 0.0
    %2797 = vmatpush1.msra.mxu0 0.0
    %2798 = vmatprep.subr.mxu0 0.0
    %2799 = vmatpush1.msra.mxu0 0.0
    %2800 = vmatprep.subr.mxu0 0.0
    %2801 = vmatpush1.msra.mxu0 0.0
    %2802 = vmatprep.subr.mxu0 0.0
    %2803 = vmatpush1.msra.mxu0 0.0
    %2804 = vmatprep.mubr.f32.mxu0 0.0
    %2805 = vmatmul.mubr.f32.gmra.mrb[0].mxu0 %v897
    %v2806 = vpop.f32.mrb[0].mxu0
    %v2807 = vadd.f32 0.0, %v2806
    %v2808 = vpop.f32.mrb[0].mxu0
    %v2809 = vadd.f32 0.0, %v2808
    %2810 = vdwg.mxu0
    %2811 = vmatprep.subr.mxu0 %v2679
    %2812 = vmatpush1.msra.mxu0 %v2678
    %2813 = vmatprep.subr.mxu0 %v2683
    %2814 = vmatpush1.msra.mxu0 %v2682
    %2815 = vmatprep.subr.mxu0 %v2687
    %2816 = vmatpush1.msra.mxu0 %v2686
    %2817 = vmatprep.subr.mxu0 %v2691
    %2818 = vmatpush1.msra.mxu0 %v2690
    %2819 = vmatprep.subr.mxu0 %v2695
    %2820 = vmatpush1.msra.mxu0 %v2694
    %2821 = vmatprep.subr.mxu0 %v2699
    %2822 = vmatpush1.msra.mxu0 %v2698
    %2823 = vmatprep.subr.mxu0 %v2703
    %2824 = vmatpush1.msra.mxu0 %v2702
    %2825 = vmatprep.subr.mxu0 %v2707
    %2826 = vmatpush1.msra.mxu0 %v2706
    %2827 = vmatprep.subr.mxu0 %v2711
    %2828 = vmatpush1.msra.mxu0 %v2710
    %2829 = vmatprep.subr.mxu0 %v2715
    %2830 = vmatpush1.msra.mxu0 %v2714
    %2831 = vmatprep.subr.mxu0 %v2719
    %2832 = vmatpush1.msra.mxu0 %v2718
    %2833 = vmatprep.subr.mxu0 %v2723
    %2834 = vmatpush1.msra.mxu0 %v2722
    %2835 = vmatprep.subr.mxu0 %v2727
    %2836 = vmatpush1.msra.mxu0 %v2726
    %2837 = vmatprep.subr.mxu0 %v2731
    %2838 = vmatpush1.msra.mxu0 %v2730
    %2839 = vmatprep.subr.mxu0 %v2735
    %2840 = vmatpush1.msra.mxu0 %v2734
    %2841 = vmatprep.subr.mxu0 %v2739
    %2842 = vmatpush1.msra.mxu0 %v2738
    %2843 = vmatprep.subr.mxu0 0.0
    %2844 = vmatpush1.msra.mxu0 0.0
    %2845 = vmatprep.subr.mxu0 0.0
    %2846 = vmatpush1.msra.mxu0 0.0
    %2847 = vmatprep.subr.mxu0 0.0
    %2848 = vmatpush1.msra.mxu0 0.0
    %2849 = vmatprep.subr.mxu0 0.0
    %2850 = vmatpush1.msra.mxu0 0.0
    %2851 = vmatprep.subr.mxu0 0.0
    %2852 = vmatpush1.msra.mxu0 0.0
    %2853 = vmatprep.subr.mxu0 0.0
    %2854 = vmatpush1.msra.mxu0 0.0
    %2855 = vmatprep.subr.mxu0 0.0
    %2856 = vmatpush1.msra.mxu0 0.0
    %2857 = vmatprep.subr.mxu0 0.0
    %2858 = vmatpush1.msra.mxu0 0.0
    %2859 = vmatprep.subr.mxu0 0.0
    %2860 = vmatpush1.msra.mxu0 0.0
    %2861 = vmatprep.subr.mxu0 0.0
    %2862 = vmatpush1.msra.mxu0 0.0
    %2863 = vmatprep.subr.mxu0 0.0
    %2864 = vmatpush1.msra.mxu0 0.0
    %2865 = vmatprep.subr.mxu0 0.0
    %2866 = vmatpush1.msra.mxu0 0.0
    %2867 = vmatprep.subr.mxu0 0.0
    %2868 = vmatpush1.msra.mxu0 0.0
    %2869 = vmatprep.subr.mxu0 0.0
    %2870 = vmatpush1.msra.mxu0 0.0
    %2871 = vmatprep.subr.mxu0 0.0
    %2872 = vmatpush1.msra.mxu0 0.0
    %2873 = vmatprep.subr.mxu0 0.0
    %2874 = vmatpush1.msra.mxu0 0.0
    %2875 = vmatprep.mubr.f32.mxu0 0.0
    %2876 = vmatmul.mubr.f32.gmra.mrb[0].mxu0 %v897
    %v2877 = vpop.f32.mrb[0].mxu0
    %v2878 = vadd.f32 0.0, %v2877
    %v2879 = vpop.f32.mrb[0].mxu0
    %v2880 = vadd.f32 0.0, %v2879
    %2881 = vdwg.mxu0
    %v2882 = vmul.f32 %v2807, %v900
    %v2883 = vmul.f32 %v2809, %v901
    %v2886 = vcombine.low %v2882, %v2883
    %v2887 = vcombine.high %v2882, %v2883
    %v2889 = vunpack.c.l.s4 1966171168
    %v2890 = vunpack.c.0.s8 %v2889
    %v2891 = vlaneseq
    %v2892 = vshrl.u32 %v2891, 7
    %v2893 = vsub.s32 %v2890, %v2892
    %v2894 = vrot.slane %v2886, %v2893
    %v2896 = vunpack.c.l.s4 1966171168
    %v2897 = vunpack.c.0.s8 %v2896
    %v2898 = vlaneseq
    %v2899 = vshrl.u32 %v2898, 7
    %v2900 = vsub.s32 %v2897, %v2899
    %v2901 = vrot.slane %v2887, %v2900
    %v2902 = vcombine.high %v2894, %v2894
    %v2903 = vcombine.high %v2901, %v2901
    %v2905 = vunpack.c.l.s4 1966171168
    %v2906 = vunpack.c.0.s8 %v2905
    %v2907 = vlaneseq
    %v2908 = vshrl.u32 %v2907, 7
    %v2909 = vsub.s32 %v2906, %v2908
    %v2910 = vrot.slane %v2894, %v2909
    %v2912 = vunpack.c.l.s4 1966171168
    %v2913 = vunpack.c.0.s8 %v2912
    %v2914 = vlaneseq
    %v2915 = vshrl.u32 %v2914, 7
    %v2916 = vsub.s32 %v2913, %v2915
    %v2917 = vrot.slane %v2901, %v2916
    %v2919 = vunpack.c.l.s4 1966171168
    %v2920 = vunpack.c.0.s8 %v2919
    %v2921 = vlaneseq
    %v2922 = vshrl.u32 %v2921, 7
    %v2923 = vsub.s32 %v2920, %v2922
    %v2924 = vrot.slane %v2902, %v2923
    %v2926 = vunpack.c.l.s4 1966171168
    %v2927 = vunpack.c.0.s8 %v2926
    %v2928 = vlaneseq
    %v2929 = vshrl.u32 %v2928, 7
    %v2930 = vsub.s32 %v2927, %v2929
    %v2931 = vrot.slane %v2903, %v2930
    %v2932 = vcombine.high %v2910, %v2910
    %v2933 = vcombine.high %v2917, %v2917
    %v2934 = vcombine.high %v2924, %v2924
    %v2935 = vcombine.high %v2931, %v2931
    %s2944 = scalar_lea.vmem [#allocation3], 4
    %2945 = vst.msk [vmem:[%s2944] ss:$8 sm:$0x3] %vm1437, %v2910
    %2946 = vst.msk [vmem:[%s2944] ss:$8 sm:$0x0] %vm1437, %v2910
    %s2947 = scalar_lea.vmem [#allocation3], 36
    %2948 = vst.msk [vmem:[%s2947] ss:$8 sm:$0x3] %vm1437, %v2924
    %2949 = vst.msk [vmem:[%s2947] ss:$8 sm:$0x0] %vm1437, %v2924
    %s2950 = scalar_lea.vmem [#allocation3], 68
    %2951 = vst.msk [vmem:[%s2950] ss:$8 sm:$0x3] %vm1437, %v2932
    %2952 = vst.msk [vmem:[%s2950] ss:$8 sm:$0x0] %vm1437, %v2932
    %s2953 = scalar_lea.vmem [#allocation3], 100
    %2954 = vst.msk [vmem:[%s2953] ss:$8 sm:$0x3] %vm1437, %v2934
    %2955 = vst.msk [vmem:[%s2953] ss:$8 sm:$0x0] %vm1437, %v2934
    %s2956 = scalar_lea.vmem [#allocation3], 132
    %2957 = vst.msk [vmem:[%s2956] ss:$8 sm:$0x3] %vm1437, %v2917
    %2958 = vst.msk [vmem:[%s2956] ss:$8 sm:$0x0] %vm1437, %v2917
    %s2959 = scalar_lea.vmem [#allocation3], 164
    %2960 = vst.msk [vmem:[%s2959] ss:$8 sm:$0x3] %vm1437, %v2931
    %2961 = vst.msk [vmem:[%s2959] ss:$8 sm:$0x0] %vm1437, %v2931
    %s2962 = scalar_lea.vmem [#allocation3], 196
    %2963 = vst.msk [vmem:[%s2962] ss:$8 sm:$0x3] %vm1437, %v2933
    %2964 = vst.msk [vmem:[%s2962] ss:$8 sm:$0x0] %vm1437, %v2933
    %s2965 = scalar_lea.vmem [#allocation3], 228
    %2966 = vst.msk [vmem:[%s2965] ss:$8 sm:$0x3] %vm1437, %v2935
    %2967 = vst.msk [vmem:[%s2965] ss:$8 sm:$0x0] %vm1437, %v2935
    %v2970 = vcombine.low %v2878, %v2880
    %v2971 = vcombine.high %v2878, %v2880
    %v2973 = vunpack.c.l.s4 1966171168
    %v2974 = vunpack.c.0.s8 %v2973
    %v2975 = vlaneseq
    %v2976 = vshrl.u32 %v2975, 7
    %v2977 = vsub.s32 %v2974, %v2976
    %v2978 = vrot.slane %v2970, %v2977
    %v2980 = vunpack.c.l.s4 1966171168
    %v2981 = vunpack.c.0.s8 %v2980
    %v2982 = vlaneseq
    %v2983 = vshrl.u32 %v2982, 7
    %v2984 = vsub.s32 %v2981, %v2983
    %v2985 = vrot.slane %v2971, %v2984
    %v2986 = vcombine.high %v2978, %v2978
    %v2987 = vcombine.high %v2985, %v2985
    %v2989 = vunpack.c.l.s4 1966171168
    %v2990 = vunpack.c.0.s8 %v2989
    %v2991 = vlaneseq
    %v2992 = vshrl.u32 %v2991, 7
    %v2993 = vsub.s32 %v2990, %v2992
    %v2994 = vrot.slane %v2978, %v2993
    %v2996 = vunpack.c.l.s4 1966171168
    %v2997 = vunpack.c.0.s8 %v2996
    %v2998 = vlaneseq
    %v2999 = vshrl.u32 %v2998, 7
    %v3000 = vsub.s32 %v2997, %v2999
    %v3001 = vrot.slane %v2985, %v3000
    %v3003 = vunpack.c.l.s4 1966171168
    %v3004 = vunpack.c.0.s8 %v3003
    %v3005 = vlaneseq
    %v3006 = vshrl.u32 %v3005, 7
    %v3007 = vsub.s32 %v3004, %v3006
    %v3008 = vrot.slane %v2986, %v3007
    %v3010 = vunpack.c.l.s4 1966171168
    %v3011 = vunpack.c.0.s8 %v3010
    %v3012 = vlaneseq
    %v3013 = vshrl.u32 %v3012, 7
    %v3014 = vsub.s32 %v3011, %v3013
    %v3015 = vrot.slane %v2987, %v3014
    %v3016 = vcombine.high %v2994, %v2994
    %v3017 = vcombine.high %v3001, %v3001
    %v3018 = vcombine.high %v3008, %v3008
    %v3019 = vcombine.high %v3015, %v3015
    %s3028 = scalar_lea.vmem [#allocation4], 4
    %3029 = vst.msk [vmem:[%s3028] ss:$8 sm:$0x3] %vm1437, %v2994
    %3030 = vst.msk [vmem:[%s3028] ss:$8 sm:$0x0] %vm1437, %v2994
    %s3031 = scalar_lea.vmem [#allocation4], 36
    %3032 = vst.msk [vmem:[%s3031] ss:$8 sm:$0x3] %vm1437, %v3008
    %3033 = vst.msk [vmem:[%s3031] ss:$8 sm:$0x0] %vm1437, %v3008
    %s3034 = scalar_lea.vmem [#allocation4], 68
    %3035 = vst.msk [vmem:[%s3034] ss:$8 sm:$0x3] %vm1437, %v3016
    %3036 = vst.msk [vmem:[%s3034] ss:$8 sm:$0x0] %vm1437, %v3016
    %s3037 = scalar_lea.vmem [#allocation4], 100
    %3038 = vst.msk [vmem:[%s3037] ss:$8 sm:$0x3] %vm1437, %v3018
    %3039 = vst.msk [vmem:[%s3037] ss:$8 sm:$0x0] %vm1437, %v3018
    %s3040 = scalar_lea.vmem [#allocation4], 132
    %3041 = vst.msk [vmem:[%s3040] ss:$8 sm:$0x3] %vm1437, %v3001
    %3042 = vst.msk [vmem:[%s3040] ss:$8 sm:$0x0] %vm1437, %v3001
    %s3043 = scalar_lea.vmem [#allocation4], 164
    %3044 = vst.msk [vmem:[%s3043] ss:$8 sm:$0x3] %vm1437, %v3015
    %3045 = vst.msk [vmem:[%s3043] ss:$8 sm:$0x0] %vm1437, %v3015
    %s3046 = scalar_lea.vmem [#allocation4], 196
    %3047 = vst.msk [vmem:[%s3046] ss:$8 sm:$0x3] %vm1437, %v3017
    %3048 = vst.msk [vmem:[%s3046] ss:$8 sm:$0x0] %vm1437, %v3017
    %s3049 = scalar_lea.vmem [#allocation4], 228
    %3050 = vst.msk [vmem:[%s3049] ss:$8 sm:$0x3] %vm1437, %v3019
    %3051 = vst.msk [vmem:[%s3049] ss:$8 sm:$0x0] %vm1437, %v3019
    %s3052 = scalar_lea.vmem [#allocation26], 2560
    %v3053 = vld [vmem:[%s3052] sm:$0xff]
    %v3054 = vld [vmem:[%s3052 + $0x8] sm:$0xff]
    %v3055 = vld [vmem:[%s3052 + $0x10] sm:$0xff]
    %v3056 = vld [vmem:[%s3052 + $0x18] sm:$0xff]
    %v3057 = vld [vmem:[%s3052 + $0x20] sm:$0xff]
    %v3058 = vld [vmem:[%s3052 + $0x28] sm:$0xff]
    %v3059 = vld [vmem:[%s3052 + $0x30] sm:$0xff]
    %v3060 = vld [vmem:[%s3052 + $0x38] sm:$0xff]
    %v3061 = vld [vmem:[%s3052 + $0x40] sm:$0xff]
    %v3062 = vld [vmem:[%s3052 + $0x48] sm:$0xff]
    %v3063 = vld [vmem:[%s3052 + $0x50] sm:$0xff]
    %v3064 = vld [vmem:[%s3052 + $0x58] sm:$0xff]
    %v3065 = vld [vmem:[%s3052 + $0x60] sm:$0xff]
    %v3066 = vld [vmem:[%s3052 + $0x68] sm:$0xff]
    %v3067 = vld [vmem:[%s3052 + $0x70] sm:$0xff]
    %v3068 = vld [vmem:[%s3052 + $0x78] sm:$0xff]
    %v3069 = vld [vmem:[%s3052 + $0x80] sm:$0xff]
    %v3070 = vld [vmem:[%s3052 + $0x88] sm:$0xff]
    %v3071 = vld [vmem:[%s3052 + $0x90] sm:$0xff]
    %v3072 = vld [vmem:[%s3052 + $0x98] sm:$0xff]
    %v3073 = vld [vmem:[%s3052 + $0xa0] sm:$0xff]
    %v3074 = vld [vmem:[%s3052 + $0xa8] sm:$0xff]
    %v3075 = vld [vmem:[%s3052 + $0xb0] sm:$0xff]
    %v3076 = vld [vmem:[%s3052 + $0xb8] sm:$0xff]
    %v3077 = vld [vmem:[%s3052 + $0xc0] sm:$0xff]
    %v3078 = vld [vmem:[%s3052 + $0xc8] sm:$0xff]
    %v3079 = vld [vmem:[%s3052 + $0xd0] sm:$0xff]
    %v3080 = vld [vmem:[%s3052 + $0xd8] sm:$0xff]
    %v3081 = vld [vmem:[%s3052 + $0xe0] sm:$0xff]
    %v3082 = vld [vmem:[%s3052 + $0xe8] sm:$0xff]
    %v3083 = vld [vmem:[%s3052 + $0xf0] sm:$0xff]
    %v3084 = vld [vmem:[%s3052 + $0xf8] sm:$0xff]
    %v3085 = vld [vmem:[%s3052 + $0x100] sm:$0xff]
    %v3086 = vld [vmem:[%s3052 + $0x108] sm:$0xff]
    %v3087 = vld [vmem:[%s3052 + $0x110] sm:$0xff]
    %v3088 = vld [vmem:[%s3052 + $0x118] sm:$0xff]
    %v3089 = vld [vmem:[%s3052 + $0x120] sm:$0xff]
    %v3090 = vld [vmem:[%s3052 + $0x128] sm:$0xff]
    %v3091 = vld [vmem:[%s3052 + $0x130] sm:$0xff]
    %v3092 = vld [vmem:[%s3052 + $0x138] sm:$0xff]
    %v3093 = vld [vmem:[%s3052 + $0x140] sm:$0xff]
    %v3094 = vld [vmem:[%s3052 + $0x148] sm:$0xff]
    %v3095 = vld [vmem:[%s3052 + $0x150] sm:$0xff]
    %v3096 = vld [vmem:[%s3052 + $0x158] sm:$0xff]
    %v3097 = vld [vmem:[%s3052 + $0x160] sm:$0xff]
    %v3098 = vld [vmem:[%s3052 + $0x168] sm:$0xff]
    %v3099 = vld [vmem:[%s3052 + $0x170] sm:$0xff]
    %v3100 = vld [vmem:[%s3052 + $0x178] sm:$0xff]
    %v3101 = vld [vmem:[%s3052 + $0x180] sm:$0xff]
    %v3102 = vld [vmem:[%s3052 + $0x188] sm:$0xff]
    %v3103 = vld [vmem:[%s3052 + $0x190] sm:$0xff]
    %v3104 = vld [vmem:[%s3052 + $0x198] sm:$0xff]
    %v3105 = vld [vmem:[%s3052 + $0x1a0] sm:$0xff]
    %v3106 = vld [vmem:[%s3052 + $0x1a8] sm:$0xff]
    %v3107 = vld [vmem:[%s3052 + $0x1b0] sm:$0xff]
    %v3108 = vld [vmem:[%s3052 + $0x1b8] sm:$0xff]
    %v3109 = vld [vmem:[%s3052 + $0x1c0] sm:$0xff]
    %v3110 = vld [vmem:[%s3052 + $0x1c8] sm:$0xff]
    %v3111 = vld [vmem:[%s3052 + $0x1d0] sm:$0xff]
    %v3112 = vld [vmem:[%s3052 + $0x1d8] sm:$0xff]
    %v3113 = vld [vmem:[%s3052 + $0x1e0] sm:$0xff]
    %v3114 = vld [vmem:[%s3052 + $0x1e8] sm:$0xff]
    %v3115 = vld [vmem:[%s3052 + $0x1f0] sm:$0xff]
    %v3116 = vld [vmem:[%s3052 + $0x1f8] sm:$0xff]
    %3117 = vmatprep.subr.mxu0 %v3054
    %3118 = vmatpush1.msra.mxu0 %v3053
    %3119 = vmatprep.subr.mxu0 %v3058
    %3120 = vmatpush1.msra.mxu0 %v3057
    %3121 = vmatprep.subr.mxu0 %v3062
    %3122 = vmatpush1.msra.mxu0 %v3061
    %3123 = vmatprep.subr.mxu0 %v3066
    %3124 = vmatpush1.msra.mxu0 %v3065
    %3125 = vmatprep.subr.mxu0 %v3070
    %3126 = vmatpush1.msra.mxu0 %v3069
    %3127 = vmatprep.subr.mxu0 %v3074
    %3128 = vmatpush1.msra.mxu0 %v3073
    %3129 = vmatprep.subr.mxu0 %v3078
    %3130 = vmatpush1.msra.mxu0 %v3077
    %3131 = vmatprep.subr.mxu0 %v3082
    %3132 = vmatpush1.msra.mxu0 %v3081
    %3133 = vmatprep.subr.mxu0 %v3086
    %3134 = vmatpush1.msra.mxu0 %v3085
    %3135 = vmatprep.subr.mxu0 %v3090
    %3136 = vmatpush1.msra.mxu0 %v3089
    %3137 = vmatprep.subr.mxu0 %v3094
    %3138 = vmatpush1.msra.mxu0 %v3093
    %3139 = vmatprep.subr.mxu0 %v3098
    %3140 = vmatpush1.msra.mxu0 %v3097
    %3141 = vmatprep.subr.mxu0 %v3102
    %3142 = vmatpush1.msra.mxu0 %v3101
    %3143 = vmatprep.subr.mxu0 %v3106
    %3144 = vmatpush1.msra.mxu0 %v3105
    %3145 = vmatprep.subr.mxu0 %v3110
    %3146 = vmatpush1.msra.mxu0 %v3109
    %3147 = vmatprep.subr.mxu0 %v3114
    %3148 = vmatpush1.msra.mxu0 %v3113
    %3149 = vmatprep.subr.mxu0 0.0
    %3150 = vmatpush1.msra.mxu0 0.0
    %3151 = vmatprep.subr.mxu0 0.0
    %3152 = vmatpush1.msra.mxu0 0.0
    %3153 = vmatprep.subr.mxu0 0.0
    %3154 = vmatpush1.msra.mxu0 0.0
    %3155 = vmatprep.subr.mxu0 0.0
    %3156 = vmatpush1.msra.mxu0 0.0
    %3157 = vmatprep.subr.mxu0 0.0
    %3158 = vmatpush1.msra.mxu0 0.0
    %3159 = vmatprep.subr.mxu0 0.0
    %3160 = vmatpush1.msra.mxu0 0.0
    %3161 = vmatprep.subr.mxu0 0.0
    %3162 = vmatpush1.msra.mxu0 0.0
    %3163 = vmatprep.subr.mxu0 0.0
    %3164 = vmatpush1.msra.mxu0 0.0
    %3165 = vmatprep.subr.mxu0 0.0
    %3166 = vmatpush1.msra.mxu0 0.0
    %3167 = vmatprep.subr.mxu0 0.0
    %3168 = vmatpush1.msra.mxu0 0.0
    %3169 = vmatprep.subr.mxu0 0.0
    %3170 = vmatpush1.msra.mxu0 0.0
    %3171 = vmatprep.subr.mxu0 0.0
    %3172 = vmatpush1.msra.mxu0 0.0
    %3173 = vmatprep.subr.mxu0 0.0
    %3174 = vmatpush1.msra.mxu0 0.0
    %3175 = vmatprep.subr.mxu0 0.0
    %3176 = vmatpush1.msra.mxu0 0.0
    %3177 = vmatprep.subr.mxu0 0.0
    %3178 = vmatpush1.msra.mxu0 0.0
    %3179 = vmatprep.subr.mxu0 0.0
    %3180 = vmatpush1.msra.mxu0 0.0
    %3181 = vmatprep.mubr.f32.mxu0 0.0
    %3182 = vmatmul.mubr.f32.gmra.mrb[0].mxu0 %v897
    %v3183 = vpop.f32.mrb[0].mxu0
    %v3184 = vadd.f32 0.0, %v3183
    %v3185 = vpop.f32.mrb[0].mxu0
    %v3186 = vadd.f32 0.0, %v3185
    %3187 = vdwg.mxu0
    %3188 = vmatprep.subr.mxu0 %v3056
    %3189 = vmatpush1.msra.mxu0 %v3055
    %3190 = vmatprep.subr.mxu0 %v3060
    %3191 = vmatpush1.msra.mxu0 %v3059
    %3192 = vmatprep.subr.mxu0 %v3064
    %3193 = vmatpush1.msra.mxu0 %v3063
    %3194 = vmatprep.subr.mxu0 %v3068
    %3195 = vmatpush1.msra.mxu0 %v3067
    %3196 = vmatprep.subr.mxu0 %v3072
    %3197 = vmatpush1.msra.mxu0 %v3071
    %3198 = vmatprep.subr.mxu0 %v3076
    %3199 = vmatpush1.msra.mxu0 %v3075
    %3200 = vmatprep.subr.mxu0 %v3080
    %3201 = vmatpush1.msra.mxu0 %v3079
    %3202 = vmatprep.subr.mxu0 %v3084
    %3203 = vmatpush1.msra.mxu0 %v3083
    %3204 = vmatprep.subr.mxu0 %v3088
    %3205 = vmatpush1.msra.mxu0 %v3087
    %3206 = vmatprep.subr.mxu0 %v3092
    %3207 = vmatpush1.msra.mxu0 %v3091
    %3208 = vmatprep.subr.mxu0 %v3096
    %3209 = vmatpush1.msra.mxu0 %v3095
    %3210 = vmatprep.subr.mxu0 %v3100
    %3211 = vmatpush1.msra.mxu0 %v3099
    %3212 = vmatprep.subr.mxu0 %v3104
    %3213 = vmatpush1.msra.mxu0 %v3103
    %3214 = vmatprep.subr.mxu0 %v3108
    %3215 = vmatpush1.msra.mxu0 %v3107
    %3216 = vmatprep.subr.mxu0 %v3112
    %3217 = vmatpush1.msra.mxu0 %v3111
    %3218 = vmatprep.subr.mxu0 %v3116
    %3219 = vmatpush1.msra.mxu0 %v3115
    %3220 = vmatprep.subr.mxu0 0.0
    %3221 = vmatpush1.msra.mxu0 0.0
    %3222 = vmatprep.subr.mxu0 0.0
    %3223 = vmatpush1.msra.mxu0 0.0
    %3224 = vmatprep.subr.mxu0 0.0
    %3225 = vmatpush1.msra.mxu0 0.0
    %3226 = vmatprep.subr.mxu0 0.0
    %3227 = vmatpush1.msra.mxu0 0.0
    %3228 = vmatprep.subr.mxu0 0.0
    %3229 = vmatpush1.msra.mxu0 0.0
    %3230 = vmatprep.subr.mxu0 0.0
    %3231 = vmatpush1.msra.mxu0 0.0
    %3232 = vmatprep.subr.mxu0 0.0
    %3233 = vmatpush1.msra.mxu0 0.0
    %3234 = vmatprep.subr.mxu0 0.0
    %3235 = vmatpush1.msra.mxu0 0.0
    %3236 = vmatprep.subr.mxu0 0.0
    %3237 = vmatpush1.msra.mxu0 0.0
    %3238 = vmatprep.subr.mxu0 0.0
    %3239 = vmatpush1.msra.mxu0 0.0
    %3240 = vmatprep.subr.mxu0 0.0
    %3241 = vmatpush1.msra.mxu0 0.0
    %3242 = vmatprep.subr.mxu0 0.0
    %3243 = vmatpush1.msra.mxu0 0.0
    %3244 = vmatprep.subr.mxu0 0.0
    %3245 = vmatpush1.msra.mxu0 0.0
    %3246 = vmatprep.subr.mxu0 0.0
    %3247 = vmatpush1.msra.mxu0 0.0
    %3248 = vmatprep.subr.mxu0 0.0
    %3249 = vmatpush1.msra.mxu0 0.0
    %3250 = vmatprep.subr.mxu0 0.0
    %3251 = vmatpush1.msra.mxu0 0.0
    %3252 = vmatprep.mubr.f32.mxu0 0.0
    %3253 = vmatmul.mubr.f32.gmra.mrb[0].mxu0 %v897
    %v3254 = vpop.f32.mrb[0].mxu0
    %v3255 = vadd.f32 0.0, %v3254
    %v3256 = vpop.f32.mrb[0].mxu0
    %v3257 = vadd.f32 0.0, %v3256
    %3258 = vdwg.mxu0
    %v3259 = vmul.f32 %v3184, %v900
    %v3260 = vmul.f32 %v3186, %v901
    %v3263 = vcombine.low %v3259, %v3260
    %v3264 = vcombine.high %v3259, %v3260
    %v3266 = vunpack.c.l.s4 1966171168
    %v3267 = vunpack.c.0.s8 %v3266
    %v3268 = vlaneseq
    %v3269 = vshrl.u32 %v3268, 7
    %v3270 = vsub.s32 %v3267, %v3269
    %v3271 = vrot.slane %v3263, %v3270
    %v3273 = vunpack.c.l.s4 1966171168
    %v3274 = vunpack.c.0.s8 %v3273
    %v3275 = vlaneseq
    %v3276 = vshrl.u32 %v3275, 7
    %v3277 = vsub.s32 %v3274, %v3276
    %v3278 = vrot.slane %v3264, %v3277
    %v3279 = vcombine.high %v3271, %v3271
    %v3280 = vcombine.high %v3278, %v3278
    %v3282 = vunpack.c.l.s4 1966171168
    %v3283 = vunpack.c.0.s8 %v3282
    %v3284 = vlaneseq
    %v3285 = vshrl.u32 %v3284, 7
    %v3286 = vsub.s32 %v3283, %v3285
    %v3287 = vrot.slane %v3271, %v3286
    %v3289 = vunpack.c.l.s4 1966171168
    %v3290 = vunpack.c.0.s8 %v3289
    %v3291 = vlaneseq
    %v3292 = vshrl.u32 %v3291, 7
    %v3293 = vsub.s32 %v3290, %v3292
    %v3294 = vrot.slane %v3278, %v3293
    %v3296 = vunpack.c.l.s4 1966171168
    %v3297 = vunpack.c.0.s8 %v3296
    %v3298 = vlaneseq
    %v3299 = vshrl.u32 %v3298, 7
    %v3300 = vsub.s32 %v3297, %v3299
    %v3301 = vrot.slane %v3279, %v3300
    %v3303 = vunpack.c.l.s4 1966171168
    %v3304 = vunpack.c.0.s8 %v3303
    %v3305 = vlaneseq
    %v3306 = vshrl.u32 %v3305, 7
    %v3307 = vsub.s32 %v3304, %v3306
    %v3308 = vrot.slane %v3280, %v3307
    %v3309 = vcombine.high %v3287, %v3287
    %v3310 = vcombine.high %v3294, %v3294
    %v3311 = vcombine.high %v3301, %v3301
    %v3312 = vcombine.high %v3308, %v3308
    %s3321 = scalar_lea.vmem [#allocation3], 5
    %3322 = vst.msk [vmem:[%s3321] ss:$8 sm:$0x3] %vm1437, %v3287
    %3323 = vst.msk [vmem:[%s3321] ss:$8 sm:$0x0] %vm1437, %v3287
    %s3324 = scalar_lea.vmem [#allocation3], 37
    %3325 = vst.msk [vmem:[%s3324] ss:$8 sm:$0x3] %vm1437, %v3301
    %3326 = vst.msk [vmem:[%s3324] ss:$8 sm:$0x0] %vm1437, %v3301
    %s3327 = scalar_lea.vmem [#allocation3], 69
    %3328 = vst.msk [vmem:[%s3327] ss:$8 sm:$0x3] %vm1437, %v3309
    %3329 = vst.msk [vmem:[%s3327] ss:$8 sm:$0x0] %vm1437, %v3309
    %s3330 = scalar_lea.vmem [#allocation3], 101
    %3331 = vst.msk [vmem:[%s3330] ss:$8 sm:$0x3] %vm1437, %v3311
    %3332 = vst.msk [vmem:[%s3330] ss:$8 sm:$0x0] %vm1437, %v3311
    %s3333 = scalar_lea.vmem [#allocation3], 133
    %3334 = vst.msk [vmem:[%s3333] ss:$8 sm:$0x3] %vm1437, %v3294
    %3335 = vst.msk [vmem:[%s3333] ss:$8 sm:$0x0] %vm1437, %v3294
    %s3336 = scalar_lea.vmem [#allocation3], 165
    %3337 = vst.msk [vmem:[%s3336] ss:$8 sm:$0x3] %vm1437, %v3308
    %3338 = vst.msk [vmem:[%s3336] ss:$8 sm:$0x0] %vm1437, %v3308
    %s3339 = scalar_lea.vmem [#allocation3], 197
    %3340 = vst.msk [vmem:[%s3339] ss:$8 sm:$0x3] %vm1437, %v3310
    %3341 = vst.msk [vmem:[%s3339] ss:$8 sm:$0x0] %vm1437, %v3310
    %s3342 = scalar_lea.vmem [#allocation3], 229
    %3343 = vst.msk [vmem:[%s3342] ss:$8 sm:$0x3] %vm1437, %v3312
    %3344 = vst.msk [vmem:[%s3342] ss:$8 sm:$0x0] %vm1437, %v3312
    %v3347 = vcombine.low %v3255, %v3257
    %v3348 = vcombine.high %v3255, %v3257
    %v3350 = vunpack.c.l.s4 1966171168
    %v3351 = vunpack.c.0.s8 %v3350
    %v3352 = vlaneseq
    %v3353 = vshrl.u32 %v3352, 7
    %v3354 = vsub.s32 %v3351, %v3353
    %v3355 = vrot.slane %v3347, %v3354
    %v3357 = vunpack.c.l.s4 1966171168
    %v3358 = vunpack.c.0.s8 %v3357
    %v3359 = vlaneseq
    %v3360 = vshrl.u32 %v3359, 7
    %v3361 = vsub.s32 %v3358, %v3360
    %v3362 = vrot.slane %v3348, %v3361
    %v3363 = vcombine.high %v3355, %v3355
    %v3364 = vcombine.high %v3362, %v3362
    %v3366 = vunpack.c.l.s4 1966171168
    %v3367 = vunpack.c.0.s8 %v3366
    %v3368 = vlaneseq
    %v3369 = vshrl.u32 %v3368, 7
    %v3370 = vsub.s32 %v3367, %v3369
    %v3371 = vrot.slane %v3355, %v3370
    %v3373 = vunpack.c.l.s4 1966171168
    %v3374 = vunpack.c.0.s8 %v3373
    %v3375 = vlaneseq
    %v3376 = vshrl.u32 %v3375, 7
    %v3377 = vsub.s32 %v3374, %v3376
    %v3378 = vrot.slane %v3362, %v3377
    %v3380 = vunpack.c.l.s4 1966171168
    %v3381 = vunpack.c.0.s8 %v3380
    %v3382 = vlaneseq
    %v3383 = vshrl.u32 %v3382, 7
    %v3384 = vsub.s32 %v3381, %v3383
    %v3385 = vrot.slane %v3363, %v3384
    %v3387 = vunpack.c.l.s4 1966171168
    %v3388 = vunpack.c.0.s8 %v3387
    %v3389 = vlaneseq
    %v3390 = vshrl.u32 %v3389, 7
    %v3391 = vsub.s32 %v3388, %v3390
    %v3392 = vrot.slane %v3364, %v3391
    %v3393 = vcombine.high %v3371, %v3371
    %v3394 = vcombine.high %v3378, %v3378
    %v3395 = vcombine.high %v3385, %v3385
    %v3396 = vcombine.high %v3392, %v3392
    %s3405 = scalar_lea.vmem [#allocation4], 5
    %3406 = vst.msk [vmem:[%s3405] ss:$8 sm:$0x3] %vm1437, %v3371
    %3407 = vst.msk [vmem:[%s3405] ss:$8 sm:$0x0] %vm1437, %v3371
    %s3408 = scalar_lea.vmem [#allocation4], 37
    %3409 = vst.msk [vmem:[%s3408] ss:$8 sm:$0x3] %vm1437, %v3385
    %3410 = vst.msk [vmem:[%s3408] ss:$8 sm:$0x0] %vm1437, %v3385
    %s3411 = scalar_lea.vmem [#allocation4], 69
    %3412 = vst.msk [vmem:[%s3411] ss:$8 sm:$0x3] %vm1437, %v3393
    %3413 = vst.msk [vmem:[%s3411] ss:$8 sm:$0x0] %vm1437, %v3393
    %s3414 = scalar_lea.vmem [#allocation4], 101
    %3415 = vst.msk [vmem:[%s3414] ss:$8 sm:$0x3] %vm1437, %v3395
    %3416 = vst.msk [vmem:[%s3414] ss:$8 sm:$0x0] %vm1437, %v3395
    %s3417 = scalar_lea.vmem [#allocation4], 133
    %3418 = vst.msk [vmem:[%s3417] ss:$8 sm:$0x3] %vm1437, %v3378
    %3419 = vst.msk [vmem:[%s3417] ss:$8 sm:$0x0] %vm1437, %v3378
    %s3420 = scalar_lea.vmem [#allocation4], 165
    %3421 = vst.msk [vmem:[%s3420] ss:$8 sm:$0x3] %vm1437, %v3392
    %3422 = vst.msk [vmem:[%s3420] ss:$8 sm:$0x0] %vm1437, %v3392
    %s3423 = scalar_lea.vmem [#allocation4], 197
    %3424 = vst.msk [vmem:[%s3423] ss:$8 sm:$0x3] %vm1437, %v3394
    %3425 = vst.msk [vmem:[%s3423] ss:$8 sm:$0x0] %vm1437, %v3394
    %s3426 = scalar_lea.vmem [#allocation4], 229
    %3427 = vst.msk [vmem:[%s3426] ss:$8 sm:$0x3] %vm1437, %v3396
    %3428 = vst.msk [vmem:[%s3426] ss:$8 sm:$0x0] %vm1437, %v3396
    %s3429 = scalar_lea.vmem [#allocation26], 3072
    %v3430 = vld [vmem:[%s3429] sm:$0xff]
    %v3431 = vld [vmem:[%s3429 + $0x8] sm:$0xff]
    %v3432 = vld [vmem:[%s3429 + $0x10] sm:$0xff]
    %v3433 = vld [vmem:[%s3429 + $0x18] sm:$0xff]
    %v3434 = vld [vmem:[%s3429 + $0x20] sm:$0xff]
    %v3435 = vld [vmem:[%s3429 + $0x28] sm:$0xff]
    %v3436 = vld [vmem:[%s3429 + $0x30] sm:$0xff]
    %v3437 = vld [vmem:[%s3429 + $0x38] sm:$0xff]
    %v3438 = vld [vmem:[%s3429 + $0x40] sm:$0xff]
    %v3439 = vld [vmem:[%s3429 + $0x48] sm:$0xff]
    %v3440 = vld [vmem:[%s3429 + $0x50] sm:$0xff]
    %v3441 = vld [vmem:[%s3429 + $0x58] sm:$0xff]
    %v3442 = vld [vmem:[%s3429 + $0x60] sm:$0xff]
    %v3443 = vld [vmem:[%s3429 + $0x68] sm:$0xff]
    %v3444 = vld [vmem:[%s3429 + $0x70] sm:$0xff]
    %v3445 = vld [vmem:[%s3429 + $0x78] sm:$0xff]
    %v3446 = vld [vmem:[%s3429 + $0x80] sm:$0xff]
    %v3447 = vld [vmem:[%s3429 + $0x88] sm:$0xff]
    %v3448 = vld [vmem:[%s3429 + $0x90] sm:$0xff]
    %v3449 = vld [vmem:[%s3429 + $0x98] sm:$0xff]
    %v3450 = vld [vmem:[%s3429 + $0xa0] sm:$0xff]
    %v3451 = vld [vmem:[%s3429 + $0xa8] sm:$0xff]
    %v3452 = vld [vmem:[%s3429 + $0xb0] sm:$0xff]
    %v3453 = vld [vmem:[%s3429 + $0xb8] sm:$0xff]
    %v3454 = vld [vmem:[%s3429 + $0xc0] sm:$0xff]
    %v3455 = vld [vmem:[%s3429 + $0xc8] sm:$0xff]
    %v3456 = vld [vmem:[%s3429 + $0xd0] sm:$0xff]
    %v3457 = vld [vmem:[%s3429 + $0xd8] sm:$0xff]
    %v3458 = vld [vmem:[%s3429 + $0xe0] sm:$0xff]
    %v3459 = vld [vmem:[%s3429 + $0xe8] sm:$0xff]
    %v3460 = vld [vmem:[%s3429 + $0xf0] sm:$0xff]
    %v3461 = vld [vmem:[%s3429 + $0xf8] sm:$0xff]
    %v3462 = vld [vmem:[%s3429 + $0x100] sm:$0xff]
    %v3463 = vld [vmem:[%s3429 + $0x108] sm:$0xff]
    %v3464 = vld [vmem:[%s3429 + $0x110] sm:$0xff]
    %v3465 = vld [vmem:[%s3429 + $0x118] sm:$0xff]
    %v3466 = vld [vmem:[%s3429 + $0x120] sm:$0xff]
    %v3467 = vld [vmem:[%s3429 + $0x128] sm:$0xff]
    %v3468 = vld [vmem:[%s3429 + $0x130] sm:$0xff]
    %v3469 = vld [vmem:[%s3429 + $0x138] sm:$0xff]
    %v3470 = vld [vmem:[%s3429 + $0x140] sm:$0xff]
    %v3471 = vld [vmem:[%s3429 + $0x148] sm:$0xff]
    %v3472 = vld [vmem:[%s3429 + $0x150] sm:$0xff]
    %v3473 = vld [vmem:[%s3429 + $0x158] sm:$0xff]
    %v3474 = vld [vmem:[%s3429 + $0x160] sm:$0xff]
    %v3475 = vld [vmem:[%s3429 + $0x168] sm:$0xff]
    %v3476 = vld [vmem:[%s3429 + $0x170] sm:$0xff]
    %v3477 = vld [vmem:[%s3429 + $0x178] sm:$0xff]
    %v3478 = vld [vmem:[%s3429 + $0x180] sm:$0xff]
    %v3479 = vld [vmem:[%s3429 + $0x188] sm:$0xff]
    %v3480 = vld [vmem:[%s3429 + $0x190] sm:$0xff]
    %v3481 = vld [vmem:[%s3429 + $0x198] sm:$0xff]
    %v3482 = vld [vmem:[%s3429 + $0x1a0] sm:$0xff]
    %v3483 = vld [vmem:[%s3429 + $0x1a8] sm:$0xff]
    %v3484 = vld [vmem:[%s3429 + $0x1b0] sm:$0xff]
    %v3485 = vld [vmem:[%s3429 + $0x1b8] sm:$0xff]
    %v3486 = vld [vmem:[%s3429 + $0x1c0] sm:$0xff]
    %v3487 = vld [vmem:[%s3429 + $0x1c8] sm:$0xff]
    %v3488 = vld [vmem:[%s3429 + $0x1d0] sm:$0xff]
    %v3489 = vld [vmem:[%s3429 + $0x1d8] sm:$0xff]
    %v3490 = vld [vmem:[%s3429 + $0x1e0] sm:$0xff]
    %v3491 = vld [vmem:[%s3429 + $0x1e8] sm:$0xff]
    %v3492 = vld [vmem:[%s3429 + $0x1f0] sm:$0xff]
    %v3493 = vld [vmem:[%s3429 + $0x1f8] sm:$0xff]
    %3494 = vmatprep.subr.mxu0 %v3431
    %3495 = vmatpush1.msra.mxu0 %v3430
    %3496 = vmatprep.subr.mxu0 %v3435
    %3497 = vmatpush1.msra.mxu0 %v3434
    %3498 = vmatprep.subr.mxu0 %v3439
    %3499 = vmatpush1.msra.mxu0 %v3438
    %3500 = vmatprep.subr.mxu0 %v3443
    %3501 = vmatpush1.msra.mxu0 %v3442
    %3502 = vmatprep.subr.mxu0 %v3447
    %3503 = vmatpush1.msra.mxu0 %v3446
    %3504 = vmatprep.subr.mxu0 %v3451
    %3505 = vmatpush1.msra.mxu0 %v3450
    %3506 = vmatprep.subr.mxu0 %v3455
    %3507 = vmatpush1.msra.mxu0 %v3454
    %3508 = vmatprep.subr.mxu0 %v3459
    %3509 = vmatpush1.msra.mxu0 %v3458
    %3510 = vmatprep.subr.mxu0 %v3463
    %3511 = vmatpush1.msra.mxu0 %v3462
    %3512 = vmatprep.subr.mxu0 %v3467
    %3513 = vmatpush1.msra.mxu0 %v3466
    %3514 = vmatprep.subr.mxu0 %v3471
    %3515 = vmatpush1.msra.mxu0 %v3470
    %3516 = vmatprep.subr.mxu0 %v3475
    %3517 = vmatpush1.msra.mxu0 %v3474
    %3518 = vmatprep.subr.mxu0 %v3479
    %3519 = vmatpush1.msra.mxu0 %v3478
    %3520 = vmatprep.subr.mxu0 %v3483
    %3521 = vmatpush1.msra.mxu0 %v3482
    %3522 = vmatprep.subr.mxu0 %v3487
    %3523 = vmatpush1.msra.mxu0 %v3486
    %3524 = vmatprep.subr.mxu0 %v3491
    %3525 = vmatpush1.msra.mxu0 %v3490
    %3526 = vmatprep.subr.mxu0 0.0
    %3527 = vmatpush1.msra.mxu0 0.0
    %3528 = vmatprep.subr.mxu0 0.0
    %3529 = vmatpush1.msra.mxu0 0.0
    %3530 = vmatprep.subr.mxu0 0.0
    %3531 = vmatpush1.msra.mxu0 0.0
    %3532 = vmatprep.subr.mxu0 0.0
    %3533 = vmatpush1.msra.mxu0 0.0
    %3534 = vmatprep.subr.mxu0 0.0
    %3535 = vmatpush1.msra.mxu0 0.0
    %3536 = vmatprep.subr.mxu0 0.0
    %3537 = vmatpush1.msra.mxu0 0.0
    %3538 = vmatprep.subr.mxu0 0.0
    %3539 = vmatpush1.msra.mxu0 0.0
    %3540 = vmatprep.subr.mxu0 0.0
    %3541 = vmatpush1.msra.mxu0 0.0
    %3542 = vmatprep.subr.mxu0 0.0
    %3543 = vmatpush1.msra.mxu0 0.0
    %3544 = vmatprep.subr.mxu0 0.0
    %3545 = vmatpush1.msra.mxu0 0.0
    %3546 = vmatprep.subr.mxu0 0.0
    %3547 = vmatpush1.msra.mxu0 0.0
    %3548 = vmatprep.subr.mxu0 0.0
    %3549 = vmatpush1.msra.mxu0 0.0
    %3550 = vmatprep.subr.mxu0 0.0
    %3551 = vmatpush1.msra.mxu0 0.0
    %3552 = vmatprep.subr.mxu0 0.0
    %3553 = vmatpush1.msra.mxu0 0.0
    %3554 = vmatprep.subr.mxu0 0.0
    %3555 = vmatpush1.msra.mxu0 0.0
    %3556 = vmatprep.subr.mxu0 0.0
    %3557 = vmatpush1.msra.mxu0 0.0
    %3558 = vmatprep.mubr.f32.mxu0 0.0
    %3559 = vmatmul.mubr.f32.gmra.mrb[0].mxu0 %v897
    %v3560 = vpop.f32.mrb[0].mxu0
    %v3561 = vadd.f32 0.0, %v3560
    %v3562 = vpop.f32.mrb[0].mxu0
    %v3563 = vadd.f32 0.0, %v3562
    %3564 = vdwg.mxu0
    %3565 = vmatprep.subr.mxu0 %v3433
    %3566 = vmatpush1.msra.mxu0 %v3432
    %3567 = vmatprep.subr.mxu0 %v3437
    %3568 = vmatpush1.msra.mxu0 %v3436
    %3569 = vmatprep.subr.mxu0 %v3441
    %3570 = vmatpush1.msra.mxu0 %v3440
    %3571 = vmatprep.subr.mxu0 %v3445
    %3572 = vmatpush1.msra.mxu0 %v3444
    %3573 = vmatprep.subr.mxu0 %v3449
    %3574 = vmatpush1.msra.mxu0 %v3448
    %3575 = vmatprep.subr.mxu0 %v3453
    %3576 = vmatpush1.msra.mxu0 %v3452
    %3577 = vmatprep.subr.mxu0 %v3457
    %3578 = vmatpush1.msra.mxu0 %v3456
    %3579 = vmatprep.subr.mxu0 %v3461
    %3580 = vmatpush1.msra.mxu0 %v3460
    %3581 = vmatprep.subr.mxu0 %v3465
    %3582 = vmatpush1.msra.mxu0 %v3464
    %3583 = vmatprep.subr.mxu0 %v3469
    %3584 = vmatpush1.msra.mxu0 %v3468
    %3585 = vmatprep.subr.mxu0 %v3473
    %3586 = vmatpush1.msra.mxu0 %v3472
    %3587 = vmatprep.subr.mxu0 %v3477
    %3588 = vmatpush1.msra.mxu0 %v3476
    %3589 = vmatprep.subr.mxu0 %v3481
    %3590 = vmatpush1.msra.mxu0 %v3480
    %3591 = vmatprep.subr.mxu0 %v3485
    %3592 = vmatpush1.msra.mxu0 %v3484
    %3593 = vmatprep.subr.mxu0 %v3489
    %3594 = vmatpush1.msra.mxu0 %v3488
    %3595 = vmatprep.subr.mxu0 %v3493
    %3596 = vmatpush1.msra.mxu0 %v3492
    %3597 = vmatprep.subr.mxu0 0.0
    %3598 = vmatpush1.msra.mxu0 0.0
    %3599 = vmatprep.subr.mxu0 0.0
    %3600 = vmatpush1.msra.mxu0 0.0
    %3601 = vmatprep.subr.mxu0 0.0
    %3602 = vmatpush1.msra.mxu0 0.0
    %3603 = vmatprep.subr.mxu0 0.0
    %3604 = vmatpush1.msra.mxu0 0.0
    %3605 = vmatprep.subr.mxu0 0.0
    %3606 = vmatpush1.msra.mxu0 0.0
    %3607 = vmatprep.subr.mxu0 0.0
    %3608 = vmatpush1.msra.mxu0 0.0
    %3609 = vmatprep.subr.mxu0 0.0
    %3610 = vmatpush1.msra.mxu0 0.0
    %3611 = vmatprep.subr.mxu0 0.0
    %3612 = vmatpush1.msra.mxu0 0.0
    %3613 = vmatprep.subr.mxu0 0.0
    %3614 = vmatpush1.msra.mxu0 0.0
    %3615 = vmatprep.subr.mxu0 0.0
    %3616 = vmatpush1.msra.mxu0 0.0
    %3617 = vmatprep.subr.mxu0 0.0
    %3618 = vmatpush1.msra.mxu0 0.0
    %3619 = vmatprep.subr.mxu0 0.0
    %3620 = vmatpush1.msra.mxu0 0.0
    %3621 = vmatprep.subr.mxu0 0.0
    %3622 = vmatpush1.msra.mxu0 0.0
    %3623 = vmatprep.subr.mxu0 0.0
    %3624 = vmatpush1.msra.mxu0 0.0
    %3625 = vmatprep.subr.mxu0 0.0
    %3626 = vmatpush1.msra.mxu0 0.0
    %3627 = vmatprep.subr.mxu0 0.0
    %3628 = vmatpush1.msra.mxu0 0.0
    %3629 = vmatprep.mubr.f32.mxu0 0.0
    %3630 = vmatmul.mubr.f32.gmra.mrb[0].mxu0 %v897
    %v3631 = vpop.f32.mrb[0].mxu0
    %v3632 = vadd.f32 0.0, %v3631
    %v3633 = vpop.f32.mrb[0].mxu0
    %v3634 = vadd.f32 0.0, %v3633
    %3635 = vdwg.mxu0
    %v3636 = vmul.f32 %v3561, %v900
    %v3637 = vmul.f32 %v3563, %v901
    %v3640 = vcombine.low %v3636, %v3637
    %v3641 = vcombine.high %v3636, %v3637
    %v3643 = vunpack.c.l.s4 1966171168
    %v3644 = vunpack.c.0.s8 %v3643
    %v3645 = vlaneseq
    %v3646 = vshrl.u32 %v3645, 7
    %v3647 = vsub.s32 %v3644, %v3646
    %v3648 = vrot.slane %v3640, %v3647
    %v3650 = vunpack.c.l.s4 1966171168
    %v3651 = vunpack.c.0.s8 %v3650
    %v3652 = vlaneseq
    %v3653 = vshrl.u32 %v3652, 7
    %v3654 = vsub.s32 %v3651, %v3653
    %v3655 = vrot.slane %v3641, %v3654
    %v3656 = vcombine.high %v3648, %v3648
    %v3657 = vcombine.high %v3655, %v3655
    %v3659 = vunpack.c.l.s4 1966171168
    %v3660 = vunpack.c.0.s8 %v3659
    %v3661 = vlaneseq
    %v3662 = vshrl.u32 %v3661, 7
    %v3663 = vsub.s32 %v3660, %v3662
    %v3664 = vrot.slane %v3648, %v3663
    %v3666 = vunpack.c.l.s4 1966171168
    %v3667 = vunpack.c.0.s8 %v3666
    %v3668 = vlaneseq
    %v3669 = vshrl.u32 %v3668, 7
    %v3670 = vsub.s32 %v3667, %v3669
    %v3671 = vrot.slane %v3655, %v3670
    %v3673 = vunpack.c.l.s4 1966171168
    %v3674 = vunpack.c.0.s8 %v3673
    %v3675 = vlaneseq
    %v3676 = vshrl.u32 %v3675, 7
    %v3677 = vsub.s32 %v3674, %v3676
    %v3678 = vrot.slane %v3656, %v3677
    %v3680 = vunpack.c.l.s4 1966171168
    %v3681 = vunpack.c.0.s8 %v3680
    %v3682 = vlaneseq
    %v3683 = vshrl.u32 %v3682, 7
    %v3684 = vsub.s32 %v3681, %v3683
    %v3685 = vrot.slane %v3657, %v3684
    %v3686 = vcombine.high %v3664, %v3664
    %v3687 = vcombine.high %v3671, %v3671
    %v3688 = vcombine.high %v3678, %v3678
    %v3689 = vcombine.high %v3685, %v3685
    %s3698 = scalar_lea.vmem [#allocation3], 6
    %3699 = vst.msk [vmem:[%s3698] ss:$8 sm:$0x3] %vm1437, %v3664
    %3700 = vst.msk [vmem:[%s3698] ss:$8 sm:$0x0] %vm1437, %v3664
    %s3701 = scalar_lea.vmem [#allocation3], 38
    %3702 = vst.msk [vmem:[%s3701] ss:$8 sm:$0x3] %vm1437, %v3678
    %3703 = vst.msk [vmem:[%s3701] ss:$8 sm:$0x0] %vm1437, %v3678
    %s3704 = scalar_lea.vmem [#allocation3], 70
    %3705 = vst.msk [vmem:[%s3704] ss:$8 sm:$0x3] %vm1437, %v3686
    %3706 = vst.msk [vmem:[%s3704] ss:$8 sm:$0x0] %vm1437, %v3686
    %s3707 = scalar_lea.vmem [#allocation3], 102
    %3708 = vst.msk [vmem:[%s3707] ss:$8 sm:$0x3] %vm1437, %v3688
    %3709 = vst.msk [vmem:[%s3707] ss:$8 sm:$0x0] %vm1437, %v3688
    %s3710 = scalar_lea.vmem [#allocation3], 134
    %3711 = vst.msk [vmem:[%s3710] ss:$8 sm:$0x3] %vm1437, %v3671
    %3712 = vst.msk [vmem:[%s3710] ss:$8 sm:$0x0] %vm1437, %v3671
    %s3713 = scalar_lea.vmem [#allocation3], 166
    %3714 = vst.msk [vmem:[%s3713] ss:$8 sm:$0x3] %vm1437, %v3685
    %3715 = vst.msk [vmem:[%s3713] ss:$8 sm:$0x0] %vm1437, %v3685
    %s3716 = scalar_lea.vmem [#allocation3], 198
    %3717 = vst.msk [vmem:[%s3716] ss:$8 sm:$0x3] %vm1437, %v3687
    %3718 = vst.msk [vmem:[%s3716] ss:$8 sm:$0x0] %vm1437, %v3687
    %s3719 = scalar_lea.vmem [#allocation3], 230
    %3720 = vst.msk [vmem:[%s3719] ss:$8 sm:$0x3] %vm1437, %v3689
    %3721 = vst.msk [vmem:[%s3719] ss:$8 sm:$0x0] %vm1437, %v3689
    %v3724 = vcombine.low %v3632, %v3634
    %v3725 = vcombine.high %v3632, %v3634
    %v3727 = vunpack.c.l.s4 1966171168
    %v3728 = vunpack.c.0.s8 %v3727
    %v3729 = vlaneseq
    %v3730 = vshrl.u32 %v3729, 7
    %v3731 = vsub.s32 %v3728, %v3730
    %v3732 = vrot.slane %v3724, %v3731
    %v3734 = vunpack.c.l.s4 1966171168
    %v3735 = vunpack.c.0.s8 %v3734
    %v3736 = vlaneseq
    %v3737 = vshrl.u32 %v3736, 7
    %v3738 = vsub.s32 %v3735, %v3737
    %v3739 = vrot.slane %v3725, %v3738
    %v3740 = vcombine.high %v3732, %v3732
    %v3741 = vcombine.high %v3739, %v3739
    %v3743 = vunpack.c.l.s4 1966171168
    %v3744 = vunpack.c.0.s8 %v3743
    %v3745 = vlaneseq
    %v3746 = vshrl.u32 %v3745, 7
    %v3747 = vsub.s32 %v3744, %v3746
    %v3748 = vrot.slane %v3732, %v3747
    %v3750 = vunpack.c.l.s4 1966171168
    %v3751 = vunpack.c.0.s8 %v3750
    %v3752 = vlaneseq
    %v3753 = vshrl.u32 %v3752, 7
    %v3754 = vsub.s32 %v3751, %v3753
    %v3755 = vrot.slane %v3739, %v3754
    %v3757 = vunpack.c.l.s4 1966171168
    %v3758 = vunpack.c.0.s8 %v3757
    %v3759 = vlaneseq
    %v3760 = vshrl.u32 %v3759, 7
    %v3761 = vsub.s32 %v3758, %v3760
    %v3762 = vrot.slane %v3740, %v3761
    %v3764 = vunpack.c.l.s4 1966171168
    %v3765 = vunpack.c.0.s8 %v3764
    %v3766 = vlaneseq
    %v3767 = vshrl.u32 %v3766, 7
    %v3768 = vsub.s32 %v3765, %v3767
    %v3769 = vrot.slane %v3741, %v3768
    %v3770 = vcombine.high %v3748, %v3748
    %v3771 = vcombine.high %v3755, %v3755
    %v3772 = vcombine.high %v3762, %v3762
    %v3773 = vcombine.high %v3769, %v3769
    %s3782 = scalar_lea.vmem [#allocation4], 6
    %3783 = vst.msk [vmem:[%s3782] ss:$8 sm:$0x3] %vm1437, %v3748
    %3784 = vst.msk [vmem:[%s3782] ss:$8 sm:$0x0] %vm1437, %v3748
    %s3785 = scalar_lea.vmem [#allocation4], 38
    %3786 = vst.msk [vmem:[%s3785] ss:$8 sm:$0x3] %vm1437, %v3762
    %3787 = vst.msk [vmem:[%s3785] ss:$8 sm:$0x0] %vm1437, %v3762
    %s3788 = scalar_lea.vmem [#allocation4], 70
    %3789 = vst.msk [vmem:[%s3788] ss:$8 sm:$0x3] %vm1437, %v3770
    %3790 = vst.msk [vmem:[%s3788] ss:$8 sm:$0x0] %vm1437, %v3770
    %s3791 = scalar_lea.vmem [#allocation4], 102
    %3792 = vst.msk [vmem:[%s3791] ss:$8 sm:$0x3] %vm1437, %v3772
    %3793 = vst.msk [vmem:[%s3791] ss:$8 sm:$0x0] %vm1437, %v3772
    %s3794 = scalar_lea.vmem [#allocation4], 134
    %3795 = vst.msk [vmem:[%s3794] ss:$8 sm:$0x3] %vm1437, %v3755
    %3796 = vst.msk [vmem:[%s3794] ss:$8 sm:$0x0] %vm1437, %v3755
    %s3797 = scalar_lea.vmem [#allocation4], 166
    %3798 = vst.msk [vmem:[%s3797] ss:$8 sm:$0x3] %vm1437, %v3769
    %3799 = vst.msk [vmem:[%s3797] ss:$8 sm:$0x0] %vm1437, %v3769
    %s3800 = scalar_lea.vmem [#allocation4], 198
    %3801 = vst.msk [vmem:[%s3800] ss:$8 sm:$0x3] %vm1437, %v3771
    %3802 = vst.msk [vmem:[%s3800] ss:$8 sm:$0x0] %vm1437, %v3771
    %s3803 = scalar_lea.vmem [#allocation4], 230
    %3804 = vst.msk [vmem:[%s3803] ss:$8 sm:$0x3] %vm1437, %v3773
    %3805 = vst.msk [vmem:[%s3803] ss:$8 sm:$0x0] %vm1437, %v3773
    %s3806 = scalar_lea.vmem [#allocation26], 3584
    %v3807 = vld [vmem:[%s3806] sm:$0xff]
    %v3808 = vld [vmem:[%s3806 + $0x8] sm:$0xff]
    %v3809 = vld [vmem:[%s3806 + $0x10] sm:$0xff]
    %v3810 = vld [vmem:[%s3806 + $0x18] sm:$0xff]
    %v3811 = vld [vmem:[%s3806 + $0x20] sm:$0xff]
    %v3812 = vld [vmem:[%s3806 + $0x28] sm:$0xff]
    %v3813 = vld [vmem:[%s3806 + $0x30] sm:$0xff]
    %v3814 = vld [vmem:[%s3806 + $0x38] sm:$0xff]
    %v3815 = vld [vmem:[%s3806 + $0x40] sm:$0xff]
    %v3816 = vld [vmem:[%s3806 + $0x48] sm:$0xff]
    %v3817 = vld [vmem:[%s3806 + $0x50] sm:$0xff]
    %v3818 = vld [vmem:[%s3806 + $0x58] sm:$0xff]
    %v3819 = vld [vmem:[%s3806 + $0x60] sm:$0xff]
    %v3820 = vld [vmem:[%s3806 + $0x68] sm:$0xff]
    %v3821 = vld [vmem:[%s3806 + $0x70] sm:$0xff]
    %v3822 = vld [vmem:[%s3806 + $0x78] sm:$0xff]
    %v3823 = vld [vmem:[%s3806 + $0x80] sm:$0xff]
    %v3824 = vld [vmem:[%s3806 + $0x88] sm:$0xff]
    %v3825 = vld [vmem:[%s3806 + $0x90] sm:$0xff]
    %v3826 = vld [vmem:[%s3806 + $0x98] sm:$0xff]
    %v3827 = vld [vmem:[%s3806 + $0xa0] sm:$0xff]
    %v3828 = vld [vmem:[%s3806 + $0xa8] sm:$0xff]
    %v3829 = vld [vmem:[%s3806 + $0xb0] sm:$0xff]
    %v3830 = vld [vmem:[%s3806 + $0xb8] sm:$0xff]
    %v3831 = vld [vmem:[%s3806 + $0xc0] sm:$0xff]
    %v3832 = vld [vmem:[%s3806 + $0xc8] sm:$0xff]
    %v3833 = vld [vmem:[%s3806 + $0xd0] sm:$0xff]
    %v3834 = vld [vmem:[%s3806 + $0xd8] sm:$0xff]
    %v3835 = vld [vmem:[%s3806 + $0xe0] sm:$0xff]
    %v3836 = vld [vmem:[%s3806 + $0xe8] sm:$0xff]
    %v3837 = vld [vmem:[%s3806 + $0xf0] sm:$0xff]
    %v3838 = vld [vmem:[%s3806 + $0xf8] sm:$0xff]
    %v3839 = vld [vmem:[%s3806 + $0x100] sm:$0xff]
    %v3840 = vld [vmem:[%s3806 + $0x108] sm:$0xff]
    %v3841 = vld [vmem:[%s3806 + $0x110] sm:$0xff]
    %v3842 = vld [vmem:[%s3806 + $0x118] sm:$0xff]
    %v3843 = vld [vmem:[%s3806 + $0x120] sm:$0xff]
    %v3844 = vld [vmem:[%s3806 + $0x128] sm:$0xff]
    %v3845 = vld [vmem:[%s3806 + $0x130] sm:$0xff]
    %v3846 = vld [vmem:[%s3806 + $0x138] sm:$0xff]
    %v3847 = vld [vmem:[%s3806 + $0x140] sm:$0xff]
    %v3848 = vld [vmem:[%s3806 + $0x148] sm:$0xff]
    %v3849 = vld [vmem:[%s3806 + $0x150] sm:$0xff]
    %v3850 = vld [vmem:[%s3806 + $0x158] sm:$0xff]
    %v3851 = vld [vmem:[%s3806 + $0x160] sm:$0xff]
    %v3852 = vld [vmem:[%s3806 + $0x168] sm:$0xff]
    %v3853 = vld [vmem:[%s3806 + $0x170] sm:$0xff]
    %v3854 = vld [vmem:[%s3806 + $0x178] sm:$0xff]
    %v3855 = vld [vmem:[%s3806 + $0x180] sm:$0xff]
    %v3856 = vld [vmem:[%s3806 + $0x188] sm:$0xff]
    %v3857 = vld [vmem:[%s3806 + $0x190] sm:$0xff]
    %v3858 = vld [vmem:[%s3806 + $0x198] sm:$0xff]
    %v3859 = vld [vmem:[%s3806 + $0x1a0] sm:$0xff]
    %v3860 = vld [vmem:[%s3806 + $0x1a8] sm:$0xff]
    %v3861 = vld [vmem:[%s3806 + $0x1b0] sm:$0xff]
    %v3862 = vld [vmem:[%s3806 + $0x1b8] sm:$0xff]
    %v3863 = vld [vmem:[%s3806 + $0x1c0] sm:$0xff]
    %v3864 = vld [vmem:[%s3806 + $0x1c8] sm:$0xff]
    %v3865 = vld [vmem:[%s3806 + $0x1d0] sm:$0xff]
    %v3866 = vld [vmem:[%s3806 + $0x1d8] sm:$0xff]
    %v3867 = vld [vmem:[%s3806 + $0x1e0] sm:$0xff]
    %v3868 = vld [vmem:[%s3806 + $0x1e8] sm:$0xff]
    %v3869 = vld [vmem:[%s3806 + $0x1f0] sm:$0xff]
    %v3870 = vld [vmem:[%s3806 + $0x1f8] sm:$0xff]
    %3871 = vmatprep.subr.mxu0 %v3808
    %3872 = vmatpush1.msra.mxu0 %v3807
    %3873 = vmatprep.subr.mxu0 %v3812
    %3874 = vmatpush1.msra.mxu0 %v3811
    %3875 = vmatprep.subr.mxu0 %v3816
    %3876 = vmatpush1.msra.mxu0 %v3815
    %3877 = vmatprep.subr.mxu0 %v3820
    %3878 = vmatpush1.msra.mxu0 %v3819
    %3879 = vmatprep.subr.mxu0 %v3824
    %3880 = vmatpush1.msra.mxu0 %v3823
    %3881 = vmatprep.subr.mxu0 %v3828
    %3882 = vmatpush1.msra.mxu0 %v3827
    %3883 = vmatprep.subr.mxu0 %v3832
    %3884 = vmatpush1.msra.mxu0 %v3831
    %3885 = vmatprep.subr.mxu0 %v3836
    %3886 = vmatpush1.msra.mxu0 %v3835
    %3887 = vmatprep.subr.mxu0 %v3840
    %3888 = vmatpush1.msra.mxu0 %v3839
    %3889 = vmatprep.subr.mxu0 %v3844
    %3890 = vmatpush1.msra.mxu0 %v3843
    %3891 = vmatprep.subr.mxu0 %v3848
    %3892 = vmatpush1.msra.mxu0 %v3847
    %3893 = vmatprep.subr.mxu0 %v3852
    %3894 = vmatpush1.msra.mxu0 %v3851
    %3895 = vmatprep.subr.mxu0 %v3856
    %3896 = vmatpush1.msra.mxu0 %v3855
    %3897 = vmatprep.subr.mxu0 %v3860
    %3898 = vmatpush1.msra.mxu0 %v3859
    %3899 = vmatprep.subr.mxu0 %v3864
    %3900 = vmatpush1.msra.mxu0 %v3863
    %3901 = vmatprep.subr.mxu0 %v3868
    %3902 = vmatpush1.msra.mxu0 %v3867
    %3903 = vmatprep.subr.mxu0 0.0
    %3904 = vmatpush1.msra.mxu0 0.0
    %3905 = vmatprep.subr.mxu0 0.0
    %3906 = vmatpush1.msra.mxu0 0.0
    %3907 = vmatprep.subr.mxu0 0.0
    %3908 = vmatpush1.msra.mxu0 0.0
    %3909 = vmatprep.subr.mxu0 0.0
    %3910 = vmatpush1.msra.mxu0 0.0
    %3911 = vmatprep.subr.mxu0 0.0
    %3912 = vmatpush1.msra.mxu0 0.0
    %3913 = vmatprep.subr.mxu0 0.0
    %3914 = vmatpush1.msra.mxu0 0.0
    %3915 = vmatprep.subr.mxu0 0.0
    %3916 = vmatpush1.msra.mxu0 0.0
    %3917 = vmatprep.subr.mxu0 0.0
    %3918 = vmatpush1.msra.mxu0 0.0
    %3919 = vmatprep.subr.mxu0 0.0
    %3920 = vmatpush1.msra.mxu0 0.0
    %3921 = vmatprep.subr.mxu0 0.0
    %3922 = vmatpush1.msra.mxu0 0.0
    %3923 = vmatprep.subr.mxu0 0.0
    %3924 = vmatpush1.msra.mxu0 0.0
    %3925 = vmatprep.subr.mxu0 0.0
    %3926 = vmatpush1.msra.mxu0 0.0
    %3927 = vmatprep.subr.mxu0 0.0
    %3928 = vmatpush1.msra.mxu0 0.0
    %3929 = vmatprep.subr.mxu0 0.0
    %3930 = vmatpush1.msra.mxu0 0.0
    %3931 = vmatprep.subr.mxu0 0.0
    %3932 = vmatpush1.msra.mxu0 0.0
    %3933 = vmatprep.subr.mxu0 0.0
    %3934 = vmatpush1.msra.mxu0 0.0
    %3935 = vmatprep.mubr.f32.mxu0 0.0
    %3936 = vmatmul.mubr.f32.gmra.mrb[0].mxu0 %v897
    %v3937 = vpop.f32.mrb[0].mxu0
    %v3938 = vadd.f32 0.0, %v3937
    %v3939 = vpop.f32.mrb[0].mxu0
    %v3940 = vadd.f32 0.0, %v3939
    %3941 = vdwg.mxu0
    %3942 = vmatprep.subr.mxu0 %v3810
    %3943 = vmatpush1.msra.mxu0 %v3809
    %3944 = vmatprep.subr.mxu0 %v3814
    %3945 = vmatpush1.msra.mxu0 %v3813
    %3946 = vmatprep.subr.mxu0 %v3818
    %3947 = vmatpush1.msra.mxu0 %v3817
    %3948 = vmatprep.subr.mxu0 %v3822
    %3949 = vmatpush1.msra.mxu0 %v3821
    %3950 = vmatprep.subr.mxu0 %v3826
    %3951 = vmatpush1.msra.mxu0 %v3825
    %3952 = vmatprep.subr.mxu0 %v3830
    %3953 = vmatpush1.msra.mxu0 %v3829
    %3954 = vmatprep.subr.mxu0 %v3834
    %3955 = vmatpush1.msra.mxu0 %v3833
    %3956 = vmatprep.subr.mxu0 %v3838
    %3957 = vmatpush1.msra.mxu0 %v3837
    %3958 = vmatprep.subr.mxu0 %v3842
    %3959 = vmatpush1.msra.mxu0 %v3841
    %3960 = vmatprep.subr.mxu0 %v3846
    %3961 = vmatpush1.msra.mxu0 %v3845
    %3962 = vmatprep.subr.mxu0 %v3850
    %3963 = vmatpush1.msra.mxu0 %v3849
    %3964 = vmatprep.subr.mxu0 %v3854
    %3965 = vmatpush1.msra.mxu0 %v3853
    %3966 = vmatprep.subr.mxu0 %v3858
    %3967 = vmatpush1.msra.mxu0 %v3857
    %3968 = vmatprep.subr.mxu0 %v3862
    %3969 = vmatpush1.msra.mxu0 %v3861
    %3970 = vmatprep.subr.mxu0 %v3866
    %3971 = vmatpush1.msra.mxu0 %v3865
    %3972 = vmatprep.subr.mxu0 %v3870
    %3973 = vmatpush1.msra.mxu0 %v3869
    %3974 = vmatprep.subr.mxu0 0.0
    %3975 = vmatpush1.msra.mxu0 0.0
    %3976 = vmatprep.subr.mxu0 0.0
    %3977 = vmatpush1.msra.mxu0 0.0
    %3978 = vmatprep.subr.mxu0 0.0
    %3979 = vmatpush1.msra.mxu0 0.0
    %3980 = vmatprep.subr.mxu0 0.0
    %3981 = vmatpush1.msra.mxu0 0.0
    %3982 = vmatprep.subr.mxu0 0.0
    %3983 = vmatpush1.msra.mxu0 0.0
    %3984 = vmatprep.subr.mxu0 0.0
    %3985 = vmatpush1.msra.mxu0 0.0
    %3986 = vmatprep.subr.mxu0 0.0
    %3987 = vmatpush1.msra.mxu0 0.0
    %3988 = vmatprep.subr.mxu0 0.0
    %3989 = vmatpush1.msra.mxu0 0.0
    %3990 = vmatprep.subr.mxu0 0.0
    %3991 = vmatpush1.msra.mxu0 0.0
    %3992 = vmatprep.subr.mxu0 0.0
    %3993 = vmatpush1.msra.mxu0 0.0
    %3994 = vmatprep.subr.mxu0 0.0
    %3995 = vmatpush1.msra.mxu0 0.0
    %3996 = vmatprep.subr.mxu0 0.0
    %3997 = vmatpush1.msra.mxu0 0.0
    %3998 = vmatprep.subr.mxu0 0.0
    %3999 = vmatpush1.msra.mxu0 0.0
    %4000 = vmatprep.subr.mxu0 0.0
    %4001 = vmatpush1.msra.mxu0 0.0
    %4002 = vmatprep.subr.mxu0 0.0
    %4003 = vmatpush1.msra.mxu0 0.0
    %4004 = vmatprep.subr.mxu0 0.0
    %4005 = vmatpush1.msra.mxu0 0.0
    %4006 = vmatprep.mubr.f32.mxu0 0.0
    %4007 = vmatmul.mubr.f32.gmra.mrb[0].mxu0 %v897
    %v4008 = vpop.f32.mrb[0].mxu0
    %v4009 = vadd.f32 0.0, %v4008
    %v4010 = vpop.f32.mrb[0].mxu0
    %v4011 = vadd.f32 0.0, %v4010
    %4012 = vdwg.mxu0
    %v4013 = vmul.f32 %v3938, %v900
    %v4014 = vmul.f32 %v3940, %v901
    %v4017 = vcombine.low %v4013, %v4014
    %v4018 = vcombine.high %v4013, %v4014
    %v4020 = vunpack.c.l.s4 1966171168
    %v4021 = vunpack.c.0.s8 %v4020
    %v4022 = vlaneseq
    %v4023 = vshrl.u32 %v4022, 7
    %v4024 = vsub.s32 %v4021, %v4023
    %v4025 = vrot.slane %v4017, %v4024
    %v4027 = vunpack.c.l.s4 1966171168
    %v4028 = vunpack.c.0.s8 %v4027
    %v4029 = vlaneseq
    %v4030 = vshrl.u32 %v4029, 7
    %v4031 = vsub.s32 %v4028, %v4030
    %v4032 = vrot.slane %v4018, %v4031
    %v4033 = vcombine.high %v4025, %v4025
    %v4034 = vcombine.high %v4032, %v4032
    %v4036 = vunpack.c.l.s4 1966171168
    %v4037 = vunpack.c.0.s8 %v4036
    %v4038 = vlaneseq
    %v4039 = vshrl.u32 %v4038, 7
    %v4040 = vsub.s32 %v4037, %v4039
    %v4041 = vrot.slane %v4025, %v4040
    %v4043 = vunpack.c.l.s4 1966171168
    %v4044 = vunpack.c.0.s8 %v4043
    %v4045 = vlaneseq
    %v4046 = vshrl.u32 %v4045, 7
    %v4047 = vsub.s32 %v4044, %v4046
    %v4048 = vrot.slane %v4032, %v4047
    %v4050 = vunpack.c.l.s4 1966171168
    %v4051 = vunpack.c.0.s8 %v4050
    %v4052 = vlaneseq
    %v4053 = vshrl.u32 %v4052, 7
    %v4054 = vsub.s32 %v4051, %v4053
    %v4055 = vrot.slane %v4033, %v4054
    %v4057 = vunpack.c.l.s4 1966171168
    %v4058 = vunpack.c.0.s8 %v4057
    %v4059 = vlaneseq
    %v4060 = vshrl.u32 %v4059, 7
    %v4061 = vsub.s32 %v4058, %v4060
    %v4062 = vrot.slane %v4034, %v4061
    %v4063 = vcombine.high %v4041, %v4041
    %v4064 = vcombine.high %v4048, %v4048
    %v4065 = vcombine.high %v4055, %v4055
    %v4066 = vcombine.high %v4062, %v4062
    %s4075 = scalar_lea.vmem [#allocation3], 7
    %4076 = vst.msk [vmem:[%s4075] ss:$8 sm:$0x3] %vm1437, %v4041
    %4077 = vst.msk [vmem:[%s4075] ss:$8 sm:$0x0] %vm1437, %v4041
    %s4078 = scalar_lea.vmem [#allocation3], 39
    %4079 = vst.msk [vmem:[%s4078] ss:$8 sm:$0x3] %vm1437, %v4055
    %4080 = vst.msk [vmem:[%s4078] ss:$8 sm:$0x0] %vm1437, %v4055
    %s4081 = scalar_lea.vmem [#allocation3], 71
    %4082 = vst.msk [vmem:[%s4081] ss:$8 sm:$0x3] %vm1437, %v4063
    %4083 = vst.msk [vmem:[%s4081] ss:$8 sm:$0x0] %vm1437, %v4063
    %s4084 = scalar_lea.vmem [#allocation3], 103
    %4085 = vst.msk [vmem:[%s4084] ss:$8 sm:$0x3] %vm1437, %v4065
    %4086 = vst.msk [vmem:[%s4084] ss:$8 sm:$0x0] %vm1437, %v4065
    %s4087 = scalar_lea.vmem [#allocation3], 135
    %4088 = vst.msk [vmem:[%s4087] ss:$8 sm:$0x3] %vm1437, %v4048
    %4089 = vst.msk [vmem:[%s4087] ss:$8 sm:$0x0] %vm1437, %v4048
    %s4090 = scalar_lea.vmem [#allocation3], 167
    %4091 = vst.msk [vmem:[%s4090] ss:$8 sm:$0x3] %vm1437, %v4062
    %4092 = vst.msk [vmem:[%s4090] ss:$8 sm:$0x0] %vm1437, %v4062
    %s4093 = scalar_lea.vmem [#allocation3], 199
    %4094 = vst.msk [vmem:[%s4093] ss:$8 sm:$0x3] %vm1437, %v4064
    %4095 = vst.msk [vmem:[%s4093] ss:$8 sm:$0x0] %vm1437, %v4064
    %s4096 = scalar_lea.vmem [#allocation3], 231
    %4097 = vst.msk [vmem:[%s4096] ss:$8 sm:$0x3] %vm1437, %v4066
    %4098 = vst.msk [vmem:[%s4096] ss:$8 sm:$0x0] %vm1437, %v4066
    %v4101 = vcombine.low %v4009, %v4011
    %v4102 = vcombine.high %v4009, %v4011
    %v4104 = vunpack.c.l.s4 1966171168
    %v4105 = vunpack.c.0.s8 %v4104
    %v4106 = vlaneseq
    %v4107 = vshrl.u32 %v4106, 7
    %v4108 = vsub.s32 %v4105, %v4107
    %v4109 = vrot.slane %v4101, %v4108
    %v4111 = vunpack.c.l.s4 1966171168
    %v4112 = vunpack.c.0.s8 %v4111
    %v4113 = vlaneseq
    %v4114 = vshrl.u32 %v4113, 7
    %v4115 = vsub.s32 %v4112, %v4114
    %v4116 = vrot.slane %v4102, %v4115
    %v4117 = vcombine.high %v4109, %v4109
    %v4118 = vcombine.high %v4116, %v4116
    %v4120 = vunpack.c.l.s4 1966171168
    %v4121 = vunpack.c.0.s8 %v4120
    %v4122 = vlaneseq
    %v4123 = vshrl.u32 %v4122, 7
    %v4124 = vsub.s32 %v4121, %v4123
    %v4125 = vrot.slane %v4109, %v4124
    %v4127 = vunpack.c.l.s4 1966171168
    %v4128 = vunpack.c.0.s8 %v4127
    %v4129 = vlaneseq
    %v4130 = vshrl.u32 %v4129, 7
    %v4131 = vsub.s32 %v4128, %v4130
    %v4132 = vrot.slane %v4116, %v4131
    %v4134 = vunpack.c.l.s4 1966171168
    %v4135 = vunpack.c.0.s8 %v4134
    %v4136 = vlaneseq
    %v4137 = vshrl.u32 %v4136, 7
    %v4138 = vsub.s32 %v4135, %v4137
    %v4139 = vrot.slane %v4117, %v4138
    %v4141 = vunpack.c.l.s4 1966171168
    %v4142 = vunpack.c.0.s8 %v4141
    %v4143 = vlaneseq
    %v4144 = vshrl.u32 %v4143, 7
    %v4145 = vsub.s32 %v4142, %v4144
    %v4146 = vrot.slane %v4118, %v4145
    %v4147 = vcombine.high %v4125, %v4125
    %v4148 = vcombine.high %v4132, %v4132
    %v4149 = vcombine.high %v4139, %v4139
    %v4150 = vcombine.high %v4146, %v4146
    %s4159 = scalar_lea.vmem [#allocation4], 7
    %4160 = vst.msk [vmem:[%s4159] ss:$8 sm:$0x3] %vm1437, %v4125
    %4161 = vst.msk [vmem:[%s4159] ss:$8 sm:$0x0] %vm1437, %v4125
    %s4162 = scalar_lea.vmem [#allocation4], 39
    %4163 = vst.msk [vmem:[%s4162] ss:$8 sm:$0x3] %vm1437, %v4139
    %4164 = vst.msk [vmem:[%s4162] ss:$8 sm:$0x0] %vm1437, %v4139
    %s4165 = scalar_lea.vmem [#allocation4], 71
    %4166 = vst.msk [vmem:[%s4165] ss:$8 sm:$0x3] %vm1437, %v4147
    %4167 = vst.msk [vmem:[%s4165] ss:$8 sm:$0x0] %vm1437, %v4147
    %s4168 = scalar_lea.vmem [#allocation4], 103
    %4169 = vst.msk [vmem:[%s4168] ss:$8 sm:$0x3] %vm1437, %v4149
    %4170 = vst.msk [vmem:[%s4168] ss:$8 sm:$0x0] %vm1437, %v4149
    %s4171 = scalar_lea.vmem [#allocation4], 135
    %4172 = vst.msk [vmem:[%s4171] ss:$8 sm:$0x3] %vm1437, %v4132
    %4173 = vst.msk [vmem:[%s4171] ss:$8 sm:$0x0] %vm1437, %v4132
    %s4174 = scalar_lea.vmem [#allocation4], 167
    %4175 = vst.msk [vmem:[%s4174] ss:$8 sm:$0x3] %vm1437, %v4146
    %4176 = vst.msk [vmem:[%s4174] ss:$8 sm:$0x0] %vm1437, %v4146
    %s4177 = scalar_lea.vmem [#allocation4], 199
    %4178 = vst.msk [vmem:[%s4177] ss:$8 sm:$0x3] %vm1437, %v4148
    %4179 = vst.msk [vmem:[%s4177] ss:$8 sm:$0x0] %vm1437, %v4148
    %s4180 = scalar_lea.vmem [#allocation4], 231
    %4181 = vst.msk [vmem:[%s4180] ss:$8 sm:$0x3] %vm1437, %v4150
    %4182 = vst.msk [vmem:[%s4180] ss:$8 sm:$0x0] %vm1437, %v4150
    %s4183 = scalar_lea.vmem [#allocation26], 4096
    %v4184 = vld [vmem:[%s4183] sm:$0xff]
    %v4185 = vld [vmem:[%s4183 + $0x8] sm:$0xff]
    %v4186 = vld [vmem:[%s4183 + $0x10] sm:$0xff]
    %v4187 = vld [vmem:[%s4183 + $0x18] sm:$0xff]
    %v4188 = vld [vmem:[%s4183 + $0x20] sm:$0xff]
    %v4189 = vld [vmem:[%s4183 + $0x28] sm:$0xff]
    %v4190 = vld [vmem:[%s4183 + $0x30] sm:$0xff]
    %v4191 = vld [vmem:[%s4183 + $0x38] sm:$0xff]
    %v4192 = vld [vmem:[%s4183 + $0x40] sm:$0xff]
    %v4193 = vld [vmem:[%s4183 + $0x48] sm:$0xff]
    %v4194 = vld [vmem:[%s4183 + $0x50] sm:$0xff]
    %v4195 = vld [vmem:[%s4183 + $0x58] sm:$0xff]
    %v4196 = vld [vmem:[%s4183 + $0x60] sm:$0xff]
    %v4197 = vld [vmem:[%s4183 + $0x68] sm:$0xff]
    %v4198 = vld [vmem:[%s4183 + $0x70] sm:$0xff]
    %v4199 = vld [vmem:[%s4183 + $0x78] sm:$0xff]
    %v4200 = vld [vmem:[%s4183 + $0x80] sm:$0xff]
    %v4201 = vld [vmem:[%s4183 + $0x88] sm:$0xff]
    %v4202 = vld [vmem:[%s4183 + $0x90] sm:$0xff]
    %v4203 = vld [vmem:[%s4183 + $0x98] sm:$0xff]
    %v4204 = vld [vmem:[%s4183 + $0xa0] sm:$0xff]
    %v4205 = vld [vmem:[%s4183 + $0xa8] sm:$0xff]
    %v4206 = vld [vmem:[%s4183 + $0xb0] sm:$0xff]
    %v4207 = vld [vmem:[%s4183 + $0xb8] sm:$0xff]
    %v4208 = vld [vmem:[%s4183 + $0xc0] sm:$0xff]
    %v4209 = vld [vmem:[%s4183 + $0xc8] sm:$0xff]
    %v4210 = vld [vmem:[%s4183 + $0xd0] sm:$0xff]
    %v4211 = vld [vmem:[%s4183 + $0xd8] sm:$0xff]
    %v4212 = vld [vmem:[%s4183 + $0xe0] sm:$0xff]
    %v4213 = vld [vmem:[%s4183 + $0xe8] sm:$0xff]
    %v4214 = vld [vmem:[%s4183 + $0xf0] sm:$0xff]
    %v4215 = vld [vmem:[%s4183 + $0xf8] sm:$0xff]
    %v4216 = vld [vmem:[%s4183 + $0x100] sm:$0xff]
    %v4217 = vld [vmem:[%s4183 + $0x108] sm:$0xff]
    %v4218 = vld [vmem:[%s4183 + $0x110] sm:$0xff]
    %v4219 = vld [vmem:[%s4183 + $0x118] sm:$0xff]
    %v4220 = vld [vmem:[%s4183 + $0x120] sm:$0xff]
    %v4221 = vld [vmem:[%s4183 + $0x128] sm:$0xff]
    %v4222 = vld [vmem:[%s4183 + $0x130] sm:$0xff]
    %v4223 = vld [vmem:[%s4183 + $0x138] sm:$0xff]
    %v4224 = vld [vmem:[%s4183 + $0x140] sm:$0xff]
    %v4225 = vld [vmem:[%s4183 + $0x148] sm:$0xff]
    %v4226 = vld [vmem:[%s4183 + $0x150] sm:$0xff]
    %v4227 = vld [vmem:[%s4183 + $0x158] sm:$0xff]
    %v4228 = vld [vmem:[%s4183 + $0x160] sm:$0xff]
    %v4229 = vld [vmem:[%s4183 + $0x168] sm:$0xff]
    %v4230 = vld [vmem:[%s4183 + $0x170] sm:$0xff]
    %v4231 = vld [vmem:[%s4183 + $0x178] sm:$0xff]
    %v4232 = vld [vmem:[%s4183 + $0x180] sm:$0xff]
    %v4233 = vld [vmem:[%s4183 + $0x188] sm:$0xff]
    %v4234 = vld [vmem:[%s4183 + $0x190] sm:$0xff]
    %v4235 = vld [vmem:[%s4183 + $0x198] sm:$0xff]
    %v4236 = vld [vmem:[%s4183 + $0x1a0] sm:$0xff]
    %v4237 = vld [vmem:[%s4183 + $0x1a8] sm:$0xff]
    %v4238 = vld [vmem:[%s4183 + $0x1b0] sm:$0xff]
    %v4239 = vld [vmem:[%s4183 + $0x1b8] sm:$0xff]
    %v4240 = vld [vmem:[%s4183 + $0x1c0] sm:$0xff]
    %v4241 = vld [vmem:[%s4183 + $0x1c8] sm:$0xff]
    %v4242 = vld [vmem:[%s4183 + $0x1d0] sm:$0xff]
    %v4243 = vld [vmem:[%s4183 + $0x1d8] sm:$0xff]
    %v4244 = vld [vmem:[%s4183 + $0x1e0] sm:$0xff]
    %v4245 = vld [vmem:[%s4183 + $0x1e8] sm:$0xff]
    %v4246 = vld [vmem:[%s4183 + $0x1f0] sm:$0xff]
    %v4247 = vld [vmem:[%s4183 + $0x1f8] sm:$0xff]
    %4248 = vmatprep.subr.mxu0 %v4185
    %4249 = vmatpush1.msra.mxu0 %v4184
    %4250 = vmatprep.subr.mxu0 %v4189
    %4251 = vmatpush1.msra.mxu0 %v4188
    %4252 = vmatprep.subr.mxu0 %v4193
    %4253 = vmatpush1.msra.mxu0 %v4192
    %4254 = vmatprep.subr.mxu0 %v4197
    %4255 = vmatpush1.msra.mxu0 %v4196
    %4256 = vmatprep.subr.mxu0 %v4201
    %4257 = vmatpush1.msra.mxu0 %v4200
    %4258 = vmatprep.subr.mxu0 %v4205
    %4259 = vmatpush1.msra.mxu0 %v4204
    %4260 = vmatprep.subr.mxu0 %v4209
    %4261 = vmatpush1.msra.mxu0 %v4208
    %4262 = vmatprep.subr.mxu0 %v4213
    %4263 = vmatpush1.msra.mxu0 %v4212
    %4264 = vmatprep.subr.mxu0 %v4217
    %4265 = vmatpush1.msra.mxu0 %v4216
    %4266 = vmatprep.subr.mxu0 %v4221
    %4267 = vmatpush1.msra.mxu0 %v4220
    %4268 = vmatprep.subr.mxu0 %v4225
    %4269 = vmatpush1.msra.mxu0 %v4224
    %4270 = vmatprep.subr.mxu0 %v4229
    %4271 = vmatpush1.msra.mxu0 %v4228
    %4272 = vmatprep.subr.mxu0 %v4233
    %4273 = vmatpush1.msra.mxu0 %v4232
    %4274 = vmatprep.subr.mxu0 %v4237
    %4275 = vmatpush1.msra.mxu0 %v4236
    %4276 = vmatprep.subr.mxu0 %v4241
    %4277 = vmatpush1.msra.mxu0 %v4240
    %4278 = vmatprep.subr.mxu0 %v4245
    %4279 = vmatpush1.msra.mxu0 %v4244
    %4280 = vmatprep.subr.mxu0 0.0
    %4281 = vmatpush1.msra.mxu0 0.0
    %4282 = vmatprep.subr.mxu0 0.0
    %4283 = vmatpush1.msra.mxu0 0.0
    %4284 = vmatprep.subr.mxu0 0.0
    %4285 = vmatpush1.msra.mxu0 0.0
    %4286 = vmatprep.subr.mxu0 0.0
    %4287 = vmatpush1.msra.mxu0 0.0
    %4288 = vmatprep.subr.mxu0 0.0
    %4289 = vmatpush1.msra.mxu0 0.0
    %4290 = vmatprep.subr.mxu0 0.0
    %4291 = vmatpush1.msra.mxu0 0.0
    %4292 = vmatprep.subr.mxu0 0.0
    %4293 = vmatpush1.msra.mxu0 0.0
    %4294 = vmatprep.subr.mxu0 0.0
    %4295 = vmatpush1.msra.mxu0 0.0
    %4296 = vmatprep.subr.mxu0 0.0
    %4297 = vmatpush1.msra.mxu0 0.0
    %4298 = vmatprep.subr.mxu0 0.0
    %4299 = vmatpush1.msra.mxu0 0.0
    %4300 = vmatprep.subr.mxu0 0.0
    %4301 = vmatpush1.msra.mxu0 0.0
    %4302 = vmatprep.subr.mxu0 0.0
    %4303 = vmatpush1.msra.mxu0 0.0
    %4304 = vmatprep.subr.mxu0 0.0
    %4305 = vmatpush1.msra.mxu0 0.0
    %4306 = vmatprep.subr.mxu0 0.0
    %4307 = vmatpush1.msra.mxu0 0.0
    %4308 = vmatprep.subr.mxu0 0.0
    %4309 = vmatpush1.msra.mxu0 0.0
    %4310 = vmatprep.subr.mxu0 0.0
    %4311 = vmatpush1.msra.mxu0 0.0
    %4312 = vmatprep.mubr.f32.mxu0 0.0
    %4313 = vmatmul.mubr.f32.gmra.mrb[0].mxu0 %v897
    %v4314 = vpop.f32.mrb[0].mxu0
    %v4315 = vadd.f32 0.0, %v4314
    %v4316 = vpop.f32.mrb[0].mxu0
    %v4317 = vadd.f32 0.0, %v4316
    %4318 = vdwg.mxu0
    %4319 = vmatprep.subr.mxu0 %v4187
    %4320 = vmatpush1.msra.mxu0 %v4186
    %4321 = vmatprep.subr.mxu0 %v4191
    %4322 = vmatpush1.msra.mxu0 %v4190
    %4323 = vmatprep.subr.mxu0 %v4195
    %4324 = vmatpush1.msra.mxu0 %v4194
    %4325 = vmatprep.subr.mxu0 %v4199
    %4326 = vmatpush1.msra.mxu0 %v4198
    %4327 = vmatprep.subr.mxu0 %v4203
    %4328 = vmatpush1.msra.mxu0 %v4202
    %4329 = vmatprep.subr.mxu0 %v4207
    %4330 = vmatpush1.msra.mxu0 %v4206
    %4331 = vmatprep.subr.mxu0 %v4211
    %4332 = vmatpush1.msra.mxu0 %v4210
    %4333 = vmatprep.subr.mxu0 %v4215
    %4334 = vmatpush1.msra.mxu0 %v4214
    %4335 = vmatprep.subr.mxu0 %v4219
    %4336 = vmatpush1.msra.mxu0 %v4218
    %4337 = vmatprep.subr.mxu0 %v4223
    %4338 = vmatpush1.msra.mxu0 %v4222
    %4339 = vmatprep.subr.mxu0 %v4227
    %4340 = vmatpush1.msra.mxu0 %v4226
    %4341 = vmatprep.subr.mxu0 %v4231
    %4342 = vmatpush1.msra.mxu0 %v4230
    %4343 = vmatprep.subr.mxu0 %v4235
    %4344 = vmatpush1.msra.mxu0 %v4234
    %4345 = vmatprep.subr.mxu0 %v4239
    %4346 = vmatpush1.msra.mxu0 %v4238
    %4347 = vmatprep.subr.mxu0 %v4243
    %4348 = vmatpush1.msra.mxu0 %v4242
    %4349 = vmatprep.subr.mxu0 %v4247
    %4350 = vmatpush1.msra.mxu0 %v4246
    %4351 = vmatprep.subr.mxu0 0.0
    %4352 = vmatpush1.msra.mxu0 0.0
    %4353 = vmatprep.subr.mxu0 0.0
    %4354 = vmatpush1.msra.mxu0 0.0
    %4355 = vmatprep.subr.mxu0 0.0
    %4356 = vmatpush1.msra.mxu0 0.0
    %4357 = vmatprep.subr.mxu0 0.0
    %4358 = vmatpush1.msra.mxu0 0.0
    %4359 = vmatprep.subr.mxu0 0.0
    %4360 = vmatpush1.msra.mxu0 0.0
    %4361 = vmatprep.subr.mxu0 0.0
    %4362 = vmatpush1.msra.mxu0 0.0
    %4363 = vmatprep.subr.mxu0 0.0
    %4364 = vmatpush1.msra.mxu0 0.0
    %4365 = vmatprep.subr.mxu0 0.0
    %4366 = vmatpush1.msra.mxu0 0.0
    %4367 = vmatprep.subr.mxu0 0.0
    %4368 = vmatpush1.msra.mxu0 0.0
    %4369 = vmatprep.subr.mxu0 0.0
    %4370 = vmatpush1.msra.mxu0 0.0
    %4371 = vmatprep.subr.mxu0 0.0
    %4372 = vmatpush1.msra.mxu0 0.0
    %4373 = vmatprep.subr.mxu0 0.0
    %4374 = vmatpush1.msra.mxu0 0.0
    %4375 = vmatprep.subr.mxu0 0.0
    %4376 = vmatpush1.msra.mxu0 0.0
    %4377 = vmatprep.subr.mxu0 0.0
    %4378 = vmatpush1.msra.mxu0 0.0
    %4379 = vmatprep.subr.mxu0 0.0
    %4380 = vmatpush1.msra.mxu0 0.0
    %4381 = vmatprep.subr.mxu0 0.0
    %4382 = vmatpush1.msra.mxu0 0.0
    %4383 = vmatprep.mubr.f32.mxu0 0.0
    %4384 = vmatmul.mubr.f32.gmra.mrb[0].mxu0 %v897
    %v4385 = vpop.f32.mrb[0].mxu0
    %v4386 = vadd.f32 0.0, %v4385
    %v4387 = vpop.f32.mrb[0].mxu0
    %v4388 = vadd.f32 0.0, %v4387
    %4389 = vdwg.mxu0
    %v4390 = vmul.f32 %v4315, %v900
    %v4391 = vmul.f32 %v4317, %v901
    %v4394 = vcombine.low %v4390, %v4391
    %v4395 = vcombine.high %v4390, %v4391
    %v4397 = vunpack.c.l.s4 1966171168
    %v4398 = vunpack.c.0.s8 %v4397
    %v4399 = vlaneseq
    %v4400 = vshrl.u32 %v4399, 7
    %v4401 = vsub.s32 %v4398, %v4400
    %v4402 = vrot.slane %v4394, %v4401
    %v4404 = vunpack.c.l.s4 1966171168
    %v4405 = vunpack.c.0.s8 %v4404
    %v4406 = vlaneseq
    %v4407 = vshrl.u32 %v4406, 7
    %v4408 = vsub.s32 %v4405, %v4407
    %v4409 = vrot.slane %v4395, %v4408
    %v4410 = vcombine.high %v4402, %v4402
    %v4411 = vcombine.high %v4409, %v4409
    %v4413 = vunpack.c.l.s4 1966171168
    %v4414 = vunpack.c.0.s8 %v4413
    %v4415 = vlaneseq
    %v4416 = vshrl.u32 %v4415, 7
    %v4417 = vsub.s32 %v4414, %v4416
    %v4418 = vrot.slane %v4402, %v4417
    %v4420 = vunpack.c.l.s4 1966171168
    %v4421 = vunpack.c.0.s8 %v4420
    %v4422 = vlaneseq
    %v4423 = vshrl.u32 %v4422, 7
    %v4424 = vsub.s32 %v4421, %v4423
    %v4425 = vrot.slane %v4409, %v4424
    %v4427 = vunpack.c.l.s4 1966171168
    %v4428 = vunpack.c.0.s8 %v4427
    %v4429 = vlaneseq
    %v4430 = vshrl.u32 %v4429, 7
    %v4431 = vsub.s32 %v4428, %v4430
    %v4432 = vrot.slane %v4410, %v4431
    %v4434 = vunpack.c.l.s4 1966171168
    %v4435 = vunpack.c.0.s8 %v4434
    %v4436 = vlaneseq
    %v4437 = vshrl.u32 %v4436, 7
    %v4438 = vsub.s32 %v4435, %v4437
    %v4439 = vrot.slane %v4411, %v4438
    %v4440 = vcombine.high %v4418, %v4418
    %v4441 = vcombine.high %v4425, %v4425
    %v4442 = vcombine.high %v4432, %v4432
    %v4443 = vcombine.high %v4439, %v4439
    %s4452 = scalar_lea.vmem [#allocation3], 16
    %4453 = vst.msk [vmem:[%s4452] ss:$8 sm:$0x3] %vm1437, %v4418
    %4454 = vst.msk [vmem:[%s4452] ss:$8 sm:$0x0] %vm1437, %v4418
    %s4455 = scalar_lea.vmem [#allocation3], 48
    %4456 = vst.msk [vmem:[%s4455] ss:$8 sm:$0x3] %vm1437, %v4432
    %4457 = vst.msk [vmem:[%s4455] ss:$8 sm:$0x0] %vm1437, %v4432
    %s4458 = scalar_lea.vmem [#allocation3], 80
    %4459 = vst.msk [vmem:[%s4458] ss:$8 sm:$0x3] %vm1437, %v4440
    %4460 = vst.msk [vmem:[%s4458] ss:$8 sm:$0x0] %vm1437, %v4440
    %s4461 = scalar_lea.vmem [#allocation3], 112
    %4462 = vst.msk [vmem:[%s4461] ss:$8 sm:$0x3] %vm1437, %v4442
    %4463 = vst.msk [vmem:[%s4461] ss:$8 sm:$0x0] %vm1437, %v4442
    %s4464 = scalar_lea.vmem [#allocation3], 144
    %4465 = vst.msk [vmem:[%s4464] ss:$8 sm:$0x3] %vm1437, %v4425
    %4466 = vst.msk [vmem:[%s4464] ss:$8 sm:$0x0] %vm1437, %v4425
    %s4467 = scalar_lea.vmem [#allocation3], 176
    %4468 = vst.msk [vmem:[%s4467] ss:$8 sm:$0x3] %vm1437, %v4439
    %4469 = vst.msk [vmem:[%s4467] ss:$8 sm:$0x0] %vm1437, %v4439
    %s4470 = scalar_lea.vmem [#allocation3], 208
    %4471 = vst.msk [vmem:[%s4470] ss:$8 sm:$0x3] %vm1437, %v4441
    %4472 = vst.msk [vmem:[%s4470] ss:$8 sm:$0x0] %vm1437, %v4441
    %s4473 = scalar_lea.vmem [#allocation3], 240
    %4474 = vst.msk [vmem:[%s4473] ss:$8 sm:$0x3] %vm1437, %v4443
    %4475 = vst.msk [vmem:[%s4473] ss:$8 sm:$0x0] %vm1437, %v4443
    %v4478 = vcombine.low %v4386, %v4388
    %v4479 = vcombine.high %v4386, %v4388
    %v4481 = vunpack.c.l.s4 1966171168
    %v4482 = vunpack.c.0.s8 %v4481
    %v4483 = vlaneseq
    %v4484 = vshrl.u32 %v4483, 7
    %v4485 = vsub.s32 %v4482, %v4484
    %v4486 = vrot.slane %v4478, %v4485
    %v4488 = vunpack.c.l.s4 1966171168
    %v4489 = vunpack.c.0.s8 %v4488
    %v4490 = vlaneseq
    %v4491 = vshrl.u32 %v4490, 7
    %v4492 = vsub.s32 %v4489, %v4491
    %v4493 = vrot.slane %v4479, %v4492
    %v4494 = vcombine.high %v4486, %v4486
    %v4495 = vcombine.high %v4493, %v4493
    %v4497 = vunpack.c.l.s4 1966171168
    %v4498 = vunpack.c.0.s8 %v4497
    %v4499 = vlaneseq
    %v4500 = vshrl.u32 %v4499, 7
    %v4501 = vsub.s32 %v4498, %v4500
    %v4502 = vrot.slane %v4486, %v4501
    %v4504 = vunpack.c.l.s4 1966171168
    %v4505 = vunpack.c.0.s8 %v4504
    %v4506 = vlaneseq
    %v4507 = vshrl.u32 %v4506, 7
    %v4508 = vsub.s32 %v4505, %v4507
    %v4509 = vrot.slane %v4493, %v4508
    %v4511 = vunpack.c.l.s4 1966171168
    %v4512 = vunpack.c.0.s8 %v4511
    %v4513 = vlaneseq
    %v4514 = vshrl.u32 %v4513, 7
    %v4515 = vsub.s32 %v4512, %v4514
    %v4516 = vrot.slane %v4494, %v4515
    %v4518 = vunpack.c.l.s4 1966171168
    %v4519 = vunpack.c.0.s8 %v4518
    %v4520 = vlaneseq
    %v4521 = vshrl.u32 %v4520, 7
    %v4522 = vsub.s32 %v4519, %v4521
    %v4523 = vrot.slane %v4495, %v4522
    %v4524 = vcombine.high %v4502, %v4502
    %v4525 = vcombine.high %v4509, %v4509
    %v4526 = vcombine.high %v4516, %v4516
    %v4527 = vcombine.high %v4523, %v4523
    %s4536 = scalar_lea.vmem [#allocation4], 16
    %4537 = vst.msk [vmem:[%s4536] ss:$8 sm:$0x3] %vm1437, %v4502
    %4538 = vst.msk [vmem:[%s4536] ss:$8 sm:$0x0] %vm1437, %v4502
    %s4539 = scalar_lea.vmem [#allocation4], 48
    %4540 = vst.msk [vmem:[%s4539] ss:$8 sm:$0x3] %vm1437, %v4516
    %4541 = vst.msk [vmem:[%s4539] ss:$8 sm:$0x0] %vm1437, %v4516
    %s4542 = scalar_lea.vmem [#allocation4], 80
    %4543 = vst.msk [vmem:[%s4542] ss:$8 sm:$0x3] %vm1437, %v4524
    %4544 = vst.msk [vmem:[%s4542] ss:$8 sm:$0x0] %vm1437, %v4524
    %s4545 = scalar_lea.vmem [#allocation4], 112
    %4546 = vst.msk [vmem:[%s4545] ss:$8 sm:$0x3] %vm1437, %v4526
    %4547 = vst.msk [vmem:[%s4545] ss:$8 sm:$0x0] %vm1437, %v4526
    %s4548 = scalar_lea.vmem [#allocation4], 144
    %4549 = vst.msk [vmem:[%s4548] ss:$8 sm:$0x3] %vm1437, %v4509
    %4550 = vst.msk [vmem:[%s4548] ss:$8 sm:$0x0] %vm1437, %v4509
    %s4551 = scalar_lea.vmem [#allocation4], 176
    %4552 = vst.msk [vmem:[%s4551] ss:$8 sm:$0x3] %vm1437, %v4523
    %4553 = vst.msk [vmem:[%s4551] ss:$8 sm:$0x0] %vm1437, %v4523
    %s4554 = scalar_lea.vmem [#allocation4], 208
    %4555 = vst.msk [vmem:[%s4554] ss:$8 sm:$0x3] %vm1437, %v4525
    %4556 = vst.msk [vmem:[%s4554] ss:$8 sm:$0x0] %vm1437, %v4525
    %s4557 = scalar_lea.vmem [#allocation4], 240
    %4558 = vst.msk [vmem:[%s4557] ss:$8 sm:$0x3] %vm1437, %v4527
    %4559 = vst.msk [vmem:[%s4557] ss:$8 sm:$0x0] %vm1437, %v4527
    %s4560 = scalar_lea.vmem [#allocation26], 4608
    %v4561 = vld [vmem:[%s4560] sm:$0xff]
    %v4562 = vld [vmem:[%s4560 + $0x8] sm:$0xff]
    %v4563 = vld [vmem:[%s4560 + $0x10] sm:$0xff]
    %v4564 = vld [vmem:[%s4560 + $0x18] sm:$0xff]
    %v4565 = vld [vmem:[%s4560 + $0x20] sm:$0xff]
    %v4566 = vld [vmem:[%s4560 + $0x28] sm:$0xff]
    %v4567 = vld [vmem:[%s4560 + $0x30] sm:$0xff]
    %v4568 = vld [vmem:[%s4560 + $0x38] sm:$0xff]
    %v4569 = vld [vmem:[%s4560 + $0x40] sm:$0xff]
    %v4570 = vld [vmem:[%s4560 + $0x48] sm:$0xff]
    %v4571 = vld [vmem:[%s4560 + $0x50] sm:$0xff]
    %v4572 = vld [vmem:[%s4560 + $0x58] sm:$0xff]
    %v4573 = vld [vmem:[%s4560 + $0x60] sm:$0xff]
    %v4574 = vld [vmem:[%s4560 + $0x68] sm:$0xff]
    %v4575 = vld [vmem:[%s4560 + $0x70] sm:$0xff]
    %v4576 = vld [vmem:[%s4560 + $0x78] sm:$0xff]
    %v4577 = vld [vmem:[%s4560 + $0x80] sm:$0xff]
    %v4578 = vld [vmem:[%s4560 + $0x88] sm:$0xff]
    %v4579 = vld [vmem:[%s4560 + $0x90] sm:$0xff]
    %v4580 = vld [vmem:[%s4560 + $0x98] sm:$0xff]
    %v4581 = vld [vmem:[%s4560 + $0xa0] sm:$0xff]
    %v4582 = vld [vmem:[%s4560 + $0xa8] sm:$0xff]
    %v4583 = vld [vmem:[%s4560 + $0xb0] sm:$0xff]
    %v4584 = vld [vmem:[%s4560 + $0xb8] sm:$0xff]
    %v4585 = vld [vmem:[%s4560 + $0xc0] sm:$0xff]
    %v4586 = vld [vmem:[%s4560 + $0xc8] sm:$0xff]
    %v4587 = vld [vmem:[%s4560 + $0xd0] sm:$0xff]
    %v4588 = vld [vmem:[%s4560 + $0xd8] sm:$0xff]
    %v4589 = vld [vmem:[%s4560 + $0xe0] sm:$0xff]
    %v4590 = vld [vmem:[%s4560 + $0xe8] sm:$0xff]
    %v4591 = vld [vmem:[%s4560 + $0xf0] sm:$0xff]
    %v4592 = vld [vmem:[%s4560 + $0xf8] sm:$0xff]
    %v4593 = vld [vmem:[%s4560 + $0x100] sm:$0xff]
    %v4594 = vld [vmem:[%s4560 + $0x108] sm:$0xff]
    %v4595 = vld [vmem:[%s4560 + $0x110] sm:$0xff]
    %v4596 = vld [vmem:[%s4560 + $0x118] sm:$0xff]
    %v4597 = vld [vmem:[%s4560 + $0x120] sm:$0xff]
    %v4598 = vld [vmem:[%s4560 + $0x128] sm:$0xff]
    %v4599 = vld [vmem:[%s4560 + $0x130] sm:$0xff]
    %v4600 = vld [vmem:[%s4560 + $0x138] sm:$0xff]
    %v4601 = vld [vmem:[%s4560 + $0x140] sm:$0xff]
    %v4602 = vld [vmem:[%s4560 + $0x148] sm:$0xff]
    %v4603 = vld [vmem:[%s4560 + $0x150] sm:$0xff]
    %v4604 = vld [vmem:[%s4560 + $0x158] sm:$0xff]
    %v4605 = vld [vmem:[%s4560 + $0x160] sm:$0xff]
    %v4606 = vld [vmem:[%s4560 + $0x168] sm:$0xff]
    %v4607 = vld [vmem:[%s4560 + $0x170] sm:$0xff]
    %v4608 = vld [vmem:[%s4560 + $0x178] sm:$0xff]
    %v4609 = vld [vmem:[%s4560 + $0x180] sm:$0xff]
    %v4610 = vld [vmem:[%s4560 + $0x188] sm:$0xff]
    %v4611 = vld [vmem:[%s4560 + $0x190] sm:$0xff]
    %v4612 = vld [vmem:[%s4560 + $0x198] sm:$0xff]
    %v4613 = vld [vmem:[%s4560 + $0x1a0] sm:$0xff]
    %v4614 = vld [vmem:[%s4560 + $0x1a8] sm:$0xff]
    %v4615 = vld [vmem:[%s4560 + $0x1b0] sm:$0xff]
    %v4616 = vld [vmem:[%s4560 + $0x1b8] sm:$0xff]
    %v4617 = vld [vmem:[%s4560 + $0x1c0] sm:$0xff]
    %v4618 = vld [vmem:[%s4560 + $0x1c8] sm:$0xff]
    %v4619 = vld [vmem:[%s4560 + $0x1d0] sm:$0xff]
    %v4620 = vld [vmem:[%s4560 + $0x1d8] sm:$0xff]
    %v4621 = vld [vmem:[%s4560 + $0x1e0] sm:$0xff]
    %v4622 = vld [vmem:[%s4560 + $0x1e8] sm:$0xff]
    %v4623 = vld [vmem:[%s4560 + $0x1f0] sm:$0xff]
    %v4624 = vld [vmem:[%s4560 + $0x1f8] sm:$0xff]
    %4625 = vmatprep.subr.mxu0 %v4562
    %4626 = vmatpush1.msra.mxu0 %v4561
    %4627 = vmatprep.subr.mxu0 %v4566
    %4628 = vmatpush1.msra.mxu0 %v4565
    %4629 = vmatprep.subr.mxu0 %v4570
    %4630 = vmatpush1.msra.mxu0 %v4569
    %4631 = vmatprep.subr.mxu0 %v4574
    %4632 = vmatpush1.msra.mxu0 %v4573
    %4633 = vmatprep.subr.mxu0 %v4578
    %4634 = vmatpush1.msra.mxu0 %v4577
    %4635 = vmatprep.subr.mxu0 %v4582
    %4636 = vmatpush1.msra.mxu0 %v4581
    %4637 = vmatprep.subr.mxu0 %v4586
    %4638 = vmatpush1.msra.mxu0 %v4585
    %4639 = vmatprep.subr.mxu0 %v4590
    %4640 = vmatpush1.msra.mxu0 %v4589
    %4641 = vmatprep.subr.mxu0 %v4594
    %4642 = vmatpush1.msra.mxu0 %v4593
    %4643 = vmatprep.subr.mxu0 %v4598
    %4644 = vmatpush1.msra.mxu0 %v4597
    %4645 = vmatprep.subr.mxu0 %v4602
    %4646 = vmatpush1.msra.mxu0 %v4601
    %4647 = vmatprep.subr.mxu0 %v4606
    %4648 = vmatpush1.msra.mxu0 %v4605
    %4649 = vmatprep.subr.mxu0 %v4610
    %4650 = vmatpush1.msra.mxu0 %v4609
    %4651 = vmatprep.subr.mxu0 %v4614
    %4652 = vmatpush1.msra.mxu0 %v4613
    %4653 = vmatprep.subr.mxu0 %v4618
    %4654 = vmatpush1.msra.mxu0 %v4617
    %4655 = vmatprep.subr.mxu0 %v4622
    %4656 = vmatpush1.msra.mxu0 %v4621
    %4657 = vmatprep.subr.mxu0 0.0
    %4658 = vmatpush1.msra.mxu0 0.0
    %4659 = vmatprep.subr.mxu0 0.0
    %4660 = vmatpush1.msra.mxu0 0.0
    %4661 = vmatprep.subr.mxu0 0.0
    %4662 = vmatpush1.msra.mxu0 0.0
    %4663 = vmatprep.subr.mxu0 0.0
    %4664 = vmatpush1.msra.mxu0 0.0
    %4665 = vmatprep.subr.mxu0 0.0
    %4666 = vmatpush1.msra.mxu0 0.0
    %4667 = vmatprep.subr.mxu0 0.0
    %4668 = vmatpush1.msra.mxu0 0.0
    %4669 = vmatprep.subr.mxu0 0.0
    %4670 = vmatpush1.msra.mxu0 0.0
    %4671 = vmatprep.subr.mxu0 0.0
    %4672 = vmatpush1.msra.mxu0 0.0
    %4673 = vmatprep.subr.mxu0 0.0
    %4674 = vmatpush1.msra.mxu0 0.0
    %4675 = vmatprep.subr.mxu0 0.0
    %4676 = vmatpush1.msra.mxu0 0.0
    %4677 = vmatprep.subr.mxu0 0.0
    %4678 = vmatpush1.msra.mxu0 0.0
    %4679 = vmatprep.subr.mxu0 0.0
    %4680 = vmatpush1.msra.mxu0 0.0
    %4681 = vmatprep.subr.mxu0 0.0
    %4682 = vmatpush1.msra.mxu0 0.0
    %4683 = vmatprep.subr.mxu0 0.0
    %4684 = vmatpush1.msra.mxu0 0.0
    %4685 = vmatprep.subr.mxu0 0.0
    %4686 = vmatpush1.msra.mxu0 0.0
    %4687 = vmatprep.subr.mxu0 0.0
    %4688 = vmatpush1.msra.mxu0 0.0
    %4689 = vmatprep.mubr.f32.mxu0 0.0
    %4690 = vmatmul.mubr.f32.gmra.mrb[0].mxu0 %v897
    %v4691 = vpop.f32.mrb[0].mxu0
    %v4692 = vadd.f32 0.0, %v4691
    %v4693 = vpop.f32.mrb[0].mxu0
    %v4694 = vadd.f32 0.0, %v4693
    %4695 = vdwg.mxu0
    %4696 = vmatprep.subr.mxu0 %v4564
    %4697 = vmatpush1.msra.mxu0 %v4563
    %4698 = vmatprep.subr.mxu0 %v4568
    %4699 = vmatpush1.msra.mxu0 %v4567
    %4700 = vmatprep.subr.mxu0 %v4572
    %4701 = vmatpush1.msra.mxu0 %v4571
    %4702 = vmatprep.subr.mxu0 %v4576
    %4703 = vmatpush1.msra.mxu0 %v4575
    %4704 = vmatprep.subr.mxu0 %v4580
    %4705 = vmatpush1.msra.mxu0 %v4579
    %4706 = vmatprep.subr.mxu0 %v4584
    %4707 = vmatpush1.msra.mxu0 %v4583
    %4708 = vmatprep.subr.mxu0 %v4588
    %4709 = vmatpush1.msra.mxu0 %v4587
    %4710 = vmatprep.subr.mxu0 %v4592
    %4711 = vmatpush1.msra.mxu0 %v4591
    %4712 = vmatprep.subr.mxu0 %v4596
    %4713 = vmatpush1.msra.mxu0 %v4595
    %4714 = vmatprep.subr.mxu0 %v4600
    %4715 = vmatpush1.msra.mxu0 %v4599
    %4716 = vmatprep.subr.mxu0 %v4604
    %4717 = vmatpush1.msra.mxu0 %v4603
    %4718 = vmatprep.subr.mxu0 %v4608
    %4719 = vmatpush1.msra.mxu0 %v4607
    %4720 = vmatprep.subr.mxu0 %v4612
    %4721 = vmatpush1.msra.mxu0 %v4611
    %4722 = vmatprep.subr.mxu0 %v4616
    %4723 = vmatpush1.msra.mxu0 %v4615
    %4724 = vmatprep.subr.mxu0 %v4620
    %4725 = vmatpush1.msra.mxu0 %v4619
    %4726 = vmatprep.subr.mxu0 %v4624
    %4727 = vmatpush1.msra.mxu0 %v4623
    %4728 = vmatprep.subr.mxu0 0.0
    %4729 = vmatpush1.msra.mxu0 0.0
    %4730 = vmatprep.subr.mxu0 0.0
    %4731 = vmatpush1.msra.mxu0 0.0
    %4732 = vmatprep.subr.mxu0 0.0
    %4733 = vmatpush1.msra.mxu0 0.0
    %4734 = vmatprep.subr.mxu0 0.0
    %4735 = vmatpush1.msra.mxu0 0.0
    %4736 = vmatprep.subr.mxu0 0.0
    %4737 = vmatpush1.msra.mxu0 0.0
    %4738 = vmatprep.subr.mxu0 0.0
    %4739 = vmatpush1.msra.mxu0 0.0
    %4740 = vmatprep.subr.mxu0 0.0
    %4741 = vmatpush1.msra.mxu0 0.0
    %4742 = vmatprep.subr.mxu0 0.0
    %4743 = vmatpush1.msra.mxu0 0.0
    %4744 = vmatprep.subr.mxu0 0.0
    %4745 = vmatpush1.msra.mxu0 0.0
    %4746 = vmatprep.subr.mxu0 0.0
    %4747 = vmatpush1.msra.mxu0 0.0
    %4748 = vmatprep.subr.mxu0 0.0
    %4749 = vmatpush1.msra.mxu0 0.0
    %4750 = vmatprep.subr.mxu0 0.0
    %4751 = vmatpush1.msra.mxu0 0.0
    %4752 = vmatprep.subr.mxu0 0.0
    %4753 = vmatpush1.msra.mxu0 0.0
    %4754 = vmatprep.subr.mxu0 0.0
    %4755 = vmatpush1.msra.mxu0 0.0
    %4756 = vmatprep.subr.mxu0 0.0
    %4757 = vmatpush1.msra.mxu0 0.0
    %4758 = vmatprep.subr.mxu0 0.0
    %4759 = vmatpush1.msra.mxu0 0.0
    %4760 = vmatprep.mubr.f32.mxu0 0.0
    %4761 = vmatmul.mubr.f32.gmra.mrb[0].mxu0 %v897
    %v4762 = vpop.f32.mrb[0].mxu0
    %v4763 = vadd.f32 0.0, %v4762
    %v4764 = vpop.f32.mrb[0].mxu0
    %v4765 = vadd.f32 0.0, %v4764
    %4766 = vdwg.mxu0
    %v4767 = vmul.f32 %v4692, %v900
    %v4768 = vmul.f32 %v4694, %v901
    %v4771 = vcombine.low %v4767, %v4768
    %v4772 = vcombine.high %v4767, %v4768
    %v4774 = vunpack.c.l.s4 1966171168
    %v4775 = vunpack.c.0.s8 %v4774
    %v4776 = vlaneseq
    %v4777 = vshrl.u32 %v4776, 7
    %v4778 = vsub.s32 %v4775, %v4777
    %v4779 = vrot.slane %v4771, %v4778
    %v4781 = vunpack.c.l.s4 1966171168
    %v4782 = vunpack.c.0.s8 %v4781
    %v4783 = vlaneseq
    %v4784 = vshrl.u32 %v4783, 7
    %v4785 = vsub.s32 %v4782, %v4784
    %v4786 = vrot.slane %v4772, %v4785
    %v4787 = vcombine.high %v4779, %v4779
    %v4788 = vcombine.high %v4786, %v4786
    %v4790 = vunpack.c.l.s4 1966171168
    %v4791 = vunpack.c.0.s8 %v4790
    %v4792 = vlaneseq
    %v4793 = vshrl.u32 %v4792, 7
    %v4794 = vsub.s32 %v4791, %v4793
    %v4795 = vrot.slane %v4779, %v4794
    %v4797 = vunpack.c.l.s4 1966171168
    %v4798 = vunpack.c.0.s8 %v4797
    %v4799 = vlaneseq
    %v4800 = vshrl.u32 %v4799, 7
    %v4801 = vsub.s32 %v4798, %v4800
    %v4802 = vrot.slane %v4786, %v4801
    %v4804 = vunpack.c.l.s4 1966171168
    %v4805 = vunpack.c.0.s8 %v4804
    %v4806 = vlaneseq
    %v4807 = vshrl.u32 %v4806, 7
    %v4808 = vsub.s32 %v4805, %v4807
    %v4809 = vrot.slane %v4787, %v4808
    %v4811 = vunpack.c.l.s4 1966171168
    %v4812 = vunpack.c.0.s8 %v4811
    %v4813 = vlaneseq
    %v4814 = vshrl.u32 %v4813, 7
    %v4815 = vsub.s32 %v4812, %v4814
    %v4816 = vrot.slane %v4788, %v4815
    %v4817 = vcombine.high %v4795, %v4795
    %v4818 = vcombine.high %v4802, %v4802
    %v4819 = vcombine.high %v4809, %v4809
    %v4820 = vcombine.high %v4816, %v4816
    %s4829 = scalar_lea.vmem [#allocation3], 17
    %4830 = vst.msk [vmem:[%s4829] ss:$8 sm:$0x3] %vm1437, %v4795
    %4831 = vst.msk [vmem:[%s4829] ss:$8 sm:$0x0] %vm1437, %v4795
    %s4832 = scalar_lea.vmem [#allocation3], 49
    %4833 = vst.msk [vmem:[%s4832] ss:$8 sm:$0x3] %vm1437, %v4809
    %4834 = vst.msk [vmem:[%s4832] ss:$8 sm:$0x0] %vm1437, %v4809
    %s4835 = scalar_lea.vmem [#allocation3], 81
    %4836 = vst.msk [vmem:[%s4835] ss:$8 sm:$0x3] %vm1437, %v4817
    %4837 = vst.msk [vmem:[%s4835] ss:$8 sm:$0x0] %vm1437, %v4817
    %s4838 = scalar_lea.vmem [#allocation3], 113
    %4839 = vst.msk [vmem:[%s4838] ss:$8 sm:$0x3] %vm1437, %v4819
    %4840 = vst.msk [vmem:[%s4838] ss:$8 sm:$0x0] %vm1437, %v4819
    %s4841 = scalar_lea.vmem [#allocation3], 145
    %4842 = vst.msk [vmem:[%s4841] ss:$8 sm:$0x3] %vm1437, %v4802
    %4843 = vst.msk [vmem:[%s4841] ss:$8 sm:$0x0] %vm1437, %v4802
    %s4844 = scalar_lea.vmem [#allocation3], 177
    %4845 = vst.msk [vmem:[%s4844] ss:$8 sm:$0x3] %vm1437, %v4816
    %4846 = vst.msk [vmem:[%s4844] ss:$8 sm:$0x0] %vm1437, %v4816
    %s4847 = scalar_lea.vmem [#allocation3], 209
    %4848 = vst.msk [vmem:[%s4847] ss:$8 sm:$0x3] %vm1437, %v4818
    %4849 = vst.msk [vmem:[%s4847] ss:$8 sm:$0x0] %vm1437, %v4818
    %s4850 = scalar_lea.vmem [#allocation3], 241
    %4851 = vst.msk [vmem:[%s4850] ss:$8 sm:$0x3] %vm1437, %v4820
    %4852 = vst.msk [vmem:[%s4850] ss:$8 sm:$0x0] %vm1437, %v4820
    %v4855 = vcombine.low %v4763, %v4765
    %v4856 = vcombine.high %v4763, %v4765
    %v4858 = vunpack.c.l.s4 1966171168
    %v4859 = vunpack.c.0.s8 %v4858
    %v4860 = vlaneseq
    %v4861 = vshrl.u32 %v4860, 7
    %v4862 = vsub.s32 %v4859, %v4861
    %v4863 = vrot.slane %v4855, %v4862
    %v4865 = vunpack.c.l.s4 1966171168
    %v4866 = vunpack.c.0.s8 %v4865
    %v4867 = vlaneseq
    %v4868 = vshrl.u32 %v4867, 7
    %v4869 = vsub.s32 %v4866, %v4868
    %v4870 = vrot.slane %v4856, %v4869
    %v4871 = vcombine.high %v4863, %v4863
    %v4872 = vcombine.high %v4870, %v4870
    %v4874 = vunpack.c.l.s4 1966171168
    %v4875 = vunpack.c.0.s8 %v4874
    %v4876 = vlaneseq
    %v4877 = vshrl.u32 %v4876, 7
    %v4878 = vsub.s32 %v4875, %v4877
    %v4879 = vrot.slane %v4863, %v4878
    %v4881 = vunpack.c.l.s4 1966171168
    %v4882 = vunpack.c.0.s8 %v4881
    %v4883 = vlaneseq
    %v4884 = vshrl.u32 %v4883, 7
    %v4885 = vsub.s32 %v4882, %v4884
    %v4886 = vrot.slane %v4870, %v4885
    %v4888 = vunpack.c.l.s4 1966171168
    %v4889 = vunpack.c.0.s8 %v4888
    %v4890 = vlaneseq
    %v4891 = vshrl.u32 %v4890, 7
    %v4892 = vsub.s32 %v4889, %v4891
    %v4893 = vrot.slane %v4871, %v4892
    %v4895 = vunpack.c.l.s4 1966171168
    %v4896 = vunpack.c.0.s8 %v4895
    %v4897 = vlaneseq
    %v4898 = vshrl.u32 %v4897, 7
    %v4899 = vsub.s32 %v4896, %v4898
    %v4900 = vrot.slane %v4872, %v4899
    %v4901 = vcombine.high %v4879, %v4879
    %v4902 = vcombine.high %v4886, %v4886
    %v4903 = vcombine.high %v4893, %v4893
    %v4904 = vcombine.high %v4900, %v4900
    %s4913 = scalar_lea.vmem [#allocation4], 17
    %4914 = vst.msk [vmem:[%s4913] ss:$8 sm:$0x3] %vm1437, %v4879
    %4915 = vst.msk [vmem:[%s4913] ss:$8 sm:$0x0] %vm1437, %v4879
    %s4916 = scalar_lea.vmem [#allocation4], 49
    %4917 = vst.msk [vmem:[%s4916] ss:$8 sm:$0x3] %vm1437, %v4893
    %4918 = vst.msk [vmem:[%s4916] ss:$8 sm:$0x0] %vm1437, %v4893
    %s4919 = scalar_lea.vmem [#allocation4], 81
    %4920 = vst.msk [vmem:[%s4919] ss:$8 sm:$0x3] %vm1437, %v4901
    %4921 = vst.msk [vmem:[%s4919] ss:$8 sm:$0x0] %vm1437, %v4901
    %s4922 = scalar_lea.vmem [#allocation4], 113
    %4923 = vst.msk [vmem:[%s4922] ss:$8 sm:$0x3] %vm1437, %v4903
    %4924 = vst.msk [vmem:[%s4922] ss:$8 sm:$0x0] %vm1437, %v4903
    %s4925 = scalar_lea.vmem [#allocation4], 145
    %4926 = vst.msk [vmem:[%s4925] ss:$8 sm:$0x3] %vm1437, %v4886
    %4927 = vst.msk [vmem:[%s4925] ss:$8 sm:$0x0] %vm1437, %v4886
    %s4928 = scalar_lea.vmem [#allocation4], 177
    %4929 = vst.msk [vmem:[%s4928] ss:$8 sm:$0x3] %vm1437, %v4900
    %4930 = vst.msk [vmem:[%s4928] ss:$8 sm:$0x0] %vm1437, %v4900
    %s4931 = scalar_lea.vmem [#allocation4], 209
    %4932 = vst.msk [vmem:[%s4931] ss:$8 sm:$0x3] %vm1437, %v4902
    %4933 = vst.msk [vmem:[%s4931] ss:$8 sm:$0x0] %vm1437, %v4902
    %s4934 = scalar_lea.vmem [#allocation4], 241
    %4935 = vst.msk [vmem:[%s4934] ss:$8 sm:$0x3] %vm1437, %v4904
    %4936 = vst.msk [vmem:[%s4934] ss:$8 sm:$0x0] %vm1437, %v4904
    %s4937 = scalar_lea.vmem [#allocation26], 5120
    %v4938 = vld [vmem:[%s4937] sm:$0xff]
    %v4939 = vld [vmem:[%s4937 + $0x8] sm:$0xff]
    %v4940 = vld [vmem:[%s4937 + $0x10] sm:$0xff]
    %v4941 = vld [vmem:[%s4937 + $0x18] sm:$0xff]
    %v4942 = vld [vmem:[%s4937 + $0x20] sm:$0xff]
    %v4943 = vld [vmem:[%s4937 + $0x28] sm:$0xff]
    %v4944 = vld [vmem:[%s4937 + $0x30] sm:$0xff]
    %v4945 = vld [vmem:[%s4937 + $0x38] sm:$0xff]
    %v4946 = vld [vmem:[%s4937 + $0x40] sm:$0xff]
    %v4947 = vld [vmem:[%s4937 + $0x48] sm:$0xff]
    %v4948 = vld [vmem:[%s4937 + $0x50] sm:$0xff]
    %v4949 = vld [vmem:[%s4937 + $0x58] sm:$0xff]
    %v4950 = vld [vmem:[%s4937 + $0x60] sm:$0xff]
    %v4951 = vld [vmem:[%s4937 + $0x68] sm:$0xff]
    %v4952 = vld [vmem:[%s4937 + $0x70] sm:$0xff]
    %v4953 = vld [vmem:[%s4937 + $0x78] sm:$0xff]
    %v4954 = vld [vmem:[%s4937 + $0x80] sm:$0xff]
    %v4955 = vld [vmem:[%s4937 + $0x88] sm:$0xff]
    %v4956 = vld [vmem:[%s4937 + $0x90] sm:$0xff]
    %v4957 = vld [vmem:[%s4937 + $0x98] sm:$0xff]
    %v4958 = vld [vmem:[%s4937 + $0xa0] sm:$0xff]
    %v4959 = vld [vmem:[%s4937 + $0xa8] sm:$0xff]
    %v4960 = vld [vmem:[%s4937 + $0xb0] sm:$0xff]
    %v4961 = vld [vmem:[%s4937 + $0xb8] sm:$0xff]
    %v4962 = vld [vmem:[%s4937 + $0xc0] sm:$0xff]
    %v4963 = vld [vmem:[%s4937 + $0xc8] sm:$0xff]
    %v4964 = vld [vmem:[%s4937 + $0xd0] sm:$0xff]
    %v4965 = vld [vmem:[%s4937 + $0xd8] sm:$0xff]
    %v4966 = vld [vmem:[%s4937 + $0xe0] sm:$0xff]
    %v4967 = vld [vmem:[%s4937 + $0xe8] sm:$0xff]
    %v4968 = vld [vmem:[%s4937 + $0xf0] sm:$0xff]
    %v4969 = vld [vmem:[%s4937 + $0xf8] sm:$0xff]
    %v4970 = vld [vmem:[%s4937 + $0x100] sm:$0xff]
    %v4971 = vld [vmem:[%s4937 + $0x108] sm:$0xff]
    %v4972 = vld [vmem:[%s4937 + $0x110] sm:$0xff]
    %v4973 = vld [vmem:[%s4937 + $0x118] sm:$0xff]
    %v4974 = vld [vmem:[%s4937 + $0x120] sm:$0xff]
    %v4975 = vld [vmem:[%s4937 + $0x128] sm:$0xff]
    %v4976 = vld [vmem:[%s4937 + $0x130] sm:$0xff]
    %v4977 = vld [vmem:[%s4937 + $0x138] sm:$0xff]
    %v4978 = vld [vmem:[%s4937 + $0x140] sm:$0xff]
    %v4979 = vld [vmem:[%s4937 + $0x148] sm:$0xff]
    %v4980 = vld [vmem:[%s4937 + $0x150] sm:$0xff]
    %v4981 = vld [vmem:[%s4937 + $0x158] sm:$0xff]
    %v4982 = vld [vmem:[%s4937 + $0x160] sm:$0xff]
    %v4983 = vld [vmem:[%s4937 + $0x168] sm:$0xff]
    %v4984 = vld [vmem:[%s4937 + $0x170] sm:$0xff]
    %v4985 = vld [vmem:[%s4937 + $0x178] sm:$0xff]
    %v4986 = vld [vmem:[%s4937 + $0x180] sm:$0xff]
    %v4987 = vld [vmem:[%s4937 + $0x188] sm:$0xff]
    %v4988 = vld [vmem:[%s4937 + $0x190] sm:$0xff]
    %v4989 = vld [vmem:[%s4937 + $0x198] sm:$0xff]
    %v4990 = vld [vmem:[%s4937 + $0x1a0] sm:$0xff]
    %v4991 = vld [vmem:[%s4937 + $0x1a8] sm:$0xff]
    %v4992 = vld [vmem:[%s4937 + $0x1b0] sm:$0xff]
    %v4993 = vld [vmem:[%s4937 + $0x1b8] sm:$0xff]
    %v4994 = vld [vmem:[%s4937 + $0x1c0] sm:$0xff]
    %v4995 = vld [vmem:[%s4937 + $0x1c8] sm:$0xff]
    %v4996 = vld [vmem:[%s4937 + $0x1d0] sm:$0xff]
    %v4997 = vld [vmem:[%s4937 + $0x1d8] sm:$0xff]
    %v4998 = vld [vmem:[%s4937 + $0x1e0] sm:$0xff]
    %v4999 = vld [vmem:[%s4937 + $0x1e8] sm:$0xff]
    %v5000 = vld [vmem:[%s4937 + $0x1f0] sm:$0xff]
    %v5001 = vld [vmem:[%s4937 + $0x1f8] sm:$0xff]
    %5002 = vmatprep.subr.mxu0 %v4939
    %5003 = vmatpush1.msra.mxu0 %v4938
    %5004 = vmatprep.subr.mxu0 %v4943
    %5005 = vmatpush1.msra.mxu0 %v4942
    %5006 = vmatprep.subr.mxu0 %v4947
    %5007 = vmatpush1.msra.mxu0 %v4946
    %5008 = vmatprep.subr.mxu0 %v4951
    %5009 = vmatpush1.msra.mxu0 %v4950
    %5010 = vmatprep.subr.mxu0 %v4955
    %5011 = vmatpush1.msra.mxu0 %v4954
    %5012 = vmatprep.subr.mxu0 %v4959
    %5013 = vmatpush1.msra.mxu0 %v4958
    %5014 = vmatprep.subr.mxu0 %v4963
    %5015 = vmatpush1.msra.mxu0 %v4962
    %5016 = vmatprep.subr.mxu0 %v4967
    %5017 = vmatpush1.msra.mxu0 %v4966
    %5018 = vmatprep.subr.mxu0 %v4971
    %5019 = vmatpush1.msra.mxu0 %v4970
    %5020 = vmatprep.subr.mxu0 %v4975
    %5021 = vmatpush1.msra.mxu0 %v4974
    %5022 = vmatprep.subr.mxu0 %v4979
    %5023 = vmatpush1.msra.mxu0 %v4978
    %5024 = vmatprep.subr.mxu0 %v4983
    %5025 = vmatpush1.msra.mxu0 %v4982
    %5026 = vmatprep.subr.mxu0 %v4987
    %5027 = vmatpush1.msra.mxu0 %v4986
    %5028 = vmatprep.subr.mxu0 %v4991
    %5029 = vmatpush1.msra.mxu0 %v4990
    %5030 = vmatprep.subr.mxu0 %v4995
    %5031 = vmatpush1.msra.mxu0 %v4994
    %5032 = vmatprep.subr.mxu0 %v4999
    %5033 = vmatpush1.msra.mxu0 %v4998
    %5034 = vmatprep.subr.mxu0 0.0
    %5035 = vmatpush1.msra.mxu0 0.0
    %5036 = vmatprep.subr.mxu0 0.0
    %5037 = vmatpush1.msra.mxu0 0.0
    %5038 = vmatprep.subr.mxu0 0.0
    %5039 = vmatpush1.msra.mxu0 0.0
    %5040 = vmatprep.subr.mxu0 0.0
    %5041 = vmatpush1.msra.mxu0 0.0
    %5042 = vmatprep.subr.mxu0 0.0
    %5043 = vmatpush1.msra.mxu0 0.0
    %5044 = vmatprep.subr.mxu0 0.0
    %5045 = vmatpush1.msra.mxu0 0.0
    %5046 = vmatprep.subr.mxu0 0.0
    %5047 = vmatpush1.msra.mxu0 0.0
    %5048 = vmatprep.subr.mxu0 0.0
    %5049 = vmatpush1.msra.mxu0 0.0
    %5050 = vmatprep.subr.mxu0 0.0
    %5051 = vmatpush1.msra.mxu0 0.0
    %5052 = vmatprep.subr.mxu0 0.0
    %5053 = vmatpush1.msra.mxu0 0.0
    %5054 = vmatprep.subr.mxu0 0.0
    %5055 = vmatpush1.msra.mxu0 0.0
    %5056 = vmatprep.subr.mxu0 0.0
    %5057 = vmatpush1.msra.mxu0 0.0
    %5058 = vmatprep.subr.mxu0 0.0
    %5059 = vmatpush1.msra.mxu0 0.0
    %5060 = vmatprep.subr.mxu0 0.0
    %5061 = vmatpush1.msra.mxu0 0.0
    %5062 = vmatprep.subr.mxu0 0.0
    %5063 = vmatpush1.msra.mxu0 0.0
    %5064 = vmatprep.subr.mxu0 0.0
    %5065 = vmatpush1.msra.mxu0 0.0
    %5066 = vmatprep.mubr.f32.mxu0 0.0
    %5067 = vmatmul.mubr.f32.gmra.mrb[0].mxu0 %v897
    %v5068 = vpop.f32.mrb[0].mxu0
    %v5069 = vadd.f32 0.0, %v5068
    %v5070 = vpop.f32.mrb[0].mxu0
    %v5071 = vadd.f32 0.0, %v5070
    %5072 = vdwg.mxu0
    %5073 = vmatprep.subr.mxu0 %v4941
    %5074 = vmatpush1.msra.mxu0 %v4940
    %5075 = vmatprep.subr.mxu0 %v4945
    %5076 = vmatpush1.msra.mxu0 %v4944
    %5077 = vmatprep.subr.mxu0 %v4949
    %5078 = vmatpush1.msra.mxu0 %v4948
    %5079 = vmatprep.subr.mxu0 %v4953
    %5080 = vmatpush1.msra.mxu0 %v4952
    %5081 = vmatprep.subr.mxu0 %v4957
    %5082 = vmatpush1.msra.mxu0 %v4956
    %5083 = vmatprep.subr.mxu0 %v4961
    %5084 = vmatpush1.msra.mxu0 %v4960
    %5085 = vmatprep.subr.mxu0 %v4965
    %5086 = vmatpush1.msra.mxu0 %v4964
    %5087 = vmatprep.subr.mxu0 %v4969
    %5088 = vmatpush1.msra.mxu0 %v4968
    %5089 = vmatprep.subr.mxu0 %v4973
    %5090 = vmatpush1.msra.mxu0 %v4972
    %5091 = vmatprep.subr.mxu0 %v4977
    %5092 = vmatpush1.msra.mxu0 %v4976
    %5093 = vmatprep.subr.mxu0 %v4981
    %5094 = vmatpush1.msra.mxu0 %v4980
    %5095 = vmatprep.subr.mxu0 %v4985
    %5096 = vmatpush1.msra.mxu0 %v4984
    %5097 = vmatprep.subr.mxu0 %v4989
    %5098 = vmatpush1.msra.mxu0 %v4988
    %5099 = vmatprep.subr.mxu0 %v4993
    %5100 = vmatpush1.msra.mxu0 %v4992
    %5101 = vmatprep.subr.mxu0 %v4997
    %5102 = vmatpush1.msra.mxu0 %v4996
    %5103 = vmatprep.subr.mxu0 %v5001
    %5104 = vmatpush1.msra.mxu0 %v5000
    %5105 = vmatprep.subr.mxu0 0.0
    %5106 = vmatpush1.msra.mxu0 0.0
    %5107 = vmatprep.subr.mxu0 0.0
    %5108 = vmatpush1.msra.mxu0 0.0
    %5109 = vmatprep.subr.mxu0 0.0
    %5110 = vmatpush1.msra.mxu0 0.0
    %5111 = vmatprep.subr.mxu0 0.0
    %5112 = vmatpush1.msra.mxu0 0.0
    %5113 = vmatprep.subr.mxu0 0.0
    %5114 = vmatpush1.msra.mxu0 0.0
    %5115 = vmatprep.subr.mxu0 0.0
    %5116 = vmatpush1.msra.mxu0 0.0
    %5117 = vmatprep.subr.mxu0 0.0
    %5118 = vmatpush1.msra.mxu0 0.0
    %5119 = vmatprep.subr.mxu0 0.0
    %5120 = vmatpush1.msra.mxu0 0.0
    %5121 = vmatprep.subr.mxu0 0.0
    %5122 = vmatpush1.msra.mxu0 0.0
    %5123 = vmatprep.subr.mxu0 0.0
    %5124 = vmatpush1.msra.mxu0 0.0
    %5125 = vmatprep.subr.mxu0 0.0
    %5126 = vmatpush1.msra.mxu0 0.0
    %5127 = vmatprep.subr.mxu0 0.0
    %5128 = vmatpush1.msra.mxu0 0.0
    %5129 = vmatprep.subr.mxu0 0.0
    %5130 = vmatpush1.msra.mxu0 0.0
    %5131 = vmatprep.subr.mxu0 0.0
    %5132 = vmatpush1.msra.mxu0 0.0
    %5133 = vmatprep.subr.mxu0 0.0
    %5134 = vmatpush1.msra.mxu0 0.0
    %5135 = vmatprep.subr.mxu0 0.0
    %5136 = vmatpush1.msra.mxu0 0.0
    %5137 = vmatprep.mubr.f32.mxu0 0.0
    %5138 = vmatmul.mubr.f32.gmra.mrb[0].mxu0 %v897
    %v5139 = vpop.f32.mrb[0].mxu0
    %v5140 = vadd.f32 0.0, %v5139
    %v5141 = vpop.f32.mrb[0].mxu0
    %v5142 = vadd.f32 0.0, %v5141
    %5143 = vdwg.mxu0
    %v5144 = vmul.f32 %v5069, %v900
    %v5145 = vmul.f32 %v5071, %v901
    %v5148 = vcombine.low %v5144, %v5145
    %v5149 = vcombine.high %v5144, %v5145
    %v5151 = vunpack.c.l.s4 1966171168
    %v5152 = vunpack.c.0.s8 %v5151
    %v5153 = vlaneseq
    %v5154 = vshrl.u32 %v5153, 7
    %v5155 = vsub.s32 %v5152, %v5154
    %v5156 = vrot.slane %v5148, %v5155
    %v5158 = vunpack.c.l.s4 1966171168
    %v5159 = vunpack.c.0.s8 %v5158
    %v5160 = vlaneseq
    %v5161 = vshrl.u32 %v5160, 7
    %v5162 = vsub.s32 %v5159, %v5161
    %v5163 = vrot.slane %v5149, %v5162
    %v5164 = vcombine.high %v5156, %v5156
    %v5165 = vcombine.high %v5163, %v5163
    %v5167 = vunpack.c.l.s4 1966171168
    %v5168 = vunpack.c.0.s8 %v5167
    %v5169 = vlaneseq
    %v5170 = vshrl.u32 %v5169, 7
    %v5171 = vsub.s32 %v5168, %v5170
    %v5172 = vrot.slane %v5156, %v5171
    %v5174 = vunpack.c.l.s4 1966171168
    %v5175 = vunpack.c.0.s8 %v5174
    %v5176 = vlaneseq
    %v5177 = vshrl.u32 %v5176, 7
    %v5178 = vsub.s32 %v5175, %v5177
    %v5179 = vrot.slane %v5163, %v5178
    %v5181 = vunpack.c.l.s4 1966171168
    %v5182 = vunpack.c.0.s8 %v5181
    %v5183 = vlaneseq
    %v5184 = vshrl.u32 %v5183, 7
    %v5185 = vsub.s32 %v5182, %v5184
    %v5186 = vrot.slane %v5164, %v5185
    %v5188 = vunpack.c.l.s4 1966171168
    %v5189 = vunpack.c.0.s8 %v5188
    %v5190 = vlaneseq
    %v5191 = vshrl.u32 %v5190, 7
    %v5192 = vsub.s32 %v5189, %v5191
    %v5193 = vrot.slane %v5165, %v5192
    %v5194 = vcombine.high %v5172, %v5172
    %v5195 = vcombine.high %v5179, %v5179
    %v5196 = vcombine.high %v5186, %v5186
    %v5197 = vcombine.high %v5193, %v5193
    %s5206 = scalar_lea.vmem [#allocation3], 18
    %5207 = vst.msk [vmem:[%s5206] ss:$8 sm:$0x3] %vm1437, %v5172
    %5208 = vst.msk [vmem:[%s5206] ss:$8 sm:$0x0] %vm1437, %v5172
    %s5209 = scalar_lea.vmem [#allocation3], 50
    %5210 = vst.msk [vmem:[%s5209] ss:$8 sm:$0x3] %vm1437, %v5186
    %5211 = vst.msk [vmem:[%s5209] ss:$8 sm:$0x0] %vm1437, %v5186
    %s5212 = scalar_lea.vmem [#allocation3], 82
    %5213 = vst.msk [vmem:[%s5212] ss:$8 sm:$0x3] %vm1437, %v5194
    %5214 = vst.msk [vmem:[%s5212] ss:$8 sm:$0x0] %vm1437, %v5194
    %s5215 = scalar_lea.vmem [#allocation3], 114
    %5216 = vst.msk [vmem:[%s5215] ss:$8 sm:$0x3] %vm1437, %v5196
    %5217 = vst.msk [vmem:[%s5215] ss:$8 sm:$0x0] %vm1437, %v5196
    %s5218 = scalar_lea.vmem [#allocation3], 146
    %5219 = vst.msk [vmem:[%s5218] ss:$8 sm:$0x3] %vm1437, %v5179
    %5220 = vst.msk [vmem:[%s5218] ss:$8 sm:$0x0] %vm1437, %v5179
    %s5221 = scalar_lea.vmem [#allocation3], 178
    %5222 = vst.msk [vmem:[%s5221] ss:$8 sm:$0x3] %vm1437, %v5193
    %5223 = vst.msk [vmem:[%s5221] ss:$8 sm:$0x0] %vm1437, %v5193
    %s5224 = scalar_lea.vmem [#allocation3], 210
    %5225 = vst.msk [vmem:[%s5224] ss:$8 sm:$0x3] %vm1437, %v5195
    %5226 = vst.msk [vmem:[%s5224] ss:$8 sm:$0x0] %vm1437, %v5195
    %s5227 = scalar_lea.vmem [#allocation3], 242
    %5228 = vst.msk [vmem:[%s5227] ss:$8 sm:$0x3] %vm1437, %v5197
    %5229 = vst.msk [vmem:[%s5227] ss:$8 sm:$0x0] %vm1437, %v5197
    %v5232 = vcombine.low %v5140, %v5142
    %v5233 = vcombine.high %v5140, %v5142
    %v5235 = vunpack.c.l.s4 1966171168
    %v5236 = vunpack.c.0.s8 %v5235
    %v5237 = vlaneseq
    %v5238 = vshrl.u32 %v5237, 7
    %v5239 = vsub.s32 %v5236, %v5238
    %v5240 = vrot.slane %v5232, %v5239
    %v5242 = vunpack.c.l.s4 1966171168
    %v5243 = vunpack.c.0.s8 %v5242
    %v5244 = vlaneseq
    %v5245 = vshrl.u32 %v5244, 7
    %v5246 = vsub.s32 %v5243, %v5245
    %v5247 = vrot.slane %v5233, %v5246
    %v5248 = vcombine.high %v5240, %v5240
    %v5249 = vcombine.high %v5247, %v5247
    %v5251 = vunpack.c.l.s4 1966171168
    %v5252 = vunpack.c.0.s8 %v5251
    %v5253 = vlaneseq
    %v5254 = vshrl.u32 %v5253, 7
    %v5255 = vsub.s32 %v5252, %v5254
    %v5256 = vrot.slane %v5240, %v5255
    %v5258 = vunpack.c.l.s4 1966171168
    %v5259 = vunpack.c.0.s8 %v5258
    %v5260 = vlaneseq
    %v5261 = vshrl.u32 %v5260, 7
    %v5262 = vsub.s32 %v5259, %v5261
    %v5263 = vrot.slane %v5247, %v5262
    %v5265 = vunpack.c.l.s4 1966171168
    %v5266 = vunpack.c.0.s8 %v5265
    %v5267 = vlaneseq
    %v5268 = vshrl.u32 %v5267, 7
    %v5269 = vsub.s32 %v5266, %v5268
    %v5270 = vrot.slane %v5248, %v5269
    %v5272 = vunpack.c.l.s4 1966171168
    %v5273 = vunpack.c.0.s8 %v5272
    %v5274 = vlaneseq
    %v5275 = vshrl.u32 %v5274, 7
    %v5276 = vsub.s32 %v5273, %v5275
    %v5277 = vrot.slane %v5249, %v5276
    %v5278 = vcombine.high %v5256, %v5256
    %v5279 = vcombine.high %v5263, %v5263
    %v5280 = vcombine.high %v5270, %v5270
    %v5281 = vcombine.high %v5277, %v5277
    %s5290 = scalar_lea.vmem [#allocation4], 18
    %5291 = vst.msk [vmem:[%s5290] ss:$8 sm:$0x3] %vm1437, %v5256
    %5292 = vst.msk [vmem:[%s5290] ss:$8 sm:$0x0] %vm1437, %v5256
    %s5293 = scalar_lea.vmem [#allocation4], 50
    %5294 = vst.msk [vmem:[%s5293] ss:$8 sm:$0x3] %vm1437, %v5270
    %5295 = vst.msk [vmem:[%s5293] ss:$8 sm:$0x0] %vm1437, %v5270
    %s5296 = scalar_lea.vmem [#allocation4], 82
    %5297 = vst.msk [vmem:[%s5296] ss:$8 sm:$0x3] %vm1437, %v5278
    %5298 = vst.msk [vmem:[%s5296] ss:$8 sm:$0x0] %vm1437, %v5278
    %s5299 = scalar_lea.vmem [#allocation4], 114
    %5300 = vst.msk [vmem:[%s5299] ss:$8 sm:$0x3] %vm1437, %v5280
    %5301 = vst.msk [vmem:[%s5299] ss:$8 sm:$0x0] %vm1437, %v5280
    %s5302 = scalar_lea.vmem [#allocation4], 146
    %5303 = vst.msk [vmem:[%s5302] ss:$8 sm:$0x3] %vm1437, %v5263
    %5304 = vst.msk [vmem:[%s5302] ss:$8 sm:$0x0] %vm1437, %v5263
    %s5305 = scalar_lea.vmem [#allocation4], 178
    %5306 = vst.msk [vmem:[%s5305] ss:$8 sm:$0x3] %vm1437, %v5277
    %5307 = vst.msk [vmem:[%s5305] ss:$8 sm:$0x0] %vm1437, %v5277
    %s5308 = scalar_lea.vmem [#allocation4], 210
    %5309 = vst.msk [vmem:[%s5308] ss:$8 sm:$0x3] %vm1437, %v5279
    %5310 = vst.msk [vmem:[%s5308] ss:$8 sm:$0x0] %vm1437, %v5279
    %s5311 = scalar_lea.vmem [#allocation4], 242
    %5312 = vst.msk [vmem:[%s5311] ss:$8 sm:$0x3] %vm1437, %v5281
    %5313 = vst.msk [vmem:[%s5311] ss:$8 sm:$0x0] %vm1437, %v5281
    %s5314 = scalar_lea.vmem [#allocation26], 5632
    %v5315 = vld [vmem:[%s5314] sm:$0xff]
    %v5316 = vld [vmem:[%s5314 + $0x8] sm:$0xff]
    %v5317 = vld [vmem:[%s5314 + $0x10] sm:$0xff]
    %v5318 = vld [vmem:[%s5314 + $0x18] sm:$0xff]
    %v5319 = vld [vmem:[%s5314 + $0x20] sm:$0xff]
    %v5320 = vld [vmem:[%s5314 + $0x28] sm:$0xff]
    %v5321 = vld [vmem:[%s5314 + $0x30] sm:$0xff]
    %v5322 = vld [vmem:[%s5314 + $0x38] sm:$0xff]
    %v5323 = vld [vmem:[%s5314 + $0x40] sm:$0xff]
    %v5324 = vld [vmem:[%s5314 + $0x48] sm:$0xff]
    %v5325 = vld [vmem:[%s5314 + $0x50] sm:$0xff]
    %v5326 = vld [vmem:[%s5314 + $0x58] sm:$0xff]
    %v5327 = vld [vmem:[%s5314 + $0x60] sm:$0xff]
    %v5328 = vld [vmem:[%s5314 + $0x68] sm:$0xff]
    %v5329 = vld [vmem:[%s5314 + $0x70] sm:$0xff]
    %v5330 = vld [vmem:[%s5314 + $0x78] sm:$0xff]
    %v5331 = vld [vmem:[%s5314 + $0x80] sm:$0xff]
    %v5332 = vld [vmem:[%s5314 + $0x88] sm:$0xff]
    %v5333 = vld [vmem:[%s5314 + $0x90] sm:$0xff]
    %v5334 = vld [vmem:[%s5314 + $0x98] sm:$0xff]
    %v5335 = vld [vmem:[%s5314 + $0xa0] sm:$0xff]
    %v5336 = vld [vmem:[%s5314 + $0xa8] sm:$0xff]
    %v5337 = vld [vmem:[%s5314 + $0xb0] sm:$0xff]
    %v5338 = vld [vmem:[%s5314 + $0xb8] sm:$0xff]
    %v5339 = vld [vmem:[%s5314 + $0xc0] sm:$0xff]
    %v5340 = vld [vmem:[%s5314 + $0xc8] sm:$0xff]
    %v5341 = vld [vmem:[%s5314 + $0xd0] sm:$0xff]
    %v5342 = vld [vmem:[%s5314 + $0xd8] sm:$0xff]
    %v5343 = vld [vmem:[%s5314 + $0xe0] sm:$0xff]
    %v5344 = vld [vmem:[%s5314 + $0xe8] sm:$0xff]
    %v5345 = vld [vmem:[%s5314 + $0xf0] sm:$0xff]
    %v5346 = vld [vmem:[%s5314 + $0xf8] sm:$0xff]
    %v5347 = vld [vmem:[%s5314 + $0x100] sm:$0xff]
    %v5348 = vld [vmem:[%s5314 + $0x108] sm:$0xff]
    %v5349 = vld [vmem:[%s5314 + $0x110] sm:$0xff]
    %v5350 = vld [vmem:[%s5314 + $0x118] sm:$0xff]
    %v5351 = vld [vmem:[%s5314 + $0x120] sm:$0xff]
    %v5352 = vld [vmem:[%s5314 + $0x128] sm:$0xff]
    %v5353 = vld [vmem:[%s5314 + $0x130] sm:$0xff]
    %v5354 = vld [vmem:[%s5314 + $0x138] sm:$0xff]
    %v5355 = vld [vmem:[%s5314 + $0x140] sm:$0xff]
    %v5356 = vld [vmem:[%s5314 + $0x148] sm:$0xff]
    %v5357 = vld [vmem:[%s5314 + $0x150] sm:$0xff]
    %v5358 = vld [vmem:[%s5314 + $0x158] sm:$0xff]
    %v5359 = vld [vmem:[%s5314 + $0x160] sm:$0xff]
    %v5360 = vld [vmem:[%s5314 + $0x168] sm:$0xff]
    %v5361 = vld [vmem:[%s5314 + $0x170] sm:$0xff]
    %v5362 = vld [vmem:[%s5314 + $0x178] sm:$0xff]
    %v5363 = vld [vmem:[%s5314 + $0x180] sm:$0xff]
    %v5364 = vld [vmem:[%s5314 + $0x188] sm:$0xff]
    %v5365 = vld [vmem:[%s5314 + $0x190] sm:$0xff]
    %v5366 = vld [vmem:[%s5314 + $0x198] sm:$0xff]
    %v5367 = vld [vmem:[%s5314 + $0x1a0] sm:$0xff]
    %v5368 = vld [vmem:[%s5314 + $0x1a8] sm:$0xff]
    %v5369 = vld [vmem:[%s5314 + $0x1b0] sm:$0xff]
    %v5370 = vld [vmem:[%s5314 + $0x1b8] sm:$0xff]
    %v5371 = vld [vmem:[%s5314 + $0x1c0] sm:$0xff]
    %v5372 = vld [vmem:[%s5314 + $0x1c8] sm:$0xff]
    %v5373 = vld [vmem:[%s5314 + $0x1d0] sm:$0xff]
    %v5374 = vld [vmem:[%s5314 + $0x1d8] sm:$0xff]
    %v5375 = vld [vmem:[%s5314 + $0x1e0] sm:$0xff]
    %v5376 = vld [vmem:[%s5314 + $0x1e8] sm:$0xff]
    %v5377 = vld [vmem:[%s5314 + $0x1f0] sm:$0xff]
    %v5378 = vld [vmem:[%s5314 + $0x1f8] sm:$0xff]
    %5379 = vmatprep.subr.mxu0 %v5316
    %5380 = vmatpush1.msra.mxu0 %v5315
    %5381 = vmatprep.subr.mxu0 %v5320
    %5382 = vmatpush1.msra.mxu0 %v5319
    %5383 = vmatprep.subr.mxu0 %v5324
    %5384 = vmatpush1.msra.mxu0 %v5323
    %5385 = vmatprep.subr.mxu0 %v5328
    %5386 = vmatpush1.msra.mxu0 %v5327
    %5387 = vmatprep.subr.mxu0 %v5332
    %5388 = vmatpush1.msra.mxu0 %v5331
    %5389 = vmatprep.subr.mxu0 %v5336
    %5390 = vmatpush1.msra.mxu0 %v5335
    %5391 = vmatprep.subr.mxu0 %v5340
    %5392 = vmatpush1.msra.mxu0 %v5339
    %5393 = vmatprep.subr.mxu0 %v5344
    %5394 = vmatpush1.msra.mxu0 %v5343
    %5395 = vmatprep.subr.mxu0 %v5348
    %5396 = vmatpush1.msra.mxu0 %v5347
    %5397 = vmatprep.subr.mxu0 %v5352
    %5398 = vmatpush1.msra.mxu0 %v5351
    %5399 = vmatprep.subr.mxu0 %v5356
    %5400 = vmatpush1.msra.mxu0 %v5355
    %5401 = vmatprep.subr.mxu0 %v5360
    %5402 = vmatpush1.msra.mxu0 %v5359
    %5403 = vmatprep.subr.mxu0 %v5364
    %5404 = vmatpush1.msra.mxu0 %v5363
    %5405 = vmatprep.subr.mxu0 %v5368
    %5406 = vmatpush1.msra.mxu0 %v5367
    %5407 = vmatprep.subr.mxu0 %v5372
    %5408 = vmatpush1.msra.mxu0 %v5371
    %5409 = vmatprep.subr.mxu0 %v5376
    %5410 = vmatpush1.msra.mxu0 %v5375
    %5411 = vmatprep.subr.mxu0 0.0
    %5412 = vmatpush1.msra.mxu0 0.0
    %5413 = vmatprep.subr.mxu0 0.0
    %5414 = vmatpush1.msra.mxu0 0.0
    %5415 = vmatprep.subr.mxu0 0.0
    %5416 = vmatpush1.msra.mxu0 0.0
    %5417 = vmatprep.subr.mxu0 0.0
    %5418 = vmatpush1.msra.mxu0 0.0
    %5419 = vmatprep.subr.mxu0 0.0
    %5420 = vmatpush1.msra.mxu0 0.0
    %5421 = vmatprep.subr.mxu0 0.0
    %5422 = vmatpush1.msra.mxu0 0.0
    %5423 = vmatprep.subr.mxu0 0.0
    %5424 = vmatpush1.msra.mxu0 0.0
    %5425 = vmatprep.subr.mxu0 0.0
    %5426 = vmatpush1.msra.mxu0 0.0
    %5427 = vmatprep.subr.mxu0 0.0
    %5428 = vmatpush1.msra.mxu0 0.0
    %5429 = vmatprep.subr.mxu0 0.0
    %5430 = vmatpush1.msra.mxu0 0.0
    %5431 = vmatprep.subr.mxu0 0.0
    %5432 = vmatpush1.msra.mxu0 0.0
    %5433 = vmatprep.subr.mxu0 0.0
    %5434 = vmatpush1.msra.mxu0 0.0
    %5435 = vmatprep.subr.mxu0 0.0
    %5436 = vmatpush1.msra.mxu0 0.0
    %5437 = vmatprep.subr.mxu0 0.0
    %5438 = vmatpush1.msra.mxu0 0.0
    %5439 = vmatprep.subr.mxu0 0.0
    %5440 = vmatpush1.msra.mxu0 0.0
    %5441 = vmatprep.subr.mxu0 0.0
    %5442 = vmatpush1.msra.mxu0 0.0
    %5443 = vmatprep.mubr.f32.mxu0 0.0
    %5444 = vmatmul.mubr.f32.gmra.mrb[0].mxu0 %v897
    %v5445 = vpop.f32.mrb[0].mxu0
    %v5446 = vadd.f32 0.0, %v5445
    %v5447 = vpop.f32.mrb[0].mxu0
    %v5448 = vadd.f32 0.0, %v5447
    %5449 = vdwg.mxu0
    %5450 = vmatprep.subr.mxu0 %v5318
    %5451 = vmatpush1.msra.mxu0 %v5317
    %5452 = vmatprep.subr.mxu0 %v5322
    %5453 = vmatpush1.msra.mxu0 %v5321
    %5454 = vmatprep.subr.mxu0 %v5326
    %5455 = vmatpush1.msra.mxu0 %v5325
    %5456 = vmatprep.subr.mxu0 %v5330
    %5457 = vmatpush1.msra.mxu0 %v5329
    %5458 = vmatprep.subr.mxu0 %v5334
    %5459 = vmatpush1.msra.mxu0 %v5333
    %5460 = vmatprep.subr.mxu0 %v5338
    %5461 = vmatpush1.msra.mxu0 %v5337
    %5462 = vmatprep.subr.mxu0 %v5342
    %5463 = vmatpush1.msra.mxu0 %v5341
    %5464 = vmatprep.subr.mxu0 %v5346
    %5465 = vmatpush1.msra.mxu0 %v5345
    %5466 = vmatprep.subr.mxu0 %v5350
    %5467 = vmatpush1.msra.mxu0 %v5349
    %5468 = vmatprep.subr.mxu0 %v5354
    %5469 = vmatpush1.msra.mxu0 %v5353
    %5470 = vmatprep.subr.mxu0 %v5358
    %5471 = vmatpush1.msra.mxu0 %v5357
    %5472 = vmatprep.subr.mxu0 %v5362
    %5473 = vmatpush1.msra.mxu0 %v5361
    %5474 = vmatprep.subr.mxu0 %v5366
    %5475 = vmatpush1.msra.mxu0 %v5365
    %5476 = vmatprep.subr.mxu0 %v5370
    %5477 = vmatpush1.msra.mxu0 %v5369
    %5478 = vmatprep.subr.mxu0 %v5374
    %5479 = vmatpush1.msra.mxu0 %v5373
    %5480 = vmatprep.subr.mxu0 %v5378
    %5481 = vmatpush1.msra.mxu0 %v5377
    %5482 = vmatprep.subr.mxu0 0.0
    %5483 = vmatpush1.msra.mxu0 0.0
    %5484 = vmatprep.subr.mxu0 0.0
    %5485 = vmatpush1.msra.mxu0 0.0
    %5486 = vmatprep.subr.mxu0 0.0
    %5487 = vmatpush1.msra.mxu0 0.0
    %5488 = vmatprep.subr.mxu0 0.0
    %5489 = vmatpush1.msra.mxu0 0.0
    %5490 = vmatprep.subr.mxu0 0.0
    %5491 = vmatpush1.msra.mxu0 0.0
    %5492 = vmatprep.subr.mxu0 0.0
    %5493 = vmatpush1.msra.mxu0 0.0
    %5494 = vmatprep.subr.mxu0 0.0
    %5495 = vmatpush1.msra.mxu0 0.0
    %5496 = vmatprep.subr.mxu0 0.0
    %5497 = vmatpush1.msra.mxu0 0.0
    %5498 = vmatprep.subr.mxu0 0.0
    %5499 = vmatpush1.msra.mxu0 0.0
    %5500 = vmatprep.subr.mxu0 0.0
    %5501 = vmatpush1.msra.mxu0 0.0
    %5502 = vmatprep.subr.mxu0 0.0
    %5503 = vmatpush1.msra.mxu0 0.0
    %5504 = vmatprep.subr.mxu0 0.0
    %5505 = vmatpush1.msra.mxu0 0.0
    %5506 = vmatprep.subr.mxu0 0.0
    %5507 = vmatpush1.msra.mxu0 0.0
    %5508 = vmatprep.subr.mxu0 0.0
    %5509 = vmatpush1.msra.mxu0 0.0
    %5510 = vmatprep.subr.mxu0 0.0
    %5511 = vmatpush1.msra.mxu0 0.0
    %5512 = vmatprep.subr.mxu0 0.0
    %5513 = vmatpush1.msra.mxu0 0.0
    %5514 = vmatprep.mubr.f32.mxu0 0.0
    %5515 = vmatmul.mubr.f32.gmra.mrb[0].mxu0 %v897
    %v5516 = vpop.f32.mrb[0].mxu0
    %v5517 = vadd.f32 0.0, %v5516
    %v5518 = vpop.f32.mrb[0].mxu0
    %v5519 = vadd.f32 0.0, %v5518
    %5520 = vdwg.mxu0
    %v5521 = vmul.f32 %v5446, %v900
    %v5522 = vmul.f32 %v5448, %v901
    %v5525 = vcombine.low %v5521, %v5522
    %v5526 = vcombine.high %v5521, %v5522
    %v5528 = vunpack.c.l.s4 1966171168
    %v5529 = vunpack.c.0.s8 %v5528
    %v5530 = vlaneseq
    %v5531 = vshrl.u32 %v5530, 7
    %v5532 = vsub.s32 %v5529, %v5531
    %v5533 = vrot.slane %v5525, %v5532
    %v5535 = vunpack.c.l.s4 1966171168
    %v5536 = vunpack.c.0.s8 %v5535
    %v5537 = vlaneseq
    %v5538 = vshrl.u32 %v5537, 7
    %v5539 = vsub.s32 %v5536, %v5538
    %v5540 = vrot.slane %v5526, %v5539
    %v5541 = vcombine.high %v5533, %v5533
    %v5542 = vcombine.high %v5540, %v5540
    %v5544 = vunpack.c.l.s4 1966171168
    %v5545 = vunpack.c.0.s8 %v5544
    %v5546 = vlaneseq
    %v5547 = vshrl.u32 %v5546, 7
    %v5548 = vsub.s32 %v5545, %v5547
    %v5549 = vrot.slane %v5533, %v5548
    %v5551 = vunpack.c.l.s4 1966171168
    %v5552 = vunpack.c.0.s8 %v5551
    %v5553 = vlaneseq
    %v5554 = vshrl.u32 %v5553, 7
    %v5555 = vsub.s32 %v5552, %v5554
    %v5556 = vrot.slane %v5540, %v5555
    %v5558 = vunpack.c.l.s4 1966171168
    %v5559 = vunpack.c.0.s8 %v5558
    %v5560 = vlaneseq
    %v5561 = vshrl.u32 %v5560, 7
    %v5562 = vsub.s32 %v5559, %v5561
    %v5563 = vrot.slane %v5541, %v5562
    %v5565 = vunpack.c.l.s4 1966171168
    %v5566 = vunpack.c.0.s8 %v5565
    %v5567 = vlaneseq
    %v5568 = vshrl.u32 %v5567, 7
    %v5569 = vsub.s32 %v5566, %v5568
    %v5570 = vrot.slane %v5542, %v5569
    %v5571 = vcombine.high %v5549, %v5549
    %v5572 = vcombine.high %v5556, %v5556
    %v5573 = vcombine.high %v5563, %v5563
    %v5574 = vcombine.high %v5570, %v5570
    %s5583 = scalar_lea.vmem [#allocation3], 19
    %5584 = vst.msk [vmem:[%s5583] ss:$8 sm:$0x3] %vm1437, %v5549
    %5585 = vst.msk [vmem:[%s5583] ss:$8 sm:$0x0] %vm1437, %v5549
    %s5586 = scalar_lea.vmem [#allocation3], 51
    %5587 = vst.msk [vmem:[%s5586] ss:$8 sm:$0x3] %vm1437, %v5563
    %5588 = vst.msk [vmem:[%s5586] ss:$8 sm:$0x0] %vm1437, %v5563
    %s5589 = scalar_lea.vmem [#allocation3], 83
    %5590 = vst.msk [vmem:[%s5589] ss:$8 sm:$0x3] %vm1437, %v5571
    %5591 = vst.msk [vmem:[%s5589] ss:$8 sm:$0x0] %vm1437, %v5571
    %s5592 = scalar_lea.vmem [#allocation3], 115
    %5593 = vst.msk [vmem:[%s5592] ss:$8 sm:$0x3] %vm1437, %v5573
    %5594 = vst.msk [vmem:[%s5592] ss:$8 sm:$0x0] %vm1437, %v5573
    %s5595 = scalar_lea.vmem [#allocation3], 147
    %5596 = vst.msk [vmem:[%s5595] ss:$8 sm:$0x3] %vm1437, %v5556
    %5597 = vst.msk [vmem:[%s5595] ss:$8 sm:$0x0] %vm1437, %v5556
    %s5598 = scalar_lea.vmem [#allocation3], 179
    %5599 = vst.msk [vmem:[%s5598] ss:$8 sm:$0x3] %vm1437, %v5570
    %5600 = vst.msk [vmem:[%s5598] ss:$8 sm:$0x0] %vm1437, %v5570
    %s5601 = scalar_lea.vmem [#allocation3], 211
    %5602 = vst.msk [vmem:[%s5601] ss:$8 sm:$0x3] %vm1437, %v5572
    %5603 = vst.msk [vmem:[%s5601] ss:$8 sm:$0x0] %vm1437, %v5572
    %s5604 = scalar_lea.vmem [#allocation3], 243
    %5605 = vst.msk [vmem:[%s5604] ss:$8 sm:$0x3] %vm1437, %v5574
    %5606 = vst.msk [vmem:[%s5604] ss:$8 sm:$0x0] %vm1437, %v5574
    %v5609 = vcombine.low %v5517, %v5519
    %v5610 = vcombine.high %v5517, %v5519
    %v5612 = vunpack.c.l.s4 1966171168
    %v5613 = vunpack.c.0.s8 %v5612
    %v5614 = vlaneseq
    %v5615 = vshrl.u32 %v5614, 7
    %v5616 = vsub.s32 %v5613, %v5615
    %v5617 = vrot.slane %v5609, %v5616
    %v5619 = vunpack.c.l.s4 1966171168
    %v5620 = vunpack.c.0.s8 %v5619
    %v5621 = vlaneseq
    %v5622 = vshrl.u32 %v5621, 7
    %v5623 = vsub.s32 %v5620, %v5622
    %v5624 = vrot.slane %v5610, %v5623
    %v5625 = vcombine.high %v5617, %v5617
    %v5626 = vcombine.high %v5624, %v5624
    %v5628 = vunpack.c.l.s4 1966171168
    %v5629 = vunpack.c.0.s8 %v5628
    %v5630 = vlaneseq
    %v5631 = vshrl.u32 %v5630, 7
    %v5632 = vsub.s32 %v5629, %v5631
    %v5633 = vrot.slane %v5617, %v5632
    %v5635 = vunpack.c.l.s4 1966171168
    %v5636 = vunpack.c.0.s8 %v5635
    %v5637 = vlaneseq
    %v5638 = vshrl.u32 %v5637, 7
    %v5639 = vsub.s32 %v5636, %v5638
    %v5640 = vrot.slane %v5624, %v5639
    %v5642 = vunpack.c.l.s4 1966171168
    %v5643 = vunpack.c.0.s8 %v5642
    %v5644 = vlaneseq
    %v5645 = vshrl.u32 %v5644, 7
    %v5646 = vsub.s32 %v5643, %v5645
    %v5647 = vrot.slane %v5625, %v5646
    %v5649 = vunpack.c.l.s4 1966171168
    %v5650 = vunpack.c.0.s8 %v5649
    %v5651 = vlaneseq
    %v5652 = vshrl.u32 %v5651, 7
    %v5653 = vsub.s32 %v5650, %v5652
    %v5654 = vrot.slane %v5626, %v5653
    %v5655 = vcombine.high %v5633, %v5633
    %v5656 = vcombine.high %v5640, %v5640
    %v5657 = vcombine.high %v5647, %v5647
    %v5658 = vcombine.high %v5654, %v5654
    %s5667 = scalar_lea.vmem [#allocation4], 19
    %5668 = vst.msk [vmem:[%s5667] ss:$8 sm:$0x3] %vm1437, %v5633
    %5669 = vst.msk [vmem:[%s5667] ss:$8 sm:$0x0] %vm1437, %v5633
    %s5670 = scalar_lea.vmem [#allocation4], 51
    %5671 = vst.msk [vmem:[%s5670] ss:$8 sm:$0x3] %vm1437, %v5647
    %5672 = vst.msk [vmem:[%s5670] ss:$8 sm:$0x0] %vm1437, %v5647
    %s5673 = scalar_lea.vmem [#allocation4], 83
    %5674 = vst.msk [vmem:[%s5673] ss:$8 sm:$0x3] %vm1437, %v5655
    %5675 = vst.msk [vmem:[%s5673] ss:$8 sm:$0x0] %vm1437, %v5655
    %s5676 = scalar_lea.vmem [#allocation4], 115
    %5677 = vst.msk [vmem:[%s5676] ss:$8 sm:$0x3] %vm1437, %v5657
    %5678 = vst.msk [vmem:[%s5676] ss:$8 sm:$0x0] %vm1437, %v5657
    %s5679 = scalar_lea.vmem [#allocation4], 147
    %5680 = vst.msk [vmem:[%s5679] ss:$8 sm:$0x3] %vm1437, %v5640
    %5681 = vst.msk [vmem:[%s5679] ss:$8 sm:$0x0] %vm1437, %v5640
    %s5682 = scalar_lea.vmem [#allocation4], 179
    %5683 = vst.msk [vmem:[%s5682] ss:$8 sm:$0x3] %vm1437, %v5654
    %5684 = vst.msk [vmem:[%s5682] ss:$8 sm:$0x0] %vm1437, %v5654
    %s5685 = scalar_lea.vmem [#allocation4], 211
    %5686 = vst.msk [vmem:[%s5685] ss:$8 sm:$0x3] %vm1437, %v5656
    %5687 = vst.msk [vmem:[%s5685] ss:$8 sm:$0x0] %vm1437, %v5656
    %s5688 = scalar_lea.vmem [#allocation4], 243
    %5689 = vst.msk [vmem:[%s5688] ss:$8 sm:$0x3] %vm1437, %v5658
    %5690 = vst.msk [vmem:[%s5688] ss:$8 sm:$0x0] %vm1437, %v5658
    %s5691 = scalar_lea.vmem [#allocation26], 6144
    %v5692 = vld [vmem:[%s5691] sm:$0xff]
    %v5693 = vld [vmem:[%s5691 + $0x8] sm:$0xff]
    %v5694 = vld [vmem:[%s5691 + $0x10] sm:$0xff]
    %v5695 = vld [vmem:[%s5691 + $0x18] sm:$0xff]
    %v5696 = vld [vmem:[%s5691 + $0x20] sm:$0xff]
    %v5697 = vld [vmem:[%s5691 + $0x28] sm:$0xff]
    %v5698 = vld [vmem:[%s5691 + $0x30] sm:$0xff]
    %v5699 = vld [vmem:[%s5691 + $0x38] sm:$0xff]
    %v5700 = vld [vmem:[%s5691 + $0x40] sm:$0xff]
    %v5701 = vld [vmem:[%s5691 + $0x48] sm:$0xff]
    %v5702 = vld [vmem:[%s5691 + $0x50] sm:$0xff]
    %v5703 = vld [vmem:[%s5691 + $0x58] sm:$0xff]
    %v5704 = vld [vmem:[%s5691 + $0x60] sm:$0xff]
    %v5705 = vld [vmem:[%s5691 + $0x68] sm:$0xff]
    %v5706 = vld [vmem:[%s5691 + $0x70] sm:$0xff]
    %v5707 = vld [vmem:[%s5691 + $0x78] sm:$0xff]
    %v5708 = vld [vmem:[%s5691 + $0x80] sm:$0xff]
    %v5709 = vld [vmem:[%s5691 + $0x88] sm:$0xff]
    %v5710 = vld [vmem:[%s5691 + $0x90] sm:$0xff]
    %v5711 = vld [vmem:[%s5691 + $0x98] sm:$0xff]
    %v5712 = vld [vmem:[%s5691 + $0xa0] sm:$0xff]
    %v5713 = vld [vmem:[%s5691 + $0xa8] sm:$0xff]
    %v5714 = vld [vmem:[%s5691 + $0xb0] sm:$0xff]
    %v5715 = vld [vmem:[%s5691 + $0xb8] sm:$0xff]
    %v5716 = vld [vmem:[%s5691 + $0xc0] sm:$0xff]
    %v5717 = vld [vmem:[%s5691 + $0xc8] sm:$0xff]
    %v5718 = vld [vmem:[%s5691 + $0xd0] sm:$0xff]
    %v5719 = vld [vmem:[%s5691 + $0xd8] sm:$0xff]
    %v5720 = vld [vmem:[%s5691 + $0xe0] sm:$0xff]
    %v5721 = vld [vmem:[%s5691 + $0xe8] sm:$0xff]
    %v5722 = vld [vmem:[%s5691 + $0xf0] sm:$0xff]
    %v5723 = vld [vmem:[%s5691 + $0xf8] sm:$0xff]
    %v5724 = vld [vmem:[%s5691 + $0x100] sm:$0xff]
    %v5725 = vld [vmem:[%s5691 + $0x108] sm:$0xff]
    %v5726 = vld [vmem:[%s5691 + $0x110] sm:$0xff]
    %v5727 = vld [vmem:[%s5691 + $0x118] sm:$0xff]
    %v5728 = vld [vmem:[%s5691 + $0x120] sm:$0xff]
    %v5729 = vld [vmem:[%s5691 + $0x128] sm:$0xff]
    %v5730 = vld [vmem:[%s5691 + $0x130] sm:$0xff]
    %v5731 = vld [vmem:[%s5691 + $0x138] sm:$0xff]
    %v5732 = vld [vmem:[%s5691 + $0x140] sm:$0xff]
    %v5733 = vld [vmem:[%s5691 + $0x148] sm:$0xff]
    %v5734 = vld [vmem:[%s5691 + $0x150] sm:$0xff]
    %v5735 = vld [vmem:[%s5691 + $0x158] sm:$0xff]
    %v5736 = vld [vmem:[%s5691 + $0x160] sm:$0xff]
    %v5737 = vld [vmem:[%s5691 + $0x168] sm:$0xff]
    %v5738 = vld [vmem:[%s5691 + $0x170] sm:$0xff]
    %v5739 = vld [vmem:[%s5691 + $0x178] sm:$0xff]
    %v5740 = vld [vmem:[%s5691 + $0x180] sm:$0xff]
    %v5741 = vld [vmem:[%s5691 + $0x188] sm:$0xff]
    %v5742 = vld [vmem:[%s5691 + $0x190] sm:$0xff]
    %v5743 = vld [vmem:[%s5691 + $0x198] sm:$0xff]
    %v5744 = vld [vmem:[%s5691 + $0x1a0] sm:$0xff]
    %v5745 = vld [vmem:[%s5691 + $0x1a8] sm:$0xff]
    %v5746 = vld [vmem:[%s5691 + $0x1b0] sm:$0xff]
    %v5747 = vld [vmem:[%s5691 + $0x1b8] sm:$0xff]
    %v5748 = vld [vmem:[%s5691 + $0x1c0] sm:$0xff]
    %v5749 = vld [vmem:[%s5691 + $0x1c8] sm:$0xff]
    %v5750 = vld [vmem:[%s5691 + $0x1d0] sm:$0xff]
    %v5751 = vld [vmem:[%s5691 + $0x1d8] sm:$0xff]
    %v5752 = vld [vmem:[%s5691 + $0x1e0] sm:$0xff]
    %v5753 = vld [vmem:[%s5691 + $0x1e8] sm:$0xff]
    %v5754 = vld [vmem:[%s5691 + $0x1f0] sm:$0xff]
    %v5755 = vld [vmem:[%s5691 + $0x1f8] sm:$0xff]
    %5756 = vmatprep.subr.mxu0 %v5693
    %5757 = vmatpush1.msra.mxu0 %v5692
    %5758 = vmatprep.subr.mxu0 %v5697
    %5759 = vmatpush1.msra.mxu0 %v5696
    %5760 = vmatprep.subr.mxu0 %v5701
    %5761 = vmatpush1.msra.mxu0 %v5700
    %5762 = vmatprep.subr.mxu0 %v5705
    %5763 = vmatpush1.msra.mxu0 %v5704
    %5764 = vmatprep.subr.mxu0 %v5709
    %5765 = vmatpush1.msra.mxu0 %v5708
    %5766 = vmatprep.subr.mxu0 %v5713
    %5767 = vmatpush1.msra.mxu0 %v5712
    %5768 = vmatprep.subr.mxu0 %v5717
    %5769 = vmatpush1.msra.mxu0 %v5716
    %5770 = vmatprep.subr.mxu0 %v5721
    %5771 = vmatpush1.msra.mxu0 %v5720
    %5772 = vmatprep.subr.mxu0 %v5725
    %5773 = vmatpush1.msra.mxu0 %v5724
    %5774 = vmatprep.subr.mxu0 %v5729
    %5775 = vmatpush1.msra.mxu0 %v5728
    %5776 = vmatprep.subr.mxu0 %v5733
    %5777 = vmatpush1.msra.mxu0 %v5732
    %5778 = vmatprep.subr.mxu0 %v5737
    %5779 = vmatpush1.msra.mxu0 %v5736
    %5780 = vmatprep.subr.mxu0 %v5741
    %5781 = vmatpush1.msra.mxu0 %v5740
    %5782 = vmatprep.subr.mxu0 %v5745
    %5783 = vmatpush1.msra.mxu0 %v5744
    %5784 = vmatprep.subr.mxu0 %v5749
    %5785 = vmatpush1.msra.mxu0 %v5748
    %5786 = vmatprep.subr.mxu0 %v5753
    %5787 = vmatpush1.msra.mxu0 %v5752
    %5788 = vmatprep.subr.mxu0 0.0
    %5789 = vmatpush1.msra.mxu0 0.0
    %5790 = vmatprep.subr.mxu0 0.0
    %5791 = vmatpush1.msra.mxu0 0.0
    %5792 = vmatprep.subr.mxu0 0.0
    %5793 = vmatpush1.msra.mxu0 0.0
    %5794 = vmatprep.subr.mxu0 0.0
    %5795 = vmatpush1.msra.mxu0 0.0
    %5796 = vmatprep.subr.mxu0 0.0
    %5797 = vmatpush1.msra.mxu0 0.0
    %5798 = vmatprep.subr.mxu0 0.0
    %5799 = vmatpush1.msra.mxu0 0.0
    %5800 = vmatprep.subr.mxu0 0.0
    %5801 = vmatpush1.msra.mxu0 0.0
    %5802 = vmatprep.subr.mxu0 0.0
    %5803 = vmatpush1.msra.mxu0 0.0
    %5804 = vmatprep.subr.mxu0 0.0
    %5805 = vmatpush1.msra.mxu0 0.0
    %5806 = vmatprep.subr.mxu0 0.0
    %5807 = vmatpush1.msra.mxu0 0.0
    %5808 = vmatprep.subr.mxu0 0.0
    %5809 = vmatpush1.msra.mxu0 0.0
    %5810 = vmatprep.subr.mxu0 0.0
    %5811 = vmatpush1.msra.mxu0 0.0
    %5812 = vmatprep.subr.mxu0 0.0
    %5813 = vmatpush1.msra.mxu0 0.0
    %5814 = vmatprep.subr.mxu0 0.0
    %5815 = vmatpush1.msra.mxu0 0.0
    %5816 = vmatprep.subr.mxu0 0.0
    %5817 = vmatpush1.msra.mxu0 0.0
    %5818 = vmatprep.subr.mxu0 0.0
    %5819 = vmatpush1.msra.mxu0 0.0
    %5820 = vmatprep.mubr.f32.mxu0 0.0
    %5821 = vmatmul.mubr.f32.gmra.mrb[0].mxu0 %v897
    %v5822 = vpop.f32.mrb[0].mxu0
    %v5823 = vadd.f32 0.0, %v5822
    %v5824 = vpop.f32.mrb[0].mxu0
    %v5825 = vadd.f32 0.0, %v5824
    %5826 = vdwg.mxu0
    %5827 = vmatprep.subr.mxu0 %v5695
    %5828 = vmatpush1.msra.mxu0 %v5694
    %5829 = vmatprep.subr.mxu0 %v5699
    %5830 = vmatpush1.msra.mxu0 %v5698
    %5831 = vmatprep.subr.mxu0 %v5703
    %5832 = vmatpush1.msra.mxu0 %v5702
    %5833 = vmatprep.subr.mxu0 %v5707
    %5834 = vmatpush1.msra.mxu0 %v5706
    %5835 = vmatprep.subr.mxu0 %v5711
    %5836 = vmatpush1.msra.mxu0 %v5710
    %5837 = vmatprep.subr.mxu0 %v5715
    %5838 = vmatpush1.msra.mxu0 %v5714
    %5839 = vmatprep.subr.mxu0 %v5719
    %5840 = vmatpush1.msra.mxu0 %v5718
    %5841 = vmatprep.subr.mxu0 %v5723
    %5842 = vmatpush1.msra.mxu0 %v5722
    %5843 = vmatprep.subr.mxu0 %v5727
    %5844 = vmatpush1.msra.mxu0 %v5726
    %5845 = vmatprep.subr.mxu0 %v5731
    %5846 = vmatpush1.msra.mxu0 %v5730
    %5847 = vmatprep.subr.mxu0 %v5735
    %5848 = vmatpush1.msra.mxu0 %v5734
    %5849 = vmatprep.subr.mxu0 %v5739
    %5850 = vmatpush1.msra.mxu0 %v5738
    %5851 = vmatprep.subr.mxu0 %v5743
    %5852 = vmatpush1.msra.mxu0 %v5742
    %5853 = vmatprep.subr.mxu0 %v5747
    %5854 = vmatpush1.msra.mxu0 %v5746
    %5855 = vmatprep.subr.mxu0 %v5751
    %5856 = vmatpush1.msra.mxu0 %v5750
    %5857 = vmatprep.subr.mxu0 %v5755
    %5858 = vmatpush1.msra.mxu0 %v5754
    %5859 = vmatprep.subr.mxu0 0.0
    %5860 = vmatpush1.msra.mxu0 0.0
    %5861 = vmatprep.subr.mxu0 0.0
    %5862 = vmatpush1.msra.mxu0 0.0
    %5863 = vmatprep.subr.mxu0 0.0
    %5864 = vmatpush1.msra.mxu0 0.0
    %5865 = vmatprep.subr.mxu0 0.0
    %5866 = vmatpush1.msra.mxu0 0.0
    %5867 = vmatprep.subr.mxu0 0.0
    %5868 = vmatpush1.msra.mxu0 0.0
    %5869 = vmatprep.subr.mxu0 0.0
    %5870 = vmatpush1.msra.mxu0 0.0
    %5871 = vmatprep.subr.mxu0 0.0
    %5872 = vmatpush1.msra.mxu0 0.0
    %5873 = vmatprep.subr.mxu0 0.0
    %5874 = vmatpush1.msra.mxu0 0.0
    %5875 = vmatprep.subr.mxu0 0.0
    %5876 = vmatpush1.msra.mxu0 0.0
    %5877 = vmatprep.subr.mxu0 0.0
    %5878 = vmatpush1.msra.mxu0 0.0
    %5879 = vmatprep.subr.mxu0 0.0
    %5880 = vmatpush1.msra.mxu0 0.0
    %5881 = vmatprep.subr.mxu0 0.0
    %5882 = vmatpush1.msra.mxu0 0.0
    %5883 = vmatprep.subr.mxu0 0.0
    %5884 = vmatpush1.msra.mxu0 0.0
    %5885 = vmatprep.subr.mxu0 0.0
    %5886 = vmatpush1.msra.mxu0 0.0
    %5887 = vmatprep.subr.mxu0 0.0
    %5888 = vmatpush1.msra.mxu0 0.0
    %5889 = vmatprep.subr.mxu0 0.0
    %5890 = vmatpush1.msra.mxu0 0.0
    %5891 = vmatprep.mubr.f32.mxu0 0.0
    %5892 = vmatmul.mubr.f32.gmra.mrb[0].mxu0 %v897
    %v5893 = vpop.f32.mrb[0].mxu0
    %v5894 = vadd.f32 0.0, %v5893
    %v5895 = vpop.f32.mrb[0].mxu0
    %v5896 = vadd.f32 0.0, %v5895
    %5897 = vdwg.mxu0
    %v5898 = vmul.f32 %v5823, %v900
    %v5899 = vmul.f32 %v5825, %v901
    %v5902 = vcombine.low %v5898, %v5899
    %v5903 = vcombine.high %v5898, %v5899
    %v5905 = vunpack.c.l.s4 1966171168
    %v5906 = vunpack.c.0.s8 %v5905
    %v5907 = vlaneseq
    %v5908 = vshrl.u32 %v5907, 7
    %v5909 = vsub.s32 %v5906, %v5908
    %v5910 = vrot.slane %v5902, %v5909
    %v5912 = vunpack.c.l.s4 1966171168
    %v5913 = vunpack.c.0.s8 %v5912
    %v5914 = vlaneseq
    %v5915 = vshrl.u32 %v5914, 7
    %v5916 = vsub.s32 %v5913, %v5915
    %v5917 = vrot.slane %v5903, %v5916
    %v5918 = vcombine.high %v5910, %v5910
    %v5919 = vcombine.high %v5917, %v5917
    %v5921 = vunpack.c.l.s4 1966171168
    %v5922 = vunpack.c.0.s8 %v5921
    %v5923 = vlaneseq
    %v5924 = vshrl.u32 %v5923, 7
    %v5925 = vsub.s32 %v5922, %v5924
    %v5926 = vrot.slane %v5910, %v5925
    %v5928 = vunpack.c.l.s4 1966171168
    %v5929 = vunpack.c.0.s8 %v5928
    %v5930 = vlaneseq
    %v5931 = vshrl.u32 %v5930, 7
    %v5932 = vsub.s32 %v5929, %v5931
    %v5933 = vrot.slane %v5917, %v5932
    %v5935 = vunpack.c.l.s4 1966171168
    %v5936 = vunpack.c.0.s8 %v5935
    %v5937 = vlaneseq
    %v5938 = vshrl.u32 %v5937, 7
    %v5939 = vsub.s32 %v5936, %v5938
    %v5940 = vrot.slane %v5918, %v5939
    %v5942 = vunpack.c.l.s4 1966171168
    %v5943 = vunpack.c.0.s8 %v5942
    %v5944 = vlaneseq
    %v5945 = vshrl.u32 %v5944, 7
    %v5946 = vsub.s32 %v5943, %v5945
    %v5947 = vrot.slane %v5919, %v5946
    %v5948 = vcombine.high %v5926, %v5926
    %v5949 = vcombine.high %v5933, %v5933
    %v5950 = vcombine.high %v5940, %v5940
    %v5951 = vcombine.high %v5947, %v5947
    %s5960 = scalar_lea.vmem [#allocation3], 20
    %5961 = vst.msk [vmem:[%s5960] ss:$8 sm:$0x3] %vm1437, %v5926
    %5962 = vst.msk [vmem:[%s5960] ss:$8 sm:$0x0] %vm1437, %v5926
    %s5963 = scalar_lea.vmem [#allocation3], 52
    %5964 = vst.msk [vmem:[%s5963] ss:$8 sm:$0x3] %vm1437, %v5940
    %5965 = vst.msk [vmem:[%s5963] ss:$8 sm:$0x0] %vm1437, %v5940
    %s5966 = scalar_lea.vmem [#allocation3], 84
    %5967 = vst.msk [vmem:[%s5966] ss:$8 sm:$0x3] %vm1437, %v5948
    %5968 = vst.msk [vmem:[%s5966] ss:$8 sm:$0x0] %vm1437, %v5948
    %s5969 = scalar_lea.vmem [#allocation3], 116
    %5970 = vst.msk [vmem:[%s5969] ss:$8 sm:$0x3] %vm1437, %v5950
    %5971 = vst.msk [vmem:[%s5969] ss:$8 sm:$0x0] %vm1437, %v5950
    %s5972 = scalar_lea.vmem [#allocation3], 148
    %5973 = vst.msk [vmem:[%s5972] ss:$8 sm:$0x3] %vm1437, %v5933
    %5974 = vst.msk [vmem:[%s5972] ss:$8 sm:$0x0] %vm1437, %v5933
    %s5975 = scalar_lea.vmem [#allocation3], 180
    %5976 = vst.msk [vmem:[%s5975] ss:$8 sm:$0x3] %vm1437, %v5947
    %5977 = vst.msk [vmem:[%s5975] ss:$8 sm:$0x0] %vm1437, %v5947
    %s5978 = scalar_lea.vmem [#allocation3], 212
    %5979 = vst.msk [vmem:[%s5978] ss:$8 sm:$0x3] %vm1437, %v5949
    %5980 = vst.msk [vmem:[%s5978] ss:$8 sm:$0x0] %vm1437, %v5949
    %s5981 = scalar_lea.vmem [#allocation3], 244
    %5982 = vst.msk [vmem:[%s5981] ss:$8 sm:$0x3] %vm1437, %v5951
    %5983 = vst.msk [vmem:[%s5981] ss:$8 sm:$0x0] %vm1437, %v5951
    %v5986 = vcombine.low %v5894, %v5896
    %v5987 = vcombine.high %v5894, %v5896
    %v5989 = vunpack.c.l.s4 1966171168
    %v5990 = vunpack.c.0.s8 %v5989
    %v5991 = vlaneseq
    %v5992 = vshrl.u32 %v5991, 7
    %v5993 = vsub.s32 %v5990, %v5992
    %v5994 = vrot.slane %v5986, %v5993
    %v5996 = vunpack.c.l.s4 1966171168
    %v5997 = vunpack.c.0.s8 %v5996
    %v5998 = vlaneseq
    %v5999 = vshrl.u32 %v5998, 7
    %v6000 = vsub.s32 %v5997, %v5999
    %v6001 = vrot.slane %v5987, %v6000
    %v6002 = vcombine.high %v5994, %v5994
    %v6003 = vcombine.high %v6001, %v6001
    %v6005 = vunpack.c.l.s4 1966171168
    %v6006 = vunpack.c.0.s8 %v6005
    %v6007 = vlaneseq
    %v6008 = vshrl.u32 %v6007, 7
    %v6009 = vsub.s32 %v6006, %v6008
    %v6010 = vrot.slane %v5994, %v6009
    %v6012 = vunpack.c.l.s4 1966171168
    %v6013 = vunpack.c.0.s8 %v6012
    %v6014 = vlaneseq
    %v6015 = vshrl.u32 %v6014, 7
    %v6016 = vsub.s32 %v6013, %v6015
    %v6017 = vrot.slane %v6001, %v6016
    %v6019 = vunpack.c.l.s4 1966171168
    %v6020 = vunpack.c.0.s8 %v6019
    %v6021 = vlaneseq
    %v6022 = vshrl.u32 %v6021, 7
    %v6023 = vsub.s32 %v6020, %v6022
    %v6024 = vrot.slane %v6002, %v6023
    %v6026 = vunpack.c.l.s4 1966171168
    %v6027 = vunpack.c.0.s8 %v6026
    %v6028 = vlaneseq
    %v6029 = vshrl.u32 %v6028, 7
    %v6030 = vsub.s32 %v6027, %v6029
    %v6031 = vrot.slane %v6003, %v6030
    %v6032 = vcombine.high %v6010, %v6010
    %v6033 = vcombine.high %v6017, %v6017
    %v6034 = vcombine.high %v6024, %v6024
    %v6035 = vcombine.high %v6031, %v6031
    %s6044 = scalar_lea.vmem [#allocation4], 20
    %6045 = vst.msk [vmem:[%s6044] ss:$8 sm:$0x3] %vm1437, %v6010
    %6046 = vst.msk [vmem:[%s6044] ss:$8 sm:$0x0] %vm1437, %v6010
    %s6047 = scalar_lea.vmem [#allocation4], 52
    %6048 = vst.msk [vmem:[%s6047] ss:$8 sm:$0x3] %vm1437, %v6024
    %6049 = vst.msk [vmem:[%s6047] ss:$8 sm:$0x0] %vm1437, %v6024
    %s6050 = scalar_lea.vmem [#allocation4], 84
    %6051 = vst.msk [vmem:[%s6050] ss:$8 sm:$0x3] %vm1437, %v6032
    %6052 = vst.msk [vmem:[%s6050] ss:$8 sm:$0x0] %vm1437, %v6032
    %s6053 = scalar_lea.vmem [#allocation4], 116
    %6054 = vst.msk [vmem:[%s6053] ss:$8 sm:$0x3] %vm1437, %v6034
    %6055 = vst.msk [vmem:[%s6053] ss:$8 sm:$0x0] %vm1437, %v6034
    %s6056 = scalar_lea.vmem [#allocation4], 148
    %6057 = vst.msk [vmem:[%s6056] ss:$8 sm:$0x3] %vm1437, %v6017
    %6058 = vst.msk [vmem:[%s6056] ss:$8 sm:$0x0] %vm1437, %v6017
    %s6059 = scalar_lea.vmem [#allocation4], 180
    %6060 = vst.msk [vmem:[%s6059] ss:$8 sm:$0x3] %vm1437, %v6031
    %6061 = vst.msk [vmem:[%s6059] ss:$8 sm:$0x0] %vm1437, %v6031
    %s6062 = scalar_lea.vmem [#allocation4], 212
    %6063 = vst.msk [vmem:[%s6062] ss:$8 sm:$0x3] %vm1437, %v6033
    %6064 = vst.msk [vmem:[%s6062] ss:$8 sm:$0x0] %vm1437, %v6033
    %s6065 = scalar_lea.vmem [#allocation4], 244
    %6066 = vst.msk [vmem:[%s6065] ss:$8 sm:$0x3] %vm1437, %v6035
    %6067 = vst.msk [vmem:[%s6065] ss:$8 sm:$0x0] %vm1437, %v6035
    %s6068 = scalar_lea.vmem [#allocation26], 6656
    %v6069 = vld [vmem:[%s6068] sm:$0xff]
    %v6070 = vld [vmem:[%s6068 + $0x8] sm:$0xff]
    %v6071 = vld [vmem:[%s6068 + $0x10] sm:$0xff]
    %v6072 = vld [vmem:[%s6068 + $0x18] sm:$0xff]
    %v6073 = vld [vmem:[%s6068 + $0x20] sm:$0xff]
    %v6074 = vld [vmem:[%s6068 + $0x28] sm:$0xff]
    %v6075 = vld [vmem:[%s6068 + $0x30] sm:$0xff]
    %v6076 = vld [vmem:[%s6068 + $0x38] sm:$0xff]
    %v6077 = vld [vmem:[%s6068 + $0x40] sm:$0xff]
    %v6078 = vld [vmem:[%s6068 + $0x48] sm:$0xff]
    %v6079 = vld [vmem:[%s6068 + $0x50] sm:$0xff]
    %v6080 = vld [vmem:[%s6068 + $0x58] sm:$0xff]
    %v6081 = vld [vmem:[%s6068 + $0x60] sm:$0xff]
    %v6082 = vld [vmem:[%s6068 + $0x68] sm:$0xff]
    %v6083 = vld [vmem:[%s6068 + $0x70] sm:$0xff]
    %v6084 = vld [vmem:[%s6068 + $0x78] sm:$0xff]
    %v6085 = vld [vmem:[%s6068 + $0x80] sm:$0xff]
    %v6086 = vld [vmem:[%s6068 + $0x88] sm:$0xff]
    %v6087 = vld [vmem:[%s6068 + $0x90] sm:$0xff]
    %v6088 = vld [vmem:[%s6068 + $0x98] sm:$0xff]
    %v6089 = vld [vmem:[%s6068 + $0xa0] sm:$0xff]
    %v6090 = vld [vmem:[%s6068 + $0xa8] sm:$0xff]
    %v6091 = vld [vmem:[%s6068 + $0xb0] sm:$0xff]
    %v6092 = vld [vmem:[%s6068 + $0xb8] sm:$0xff]
    %v6093 = vld [vmem:[%s6068 + $0xc0] sm:$0xff]
    %v6094 = vld [vmem:[%s6068 + $0xc8] sm:$0xff]
    %v6095 = vld [vmem:[%s6068 + $0xd0] sm:$0xff]
    %v6096 = vld [vmem:[%s6068 + $0xd8] sm:$0xff]
    %v6097 = vld [vmem:[%s6068 + $0xe0] sm:$0xff]
    %v6098 = vld [vmem:[%s6068 + $0xe8] sm:$0xff]
    %v6099 = vld [vmem:[%s6068 + $0xf0] sm:$0xff]
    %v6100 = vld [vmem:[%s6068 + $0xf8] sm:$0xff]
    %v6101 = vld [vmem:[%s6068 + $0x100] sm:$0xff]
    %v6102 = vld [vmem:[%s6068 + $0x108] sm:$0xff]
    %v6103 = vld [vmem:[%s6068 + $0x110] sm:$0xff]
    %v6104 = vld [vmem:[%s6068 + $0x118] sm:$0xff]
    %v6105 = vld [vmem:[%s6068 + $0x120] sm:$0xff]
    %v6106 = vld [vmem:[%s6068 + $0x128] sm:$0xff]
    %v6107 = vld [vmem:[%s6068 + $0x130] sm:$0xff]
    %v6108 = vld [vmem:[%s6068 + $0x138] sm:$0xff]
    %v6109 = vld [vmem:[%s6068 + $0x140] sm:$0xff]
    %v6110 = vld [vmem:[%s6068 + $0x148] sm:$0xff]
    %v6111 = vld [vmem:[%s6068 + $0x150] sm:$0xff]
    %v6112 = vld [vmem:[%s6068 + $0x158] sm:$0xff]
    %v6113 = vld [vmem:[%s6068 + $0x160] sm:$0xff]
    %v6114 = vld [vmem:[%s6068 + $0x168] sm:$0xff]
    %v6115 = vld [vmem:[%s6068 + $0x170] sm:$0xff]
    %v6116 = vld [vmem:[%s6068 + $0x178] sm:$0xff]
    %v6117 = vld [vmem:[%s6068 + $0x180] sm:$0xff]
    %v6118 = vld [vmem:[%s6068 + $0x188] sm:$0xff]
    %v6119 = vld [vmem:[%s6068 + $0x190] sm:$0xff]
    %v6120 = vld [vmem:[%s6068 + $0x198] sm:$0xff]
    %v6121 = vld [vmem:[%s6068 + $0x1a0] sm:$0xff]
    %v6122 = vld [vmem:[%s6068 + $0x1a8] sm:$0xff]
    %v6123 = vld [vmem:[%s6068 + $0x1b0] sm:$0xff]
    %v6124 = vld [vmem:[%s6068 + $0x1b8] sm:$0xff]
    %v6125 = vld [vmem:[%s6068 + $0x1c0] sm:$0xff]
    %v6126 = vld [vmem:[%s6068 + $0x1c8] sm:$0xff]
    %v6127 = vld [vmem:[%s6068 + $0x1d0] sm:$0xff]
    %v6128 = vld [vmem:[%s6068 + $0x1d8] sm:$0xff]
    %v6129 = vld [vmem:[%s6068 + $0x1e0] sm:$0xff]
    %v6130 = vld [vmem:[%s6068 + $0x1e8] sm:$0xff]
    %v6131 = vld [vmem:[%s6068 + $0x1f0] sm:$0xff]
    %v6132 = vld [vmem:[%s6068 + $0x1f8] sm:$0xff]
    %6133 = vmatprep.subr.mxu0 %v6070
    %6134 = vmatpush1.msra.mxu0 %v6069
    %6135 = vmatprep.subr.mxu0 %v6074
    %6136 = vmatpush1.msra.mxu0 %v6073
    %6137 = vmatprep.subr.mxu0 %v6078
    %6138 = vmatpush1.msra.mxu0 %v6077
    %6139 = vmatprep.subr.mxu0 %v6082
    %6140 = vmatpush1.msra.mxu0 %v6081
    %6141 = vmatprep.subr.mxu0 %v6086
    %6142 = vmatpush1.msra.mxu0 %v6085
    %6143 = vmatprep.subr.mxu0 %v6090
    %6144 = vmatpush1.msra.mxu0 %v6089
    %6145 = vmatprep.subr.mxu0 %v6094
    %6146 = vmatpush1.msra.mxu0 %v6093
    %6147 = vmatprep.subr.mxu0 %v6098
    %6148 = vmatpush1.msra.mxu0 %v6097
    %6149 = vmatprep.subr.mxu0 %v6102
    %6150 = vmatpush1.msra.mxu0 %v6101
    %6151 = vmatprep.subr.mxu0 %v6106
    %6152 = vmatpush1.msra.mxu0 %v6105
    %6153 = vmatprep.subr.mxu0 %v6110
    %6154 = vmatpush1.msra.mxu0 %v6109
    %6155 = vmatprep.subr.mxu0 %v6114
    %6156 = vmatpush1.msra.mxu0 %v6113
    %6157 = vmatprep.subr.mxu0 %v6118
    %6158 = vmatpush1.msra.mxu0 %v6117
    %6159 = vmatprep.subr.mxu0 %v6122
    %6160 = vmatpush1.msra.mxu0 %v6121
    %6161 = vmatprep.subr.mxu0 %v6126
    %6162 = vmatpush1.msra.mxu0 %v6125
    %6163 = vmatprep.subr.mxu0 %v6130
    %6164 = vmatpush1.msra.mxu0 %v6129
    %6165 = vmatprep.subr.mxu0 0.0
    %6166 = vmatpush1.msra.mxu0 0.0
    %6167 = vmatprep.subr.mxu0 0.0
    %6168 = vmatpush1.msra.mxu0 0.0
    %6169 = vmatprep.subr.mxu0 0.0
    %6170 = vmatpush1.msra.mxu0 0.0
    %6171 = vmatprep.subr.mxu0 0.0
    %6172 = vmatpush1.msra.mxu0 0.0
    %6173 = vmatprep.subr.mxu0 0.0
    %6174 = vmatpush1.msra.mxu0 0.0
    %6175 = vmatprep.subr.mxu0 0.0
    %6176 = vmatpush1.msra.mxu0 0.0
    %6177 = vmatprep.subr.mxu0 0.0
    %6178 = vmatpush1.msra.mxu0 0.0
    %6179 = vmatprep.subr.mxu0 0.0
    %6180 = vmatpush1.msra.mxu0 0.0
    %6181 = vmatprep.subr.mxu0 0.0
    %6182 = vmatpush1.msra.mxu0 0.0
    %6183 = vmatprep.subr.mxu0 0.0
    %6184 = vmatpush1.msra.mxu0 0.0
    %6185 = vmatprep.subr.mxu0 0.0
    %6186 = vmatpush1.msra.mxu0 0.0
    %6187 = vmatprep.subr.mxu0 0.0
    %6188 = vmatpush1.msra.mxu0 0.0
    %6189 = vmatprep.subr.mxu0 0.0
    %6190 = vmatpush1.msra.mxu0 0.0
    %6191 = vmatprep.subr.mxu0 0.0
    %6192 = vmatpush1.msra.mxu0 0.0
    %6193 = vmatprep.subr.mxu0 0.0
    %6194 = vmatpush1.msra.mxu0 0.0
    %6195 = vmatprep.subr.mxu0 0.0
    %6196 = vmatpush1.msra.mxu0 0.0
    %6197 = vmatprep.mubr.f32.mxu0 0.0
    %6198 = vmatmul.mubr.f32.gmra.mrb[0].mxu0 %v897
    %v6199 = vpop.f32.mrb[0].mxu0
    %v6200 = vadd.f32 0.0, %v6199
    %v6201 = vpop.f32.mrb[0].mxu0
    %v6202 = vadd.f32 0.0, %v6201
    %6203 = vdwg.mxu0
    %6204 = vmatprep.subr.mxu0 %v6072
    %6205 = vmatpush1.msra.mxu0 %v6071
    %6206 = vmatprep.subr.mxu0 %v6076
    %6207 = vmatpush1.msra.mxu0 %v6075
    %6208 = vmatprep.subr.mxu0 %v6080
    %6209 = vmatpush1.msra.mxu0 %v6079
    %6210 = vmatprep.subr.mxu0 %v6084
    %6211 = vmatpush1.msra.mxu0 %v6083
    %6212 = vmatprep.subr.mxu0 %v6088
    %6213 = vmatpush1.msra.mxu0 %v6087
    %6214 = vmatprep.subr.mxu0 %v6092
    %6215 = vmatpush1.msra.mxu0 %v6091
    %6216 = vmatprep.subr.mxu0 %v6096
    %6217 = vmatpush1.msra.mxu0 %v6095
    %6218 = vmatprep.subr.mxu0 %v6100
    %6219 = vmatpush1.msra.mxu0 %v6099
    %6220 = vmatprep.subr.mxu0 %v6104
    %6221 = vmatpush1.msra.mxu0 %v6103
    %6222 = vmatprep.subr.mxu0 %v6108
    %6223 = vmatpush1.msra.mxu0 %v6107
    %6224 = vmatprep.subr.mxu0 %v6112
    %6225 = vmatpush1.msra.mxu0 %v6111
    %6226 = vmatprep.subr.mxu0 %v6116
    %6227 = vmatpush1.msra.mxu0 %v6115
    %6228 = vmatprep.subr.mxu0 %v6120
    %6229 = vmatpush1.msra.mxu0 %v6119
    %6230 = vmatprep.subr.mxu0 %v6124
    %6231 = vmatpush1.msra.mxu0 %v6123
    %6232 = vmatprep.subr.mxu0 %v6128
    %6233 = vmatpush1.msra.mxu0 %v6127
    %6234 = vmatprep.subr.mxu0 %v6132
    %6235 = vmatpush1.msra.mxu0 %v6131
    %6236 = vmatprep.subr.mxu0 0.0
    %6237 = vmatpush1.msra.mxu0 0.0
    %6238 = vmatprep.subr.mxu0 0.0
    %6239 = vmatpush1.msra.mxu0 0.0
    %6240 = vmatprep.subr.mxu0 0.0
    %6241 = vmatpush1.msra.mxu0 0.0
    %6242 = vmatprep.subr.mxu0 0.0
    %6243 = vmatpush1.msra.mxu0 0.0
    %6244 = vmatprep.subr.mxu0 0.0
    %6245 = vmatpush1.msra.mxu0 0.0
    %6246 = vmatprep.subr.mxu0 0.0
    %6247 = vmatpush1.msra.mxu0 0.0
    %6248 = vmatprep.subr.mxu0 0.0
    %6249 = vmatpush1.msra.mxu0 0.0
    %6250 = vmatprep.subr.mxu0 0.0
    %6251 = vmatpush1.msra.mxu0 0.0
    %6252 = vmatprep.subr.mxu0 0.0
    %6253 = vmatpush1.msra.mxu0 0.0
    %6254 = vmatprep.subr.mxu0 0.0
    %6255 = vmatpush1.msra.mxu0 0.0
    %6256 = vmatprep.subr.mxu0 0.0
    %6257 = vmatpush1.msra.mxu0 0.0
    %6258 = vmatprep.subr.mxu0 0.0
    %6259 = vmatpush1.msra.mxu0 0.0
    %6260 = vmatprep.subr.mxu0 0.0
    %6261 = vmatpush1.msra.mxu0 0.0
    %6262 = vmatprep.subr.mxu0 0.0
    %6263 = vmatpush1.msra.mxu0 0.0
    %6264 = vmatprep.subr.mxu0 0.0
    %6265 = vmatpush1.msra.mxu0 0.0
    %6266 = vmatprep.subr.mxu0 0.0
    %6267 = vmatpush1.msra.mxu0 0.0
    %6268 = vmatprep.mubr.f32.mxu0 0.0
    %6269 = vmatmul.mubr.f32.gmra.mrb[0].mxu0 %v897
    %v6270 = vpop.f32.mrb[0].mxu0
    %v6271 = vadd.f32 0.0, %v6270
    %v6272 = vpop.f32.mrb[0].mxu0
    %v6273 = vadd.f32 0.0, %v6272
    %6274 = vdwg.mxu0
    %v6275 = vmul.f32 %v6200, %v900
    %v6276 = vmul.f32 %v6202, %v901
    %v6279 = vcombine.low %v6275, %v6276
    %v6280 = vcombine.high %v6275, %v6276
    %v6282 = vunpack.c.l.s4 1966171168
    %v6283 = vunpack.c.0.s8 %v6282
    %v6284 = vlaneseq
    %v6285 = vshrl.u32 %v6284, 7
    %v6286 = vsub.s32 %v6283, %v6285
    %v6287 = vrot.slane %v6279, %v6286
    %v6289 = vunpack.c.l.s4 1966171168
    %v6290 = vunpack.c.0.s8 %v6289
    %v6291 = vlaneseq
    %v6292 = vshrl.u32 %v6291, 7
    %v6293 = vsub.s32 %v6290, %v6292
    %v6294 = vrot.slane %v6280, %v6293
    %v6295 = vcombine.high %v6287, %v6287
    %v6296 = vcombine.high %v6294, %v6294
    %v6298 = vunpack.c.l.s4 1966171168
    %v6299 = vunpack.c.0.s8 %v6298
    %v6300 = vlaneseq
    %v6301 = vshrl.u32 %v6300, 7
    %v6302 = vsub.s32 %v6299, %v6301
    %v6303 = vrot.slane %v6287, %v6302
    %v6305 = vunpack.c.l.s4 1966171168
    %v6306 = vunpack.c.0.s8 %v6305
    %v6307 = vlaneseq
    %v6308 = vshrl.u32 %v6307, 7
    %v6309 = vsub.s32 %v6306, %v6308
    %v6310 = vrot.slane %v6294, %v6309
    %v6312 = vunpack.c.l.s4 1966171168
    %v6313 = vunpack.c.0.s8 %v6312
    %v6314 = vlaneseq
    %v6315 = vshrl.u32 %v6314, 7
    %v6316 = vsub.s32 %v6313, %v6315
    %v6317 = vrot.slane %v6295, %v6316
    %v6319 = vunpack.c.l.s4 1966171168
    %v6320 = vunpack.c.0.s8 %v6319
    %v6321 = vlaneseq
    %v6322 = vshrl.u32 %v6321, 7
    %v6323 = vsub.s32 %v6320, %v6322
    %v6324 = vrot.slane %v6296, %v6323
    %v6325 = vcombine.high %v6303, %v6303
    %v6326 = vcombine.high %v6310, %v6310
    %v6327 = vcombine.high %v6317, %v6317
    %v6328 = vcombine.high %v6324, %v6324
    %s6337 = scalar_lea.vmem [#allocation3], 21
    %6338 = vst.msk [vmem:[%s6337] ss:$8 sm:$0x3] %vm1437, %v6303
    %6339 = vst.msk [vmem:[%s6337] ss:$8 sm:$0x0] %vm1437, %v6303
    %s6340 = scalar_lea.vmem [#allocation3], 53
    %6341 = vst.msk [vmem:[%s6340] ss:$8 sm:$0x3] %vm1437, %v6317
    %6342 = vst.msk [vmem:[%s6340] ss:$8 sm:$0x0] %vm1437, %v6317
    %s6343 = scalar_lea.vmem [#allocation3], 85
    %6344 = vst.msk [vmem:[%s6343] ss:$8 sm:$0x3] %vm1437, %v6325
    %6345 = vst.msk [vmem:[%s6343] ss:$8 sm:$0x0] %vm1437, %v6325
    %s6346 = scalar_lea.vmem [#allocation3], 117
    %6347 = vst.msk [vmem:[%s6346] ss:$8 sm:$0x3] %vm1437, %v6327
    %6348 = vst.msk [vmem:[%s6346] ss:$8 sm:$0x0] %vm1437, %v6327
    %s6349 = scalar_lea.vmem [#allocation3], 149
    %6350 = vst.msk [vmem:[%s6349] ss:$8 sm:$0x3] %vm1437, %v6310
    %6351 = vst.msk [vmem:[%s6349] ss:$8 sm:$0x0] %vm1437, %v6310
    %s6352 = scalar_lea.vmem [#allocation3], 181
    %6353 = vst.msk [vmem:[%s6352] ss:$8 sm:$0x3] %vm1437, %v6324
    %6354 = vst.msk [vmem:[%s6352] ss:$8 sm:$0x0] %vm1437, %v6324
    %s6355 = scalar_lea.vmem [#allocation3], 213
    %6356 = vst.msk [vmem:[%s6355] ss:$8 sm:$0x3] %vm1437, %v6326
    %6357 = vst.msk [vmem:[%s6355] ss:$8 sm:$0x0] %vm1437, %v6326
    %s6358 = scalar_lea.vmem [#allocation3], 245
    %6359 = vst.msk [vmem:[%s6358] ss:$8 sm:$0x3] %vm1437, %v6328
    %6360 = vst.msk [vmem:[%s6358] ss:$8 sm:$0x0] %vm1437, %v6328
    %v6363 = vcombine.low %v6271, %v6273
    %v6364 = vcombine.high %v6271, %v6273
    %v6366 = vunpack.c.l.s4 1966171168
    %v6367 = vunpack.c.0.s8 %v6366
    %v6368 = vlaneseq
    %v6369 = vshrl.u32 %v6368, 7
    %v6370 = vsub.s32 %v6367, %v6369
    %v6371 = vrot.slane %v6363, %v6370
    %v6373 = vunpack.c.l.s4 1966171168
    %v6374 = vunpack.c.0.s8 %v6373
    %v6375 = vlaneseq
    %v6376 = vshrl.u32 %v6375, 7
    %v6377 = vsub.s32 %v6374, %v6376
    %v6378 = vrot.slane %v6364, %v6377
    %v6379 = vcombine.high %v6371, %v6371
    %v6380 = vcombine.high %v6378, %v6378
    %v6382 = vunpack.c.l.s4 1966171168
    %v6383 = vunpack.c.0.s8 %v6382
    %v6384 = vlaneseq
    %v6385 = vshrl.u32 %v6384, 7
    %v6386 = vsub.s32 %v6383, %v6385
    %v6387 = vrot.slane %v6371, %v6386
    %v6389 = vunpack.c.l.s4 1966171168
    %v6390 = vunpack.c.0.s8 %v6389
    %v6391 = vlaneseq
    %v6392 = vshrl.u32 %v6391, 7
    %v6393 = vsub.s32 %v6390, %v6392
    %v6394 = vrot.slane %v6378, %v6393
    %v6396 = vunpack.c.l.s4 1966171168
    %v6397 = vunpack.c.0.s8 %v6396
    %v6398 = vlaneseq
    %v6399 = vshrl.u32 %v6398, 7
    %v6400 = vsub.s32 %v6397, %v6399
    %v6401 = vrot.slane %v6379, %v6400
    %v6403 = vunpack.c.l.s4 1966171168
    %v6404 = vunpack.c.0.s8 %v6403
    %v6405 = vlaneseq
    %v6406 = vshrl.u32 %v6405, 7
    %v6407 = vsub.s32 %v6404, %v6406
    %v6408 = vrot.slane %v6380, %v6407
    %v6409 = vcombine.high %v6387, %v6387
    %v6410 = vcombine.high %v6394, %v6394
    %v6411 = vcombine.high %v6401, %v6401
    %v6412 = vcombine.high %v6408, %v6408
    %s6421 = scalar_lea.vmem [#allocation4], 21
    %6422 = vst.msk [vmem:[%s6421] ss:$8 sm:$0x3] %vm1437, %v6387
    %6423 = vst.msk [vmem:[%s6421] ss:$8 sm:$0x0] %vm1437, %v6387
    %s6424 = scalar_lea.vmem [#allocation4], 53
    %6425 = vst.msk [vmem:[%s6424] ss:$8 sm:$0x3] %vm1437, %v6401
    %6426 = vst.msk [vmem:[%s6424] ss:$8 sm:$0x0] %vm1437, %v6401
    %s6427 = scalar_lea.vmem [#allocation4], 85
    %6428 = vst.msk [vmem:[%s6427] ss:$8 sm:$0x3] %vm1437, %v6409
    %6429 = vst.msk [vmem:[%s6427] ss:$8 sm:$0x0] %vm1437, %v6409
    %s6430 = scalar_lea.vmem [#allocation4], 117
    %6431 = vst.msk [vmem:[%s6430] ss:$8 sm:$0x3] %vm1437, %v6411
    %6432 = vst.msk [vmem:[%s6430] ss:$8 sm:$0x0] %vm1437, %v6411
    %s6433 = scalar_lea.vmem [#allocation4], 149
    %6434 = vst.msk [vmem:[%s6433] ss:$8 sm:$0x3] %vm1437, %v6394
    %6435 = vst.msk [vmem:[%s6433] ss:$8 sm:$0x0] %vm1437, %v6394
    %s6436 = scalar_lea.vmem [#allocation4], 181
    %6437 = vst.msk [vmem:[%s6436] ss:$8 sm:$0x3] %vm1437, %v6408
    %6438 = vst.msk [vmem:[%s6436] ss:$8 sm:$0x0] %vm1437, %v6408
    %s6439 = scalar_lea.vmem [#allocation4], 213
    %6440 = vst.msk [vmem:[%s6439] ss:$8 sm:$0x3] %vm1437, %v6410
    %6441 = vst.msk [vmem:[%s6439] ss:$8 sm:$0x0] %vm1437, %v6410
    %s6442 = scalar_lea.vmem [#allocation4], 245
    %6443 = vst.msk [vmem:[%s6442] ss:$8 sm:$0x3] %vm1437, %v6412
    %6444 = vst.msk [vmem:[%s6442] ss:$8 sm:$0x0] %vm1437, %v6412
    %s6445 = scalar_lea.vmem [#allocation26], 7168
    %v6446 = vld [vmem:[%s6445] sm:$0xff]
    %v6447 = vld [vmem:[%s6445 + $0x8] sm:$0xff]
    %v6448 = vld [vmem:[%s6445 + $0x10] sm:$0xff]
    %v6449 = vld [vmem:[%s6445 + $0x18] sm:$0xff]
    %v6450 = vld [vmem:[%s6445 + $0x20] sm:$0xff]
    %v6451 = vld [vmem:[%s6445 + $0x28] sm:$0xff]
    %v6452 = vld [vmem:[%s6445 + $0x30] sm:$0xff]
    %v6453 = vld [vmem:[%s6445 + $0x38] sm:$0xff]
    %v6454 = vld [vmem:[%s6445 + $0x40] sm:$0xff]
    %v6455 = vld [vmem:[%s6445 + $0x48] sm:$0xff]
    %v6456 = vld [vmem:[%s6445 + $0x50] sm:$0xff]
    %v6457 = vld [vmem:[%s6445 + $0x58] sm:$0xff]
    %v6458 = vld [vmem:[%s6445 + $0x60] sm:$0xff]
    %v6459 = vld [vmem:[%s6445 + $0x68] sm:$0xff]
    %v6460 = vld [vmem:[%s6445 + $0x70] sm:$0xff]
    %v6461 = vld [vmem:[%s6445 + $0x78] sm:$0xff]
    %v6462 = vld [vmem:[%s6445 + $0x80] sm:$0xff]
    %v6463 = vld [vmem:[%s6445 + $0x88] sm:$0xff]
    %v6464 = vld [vmem:[%s6445 + $0x90] sm:$0xff]
    %v6465 = vld [vmem:[%s6445 + $0x98] sm:$0xff]
    %v6466 = vld [vmem:[%s6445 + $0xa0] sm:$0xff]
    %v6467 = vld [vmem:[%s6445 + $0xa8] sm:$0xff]
    %v6468 = vld [vmem:[%s6445 + $0xb0] sm:$0xff]
    %v6469 = vld [vmem:[%s6445 + $0xb8] sm:$0xff]
    %v6470 = vld [vmem:[%s6445 + $0xc0] sm:$0xff]
    %v6471 = vld [vmem:[%s6445 + $0xc8] sm:$0xff]
    %v6472 = vld [vmem:[%s6445 + $0xd0] sm:$0xff]
    %v6473 = vld [vmem:[%s6445 + $0xd8] sm:$0xff]
    %v6474 = vld [vmem:[%s6445 + $0xe0] sm:$0xff]
    %v6475 = vld [vmem:[%s6445 + $0xe8] sm:$0xff]
    %v6476 = vld [vmem:[%s6445 + $0xf0] sm:$0xff]
    %v6477 = vld [vmem:[%s6445 + $0xf8] sm:$0xff]
    %v6478 = vld [vmem:[%s6445 + $0x100] sm:$0xff]
    %v6479 = vld [vmem:[%s6445 + $0x108] sm:$0xff]
    %v6480 = vld [vmem:[%s6445 + $0x110] sm:$0xff]
    %v6481 = vld [vmem:[%s6445 + $0x118] sm:$0xff]
    %v6482 = vld [vmem:[%s6445 + $0x120] sm:$0xff]
    %v6483 = vld [vmem:[%s6445 + $0x128] sm:$0xff]
    %v6484 = vld [vmem:[%s6445 + $0x130] sm:$0xff]
    %v6485 = vld [vmem:[%s6445 + $0x138] sm:$0xff]
    %v6486 = vld [vmem:[%s6445 + $0x140] sm:$0xff]
    %v6487 = vld [vmem:[%s6445 + $0x148] sm:$0xff]
    %v6488 = vld [vmem:[%s6445 + $0x150] sm:$0xff]
    %v6489 = vld [vmem:[%s6445 + $0x158] sm:$0xff]
    %v6490 = vld [vmem:[%s6445 + $0x160] sm:$0xff]
    %v6491 = vld [vmem:[%s6445 + $0x168] sm:$0xff]
    %v6492 = vld [vmem:[%s6445 + $0x170] sm:$0xff]
    %v6493 = vld [vmem:[%s6445 + $0x178] sm:$0xff]
    %v6494 = vld [vmem:[%s6445 + $0x180] sm:$0xff]
    %v6495 = vld [vmem:[%s6445 + $0x188] sm:$0xff]
    %v6496 = vld [vmem:[%s6445 + $0x190] sm:$0xff]
    %v6497 = vld [vmem:[%s6445 + $0x198] sm:$0xff]
    %v6498 = vld [vmem:[%s6445 + $0x1a0] sm:$0xff]
    %v6499 = vld [vmem:[%s6445 + $0x1a8] sm:$0xff]
    %v6500 = vld [vmem:[%s6445 + $0x1b0] sm:$0xff]
    %v6501 = vld [vmem:[%s6445 + $0x1b8] sm:$0xff]
    %v6502 = vld [vmem:[%s6445 + $0x1c0] sm:$0xff]
    %v6503 = vld [vmem:[%s6445 + $0x1c8] sm:$0xff]
    %v6504 = vld [vmem:[%s6445 + $0x1d0] sm:$0xff]
    %v6505 = vld [vmem:[%s6445 + $0x1d8] sm:$0xff]
    %v6506 = vld [vmem:[%s6445 + $0x1e0] sm:$0xff]
    %v6507 = vld [vmem:[%s6445 + $0x1e8] sm:$0xff]
    %v6508 = vld [vmem:[%s6445 + $0x1f0] sm:$0xff]
    %v6509 = vld [vmem:[%s6445 + $0x1f8] sm:$0xff]
    %6510 = vmatprep.subr.mxu0 %v6447
    %6511 = vmatpush1.msra.mxu0 %v6446
    %6512 = vmatprep.subr.mxu0 %v6451
    %6513 = vmatpush1.msra.mxu0 %v6450
    %6514 = vmatprep.subr.mxu0 %v6455
    %6515 = vmatpush1.msra.mxu0 %v6454
    %6516 = vmatprep.subr.mxu0 %v6459
    %6517 = vmatpush1.msra.mxu0 %v6458
    %6518 = vmatprep.subr.mxu0 %v6463
    %6519 = vmatpush1.msra.mxu0 %v6462
    %6520 = vmatprep.subr.mxu0 %v6467
    %6521 = vmatpush1.msra.mxu0 %v6466
    %6522 = vmatprep.subr.mxu0 %v6471
    %6523 = vmatpush1.msra.mxu0 %v6470
    %6524 = vmatprep.subr.mxu0 %v6475
    %6525 = vmatpush1.msra.mxu0 %v6474
    %6526 = vmatprep.subr.mxu0 %v6479
    %6527 = vmatpush1.msra.mxu0 %v6478
    %6528 = vmatprep.subr.mxu0 %v6483
    %6529 = vmatpush1.msra.mxu0 %v6482
    %6530 = vmatprep.subr.mxu0 %v6487
    %6531 = vmatpush1.msra.mxu0 %v6486
    %6532 = vmatprep.subr.mxu0 %v6491
    %6533 = vmatpush1.msra.mxu0 %v6490
    %6534 = vmatprep.subr.mxu0 %v6495
    %6535 = vmatpush1.msra.mxu0 %v6494
    %6536 = vmatprep.subr.mxu0 %v6499
    %6537 = vmatpush1.msra.mxu0 %v6498
    %6538 = vmatprep.subr.mxu0 %v6503
    %6539 = vmatpush1.msra.mxu0 %v6502
    %6540 = vmatprep.subr.mxu0 %v6507
    %6541 = vmatpush1.msra.mxu0 %v6506
    %6542 = vmatprep.subr.mxu0 0.0
    %6543 = vmatpush1.msra.mxu0 0.0
    %6544 = vmatprep.subr.mxu0 0.0
    %6545 = vmatpush1.msra.mxu0 0.0
    %6546 = vmatprep.subr.mxu0 0.0
    %6547 = vmatpush1.msra.mxu0 0.0
    %6548 = vmatprep.subr.mxu0 0.0
    %6549 = vmatpush1.msra.mxu0 0.0
    %6550 = vmatprep.subr.mxu0 0.0
    %6551 = vmatpush1.msra.mxu0 0.0
    %6552 = vmatprep.subr.mxu0 0.0
    %6553 = vmatpush1.msra.mxu0 0.0
    %6554 = vmatprep.subr.mxu0 0.0
    %6555 = vmatpush1.msra.mxu0 0.0
    %6556 = vmatprep.subr.mxu0 0.0
    %6557 = vmatpush1.msra.mxu0 0.0
    %6558 = vmatprep.subr.mxu0 0.0
    %6559 = vmatpush1.msra.mxu0 0.0
    %6560 = vmatprep.subr.mxu0 0.0
    %6561 = vmatpush1.msra.mxu0 0.0
    %6562 = vmatprep.subr.mxu0 0.0
    %6563 = vmatpush1.msra.mxu0 0.0
    %6564 = vmatprep.subr.mxu0 0.0
    %6565 = vmatpush1.msra.mxu0 0.0
    %6566 = vmatprep.subr.mxu0 0.0
    %6567 = vmatpush1.msra.mxu0 0.0
    %6568 = vmatprep.subr.mxu0 0.0
    %6569 = vmatpush1.msra.mxu0 0.0
    %6570 = vmatprep.subr.mxu0 0.0
    %6571 = vmatpush1.msra.mxu0 0.0
    %6572 = vmatprep.subr.mxu0 0.0
    %6573 = vmatpush1.msra.mxu0 0.0
    %6574 = vmatprep.mubr.f32.mxu0 0.0
    %6575 = vmatmul.mubr.f32.gmra.mrb[0].mxu0 %v897
    %v6576 = vpop.f32.mrb[0].mxu0
    %v6577 = vadd.f32 0.0, %v6576
    %v6578 = vpop.f32.mrb[0].mxu0
    %v6579 = vadd.f32 0.0, %v6578
    %6580 = vdwg.mxu0
    %6581 = vmatprep.subr.mxu0 %v6449
    %6582 = vmatpush1.msra.mxu0 %v6448
    %6583 = vmatprep.subr.mxu0 %v6453
    %6584 = vmatpush1.msra.mxu0 %v6452
    %6585 = vmatprep.subr.mxu0 %v6457
    %6586 = vmatpush1.msra.mxu0 %v6456
    %6587 = vmatprep.subr.mxu0 %v6461
    %6588 = vmatpush1.msra.mxu0 %v6460
    %6589 = vmatprep.subr.mxu0 %v6465
    %6590 = vmatpush1.msra.mxu0 %v6464
    %6591 = vmatprep.subr.mxu0 %v6469
    %6592 = vmatpush1.msra.mxu0 %v6468
    %6593 = vmatprep.subr.mxu0 %v6473
    %6594 = vmatpush1.msra.mxu0 %v6472
    %6595 = vmatprep.subr.mxu0 %v6477
    %6596 = vmatpush1.msra.mxu0 %v6476
    %6597 = vmatprep.subr.mxu0 %v6481
    %6598 = vmatpush1.msra.mxu0 %v6480
    %6599 = vmatprep.subr.mxu0 %v6485
    %6600 = vmatpush1.msra.mxu0 %v6484
    %6601 = vmatprep.subr.mxu0 %v6489
    %6602 = vmatpush1.msra.mxu0 %v6488
    %6603 = vmatprep.subr.mxu0 %v6493
    %6604 = vmatpush1.msra.mxu0 %v6492
    %6605 = vmatprep.subr.mxu0 %v6497
    %6606 = vmatpush1.msra.mxu0 %v6496
    %6607 = vmatprep.subr.mxu0 %v6501
    %6608 = vmatpush1.msra.mxu0 %v6500
    %6609 = vmatprep.subr.mxu0 %v6505
    %6610 = vmatpush1.msra.mxu0 %v6504
    %6611 = vmatprep.subr.mxu0 %v6509
    %6612 = vmatpush1.msra.mxu0 %v6508
    %6613 = vmatprep.subr.mxu0 0.0
    %6614 = vmatpush1.msra.mxu0 0.0
    %6615 = vmatprep.subr.mxu0 0.0
    %6616 = vmatpush1.msra.mxu0 0.0
    %6617 = vmatprep.subr.mxu0 0.0
    %6618 = vmatpush1.msra.mxu0 0.0
    %6619 = vmatprep.subr.mxu0 0.0
    %6620 = vmatpush1.msra.mxu0 0.0
    %6621 = vmatprep.subr.mxu0 0.0
    %6622 = vmatpush1.msra.mxu0 0.0
    %6623 = vmatprep.subr.mxu0 0.0
    %6624 = vmatpush1.msra.mxu0 0.0
    %6625 = vmatprep.subr.mxu0 0.0
    %6626 = vmatpush1.msra.mxu0 0.0
    %6627 = vmatprep.subr.mxu0 0.0
    %6628 = vmatpush1.msra.mxu0 0.0
    %6629 = vmatprep.subr.mxu0 0.0
    %6630 = vmatpush1.msra.mxu0 0.0
    %6631 = vmatprep.subr.mxu0 0.0
    %6632 = vmatpush1.msra.mxu0 0.0
    %6633 = vmatprep.subr.mxu0 0.0
    %6634 = vmatpush1.msra.mxu0 0.0
    %6635 = vmatprep.subr.mxu0 0.0
    %6636 = vmatpush1.msra.mxu0 0.0
    %6637 = vmatprep.subr.mxu0 0.0
    %6638 = vmatpush1.msra.mxu0 0.0
    %6639 = vmatprep.subr.mxu0 0.0
    %6640 = vmatpush1.msra.mxu0 0.0
    %6641 = vmatprep.subr.mxu0 0.0
    %6642 = vmatpush1.msra.mxu0 0.0
    %6643 = vmatprep.subr.mxu0 0.0
    %6644 = vmatpush1.msra.mxu0 0.0
    %6645 = vmatprep.mubr.f32.mxu0 0.0
    %6646 = vmatmul.mubr.f32.gmra.mrb[0].mxu0 %v897
    %v6647 = vpop.f32.mrb[0].mxu0
    %v6648 = vadd.f32 0.0, %v6647
    %v6649 = vpop.f32.mrb[0].mxu0
    %v6650 = vadd.f32 0.0, %v6649
    %6651 = vdwg.mxu0
    %v6652 = vmul.f32 %v6577, %v900
    %v6653 = vmul.f32 %v6579, %v901
    %v6656 = vcombine.low %v6652, %v6653
    %v6657 = vcombine.high %v6652, %v6653
    %v6659 = vunpack.c.l.s4 1966171168
    %v6660 = vunpack.c.0.s8 %v6659
    %v6661 = vlaneseq
    %v6662 = vshrl.u32 %v6661, 7
    %v6663 = vsub.s32 %v6660, %v6662
    %v6664 = vrot.slane %v6656, %v6663
    %v6666 = vunpack.c.l.s4 1966171168
    %v6667 = vunpack.c.0.s8 %v6666
    %v6668 = vlaneseq
    %v6669 = vshrl.u32 %v6668, 7
    %v6670 = vsub.s32 %v6667, %v6669
    %v6671 = vrot.slane %v6657, %v6670
    %v6672 = vcombine.high %v6664, %v6664
    %v6673 = vcombine.high %v6671, %v6671
    %v6675 = vunpack.c.l.s4 1966171168
    %v6676 = vunpack.c.0.s8 %v6675
    %v6677 = vlaneseq
    %v6678 = vshrl.u32 %v6677, 7
    %v6679 = vsub.s32 %v6676, %v6678
    %v6680 = vrot.slane %v6664, %v6679
    %v6682 = vunpack.c.l.s4 1966171168
    %v6683 = vunpack.c.0.s8 %v6682
    %v6684 = vlaneseq
    %v6685 = vshrl.u32 %v6684, 7
    %v6686 = vsub.s32 %v6683, %v6685
    %v6687 = vrot.slane %v6671, %v6686
    %v6689 = vunpack.c.l.s4 1966171168
    %v6690 = vunpack.c.0.s8 %v6689
    %v6691 = vlaneseq
    %v6692 = vshrl.u32 %v6691, 7
    %v6693 = vsub.s32 %v6690, %v6692
    %v6694 = vrot.slane %v6672, %v6693
    %v6696 = vunpack.c.l.s4 1966171168
    %v6697 = vunpack.c.0.s8 %v6696
    %v6698 = vlaneseq
    %v6699 = vshrl.u32 %v6698, 7
    %v6700 = vsub.s32 %v6697, %v6699
    %v6701 = vrot.slane %v6673, %v6700
    %v6702 = vcombine.high %v6680, %v6680
    %v6703 = vcombine.high %v6687, %v6687
    %v6704 = vcombine.high %v6694, %v6694
    %v6705 = vcombine.high %v6701, %v6701
    %s6714 = scalar_lea.vmem [#allocation3], 22
    %6715 = vst.msk [vmem:[%s6714] ss:$8 sm:$0x3] %vm1437, %v6680
    %6716 = vst.msk [vmem:[%s6714] ss:$8 sm:$0x0] %vm1437, %v6680
    %s6717 = scalar_lea.vmem [#allocation3], 54
    %6718 = vst.msk [vmem:[%s6717] ss:$8 sm:$0x3] %vm1437, %v6694
    %6719 = vst.msk [vmem:[%s6717] ss:$8 sm:$0x0] %vm1437, %v6694
    %s6720 = scalar_lea.vmem [#allocation3], 86
    %6721 = vst.msk [vmem:[%s6720] ss:$8 sm:$0x3] %vm1437, %v6702
    %6722 = vst.msk [vmem:[%s6720] ss:$8 sm:$0x0] %vm1437, %v6702
    %s6723 = scalar_lea.vmem [#allocation3], 118
    %6724 = vst.msk [vmem:[%s6723] ss:$8 sm:$0x3] %vm1437, %v6704
    %6725 = vst.msk [vmem:[%s6723] ss:$8 sm:$0x0] %vm1437, %v6704
    %s6726 = scalar_lea.vmem [#allocation3], 150
    %6727 = vst.msk [vmem:[%s6726] ss:$8 sm:$0x3] %vm1437, %v6687
    %6728 = vst.msk [vmem:[%s6726] ss:$8 sm:$0x0] %vm1437, %v6687
    %s6729 = scalar_lea.vmem [#allocation3], 182
    %6730 = vst.msk [vmem:[%s6729] ss:$8 sm:$0x3] %vm1437, %v6701
    %6731 = vst.msk [vmem:[%s6729] ss:$8 sm:$0x0] %vm1437, %v6701
    %s6732 = scalar_lea.vmem [#allocation3], 214
    %6733 = vst.msk [vmem:[%s6732] ss:$8 sm:$0x3] %vm1437, %v6703
    %6734 = vst.msk [vmem:[%s6732] ss:$8 sm:$0x0] %vm1437, %v6703
    %s6735 = scalar_lea.vmem [#allocation3], 246
    %6736 = vst.msk [vmem:[%s6735] ss:$8 sm:$0x3] %vm1437, %v6705
    %6737 = vst.msk [vmem:[%s6735] ss:$8 sm:$0x0] %vm1437, %v6705
    %v6740 = vcombine.low %v6648, %v6650
    %v6741 = vcombine.high %v6648, %v6650
    %v6743 = vunpack.c.l.s4 1966171168
    %v6744 = vunpack.c.0.s8 %v6743
    %v6745 = vlaneseq
    %v6746 = vshrl.u32 %v6745, 7
    %v6747 = vsub.s32 %v6744, %v6746
    %v6748 = vrot.slane %v6740, %v6747
    %v6750 = vunpack.c.l.s4 1966171168
    %v6751 = vunpack.c.0.s8 %v6750
    %v6752 = vlaneseq
    %v6753 = vshrl.u32 %v6752, 7
    %v6754 = vsub.s32 %v6751, %v6753
    %v6755 = vrot.slane %v6741, %v6754
    %v6756 = vcombine.high %v6748, %v6748
    %v6757 = vcombine.high %v6755, %v6755
    %v6759 = vunpack.c.l.s4 1966171168
    %v6760 = vunpack.c.0.s8 %v6759
    %v6761 = vlaneseq
    %v6762 = vshrl.u32 %v6761, 7
    %v6763 = vsub.s32 %v6760, %v6762
    %v6764 = vrot.slane %v6748, %v6763
    %v6766 = vunpack.c.l.s4 1966171168
    %v6767 = vunpack.c.0.s8 %v6766
    %v6768 = vlaneseq
    %v6769 = vshrl.u32 %v6768, 7
    %v6770 = vsub.s32 %v6767, %v6769
    %v6771 = vrot.slane %v6755, %v6770
    %v6773 = vunpack.c.l.s4 1966171168
    %v6774 = vunpack.c.0.s8 %v6773
    %v6775 = vlaneseq
    %v6776 = vshrl.u32 %v6775, 7
    %v6777 = vsub.s32 %v6774, %v6776
    %v6778 = vrot.slane %v6756, %v6777
    %v6780 = vunpack.c.l.s4 1966171168
    %v6781 = vunpack.c.0.s8 %v6780
    %v6782 = vlaneseq
    %v6783 = vshrl.u32 %v6782, 7
    %v6784 = vsub.s32 %v6781, %v6783
    %v6785 = vrot.slane %v6757, %v6784
    %v6786 = vcombine.high %v6764, %v6764
    %v6787 = vcombine.high %v6771, %v6771
    %v6788 = vcombine.high %v6778, %v6778
    %v6789 = vcombine.high %v6785, %v6785
    %s6798 = scalar_lea.vmem [#allocation4], 22
    %6799 = vst.msk [vmem:[%s6798] ss:$8 sm:$0x3] %vm1437, %v6764
    %6800 = vst.msk [vmem:[%s6798] ss:$8 sm:$0x0] %vm1437, %v6764
    %s6801 = scalar_lea.vmem [#allocation4], 54
    %6802 = vst.msk [vmem:[%s6801] ss:$8 sm:$0x3] %vm1437, %v6778
    %6803 = vst.msk [vmem:[%s6801] ss:$8 sm:$0x0] %vm1437, %v6778
    %s6804 = scalar_lea.vmem [#allocation4], 86
    %6805 = vst.msk [vmem:[%s6804] ss:$8 sm:$0x3] %vm1437, %v6786
    %6806 = vst.msk [vmem:[%s6804] ss:$8 sm:$0x0] %vm1437, %v6786
    %s6807 = scalar_lea.vmem [#allocation4], 118
    %6808 = vst.msk [vmem:[%s6807] ss:$8 sm:$0x3] %vm1437, %v6788
    %6809 = vst.msk [vmem:[%s6807] ss:$8 sm:$0x0] %vm1437, %v6788
    %s6810 = scalar_lea.vmem [#allocation4], 150
    %6811 = vst.msk [vmem:[%s6810] ss:$8 sm:$0x3] %vm1437, %v6771
    %6812 = vst.msk [vmem:[%s6810] ss:$8 sm:$0x0] %vm1437, %v6771
    %s6813 = scalar_lea.vmem [#allocation4], 182
    %6814 = vst.msk [vmem:[%s6813] ss:$8 sm:$0x3] %vm1437, %v6785
    %6815 = vst.msk [vmem:[%s6813] ss:$8 sm:$0x0] %vm1437, %v6785
    %s6816 = scalar_lea.vmem [#allocation4], 214
    %6817 = vst.msk [vmem:[%s6816] ss:$8 sm:$0x3] %vm1437, %v6787
    %6818 = vst.msk [vmem:[%s6816] ss:$8 sm:$0x0] %vm1437, %v6787
    %s6819 = scalar_lea.vmem [#allocation4], 246
    %6820 = vst.msk [vmem:[%s6819] ss:$8 sm:$0x3] %vm1437, %v6789
    %6821 = vst.msk [vmem:[%s6819] ss:$8 sm:$0x0] %vm1437, %v6789
    %s6822 = scalar_lea.vmem [#allocation26], 7680
    %v6823 = vld [vmem:[%s6822] sm:$0xff]
    %v6824 = vld [vmem:[%s6822 + $0x8] sm:$0xff]
    %v6825 = vld [vmem:[%s6822 + $0x10] sm:$0xff]
    %v6826 = vld [vmem:[%s6822 + $0x18] sm:$0xff]
    %v6827 = vld [vmem:[%s6822 + $0x20] sm:$0xff]
    %v6828 = vld [vmem:[%s6822 + $0x28] sm:$0xff]
    %v6829 = vld [vmem:[%s6822 + $0x30] sm:$0xff]
    %v6830 = vld [vmem:[%s6822 + $0x38] sm:$0xff]
    %v6831 = vld [vmem:[%s6822 + $0x40] sm:$0xff]
    %v6832 = vld [vmem:[%s6822 + $0x48] sm:$0xff]
    %v6833 = vld [vmem:[%s6822 + $0x50] sm:$0xff]
    %v6834 = vld [vmem:[%s6822 + $0x58] sm:$0xff]
    %v6835 = vld [vmem:[%s6822 + $0x60] sm:$0xff]
    %v6836 = vld [vmem:[%s6822 + $0x68] sm:$0xff]
    %v6837 = vld [vmem:[%s6822 + $0x70] sm:$0xff]
    %v6838 = vld [vmem:[%s6822 + $0x78] sm:$0xff]
    %v6839 = vld [vmem:[%s6822 + $0x80] sm:$0xff]
    %v6840 = vld [vmem:[%s6822 + $0x88] sm:$0xff]
    %v6841 = vld [vmem:[%s6822 + $0x90] sm:$0xff]
    %v6842 = vld [vmem:[%s6822 + $0x98] sm:$0xff]
    %v6843 = vld [vmem:[%s6822 + $0xa0] sm:$0xff]
    %v6844 = vld [vmem:[%s6822 + $0xa8] sm:$0xff]
    %v6845 = vld [vmem:[%s6822 + $0xb0] sm:$0xff]
    %v6846 = vld [vmem:[%s6822 + $0xb8] sm:$0xff]
    %v6847 = vld [vmem:[%s6822 + $0xc0] sm:$0xff]
    %v6848 = vld [vmem:[%s6822 + $0xc8] sm:$0xff]
    %v6849 = vld [vmem:[%s6822 + $0xd0] sm:$0xff]
    %v6850 = vld [vmem:[%s6822 + $0xd8] sm:$0xff]
    %v6851 = vld [vmem:[%s6822 + $0xe0] sm:$0xff]
    %v6852 = vld [vmem:[%s6822 + $0xe8] sm:$0xff]
    %v6853 = vld [vmem:[%s6822 + $0xf0] sm:$0xff]
    %v6854 = vld [vmem:[%s6822 + $0xf8] sm:$0xff]
    %v6855 = vld [vmem:[%s6822 + $0x100] sm:$0xff]
    %v6856 = vld [vmem:[%s6822 + $0x108] sm:$0xff]
    %v6857 = vld [vmem:[%s6822 + $0x110] sm:$0xff]
    %v6858 = vld [vmem:[%s6822 + $0x118] sm:$0xff]
    %v6859 = vld [vmem:[%s6822 + $0x120] sm:$0xff]
    %v6860 = vld [vmem:[%s6822 + $0x128] sm:$0xff]
    %v6861 = vld [vmem:[%s6822 + $0x130] sm:$0xff]
    %v6862 = vld [vmem:[%s6822 + $0x138] sm:$0xff]
    %v6863 = vld [vmem:[%s6822 + $0x140] sm:$0xff]
    %v6864 = vld [vmem:[%s6822 + $0x148] sm:$0xff]
    %v6865 = vld [vmem:[%s6822 + $0x150] sm:$0xff]
    %v6866 = vld [vmem:[%s6822 + $0x158] sm:$0xff]
    %v6867 = vld [vmem:[%s6822 + $0x160] sm:$0xff]
    %v6868 = vld [vmem:[%s6822 + $0x168] sm:$0xff]
    %v6869 = vld [vmem:[%s6822 + $0x170] sm:$0xff]
    %v6870 = vld [vmem:[%s6822 + $0x178] sm:$0xff]
    %v6871 = vld [vmem:[%s6822 + $0x180] sm:$0xff]
    %v6872 = vld [vmem:[%s6822 + $0x188] sm:$0xff]
    %v6873 = vld [vmem:[%s6822 + $0x190] sm:$0xff]
    %v6874 = vld [vmem:[%s6822 + $0x198] sm:$0xff]
    %v6875 = vld [vmem:[%s6822 + $0x1a0] sm:$0xff]
    %v6876 = vld [vmem:[%s6822 + $0x1a8] sm:$0xff]
    %v6877 = vld [vmem:[%s6822 + $0x1b0] sm:$0xff]
    %v6878 = vld [vmem:[%s6822 + $0x1b8] sm:$0xff]
    %v6879 = vld [vmem:[%s6822 + $0x1c0] sm:$0xff]
    %v6880 = vld [vmem:[%s6822 + $0x1c8] sm:$0xff]
    %v6881 = vld [vmem:[%s6822 + $0x1d0] sm:$0xff]
    %v6882 = vld [vmem:[%s6822 + $0x1d8] sm:$0xff]
    %v6883 = vld [vmem:[%s6822 + $0x1e0] sm:$0xff]
    %v6884 = vld [vmem:[%s6822 + $0x1e8] sm:$0xff]
    %v6885 = vld [vmem:[%s6822 + $0x1f0] sm:$0xff]
    %v6886 = vld [vmem:[%s6822 + $0x1f8] sm:$0xff]
    %6887 = vmatprep.subr.mxu0 %v6824
    %6888 = vmatpush1.msra.mxu0 %v6823
    %6889 = vmatprep.subr.mxu0 %v6828
    %6890 = vmatpush1.msra.mxu0 %v6827
    %6891 = vmatprep.subr.mxu0 %v6832
    %6892 = vmatpush1.msra.mxu0 %v6831
    %6893 = vmatprep.subr.mxu0 %v6836
    %6894 = vmatpush1.msra.mxu0 %v6835
    %6895 = vmatprep.subr.mxu0 %v6840
    %6896 = vmatpush1.msra.mxu0 %v6839
    %6897 = vmatprep.subr.mxu0 %v6844
    %6898 = vmatpush1.msra.mxu0 %v6843
    %6899 = vmatprep.subr.mxu0 %v6848
    %6900 = vmatpush1.msra.mxu0 %v6847
    %6901 = vmatprep.subr.mxu0 %v6852
    %6902 = vmatpush1.msra.mxu0 %v6851
    %6903 = vmatprep.subr.mxu0 %v6856
    %6904 = vmatpush1.msra.mxu0 %v6855
    %6905 = vmatprep.subr.mxu0 %v6860
    %6906 = vmatpush1.msra.mxu0 %v6859
    %6907 = vmatprep.subr.mxu0 %v6864
    %6908 = vmatpush1.msra.mxu0 %v6863
    %6909 = vmatprep.subr.mxu0 %v6868
    %6910 = vmatpush1.msra.mxu0 %v6867
    %6911 = vmatprep.subr.mxu0 %v6872
    %6912 = vmatpush1.msra.mxu0 %v6871
    %6913 = vmatprep.subr.mxu0 %v6876
    %6914 = vmatpush1.msra.mxu0 %v6875
    %6915 = vmatprep.subr.mxu0 %v6880
    %6916 = vmatpush1.msra.mxu0 %v6879
    %6917 = vmatprep.subr.mxu0 %v6884
    %6918 = vmatpush1.msra.mxu0 %v6883
    %6919 = vmatprep.subr.mxu0 0.0
    %6920 = vmatpush1.msra.mxu0 0.0
    %6921 = vmatprep.subr.mxu0 0.0
    %6922 = vmatpush1.msra.mxu0 0.0
    %6923 = vmatprep.subr.mxu0 0.0
    %6924 = vmatpush1.msra.mxu0 0.0
    %6925 = vmatprep.subr.mxu0 0.0
    %6926 = vmatpush1.msra.mxu0 0.0
    %6927 = vmatprep.subr.mxu0 0.0
    %6928 = vmatpush1.msra.mxu0 0.0
    %6929 = vmatprep.subr.mxu0 0.0
    %6930 = vmatpush1.msra.mxu0 0.0
    %6931 = vmatprep.subr.mxu0 0.0
    %6932 = vmatpush1.msra.mxu0 0.0
    %6933 = vmatprep.subr.mxu0 0.0
    %6934 = vmatpush1.msra.mxu0 0.0
    %6935 = vmatprep.subr.mxu0 0.0
    %6936 = vmatpush1.msra.mxu0 0.0
    %6937 = vmatprep.subr.mxu0 0.0
    %6938 = vmatpush1.msra.mxu0 0.0
    %6939 = vmatprep.subr.mxu0 0.0
    %6940 = vmatpush1.msra.mxu0 0.0
    %6941 = vmatprep.subr.mxu0 0.0
    %6942 = vmatpush1.msra.mxu0 0.0
    %6943 = vmatprep.subr.mxu0 0.0
    %6944 = vmatpush1.msra.mxu0 0.0
    %6945 = vmatprep.subr.mxu0 0.0
    %6946 = vmatpush1.msra.mxu0 0.0
    %6947 = vmatprep.subr.mxu0 0.0
    %6948 = vmatpush1.msra.mxu0 0.0
    %6949 = vmatprep.subr.mxu0 0.0
    %6950 = vmatpush1.msra.mxu0 0.0
    %6951 = vmatprep.mubr.f32.mxu0 0.0
    %6952 = vmatmul.mubr.f32.gmra.mrb[0].mxu0 %v897
    %v6953 = vpop.f32.mrb[0].mxu0
    %v6954 = vadd.f32 0.0, %v6953
    %v6955 = vpop.f32.mrb[0].mxu0
    %v6956 = vadd.f32 0.0, %v6955
    %6957 = vdwg.mxu0
    %6958 = vmatprep.subr.mxu0 %v6826
    %6959 = vmatpush1.msra.mxu0 %v6825
    %6960 = vmatprep.subr.mxu0 %v6830
    %6961 = vmatpush1.msra.mxu0 %v6829
    %6962 = vmatprep.subr.mxu0 %v6834
    %6963 = vmatpush1.msra.mxu0 %v6833
    %6964 = vmatprep.subr.mxu0 %v6838
    %6965 = vmatpush1.msra.mxu0 %v6837
    %6966 = vmatprep.subr.mxu0 %v6842
    %6967 = vmatpush1.msra.mxu0 %v6841
    %6968 = vmatprep.subr.mxu0 %v6846
    %6969 = vmatpush1.msra.mxu0 %v6845
    %6970 = vmatprep.subr.mxu0 %v6850
    %6971 = vmatpush1.msra.mxu0 %v6849
    %6972 = vmatprep.subr.mxu0 %v6854
    %6973 = vmatpush1.msra.mxu0 %v6853
    %6974 = vmatprep.subr.mxu0 %v6858
    %6975 = vmatpush1.msra.mxu0 %v6857
    %6976 = vmatprep.subr.mxu0 %v6862
    %6977 = vmatpush1.msra.mxu0 %v6861
    %6978 = vmatprep.subr.mxu0 %v6866
    %6979 = vmatpush1.msra.mxu0 %v6865
    %6980 = vmatprep.subr.mxu0 %v6870
    %6981 = vmatpush1.msra.mxu0 %v6869
    %6982 = vmatprep.subr.mxu0 %v6874
    %6983 = vmatpush1.msra.mxu0 %v6873
    %6984 = vmatprep.subr.mxu0 %v6878
    %6985 = vmatpush1.msra.mxu0 %v6877
    %6986 = vmatprep.subr.mxu0 %v6882
    %6987 = vmatpush1.msra.mxu0 %v6881
    %6988 = vmatprep.subr.mxu0 %v6886
    %6989 = vmatpush1.msra.mxu0 %v6885
    %6990 = vmatprep.subr.mxu0 0.0
    %6991 = vmatpush1.msra.mxu0 0.0
    %6992 = vmatprep.subr.mxu0 0.0
    %6993 = vmatpush1.msra.mxu0 0.0
    %6994 = vmatprep.subr.mxu0 0.0
    %6995 = vmatpush1.msra.mxu0 0.0
    %6996 = vmatprep.subr.mxu0 0.0
    %6997 = vmatpush1.msra.mxu0 0.0
    %6998 = vmatprep.subr.mxu0 0.0
    %6999 = vmatpush1.msra.mxu0 0.0
    %7000 = vmatprep.subr.mxu0 0.0
    %7001 = vmatpush1.msra.mxu0 0.0
    %7002 = vmatprep.subr.mxu0 0.0
    %7003 = vmatpush1.msra.mxu0 0.0
    %7004 = vmatprep.subr.mxu0 0.0
    %7005 = vmatpush1.msra.mxu0 0.0
    %7006 = vmatprep.subr.mxu0 0.0
    %7007 = vmatpush1.msra.mxu0 0.0
    %7008 = vmatprep.subr.mxu0 0.0
    %7009 = vmatpush1.msra.mxu0 0.0
    %7010 = vmatprep.subr.mxu0 0.0
    %7011 = vmatpush1.msra.mxu0 0.0
    %7012 = vmatprep.subr.mxu0 0.0
    %7013 = vmatpush1.msra.mxu0 0.0
    %7014 = vmatprep.subr.mxu0 0.0
    %7015 = vmatpush1.msra.mxu0 0.0
    %7016 = vmatprep.subr.mxu0 0.0
    %7017 = vmatpush1.msra.mxu0 0.0
    %7018 = vmatprep.subr.mxu0 0.0
    %7019 = vmatpush1.msra.mxu0 0.0
    %7020 = vmatprep.subr.mxu0 0.0
    %7021 = vmatpush1.msra.mxu0 0.0
    %7022 = vmatprep.mubr.f32.mxu0 0.0
    %7023 = vmatmul.mubr.f32.gmra.mrb[0].mxu0 %v897
    %v7024 = vpop.f32.mrb[0].mxu0
    %v7025 = vadd.f32 0.0, %v7024
    %v7026 = vpop.f32.mrb[0].mxu0
    %v7027 = vadd.f32 0.0, %v7026
    %7028 = vdwg.mxu0
    %v7029 = vmul.f32 %v6954, %v900
    %v7030 = vmul.f32 %v6956, %v901
    %v7033 = vcombine.low %v7029, %v7030
    %v7034 = vcombine.high %v7029, %v7030
    %v7036 = vunpack.c.l.s4 1966171168
    %v7037 = vunpack.c.0.s8 %v7036
    %v7038 = vlaneseq
    %v7039 = vshrl.u32 %v7038, 7
    %v7040 = vsub.s32 %v7037, %v7039
    %v7041 = vrot.slane %v7033, %v7040
    %v7043 = vunpack.c.l.s4 1966171168
    %v7044 = vunpack.c.0.s8 %v7043
    %v7045 = vlaneseq
    %v7046 = vshrl.u32 %v7045, 7
    %v7047 = vsub.s32 %v7044, %v7046
    %v7048 = vrot.slane %v7034, %v7047
    %v7049 = vcombine.high %v7041, %v7041
    %v7050 = vcombine.high %v7048, %v7048
    %v7052 = vunpack.c.l.s4 1966171168
    %v7053 = vunpack.c.0.s8 %v7052
    %v7054 = vlaneseq
    %v7055 = vshrl.u32 %v7054, 7
    %v7056 = vsub.s32 %v7053, %v7055
    %v7057 = vrot.slane %v7041, %v7056
    %v7059 = vunpack.c.l.s4 1966171168
    %v7060 = vunpack.c.0.s8 %v7059
    %v7061 = vlaneseq
    %v7062 = vshrl.u32 %v7061, 7
    %v7063 = vsub.s32 %v7060, %v7062
    %v7064 = vrot.slane %v7048, %v7063
    %v7066 = vunpack.c.l.s4 1966171168
    %v7067 = vunpack.c.0.s8 %v7066
    %v7068 = vlaneseq
    %v7069 = vshrl.u32 %v7068, 7
    %v7070 = vsub.s32 %v7067, %v7069
    %v7071 = vrot.slane %v7049, %v7070
    %v7073 = vunpack.c.l.s4 1966171168
    %v7074 = vunpack.c.0.s8 %v7073
    %v7075 = vlaneseq
    %v7076 = vshrl.u32 %v7075, 7
    %v7077 = vsub.s32 %v7074, %v7076
    %v7078 = vrot.slane %v7050, %v7077
    %v7079 = vcombine.high %v7057, %v7057
    %v7080 = vcombine.high %v7064, %v7064
    %v7081 = vcombine.high %v7071, %v7071
    %v7082 = vcombine.high %v7078, %v7078
    %s7091 = scalar_lea.vmem [#allocation3], 23
    %7092 = vst.msk [vmem:[%s7091] ss:$8 sm:$0x3] %vm1437, %v7057
    %7093 = vst.msk [vmem:[%s7091] ss:$8 sm:$0x0] %vm1437, %v7057
    %s7094 = scalar_lea.vmem [#allocation3], 55
    %7095 = vst.msk [vmem:[%s7094] ss:$8 sm:$0x3] %vm1437, %v7071
    %7096 = vst.msk [vmem:[%s7094] ss:$8 sm:$0x0] %vm1437, %v7071
    %s7097 = scalar_lea.vmem [#allocation3], 87
    %7098 = vst.msk [vmem:[%s7097] ss:$8 sm:$0x3] %vm1437, %v7079
    %7099 = vst.msk [vmem:[%s7097] ss:$8 sm:$0x0] %vm1437, %v7079
    %s7100 = scalar_lea.vmem [#allocation3], 119
    %7101 = vst.msk [vmem:[%s7100] ss:$8 sm:$0x3] %vm1437, %v7081
    %7102 = vst.msk [vmem:[%s7100] ss:$8 sm:$0x0] %vm1437, %v7081
    %s7103 = scalar_lea.vmem [#allocation3], 151
    %7104 = vst.msk [vmem:[%s7103] ss:$8 sm:$0x3] %vm1437, %v7064
    %7105 = vst.msk [vmem:[%s7103] ss:$8 sm:$0x0] %vm1437, %v7064
    %s7106 = scalar_lea.vmem [#allocation3], 183
    %7107 = vst.msk [vmem:[%s7106] ss:$8 sm:$0x3] %vm1437, %v7078
    %7108 = vst.msk [vmem:[%s7106] ss:$8 sm:$0x0] %vm1437, %v7078
    %s7109 = scalar_lea.vmem [#allocation3], 215
    %7110 = vst.msk [vmem:[%s7109] ss:$8 sm:$0x3] %vm1437, %v7080
    %7111 = vst.msk [vmem:[%s7109] ss:$8 sm:$0x0] %vm1437, %v7080
    %s7112 = scalar_lea.vmem [#allocation3], 247
    %7113 = vst.msk [vmem:[%s7112] ss:$8 sm:$0x3] %vm1437, %v7082
    %7114 = vst.msk [vmem:[%s7112] ss:$8 sm:$0x0] %vm1437, %v7082
    %v7117 = vcombine.low %v7025, %v7027
    %v7118 = vcombine.high %v7025, %v7027
    %v7120 = vunpack.c.l.s4 1966171168
    %v7121 = vunpack.c.0.s8 %v7120
    %v7122 = vlaneseq
    %v7123 = vshrl.u32 %v7122, 7
    %v7124 = vsub.s32 %v7121, %v7123
    %v7125 = vrot.slane %v7117, %v7124
    %v7127 = vunpack.c.l.s4 1966171168
    %v7128 = vunpack.c.0.s8 %v7127
    %v7129 = vlaneseq
    %v7130 = vshrl.u32 %v7129, 7
    %v7131 = vsub.s32 %v7128, %v7130
    %v7132 = vrot.slane %v7118, %v7131
    %v7133 = vcombine.high %v7125, %v7125
    %v7134 = vcombine.high %v7132, %v7132
    %v7136 = vunpack.c.l.s4 1966171168
    %v7137 = vunpack.c.0.s8 %v7136
    %v7138 = vlaneseq
    %v7139 = vshrl.u32 %v7138, 7
    %v7140 = vsub.s32 %v7137, %v7139
    %v7141 = vrot.slane %v7125, %v7140
    %v7143 = vunpack.c.l.s4 1966171168
    %v7144 = vunpack.c.0.s8 %v7143
    %v7145 = vlaneseq
    %v7146 = vshrl.u32 %v7145, 7
    %v7147 = vsub.s32 %v7144, %v7146
    %v7148 = vrot.slane %v7132, %v7147
    %v7150 = vunpack.c.l.s4 1966171168
    %v7151 = vunpack.c.0.s8 %v7150
    %v7152 = vlaneseq
    %v7153 = vshrl.u32 %v7152, 7
    %v7154 = vsub.s32 %v7151, %v7153
    %v7155 = vrot.slane %v7133, %v7154
    %v7157 = vunpack.c.l.s4 1966171168
    %v7158 = vunpack.c.0.s8 %v7157
    %v7159 = vlaneseq
    %v7160 = vshrl.u32 %v7159, 7
    %v7161 = vsub.s32 %v7158, %v7160
    %v7162 = vrot.slane %v7134, %v7161
    %v7163 = vcombine.high %v7141, %v7141
    %v7164 = vcombine.high %v7148, %v7148
    %v7165 = vcombine.high %v7155, %v7155
    %v7166 = vcombine.high %v7162, %v7162
    %s7175 = scalar_lea.vmem [#allocation4], 23
    %7176 = vst.msk [vmem:[%s7175] ss:$8 sm:$0x3] %vm1437, %v7141
    %7177 = vst.msk [vmem:[%s7175] ss:$8 sm:$0x0] %vm1437, %v7141
    %s7178 = scalar_lea.vmem [#allocation4], 55
    %7179 = vst.msk [vmem:[%s7178] ss:$8 sm:$0x3] %vm1437, %v7155
    %7180 = vst.msk [vmem:[%s7178] ss:$8 sm:$0x0] %vm1437, %v7155
    %s7181 = scalar_lea.vmem [#allocation4], 87
    %7182 = vst.msk [vmem:[%s7181] ss:$8 sm:$0x3] %vm1437, %v7163
    %7183 = vst.msk [vmem:[%s7181] ss:$8 sm:$0x0] %vm1437, %v7163
    %s7184 = scalar_lea.vmem [#allocation4], 119
    %7185 = vst.msk [vmem:[%s7184] ss:$8 sm:$0x3] %vm1437, %v7165
    %7186 = vst.msk [vmem:[%s7184] ss:$8 sm:$0x0] %vm1437, %v7165
    %s7187 = scalar_lea.vmem [#allocation4], 151
    %7188 = vst.msk [vmem:[%s7187] ss:$8 sm:$0x3] %vm1437, %v7148
    %7189 = vst.msk [vmem:[%s7187] ss:$8 sm:$0x0] %vm1437, %v7148
    %s7190 = scalar_lea.vmem [#allocation4], 183
    %7191 = vst.msk [vmem:[%s7190] ss:$8 sm:$0x3] %vm1437, %v7162
    %7192 = vst.msk [vmem:[%s7190] ss:$8 sm:$0x0] %vm1437, %v7162
    %s7193 = scalar_lea.vmem [#allocation4], 215
    %7194 = vst.msk [vmem:[%s7193] ss:$8 sm:$0x3] %vm1437, %v7164
    %7195 = vst.msk [vmem:[%s7193] ss:$8 sm:$0x0] %vm1437, %v7164
    %s7196 = scalar_lea.vmem [#allocation4], 247
    %7197 = vst.msk [vmem:[%s7196] ss:$8 sm:$0x3] %vm1437, %v7166
    %7198 = vst.msk [vmem:[%s7196] ss:$8 sm:$0x0] %vm1437, %v7166
    %v7199 = vld [vmem:[#allocation2] sm:$0xff]
    %v7200 = vld [vmem:[#allocation2 + $0x8] sm:$0xff]
    %v7201 = vld [vmem:[#allocation2 + $0x10] sm:$0xff]
    %v7202 = vld [vmem:[#allocation2 + $0x18] sm:$0xff]
    %v7203 = vmul.f32 %v7199, 0.0
    %v7204 = vmul.f32 %v7200, 0.0
    %v7205 = vmul.f32 %v7201, 0.0
    %v7206 = vmul.f32 %v7202, 0.0
    %v7207 = vld [vmem:[#allocation3] sm:$0xff]
    %v7208 = vld [vmem:[#allocation3 + $0x8] sm:$0xff]
    %v7209 = vld [vmem:[#allocation3 + $0x10] sm:$0xff]
    %v7210 = vld [vmem:[#allocation3 + $0x18] sm:$0xff]
    %v7211 = vadd.f32 %v7203, %v7207
    %v7212 = vadd.f32 %v7204, %v7208
    %v7213 = vadd.f32 %v7205, %v7209
    %v7214 = vadd.f32 %v7206, %v7210
    %v7215 = vld [vmem:[#allocation4] sm:$0xff]
    %v7216 = vld [vmem:[#allocation4 + $0x8] sm:$0xff]
    %v7217 = vld [vmem:[#allocation4 + $0x10] sm:$0xff]
    %v7218 = vld [vmem:[#allocation4 + $0x18] sm:$0xff]
    %v7219 = vmul.f32 %v7215, %v7211
    %v7220 = vmul.f32 %v7216, %v7212
    %v7221 = vmul.f32 %v7217, %v7213
    %v7222 = vmul.f32 %v7218, %v7214
    %v7223 = vadd.f32 %v7219, %v7221
    %v7224 = vrot.slane %v7223, 4
    %v7225 = vadd.f32 %v7223, %v7224
    %v7226 = vrot.slane %v7225, 2
    %v7227 = vadd.f32 %v7225, %v7226
    %v7228 = vrot.slane %v7227, 1
    %v7229 = vadd.f32 %v7227, %v7228
    %v7230 = vadd.f32 %v7220, %v7222
    %v7231 = vrot.slane %v7230, 4
    %v7232 = vadd.f32 %v7230, %v7231
    %v7233 = vrot.slane %v7232, 2
    %v7234 = vadd.f32 %v7232, %v7233
    %v7235 = vrot.slane %v7234, 1
    %v7236 = vadd.f32 %v7234, %v7235
    %v7239 = vcombine.low %v7229, %v7236
    %v7241 = vunpack.c.l.s4 1966171168
    %v7242 = vunpack.c.0.s8 %v7241
    %v7243 = vlaneseq
    %v7244 = vshrl.u32 %v7243, 7
    %v7245 = vsub.s32 %v7242, %v7244
    %v7246 = vrot.slane %v7239, %v7245
    %v7248 = vunpack.c.l.s4 1966171168
    %v7249 = vunpack.c.0.s8 %v7248
    %v7250 = vlaneseq
    %v7251 = vshrl.u32 %v7250, 7
    %v7252 = vsub.s32 %v7249, %v7251
    %v7253 = vrot.slane %v7246, %v7252
    %7255 = vst.msk [vmem:[#allocation5] ss:$8 sm:$0x3] %vm1437, %v7253
    %7256 = vst.msk [vmem:[#allocation5] ss:$8 sm:$0x0] %vm1437, %v7253
    %s7257 = scalar_lea.vmem [#allocation2], 32
    %v7258 = vld [vmem:[%s7257] sm:$0xff]
    %v7259 = vld [vmem:[%s7257 + $0x8] sm:$0xff]
    %v7260 = vld [vmem:[%s7257 + $0x10] sm:$0xff]
    %v7261 = vld [vmem:[%s7257 + $0x18] sm:$0xff]
    %v7262 = vmul.f32 %v7258, %v7211
    %v7263 = vmul.f32 %v7259, %v7212
    %v7264 = vmul.f32 %v7260, %v7213
    %v7265 = vmul.f32 %v7261, %v7214
    %s7266 = scalar_lea.vmem [#allocation3], 32
    %v7267 = vld [vmem:[%s7266] sm:$0xff]
    %v7268 = vld [vmem:[%s7266 + $0x8] sm:$0xff]
    %v7269 = vld [vmem:[%s7266 + $0x10] sm:$0xff]
    %v7270 = vld [vmem:[%s7266 + $0x18] sm:$0xff]
    %v7271 = vadd.f32 %v7262, %v7267
    %v7272 = vadd.f32 %v7263, %v7268
    %v7273 = vadd.f32 %v7264, %v7269
    %v7274 = vadd.f32 %v7265, %v7270
    %s7275 = scalar_lea.vmem [#allocation4], 32
    %v7276 = vld [vmem:[%s7275] sm:$0xff]
    %v7277 = vld [vmem:[%s7275 + $0x8] sm:$0xff]
    %v7278 = vld [vmem:[%s7275 + $0x10] sm:$0xff]
    %v7279 = vld [vmem:[%s7275 + $0x18] sm:$0xff]
    %v7280 = vmul.f32 %v7276, %v7271
    %v7281 = vmul.f32 %v7277, %v7272
    %v7282 = vmul.f32 %v7278, %v7273
    %v7283 = vmul.f32 %v7279, %v7274
    %v7284 = vadd.f32 %v7280, %v7282
    %v7285 = vrot.slane %v7284, 4
    %v7286 = vadd.f32 %v7284, %v7285
    %v7287 = vrot.slane %v7286, 2
    %v7288 = vadd.f32 %v7286, %v7287
    %v7289 = vrot.slane %v7288, 1
    %v7290 = vadd.f32 %v7288, %v7289
    %v7291 = vadd.f32 %v7281, %v7283
    %v7292 = vrot.slane %v7291, 4
    %v7293 = vadd.f32 %v7291, %v7292
    %v7294 = vrot.slane %v7293, 2
    %v7295 = vadd.f32 %v7293, %v7294
    %v7296 = vrot.slane %v7295, 1
    %v7297 = vadd.f32 %v7295, %v7296
    %v7300 = vcombine.low %v7290, %v7297
    %v7302 = vunpack.c.l.s4 1966171168
    %v7303 = vunpack.c.0.s8 %v7302
    %v7304 = vlaneseq
    %v7305 = vshrl.u32 %v7304, 7
    %v7306 = vsub.s32 %v7303, %v7305
    %v7307 = vrot.slane %v7300, %v7306
    %v7309 = vunpack.c.l.s4 1966171168
    %v7310 = vunpack.c.0.s8 %v7309
    %v7311 = vlaneseq
    %v7312 = vshrl.u32 %v7311, 7
    %v7313 = vsub.s32 %v7310, %v7312
    %v7314 = vrot.slane %v7307, %v7313
    %s7316 = scalar_lea.vmem [#allocation5], 1
    %7317 = vst.msk [vmem:[%s7316] ss:$8 sm:$0x3] %vm1437, %v7314
    %7318 = vst.msk [vmem:[%s7316] ss:$8 sm:$0x0] %vm1437, %v7314
    %s7319 = scalar_lea.vmem [#allocation2], 64
    %v7320 = vld [vmem:[%s7319] sm:$0xff]
    %v7321 = vld [vmem:[%s7319 + $0x8] sm:$0xff]
    %v7322 = vld [vmem:[%s7319 + $0x10] sm:$0xff]
    %v7323 = vld [vmem:[%s7319 + $0x18] sm:$0xff]
    %v7324 = vmul.f32 %v7320, %v7271
    %v7325 = vmul.f32 %v7321, %v7272
    %v7326 = vmul.f32 %v7322, %v7273
    %v7327 = vmul.f32 %v7323, %v7274
    %s7328 = scalar_lea.vmem [#allocation3], 64
    %v7329 = vld [vmem:[%s7328] sm:$0xff]
    %v7330 = vld [vmem:[%s7328 + $0x8] sm:$0xff]
    %v7331 = vld [vmem:[%s7328 + $0x10] sm:$0xff]
    %v7332 = vld [vmem:[%s7328 + $0x18] sm:$0xff]
    %v7333 = vadd.f32 %v7324, %v7329
    %v7334 = vadd.f32 %v7325, %v7330
    %v7335 = vadd.f32 %v7326, %v7331
    %v7336 = vadd.f32 %v7327, %v7332
    %s7337 = scalar_lea.vmem [#allocation4], 64
    %v7338 = vld [vmem:[%s7337] sm:$0xff]
    %v7339 = vld [vmem:[%s7337 + $0x8] sm:$0xff]
    %v7340 = vld [vmem:[%s7337 + $0x10] sm:$0xff]
    %v7341 = vld [vmem:[%s7337 + $0x18] sm:$0xff]
    %v7342 = vmul.f32 %v7338, %v7333
    %v7343 = vmul.f32 %v7339, %v7334
    %v7344 = vmul.f32 %v7340, %v7335
    %v7345 = vmul.f32 %v7341, %v7336
    %v7346 = vadd.f32 %v7342, %v7344
    %v7347 = vrot.slane %v7346, 4
    %v7348 = vadd.f32 %v7346, %v7347
    %v7349 = vrot.slane %v7348, 2
    %v7350 = vadd.f32 %v7348, %v7349
    %v7351 = vrot.slane %v7350, 1
    %v7352 = vadd.f32 %v7350, %v7351
    %v7353 = vadd.f32 %v7343, %v7345
    %v7354 = vrot.slane %v7353, 4
    %v7355 = vadd.f32 %v7353, %v7354
    %v7356 = vrot.slane %v7355, 2
    %v7357 = vadd.f32 %v7355, %v7356
    %v7358 = vrot.slane %v7357, 1
    %v7359 = vadd.f32 %v7357, %v7358
    %v7362 = vcombine.low %v7352, %v7359
    %v7364 = vunpack.c.l.s4 1966171168
    %v7365 = vunpack.c.0.s8 %v7364
    %v7366 = vlaneseq
    %v7367 = vshrl.u32 %v7366, 7
    %v7368 = vsub.s32 %v7365, %v7367
    %v7369 = vrot.slane %v7362, %v7368
    %v7371 = vunpack.c.l.s4 1966171168
    %v7372 = vunpack.c.0.s8 %v7371
    %v7373 = vlaneseq
    %v7374 = vshrl.u32 %v7373, 7
    %v7375 = vsub.s32 %v7372, %v7374
    %v7376 = vrot.slane %v7369, %v7375
    %s7378 = scalar_lea.vmem [#allocation5], 2
    %7379 = vst.msk [vmem:[%s7378] ss:$8 sm:$0x3] %vm1437, %v7376
    %7380 = vst.msk [vmem:[%s7378] ss:$8 sm:$0x0] %vm1437, %v7376
    %s7381 = scalar_lea.vmem [#allocation2], 96
    %v7382 = vld [vmem:[%s7381] sm:$0xff]
    %v7383 = vld [vmem:[%s7381 + $0x8] sm:$0xff]
    %v7384 = vld [vmem:[%s7381 + $0x10] sm:$0xff]
    %v7385 = vld [vmem:[%s7381 + $0x18] sm:$0xff]
    %v7386 = vmul.f32 %v7382, %v7333
    %v7387 = vmul.f32 %v7383, %v7334
    %v7388 = vmul.f32 %v7384, %v7335
    %v7389 = vmul.f32 %v7385, %v7336
    %s7390 = scalar_lea.vmem [#allocation3], 96
    %v7391 = vld [vmem:[%s7390] sm:$0xff]
    %v7392 = vld [vmem:[%s7390 + $0x8] sm:$0xff]
    %v7393 = vld [vmem:[%s7390 + $0x10] sm:$0xff]
    %v7394 = vld [vmem:[%s7390 + $0x18] sm:$0xff]
    %v7395 = vadd.f32 %v7386, %v7391
    %v7396 = vadd.f32 %v7387, %v7392
    %v7397 = vadd.f32 %v7388, %v7393
    %v7398 = vadd.f32 %v7389, %v7394
    %s7399 = scalar_lea.vmem [#allocation4], 96
    %v7400 = vld [vmem:[%s7399] sm:$0xff]
    %v7401 = vld [vmem:[%s7399 + $0x8] sm:$0xff]
    %v7402 = vld [vmem:[%s7399 + $0x10] sm:$0xff]
    %v7403 = vld [vmem:[%s7399 + $0x18] sm:$0xff]
    %v7404 = vmul.f32 %v7400, %v7395
    %v7405 = vmul.f32 %v7401, %v7396
    %v7406 = vmul.f32 %v7402, %v7397
    %v7407 = vmul.f32 %v7403, %v7398
    %v7408 = vadd.f32 %v7404, %v7406
    %v7409 = vrot.slane %v7408, 4
    %v7410 = vadd.f32 %v7408, %v7409
    %v7411 = vrot.slane %v7410, 2
    %v7412 = vadd.f32 %v7410, %v7411
    %v7413 = vrot.slane %v7412, 1
    %v7414 = vadd.f32 %v7412, %v7413
    %v7415 = vadd.f32 %v7405, %v7407
    %v7416 = vrot.slane %v7415, 4
    %v7417 = vadd.f32 %v7415, %v7416
    %v7418 = vrot.slane %v7417, 2
    %v7419 = vadd.f32 %v7417, %v7418
    %v7420 = vrot.slane %v7419, 1
    %v7421 = vadd.f32 %v7419, %v7420
    %v7424 = vcombine.low %v7414, %v7421
    %v7426 = vunpack.c.l.s4 1966171168
    %v7427 = vunpack.c.0.s8 %v7426
    %v7428 = vlaneseq
    %v7429 = vshrl.u32 %v7428, 7
    %v7430 = vsub.s32 %v7427, %v7429
    %v7431 = vrot.slane %v7424, %v7430
    %v7433 = vunpack.c.l.s4 1966171168
    %v7434 = vunpack.c.0.s8 %v7433
    %v7435 = vlaneseq
    %v7436 = vshrl.u32 %v7435, 7
    %v7437 = vsub.s32 %v7434, %v7436
    %v7438 = vrot.slane %v7431, %v7437
    %s7440 = scalar_lea.vmem [#allocation5], 3
    %7441 = vst.msk [vmem:[%s7440] ss:$8 sm:$0x3] %vm1437, %v7438
    %7442 = vst.msk [vmem:[%s7440] ss:$8 sm:$0x0] %vm1437, %v7438
    %s7443 = scalar_lea.vmem [#allocation2], 128
    %v7444 = vld [vmem:[%s7443] sm:$0xff]
    %v7445 = vld [vmem:[%s7443 + $0x8] sm:$0xff]
    %v7446 = vld [vmem:[%s7443 + $0x10] sm:$0xff]
    %v7447 = vld [vmem:[%s7443 + $0x18] sm:$0xff]
    %v7448 = vmul.f32 %v7444, %v7395
    %v7449 = vmul.f32 %v7445, %v7396
    %v7450 = vmul.f32 %v7446, %v7397
    %v7451 = vmul.f32 %v7447, %v7398
    %s7452 = scalar_lea.vmem [#allocation3], 128
    %v7453 = vld [vmem:[%s7452] sm:$0xff]
    %v7454 = vld [vmem:[%s7452 + $0x8] sm:$0xff]
    %v7455 = vld [vmem:[%s7452 + $0x10] sm:$0xff]
    %v7456 = vld [vmem:[%s7452 + $0x18] sm:$0xff]
    %v7457 = vadd.f32 %v7448, %v7453
    %v7458 = vadd.f32 %v7449, %v7454
    %v7459 = vadd.f32 %v7450, %v7455
    %v7460 = vadd.f32 %v7451, %v7456
    %s7461 = scalar_lea.vmem [#allocation4], 128
    %v7462 = vld [vmem:[%s7461] sm:$0xff]
    %v7463 = vld [vmem:[%s7461 + $0x8] sm:$0xff]
    %v7464 = vld [vmem:[%s7461 + $0x10] sm:$0xff]
    %v7465 = vld [vmem:[%s7461 + $0x18] sm:$0xff]
    %v7466 = vmul.f32 %v7462, %v7457
    %v7467 = vmul.f32 %v7463, %v7458
    %v7468 = vmul.f32 %v7464, %v7459
    %v7469 = vmul.f32 %v7465, %v7460
    %v7470 = vadd.f32 %v7466, %v7468
    %v7471 = vrot.slane %v7470, 4
    %v7472 = vadd.f32 %v7470, %v7471
    %v7473 = vrot.slane %v7472, 2
    %v7474 = vadd.f32 %v7472, %v7473
    %v7475 = vrot.slane %v7474, 1
    %v7476 = vadd.f32 %v7474, %v7475
    %v7477 = vadd.f32 %v7467, %v7469
    %v7478 = vrot.slane %v7477, 4
    %v7479 = vadd.f32 %v7477, %v7478
    %v7480 = vrot.slane %v7479, 2
    %v7481 = vadd.f32 %v7479, %v7480
    %v7482 = vrot.slane %v7481, 1
    %v7483 = vadd.f32 %v7481, %v7482
    %v7486 = vcombine.low %v7476, %v7483
    %v7488 = vunpack.c.l.s4 1966171168
    %v7489 = vunpack.c.0.s8 %v7488
    %v7490 = vlaneseq
    %v7491 = vshrl.u32 %v7490, 7
    %v7492 = vsub.s32 %v7489, %v7491
    %v7493 = vrot.slane %v7486, %v7492
    %v7495 = vunpack.c.l.s4 1966171168
    %v7496 = vunpack.c.0.s8 %v7495
    %v7497 = vlaneseq
    %v7498 = vshrl.u32 %v7497, 7
    %v7499 = vsub.s32 %v7496, %v7498
    %v7500 = vrot.slane %v7493, %v7499
    %s7502 = scalar_lea.vmem [#allocation5], 4
    %7503 = vst.msk [vmem:[%s7502] ss:$8 sm:$0x3] %vm1437, %v7500
    %7504 = vst.msk [vmem:[%s7502] ss:$8 sm:$0x0] %vm1437, %v7500
    %s7505 = scalar_lea.vmem [#allocation2], 160
    %v7506 = vld [vmem:[%s7505] sm:$0xff]
    %v7507 = vld [vmem:[%s7505 + $0x8] sm:$0xff]
    %v7508 = vld [vmem:[%s7505 + $0x10] sm:$0xff]
    %v7509 = vld [vmem:[%s7505 + $0x18] sm:$0xff]
    %v7510 = vmul.f32 %v7506, %v7457
    %v7511 = vmul.f32 %v7507, %v7458
    %v7512 = vmul.f32 %v7508, %v7459
    %v7513 = vmul.f32 %v7509, %v7460
    %s7514 = scalar_lea.vmem [#allocation3], 160
    %v7515 = vld [vmem:[%s7514] sm:$0xff]
    %v7516 = vld [vmem:[%s7514 + $0x8] sm:$0xff]
    %v7517 = vld [vmem:[%s7514 + $0x10] sm:$0xff]
    %v7518 = vld [vmem:[%s7514 + $0x18] sm:$0xff]
    %v7519 = vadd.f32 %v7510, %v7515
    %v7520 = vadd.f32 %v7511, %v7516
    %v7521 = vadd.f32 %v7512, %v7517
    %v7522 = vadd.f32 %v7513, %v7518
    %s7523 = scalar_lea.vmem [#allocation4], 160
    %v7524 = vld [vmem:[%s7523] sm:$0xff]
    %v7525 = vld [vmem:[%s7523 + $0x8] sm:$0xff]
    %v7526 = vld [vmem:[%s7523 + $0x10] sm:$0xff]
    %v7527 = vld [vmem:[%s7523 + $0x18] sm:$0xff]
    %v7528 = vmul.f32 %v7524, %v7519
    %v7529 = vmul.f32 %v7525, %v7520
    %v7530 = vmul.f32 %v7526, %v7521
    %v7531 = vmul.f32 %v7527, %v7522
    %v7532 = vadd.f32 %v7528, %v7530
    %v7533 = vrot.slane %v7532, 4
    %v7534 = vadd.f32 %v7532, %v7533
    %v7535 = vrot.slane %v7534, 2
    %v7536 = vadd.f32 %v7534, %v7535
    %v7537 = vrot.slane %v7536, 1
    %v7538 = vadd.f32 %v7536, %v7537
    %v7539 = vadd.f32 %v7529, %v7531
    %v7540 = vrot.slane %v7539, 4
    %v7541 = vadd.f32 %v7539, %v7540
    %v7542 = vrot.slane %v7541, 2
    %v7543 = vadd.f32 %v7541, %v7542
    %v7544 = vrot.slane %v7543, 1
    %v7545 = vadd.f32 %v7543, %v7544
    %v7548 = vcombine.low %v7538, %v7545
    %v7550 = vunpack.c.l.s4 1966171168
    %v7551 = vunpack.c.0.s8 %v7550
    %v7552 = vlaneseq
    %v7553 = vshrl.u32 %v7552, 7
    %v7554 = vsub.s32 %v7551, %v7553
    %v7555 = vrot.slane %v7548, %v7554
    %v7557 = vunpack.c.l.s4 1966171168
    %v7558 = vunpack.c.0.s8 %v7557
    %v7559 = vlaneseq
    %v7560 = vshrl.u32 %v7559, 7
    %v7561 = vsub.s32 %v7558, %v7560
    %v7562 = vrot.slane %v7555, %v7561
    %s7564 = scalar_lea.vmem [#allocation5], 5
    %7565 = vst.msk [vmem:[%s7564] ss:$8 sm:$0x3] %vm1437, %v7562
    %7566 = vst.msk [vmem:[%s7564] ss:$8 sm:$0x0] %vm1437, %v7562
    %s7567 = scalar_lea.vmem [#allocation2], 192
    %v7568 = vld [vmem:[%s7567] sm:$0xff]
    %v7569 = vld [vmem:[%s7567 + $0x8] sm:$0xff]
    %v7570 = vld [vmem:[%s7567 + $0x10] sm:$0xff]
    %v7571 = vld [vmem:[%s7567 + $0x18] sm:$0xff]
    %v7572 = vmul.f32 %v7568, %v7519
    %v7573 = vmul.f32 %v7569, %v7520
    %v7574 = vmul.f32 %v7570, %v7521
    %v7575 = vmul.f32 %v7571, %v7522
    %s7576 = scalar_lea.vmem [#allocation3], 192
    %v7577 = vld [vmem:[%s7576] sm:$0xff]
    %v7578 = vld [vmem:[%s7576 + $0x8] sm:$0xff]
    %v7579 = vld [vmem:[%s7576 + $0x10] sm:$0xff]
    %v7580 = vld [vmem:[%s7576 + $0x18] sm:$0xff]
    %v7581 = vadd.f32 %v7572, %v7577
    %v7582 = vadd.f32 %v7573, %v7578
    %v7583 = vadd.f32 %v7574, %v7579
    %v7584 = vadd.f32 %v7575, %v7580
    %s7585 = scalar_lea.vmem [#allocation4], 192
    %v7586 = vld [vmem:[%s7585] sm:$0xff]
    %v7587 = vld [vmem:[%s7585 + $0x8] sm:$0xff]
    %v7588 = vld [vmem:[%s7585 + $0x10] sm:$0xff]
    %v7589 = vld [vmem:[%s7585 + $0x18] sm:$0xff]
    %v7590 = vmul.f32 %v7586, %v7581
    %v7591 = vmul.f32 %v7587, %v7582
    %v7592 = vmul.f32 %v7588, %v7583
    %v7593 = vmul.f32 %v7589, %v7584
    %v7594 = vadd.f32 %v7590, %v7592
    %v7595 = vrot.slane %v7594, 4
    %v7596 = vadd.f32 %v7594, %v7595
    %v7597 = vrot.slane %v7596, 2
    %v7598 = vadd.f32 %v7596, %v7597
    %v7599 = vrot.slane %v7598, 1
    %v7600 = vadd.f32 %v7598, %v7599
    %v7601 = vadd.f32 %v7591, %v7593
    %v7602 = vrot.slane %v7601, 4
    %v7603 = vadd.f32 %v7601, %v7602
    %v7604 = vrot.slane %v7603, 2
    %v7605 = vadd.f32 %v7603, %v7604
    %v7606 = vrot.slane %v7605, 1
    %v7607 = vadd.f32 %v7605, %v7606
    %v7610 = vcombine.low %v7600, %v7607
    %v7612 = vunpack.c.l.s4 1966171168
    %v7613 = vunpack.c.0.s8 %v7612
    %v7614 = vlaneseq
    %v7615 = vshrl.u32 %v7614, 7
    %v7616 = vsub.s32 %v7613, %v7615
    %v7617 = vrot.slane %v7610, %v7616
    %v7619 = vunpack.c.l.s4 1966171168
    %v7620 = vunpack.c.0.s8 %v7619
    %v7621 = vlaneseq
    %v7622 = vshrl.u32 %v7621, 7
    %v7623 = vsub.s32 %v7620, %v7622
    %v7624 = vrot.slane %v7617, %v7623
    %s7626 = scalar_lea.vmem [#allocation5], 6
    %7627 = vst.msk [vmem:[%s7626] ss:$8 sm:$0x3] %vm1437, %v7624
    %7628 = vst.msk [vmem:[%s7626] ss:$8 sm:$0x0] %vm1437, %v7624
    %s7629 = scalar_lea.vmem [#allocation2], 224
    %v7630 = vld [vmem:[%s7629] sm:$0xff]
    %v7631 = vld [vmem:[%s7629 + $0x8] sm:$0xff]
    %v7632 = vld [vmem:[%s7629 + $0x10] sm:$0xff]
    %v7633 = vld [vmem:[%s7629 + $0x18] sm:$0xff]
    %v7634 = vmul.f32 %v7630, %v7581
    %v7635 = vmul.f32 %v7631, %v7582
    %v7636 = vmul.f32 %v7632, %v7583
    %v7637 = vmul.f32 %v7633, %v7584
    %s7638 = scalar_lea.vmem [#allocation3], 224
    %v7639 = vld [vmem:[%s7638] sm:$0xff]
    %v7640 = vld [vmem:[%s7638 + $0x8] sm:$0xff]
    %v7641 = vld [vmem:[%s7638 + $0x10] sm:$0xff]
    %v7642 = vld [vmem:[%s7638 + $0x18] sm:$0xff]
    %v7643 = vadd.f32 %v7634, %v7639
    %v7644 = vadd.f32 %v7635, %v7640
    %v7645 = vadd.f32 %v7636, %v7641
    %v7646 = vadd.f32 %v7637, %v7642
    %s7647 = scalar_lea.vmem [#allocation4], 224
    %v7648 = vld [vmem:[%s7647] sm:$0xff]
    %v7649 = vld [vmem:[%s7647 + $0x8] sm:$0xff]
    %v7650 = vld [vmem:[%s7647 + $0x10] sm:$0xff]
    %v7651 = vld [vmem:[%s7647 + $0x18] sm:$0xff]
    %v7652 = vmul.f32 %v7648, %v7643
    %v7653 = vmul.f32 %v7649, %v7644
    %v7654 = vmul.f32 %v7650, %v7645
    %v7655 = vmul.f32 %v7651, %v7646
    %v7656 = vadd.f32 %v7652, %v7654
    %v7657 = vrot.slane %v7656, 4
    %v7658 = vadd.f32 %v7656, %v7657
    %v7659 = vrot.slane %v7658, 2
    %v7660 = vadd.f32 %v7658, %v7659
    %v7661 = vrot.slane %v7660, 1
    %v7662 = vadd.f32 %v7660, %v7661
    %v7663 = vadd.f32 %v7653, %v7655
    %v7664 = vrot.slane %v7663, 4
    %v7665 = vadd.f32 %v7663, %v7664
    %v7666 = vrot.slane %v7665, 2
    %v7667 = vadd.f32 %v7665, %v7666
    %v7668 = vrot.slane %v7667, 1
    %v7669 = vadd.f32 %v7667, %v7668
    %v7672 = vcombine.low %v7662, %v7669
    %v7674 = vunpack.c.l.s4 1966171168
    %v7675 = vunpack.c.0.s8 %v7674
    %v7676 = vlaneseq
    %v7677 = vshrl.u32 %v7676, 7
    %v7678 = vsub.s32 %v7675, %v7677
    %v7679 = vrot.slane %v7672, %v7678
    %v7681 = vunpack.c.l.s4 1966171168
    %v7682 = vunpack.c.0.s8 %v7681
    %v7683 = vlaneseq
    %v7684 = vshrl.u32 %v7683, 7
    %v7685 = vsub.s32 %v7682, %v7684
    %v7686 = vrot.slane %v7679, %v7685
    %s7688 = scalar_lea.vmem [#allocation5], 7
    %7689 = vst.msk [vmem:[%s7688] ss:$8 sm:$0x3] %vm1437, %v7686
    %7690 = vst.msk [vmem:[%s7688] ss:$8 sm:$0x0] %vm1437, %v7686
    %v7691 = vld [vmem:[#allocation5] sm:$0xff]
    %v7692 = vld [vmem:[#allocation5 + $0x8] sm:$0xff]
    %v7693 = vld [vmem:[#allocation23] sm:$0x3]
    %v7695 = vlaneseq
    %v7696 = vshrl.u32 %v7695, 7
    %v7697 = vsub.s32 0, %v7696
    %v7698 = vrot.slane %v7693, %v7697
    %v7699 = vlaneseq
    %v7700 = vshrl.u32 %v7699, 7
    %v7701 = vsub.s32 1, %v7700
    %v7702 = vrot.slane %v7693, %v7701
    %v7705 = vmul.f32 %v621, %v7698
    %v7706 = vmul.f32 %v622, %v7702
    %v7707 = vadd.f32 %v7691, %v7705
    %v7708 = vadd.f32 %v7692, %v7706
    %v7709 = vxor.u32 %v509, 2147483648
    %v7710 = vxor.u32 %v511, 2147483648
    %v7711 = vmul.f32 %v7709, 1.442695
    %v7712 = vpow.pop %v7711
    %v7713 = vmul.f32 %v7710, 1.442695
    %v7714 = vpow.pop %v7713
    %v7715 = vadd.f32 %v7712, 1.0
    %v7716 = vadd.f32 %v7714, 1.0
    %v7717 = vrcp.pop %v7715
    %v7718 = vmul.f32 1.0, %v7717
    %v7719 = vrcp.pop %v7716
    %v7720 = vmul.f32 1.0, %v7719
    %v7721 = vmul.f32 %v509, %v7718
    %v7722 = vmul.f32 %v511, %v7720
    %v7723 = vmul.f32 %v7707, %v7721
    %v7724 = vmul.f32 %v7708, %v7722
    %v7725 = vld [vmem:[#allocation24] sm:$0xff]
    %v7726 = vld [vmem:[#allocation24 + $0x8] sm:$0xff]
    %v7727 = vld [vmem:[#allocation24 + $0x10] sm:$0xff]
    %v7728 = vld [vmem:[#allocation24 + $0x18] sm:$0xff]
    %v7729 = vld [vmem:[#allocation24 + $0x20] sm:$0xff]
    %v7730 = vld [vmem:[#allocation24 + $0x28] sm:$0xff]
    %v7731 = vld [vmem:[#allocation24 + $0x30] sm:$0xff]
    %v7732 = vld [vmem:[#allocation24 + $0x38] sm:$0xff]
    %v7733 = vld [vmem:[#allocation24 + $0x40] sm:$0xff]
    %v7734 = vld [vmem:[#allocation24 + $0x48] sm:$0xff]
    %v7735 = vld [vmem:[#allocation24 + $0x50] sm:$0xff]
    %v7736 = vld [vmem:[#allocation24 + $0x58] sm:$0xff]
    %v7737 = vld [vmem:[#allocation24 + $0x60] sm:$0xff]
    %v7738 = vld [vmem:[#allocation24 + $0x68] sm:$0xff]
    %v7739 = vld [vmem:[#allocation24 + $0x70] sm:$0xff]
    %v7740 = vld [vmem:[#allocation24 + $0x78] sm:$0xff]
    %v7741 = vld [vmem:[#allocation24 + $0x80] sm:$0xff]
    %v7742 = vld [vmem:[#allocation24 + $0x88] sm:$0xff]
    %v7743 = vld [vmem:[#allocation24 + $0x90] sm:$0xff]
    %v7744 = vld [vmem:[#allocation24 + $0x98] sm:$0xff]
    %v7745 = vld [vmem:[#allocation24 + $0xa0] sm:$0xff]
    %v7746 = vld [vmem:[#allocation24 + $0xa8] sm:$0xff]
    %v7747 = vld [vmem:[#allocation24 + $0xb0] sm:$0xff]
    %v7748 = vld [vmem:[#allocation24 + $0xb8] sm:$0xff]
    %v7749 = vld [vmem:[#allocation24 + $0xc0] sm:$0xff]
    %v7750 = vld [vmem:[#allocation24 + $0xc8] sm:$0xff]
    %v7751 = vld [vmem:[#allocation24 + $0xd0] sm:$0xff]
    %v7752 = vld [vmem:[#allocation24 + $0xd8] sm:$0xff]
    %v7753 = vld [vmem:[#allocation24 + $0xe0] sm:$0xff]
    %v7754 = vld [vmem:[#allocation24 + $0xe8] sm:$0xff]
    %v7755 = vld [vmem:[#allocation24 + $0xf0] sm:$0xff]
    %v7756 = vld [vmem:[#allocation24 + $0xf8] sm:$0xff]
    %7757 = vmatprep.subr.mxu0 0.0
    %7758 = vmatpush1.msra.mxu0 %v7725
    %7759 = vmatprep.subr.mxu0 0.0
    %7760 = vmatpush1.msra.mxu0 %v7726
    %7761 = vmatprep.subr.mxu0 0.0
    %7762 = vmatpush1.msra.mxu0 %v7727
    %7763 = vmatprep.subr.mxu0 0.0
    %7764 = vmatpush1.msra.mxu0 %v7728
    %7765 = vmatprep.subr.mxu0 0.0
    %7766 = vmatpush1.msra.mxu0 %v7729
    %7767 = vmatprep.subr.mxu0 0.0
    %7768 = vmatpush1.msra.mxu0 %v7730
    %7769 = vmatprep.subr.mxu0 0.0
    %7770 = vmatpush1.msra.mxu0 %v7731
    %7771 = vmatprep.subr.mxu0 0.0
    %7772 = vmatpush1.msra.mxu0 %v7732
    %7773 = vmatprep.subr.mxu0 0.0
    %7774 = vmatpush1.msra.mxu0 %v7733
    %7775 = vmatprep.subr.mxu0 0.0
    %7776 = vmatpush1.msra.mxu0 %v7734
    %7777 = vmatprep.subr.mxu0 0.0
    %7778 = vmatpush1.msra.mxu0 %v7735
    %7779 = vmatprep.subr.mxu0 0.0
    %7780 = vmatpush1.msra.mxu0 %v7736
    %7781 = vmatprep.subr.mxu0 0.0
    %7782 = vmatpush1.msra.mxu0 %v7737
    %7783 = vmatprep.subr.mxu0 0.0
    %7784 = vmatpush1.msra.mxu0 %v7738
    %7785 = vmatprep.subr.mxu0 0.0
    %7786 = vmatpush1.msra.mxu0 %v7739
    %7787 = vmatprep.subr.mxu0 0.0
    %7788 = vmatpush1.msra.mxu0 %v7740
    %7789 = vmatprep.subr.mxu0 0.0
    %7790 = vmatpush1.msra.mxu0 %v7741
    %7791 = vmatprep.subr.mxu0 0.0
    %7792 = vmatpush1.msra.mxu0 %v7742
    %7793 = vmatprep.subr.mxu0 0.0
    %7794 = vmatpush1.msra.mxu0 %v7743
    %7795 = vmatprep.subr.mxu0 0.0
    %7796 = vmatpush1.msra.mxu0 %v7744
    %7797 = vmatprep.subr.mxu0 0.0
    %7798 = vmatpush1.msra.mxu0 %v7745
    %7799 = vmatprep.subr.mxu0 0.0
    %7800 = vmatpush1.msra.mxu0 %v7746
    %7801 = vmatprep.subr.mxu0 0.0
    %7802 = vmatpush1.msra.mxu0 %v7747
    %7803 = vmatprep.subr.mxu0 0.0
    %7804 = vmatpush1.msra.mxu0 %v7748
    %7805 = vmatprep.subr.mxu0 0.0
    %7806 = vmatpush1.msra.mxu0 %v7749
    %7807 = vmatprep.subr.mxu0 0.0
    %7808 = vmatpush1.msra.mxu0 %v7750
    %7809 = vmatprep.subr.mxu0 0.0
    %7810 = vmatpush1.msra.mxu0 %v7751
    %7811 = vmatprep.subr.mxu0 0.0
    %7812 = vmatpush1.msra.mxu0 %v7752
    %7813 = vmatprep.subr.mxu0 0.0
    %7814 = vmatpush1.msra.mxu0 %v7753
    %7815 = vmatprep.subr.mxu0 0.0
    %7816 = vmatpush1.msra.mxu0 %v7754
    %7817 = vmatprep.subr.mxu0 0.0
    %7818 = vmatpush1.msra.mxu0 %v7755
    %7819 = vmatprep.subr.mxu0 0.0
    %7820 = vmatpush1.msra.mxu0 %v7756
    %7821 = vmatprep.mubr.f32.mxu0 %v7724
    %7822 = vmatmul.mubr.f32.gmra.mrb[0].mxu0 %v7723
    %v7823 = vpop.f32.mrb[0].mxu0
    %v7824 = vadd.f32 %v209, %v7823
    %v7825 = vpop.f32.mrb[0].mxu0
    %7826 = vdwg.mxu0
    %7827 = vst [vmem:[#allocation27] sm:$0xff] %v7824
    // Predicated region
    $region106: #{tpu_custom_call.1} parent=1 // pred_check
      _
    $region107: #{tpu_custom_call.1} parent=1 // pred_check_branch
      %7829 = sbr.rel (0) target = $region109
    $region108: #{tpu_custom_call.1} parent=1 // pred_region
      %s7831 = ssub.s32 128, 128
      %7832 = vsyncadd [#allocation8], %s7831
      %s7834 = sshll.u32 [#allocation27], 4
      %s7835 = int_to_ptr.vmem [resolvable:$true] %s7834
      %7837 = dma.vmem_to_hbm [thread:$0]  %s7835, 128, %s13, [#allocation8]
    $region109: #{tpu_custom_call.1} parent=1 // pred_fallthru
      _
    // Predicated region
    $region110: #{tpu_custom_call.1} parent=1 // pred_check
      _
    $region111: #{tpu_custom_call.1} parent=1 // pred_check_branch
      %7839 = sbr.rel (0) target = $region113
    $region112: #{tpu_custom_call.1} parent=1 // pred_region
      %7840 = dma.done [#allocation8], 128
    $region113: #{tpu_custom_call.1} parent=1 // pred_fallthru
      _
    %7841 = vsyncpa [#allocation7], 1
    %7842 = vsyncpa [#allocation10], 1
    %7843 = vsyncpa [#allocation13], 1
    %7844 = vsyncpa [#allocation16], 1
    %7845 = vsyncpa [#allocation19], 1
    %7846 = vsyncpa [#allocation22], 1
    %7847 = vsyncpa [#allocation25], 1
    %7848 = vsyncpa [#allocation8], 1

</llo_original>
